<compile_context>
chip_gen: v5e
topology: v5e:2x2
jax: 0.10.0
libtpu: 0.0.40
codegen_flags: <defaults>
</compile_context>

<pallas_src>
import functools

import jax
import jax.numpy as jnp
import numpy as np
from jax import lax
from jax.experimental import pallas as pl
from jax.experimental.pallas import tpu as pltpu


def rcsa_kernel(x_ref, w1_ref, w2t_ref, wc_ref, out_ref, *, H, W, C, K, Nb):
    """One packed group of Nb batch elements per grid step.

    x_ref   : (H, W, L)   VMEM, L = Nb*C, channels fastest within each lane group
    w1_ref  : (Nb*Cr, L)  VMEM, block-diagonal fc1 weight (out, in) of 1x1 conv
    w2t_ref : (Nb*Cr, L)  VMEM, block-diagonal fc2 weight transposed (in, out)
    wc_ref  : (K, K)      SMEM, KxK spatial-attention conv weight (scalars)
    out_ref : (H, W, L)   VMEM
    """
    p = K // 2
    L = Nb * C
    x = x_ref[...].astype(jnp.float32)                                   # (H, W, L)

    # ---------------- ChannelAttention (all packed batches at once) -------------
    # AdaptiveMaxPool2d(1): global spatial max per (batch-slice, channel) lane.
    pooled = jnp.max(jnp.max(x, axis=0), axis=0, keepdims=True)          # (1, L)
    # fc1 (block-diagonal 1x1 conv, no bias) + ReLU
    h1 = jnp.sum(w1_ref[...] * pooled, axis=1, keepdims=True)            # (Nb*Cr, 1)
    h1 = jnp.maximum(h1, 0.0)
    # fc2 (block-diagonal 1x1 conv, no bias)
    h2 = jnp.sum(w2t_ref[...] * h1, axis=0, keepdims=True)               # (1, L)
    ca = jax.nn.sigmoid(h2)                                              # (1, L)
    x_ca = x * ca.reshape(1, 1, L)                                       # (H, W, L)

    # ---------------- SpatialAttention ------------------------------------------
    # channel max per packed batch slice -> (H, W, Nb)
    m_parts = [jnp.max(x_ca[:, :, b * C:(b + 1) * C], axis=2, keepdims=True)
               for b in range(Nb)]
    m = m_parts[0] if Nb == 1 else jnp.concatenate(m_parts, axis=2)      # (H, W, Nb)

    # zero-pad fully in-register (no VMEM scratch round trips)
    zh = jnp.zeros((p, W, Nb), jnp.float32)
    mp = jnp.concatenate([zh, m, zh], axis=0)                            # (H+2p, W, Nb)
    zw = jnp.zeros((H + 2 * p, p, Nb), jnp.float32)
    mp = jnp.concatenate([zw, mp, zw], axis=1)                           # (H+2p, W+2p, Nb)

    # KxK cross-correlation (== PyTorch Conv2d) from static shifted slices.
    acc = jnp.zeros((H, W, Nb), jnp.float32)
    for di in range(K):
        for dj in range(K):
            acc = acc + wc_ref[di, dj] * mp[di:di + H, dj:dj + W, :]
    sa = jax.nn.sigmoid(acc)                                             # (H, W, Nb)

    # broadcast sa back over each slice's C channels -> (H, W, L)
    sa_parts = [jnp.broadcast_to(sa[:, :, b:b + 1], (H, W, C)) for b in range(Nb)]
    sa_full = sa_parts[0] if Nb == 1 else jnp.concatenate(sa_parts, axis=2)

    # ---------------- Residual combine ------------------------------------------
    out_ref[...] = (x + x_ca * sa_full).astype(out_ref.dtype)


def rcsa_pallas(x_nchw, w_fc1, w_fc2, w_conv):
    """x_nchw: (N, C, H, W); w_fc1: (Cr, C); w_fc2: (C, Cr); w_conv: (K, K)."""
    N, C, H, W = x_nchw.shape
    Cr = w_fc1.shape[0]
    K = w_conv.shape[0]

    # Pack Nb batch elements along the lane (channel) axis so lanes are dense.
    Nb = 1
    for d in range(1, N + 1):
        if N % d == 0 and d * C <= 128:
            Nb = d
    G = N // Nb
    L = Nb * C

    # (N, C, H, W) -> (G, H, W, Nb*C): channels fastest within each packed group.
    # TODO(synk): in an NHWC end-to-end model this transpose (and the inverse
    # below) would be elided / fused with adjacent ops.
    xp = x_nchw.reshape(G, Nb, C, H, W).transpose(0, 3, 4, 1, 2).reshape(G, H, W, L)

    # Block-diagonal 1x1-conv weights handle all Nb packed batch slices at once.
    w1 = w_fc1.astype(jnp.float32)                                       # (Cr, C)
    w2t = jnp.transpose(w_fc2).astype(jnp.float32)                       # (Cr, C)
    if Nb == 1:
        w1bd, w2bd = w1, w2t
    else:
        w1bd = jnp.zeros((Nb * Cr, L), jnp.float32)
        w2bd = jnp.zeros((Nb * Cr, L), jnp.float32)
        for b in range(Nb):
            w1bd = w1bd.at[b * Cr:(b + 1) * Cr, b * C:(b + 1) * C].set(w1)
            w2bd = w2bd.at[b * Cr:(b + 1) * Cr, b * C:(b + 1) * C].set(w2t)

    kernel = functools.partial(rcsa_kernel, H=H, W=W, C=C, K=K, Nb=Nb)
    out = pl.pallas_call(
        kernel,
        out_shape=jax.ShapeDtypeStruct((G, H, W, L), x_nchw.dtype),
        grid_spec=pltpu.PrefetchScalarGridSpec(
            num_scalar_prefetch=0,
            grid=(G,),
            in_specs=[
                pl.BlockSpec((None, H, W, L), lambda g: (g, 0, 0, 0)),   # packed x
                pl.BlockSpec((Nb * Cr, L), lambda g: (0, 0)),            # block-diag fc1
                pl.BlockSpec((Nb * Cr, L), lambda g: (0, 0)),            # block-diag fc2^T
                pl.BlockSpec(memory_space=pltpu.MemorySpace.SMEM),       # KxK conv weight
            ],
            out_specs=pl.BlockSpec((None, H, W, L), lambda g: (g, 0, 0, 0)),
        ),
        # Groups are fully independent -> shard across v7x's 2 TensorCores.
        compiler_params=pltpu.CompilerParams(dimension_semantics=("parallel",)),
    )(xp, w1bd, w2bd, w_conv.astype(jnp.float32))

    # back to NCHW
    return out.reshape(G, H, W, Nb, C).transpose(0, 3, 4, 1, 2).reshape(N, C, H, W)


def rcsa_reference(x, w_fc1, w_fc2, w_conv):
    """Pure-JAX reference matching the PyTorch RCSA forward (NCHW)."""
    K = w_conv.shape[0]
    pooled = jnp.max(x, axis=(2, 3), keepdims=True)                      # (N, C, 1, 1)
    h1 = jax.nn.relu(jnp.einsum("nchw,rc->nrhw", pooled, w_fc1))
    h2 = jnp.einsum("nrhw,cr->nchw", h1, w_fc2)
    ca = jax.nn.sigmoid(h2)
    x1_ca = x * ca
    m = jnp.max(x1_ca, axis=1, keepdims=True)                            # (N, 1, H, W)
    conv = lax.conv_general_dilated(
        m, w_conv.reshape(1, 1, K, K), window_strides=(1, 1),
        padding=[(K // 2, K // 2), (K // 2, K // 2)],
        dimension_numbers=("NCHW", "OIHW", "NCHW"))
    sa = jax.nn.sigmoid(conv)
    return x + x1_ca * sa


if __name__ == "__main__":
    N, C, H, W = 2, 32, 16, 16          # in_channel=32 so C//16 = 2
    Cr = C // 16
    K = 7

    key = jax.random.PRNGKey(0)
    kx, k1, k2, k3 = jax.random.split(key, 4)
    x = jax.random.normal(kx, (N, C, H, W), jnp.float32)
    w_fc1 = jax.random.normal(k1, (Cr, C), jnp.float32) * 0.2            # Conv2d(C, C//16, 1)
    w_fc2 = jax.random.normal(k2, (C, Cr), jnp.float32) * 0.2            # Conv2d(C//16, C, 1)
    w_conv = jax.random.normal(k3, (K, K), jnp.float32) * 0.2            # Conv2d(1, 1, 7)

    out = rcsa_pallas(x, w_fc1, w_fc2, w_conv)
    out = jax.block_until_ready(out)

    ref = rcsa_reference(x, w_fc1, w_fc2, w_conv)
    np.testing.assert_allclose(np.asarray(out), np.asarray(ref), rtol=1e-4, atol=1e-4)
    print("KERNEL_OK")
</pallas_src>

<mosaic_0001>
module attributes {stable_mosaic.version = 11 : i64} {
  func.func @rcsa_kernel(%arg0: i32, %arg1: memref<1x16x16x64xf32, #tpu.memory_space<vmem>>, %arg2: memref<4x64xf32, #tpu.memory_space<vmem>>, %arg3: memref<4x64xf32, #tpu.memory_space<vmem>>, %arg4: memref<7x7xf32, #tpu.memory_space<smem>>, %arg5: memref<1x16x16x64xf32, #tpu.memory_space<vmem>>) attributes {dimension_semantics = [#tpu.dimension_semantics<parallel>], iteration_bounds = array<i64: 1>, scalar_prefetch = 0 : i64, scratch_operands = 0 : i64, tpu.core_type = #tpu.core_type<tc>, window_params = [{transform_indices = @transform_0, window_bounds = array<i64: 1, 16, 16, 64>}, {pipeline_mode = #tpu.pipeline_mode<synchronous>, transform_indices = @transform_1, window_bounds = array<i64: 4, 64>}, {pipeline_mode = #tpu.pipeline_mode<synchronous>, transform_indices = @transform_2, window_bounds = array<i64: 4, 64>}, {transform_indices = @transform_3, window_bounds = array<i64: 7, 7>}, {transform_indices = @transform_4, window_bounds = array<i64: 1, 16, 16, 64>}]} {
    %c0 = arith.constant 0 : index
    %c0_0 = arith.constant 0 : index
    %c0_1 = arith.constant 0 : index
    %c0_2 = arith.constant 0 : index
    %0 = vector.load %arg1[%c0, %c0_0, %c0_1, %c0_2] : memref<1x16x16x64xf32, #tpu.memory_space<vmem>>, vector<1x16x16x64xf32>
    %1 = vector.shape_cast %0 : vector<1x16x16x64xf32> to vector<16x16x64xf32>
    %cst = arith.constant dense<0xFF800000> : vector<16x64xf32>
    %2 = vector.multi_reduction <maximumf>, %1, %cst [0] : vector<16x16x64xf32> to vector<16x64xf32>
    %cst_3 = arith.constant dense<0xFF800000> : vector<64xf32>
    %3 = vector.multi_reduction <maximumf>, %2, %cst_3 [0] : vector<16x64xf32> to vector<64xf32>
    %4 = vector.shape_cast %3 : vector<64xf32> to vector<1x64xf32>
    %c0_4 = arith.constant 0 : index
    %c0_5 = arith.constant 0 : index
    %5 = vector.load %arg2[%c0_4, %c0_5] : memref<4x64xf32, #tpu.memory_space<vmem>>, vector<4x64xf32>
    %6 = vector.broadcast %4 : vector<1x64xf32> to vector<4x64xf32>
    %7 = arith.mulf %5, %6 : vector<4x64xf32>
    %cst_6 = arith.constant dense<0.000000e+00> : vector<4xf32>
    %8 = vector.multi_reduction <add>, %7, %cst_6 [1] : vector<4x64xf32> to vector<4xf32>
    %9 = vector.shape_cast %8 : vector<4xf32> to vector<4x1xf32>
    %cst_7 = arith.constant 0.000000e+00 : f32
    %10 = vector.broadcast %cst_7 : f32 to vector<4x1xf32>
    %11 = arith.maximumf %9, %10 : vector<4x1xf32>
    %c0_8 = arith.constant 0 : index
    %c0_9 = arith.constant 0 : index
    %12 = vector.load %arg3[%c0_8, %c0_9] : memref<4x64xf32, #tpu.memory_space<vmem>>, vector<4x64xf32>
    %13 = vector.broadcast %11 : vector<4x1xf32> to vector<4x64xf32>
    %14 = arith.mulf %12, %13 : vector<4x64xf32>
    %cst_10 = arith.constant dense<0.000000e+00> : vector<64xf32>
    %15 = vector.multi_reduction <add>, %14, %cst_10 [0] : vector<4x64xf32> to vector<64xf32>
    %16 = vector.shape_cast %15 : vector<64xf32> to vector<1x64xf32>
    %17 = arith.negf %16 : vector<1x64xf32>
    %18 = math.exp %17 : vector<1x64xf32>
    %cst_11 = arith.constant 1.000000e+00 : f32
    %19 = vector.broadcast %cst_11 : f32 to vector<1x64xf32>
    %20 = arith.addf %19, %18 : vector<1x64xf32>
    %21 = arith.divf %19, %20 : vector<1x64xf32>
    %22 = vector.shape_cast %21 : vector<1x64xf32> to vector<1x1x64xf32>
    %23 = vector.broadcast %22 : vector<1x1x64xf32> to vector<16x16x64xf32>
    %24 = arith.mulf %1, %23 : vector<16x16x64xf32>
    %25 = vector.extract_strided_slice %24 {offsets = [0, 0, 0], sizes = [16, 16, 32], strides = [1, 1, 1]} : vector<16x16x64xf32> to vector<16x16x32xf32>
    %cst_12 = arith.constant dense<0xFF800000> : vector<16x16xf32>
    %26 = vector.multi_reduction <maximumf>, %25, %cst_12 [2] : vector<16x16x32xf32> to vector<16x16xf32>
    %27 = vector.shape_cast %26 : vector<16x16xf32> to vector<16x16x1xf32>
    %28 = vector.extract_strided_slice %24 {offsets = [0, 0, 32], sizes = [16, 16, 32], strides = [1, 1, 1]} : vector<16x16x64xf32> to vector<16x16x32xf32>
    %cst_13 = arith.constant dense<0xFF800000> : vector<16x16xf32>
    %29 = vector.multi_reduction <maximumf>, %28, %cst_13 [2] : vector<16x16x32xf32> to vector<16x16xf32>
    %30 = vector.shape_cast %29 : vector<16x16xf32> to vector<16x16x1xf32>
    %31 = tpu.concatenate %27, %30 in 2 : vector<16x16x1xf32>, vector<16x16x1xf32> -> vector<16x16x2xf32>
    %cst_14 = arith.constant 0.000000e+00 : f32
    %32 = vector.broadcast %cst_14 : f32 to vector<3x16x2xf32>
    %33 = tpu.concatenate %32, %31, %32 in 0 : vector<3x16x2xf32>, vector<16x16x2xf32>, vector<3x16x2xf32> -> vector<22x16x2xf32>
    %cst_15 = arith.constant 0.000000e+00 : f32
    %34 = vector.broadcast %cst_15 : f32 to vector<22x3x2xf32>
    %35 = tpu.concatenate %34, %33, %34 in 1 : vector<22x3x2xf32>, vector<22x16x2xf32>, vector<22x3x2xf32> -> vector<22x22x2xf32>
    %cst_16 = arith.constant 0.000000e+00 : f32
    %36 = vector.broadcast %cst_16 : f32 to vector<16x16x2xf32>
    %c0_17 = arith.constant 0 : index
    %c0_18 = arith.constant 0 : index
    %37 = memref.load %arg4[%c0_17, %c0_18] : memref<7x7xf32, #tpu.memory_space<smem>>
    %38 = vector.extract_strided_slice %35 {offsets = [0, 0, 0], sizes = [16, 16, 2], strides = [1, 1, 1]} : vector<22x22x2xf32> to vector<16x16x2xf32>
    %39 = vector.broadcast %37 : f32 to vector<16x16x2xf32>
    %40 = arith.mulf %39, %38 : vector<16x16x2xf32>
    %41 = arith.addf %36, %40 : vector<16x16x2xf32>
    %c0_19 = arith.constant 0 : index
    %c1 = arith.constant 1 : index
    %42 = memref.load %arg4[%c0_19, %c1] : memref<7x7xf32, #tpu.memory_space<smem>>
    %43 = vector.extract_strided_slice %35 {offsets = [0, 1, 0], sizes = [16, 16, 2], strides = [1, 1, 1]} : vector<22x22x2xf32> to vector<16x16x2xf32>
    %44 = vector.broadcast %42 : f32 to vector<16x16x2xf32>
    %45 = arith.mulf %44, %43 : vector<16x16x2xf32>
    %46 = arith.addf %41, %45 : vector<16x16x2xf32>
    %c0_20 = arith.constant 0 : index
    %c2 = arith.constant 2 : index
    %47 = memref.load %arg4[%c0_20, %c2] : memref<7x7xf32, #tpu.memory_space<smem>>
    %48 = vector.extract_strided_slice %35 {offsets = [0, 2, 0], sizes = [16, 16, 2], strides = [1, 1, 1]} : vector<22x22x2xf32> to vector<16x16x2xf32>
    %49 = vector.broadcast %47 : f32 to vector<16x16x2xf32>
    %50 = arith.mulf %49, %48 : vector<16x16x2xf32>
    %51 = arith.addf %46, %50 : vector<16x16x2xf32>
    %c0_21 = arith.constant 0 : index
    %c3 = arith.constant 3 : index
    %52 = memref.load %arg4[%c0_21, %c3] : memref<7x7xf32, #tpu.memory_space<smem>>
    %53 = vector.extract_strided_slice %35 {offsets = [0, 3, 0], sizes = [16, 16, 2], strides = [1, 1, 1]} : vector<22x22x2xf32> to vector<16x16x2xf32>
    %54 = vector.broadcast %52 : f32 to vector<16x16x2xf32>
    %55 = arith.mulf %54, %53 : vector<16x16x2xf32>
    %56 = arith.addf %51, %55 : vector<16x16x2xf32>
    %c0_22 = arith.constant 0 : index
    %c4 = arith.constant 4 : index
    %57 = memref.load %arg4[%c0_22, %c4] : memref<7x7xf32, #tpu.memory_space<smem>>
    %58 = vector.extract_strided_slice %35 {offsets = [0, 4, 0], sizes = [16, 16, 2], strides = [1, 1, 1]} : vector<22x22x2xf32> to vector<16x16x2xf32>
    %59 = vector.broadcast %57 : f32 to vector<16x16x2xf32>
    %60 = arith.mulf %59, %58 : vector<16x16x2xf32>
    %61 = arith.addf %56, %60 : vector<16x16x2xf32>
    %c0_23 = arith.constant 0 : index
    %c5 = arith.constant 5 : index
    %62 = memref.load %arg4[%c0_23, %c5] : memref<7x7xf32, #tpu.memory_space<smem>>
    %63 = vector.extract_strided_slice %35 {offsets = [0, 5, 0], sizes = [16, 16, 2], strides = [1, 1, 1]} : vector<22x22x2xf32> to vector<16x16x2xf32>
    %64 = vector.broadcast %62 : f32 to vector<16x16x2xf32>
    %65 = arith.mulf %64, %63 : vector<16x16x2xf32>
    %66 = arith.addf %61, %65 : vector<16x16x2xf32>
    %c0_24 = arith.constant 0 : index
    %c6 = arith.constant 6 : index
    %67 = memref.load %arg4[%c0_24, %c6] : memref<7x7xf32, #tpu.memory_space<smem>>
    %68 = vector.extract_strided_slice %35 {offsets = [0, 6, 0], sizes = [16, 16, 2], strides = [1, 1, 1]} : vector<22x22x2xf32> to vector<16x16x2xf32>
    %69 = vector.broadcast %67 : f32 to vector<16x16x2xf32>
    %70 = arith.mulf %69, %68 : vector<16x16x2xf32>
    %71 = arith.addf %66, %70 : vector<16x16x2xf32>
    %c1_25 = arith.constant 1 : index
    %c0_26 = arith.constant 0 : index
    %72 = memref.load %arg4[%c1_25, %c0_26] : memref<7x7xf32, #tpu.memory_space<smem>>
    %73 = vector.extract_strided_slice %35 {offsets = [1, 0, 0], sizes = [16, 16, 2], strides = [1, 1, 1]} : vector<22x22x2xf32> to vector<16x16x2xf32>
    %74 = vector.broadcast %72 : f32 to vector<16x16x2xf32>
    %75 = arith.mulf %74, %73 : vector<16x16x2xf32>
    %76 = arith.addf %71, %75 : vector<16x16x2xf32>
    %c1_27 = arith.constant 1 : index
    %c1_28 = arith.constant 1 : index
    %77 = memref.load %arg4[%c1_27, %c1_28] : memref<7x7xf32, #tpu.memory_space<smem>>
    %78 = vector.extract_strided_slice %35 {offsets = [1, 1, 0], sizes = [16, 16, 2], strides = [1, 1, 1]} : vector<22x22x2xf32> to vector<16x16x2xf32>
    %79 = vector.broadcast %77 : f32 to vector<16x16x2xf32>
    %80 = arith.mulf %79, %78 : vector<16x16x2xf32>
    %81 = arith.addf %76, %80 : vector<16x16x2xf32>
    %c1_29 = arith.constant 1 : index
    %c2_30 = arith.constant 2 : index
    %82 = memref.load %arg4[%c1_29, %c2_30] : memref<7x7xf32, #tpu.memory_space<smem>>
    %83 = vector.extract_strided_slice %35 {offsets = [1, 2, 0], sizes = [16, 16, 2], strides = [1, 1, 1]} : vector<22x22x2xf32> to vector<16x16x2xf32>
    %84 = vector.broadcast %82 : f32 to vector<16x16x2xf32>
    %85 = arith.mulf %84, %83 : vector<16x16x2xf32>
    %86 = arith.addf %81, %85 : vector<16x16x2xf32>
    %c1_31 = arith.constant 1 : index
    %c3_32 = arith.constant 3 : index
    %87 = memref.load %arg4[%c1_31, %c3_32] : memref<7x7xf32, #tpu.memory_space<smem>>
    %88 = vector.extract_strided_slice %35 {offsets = [1, 3, 0], sizes = [16, 16, 2], strides = [1, 1, 1]} : vector<22x22x2xf32> to vector<16x16x2xf32>
    %89 = vector.broadcast %87 : f32 to vector<16x16x2xf32>
    %90 = arith.mulf %89, %88 : vector<16x16x2xf32>
    %91 = arith.addf %86, %90 : vector<16x16x2xf32>
    %c1_33 = arith.constant 1 : index
    %c4_34 = arith.constant 4 : index
    %92 = memref.load %arg4[%c1_33, %c4_34] : memref<7x7xf32, #tpu.memory_space<smem>>
    %93 = vector.extract_strided_slice %35 {offsets = [1, 4, 0], sizes = [16, 16, 2], strides = [1, 1, 1]} : vector<22x22x2xf32> to vector<16x16x2xf32>
    %94 = vector.broadcast %92 : f32 to vector<16x16x2xf32>
    %95 = arith.mulf %94, %93 : vector<16x16x2xf32>
    %96 = arith.addf %91, %95 : vector<16x16x2xf32>
    %c1_35 = arith.constant 1 : index
    %c5_36 = arith.constant 5 : index
    %97 = memref.load %arg4[%c1_35, %c5_36] : memref<7x7xf32, #tpu.memory_space<smem>>
    %98 = vector.extract_strided_slice %35 {offsets = [1, 5, 0], sizes = [16, 16, 2], strides = [1, 1, 1]} : vector<22x22x2xf32> to vector<16x16x2xf32>
    %99 = vector.broadcast %97 : f32 to vector<16x16x2xf32>
    %100 = arith.mulf %99, %98 : vector<16x16x2xf32>
    %101 = arith.addf %96, %100 : vector<16x16x2xf32>
    %c1_37 = arith.constant 1 : index
    %c6_38 = arith.constant 6 : index
    %102 = memref.load %arg4[%c1_37, %c6_38] : memref<7x7xf32, #tpu.memory_space<smem>>
    %103 = vector.extract_strided_slice %35 {offsets = [1, 6, 0], sizes = [16, 16, 2], strides = [1, 1, 1]} : vector<22x22x2xf32> to vector<16x16x2xf32>
    %104 = vector.broadcast %102 : f32 to vector<16x16x2xf32>
    %105 = arith.mulf %104, %103 : vector<16x16x2xf32>
    %106 = arith.addf %101, %105 : vector<16x16x2xf32>
    %c2_39 = arith.constant 2 : index
    %c0_40 = arith.constant 0 : index
    %107 = memref.load %arg4[%c2_39, %c0_40] : memref<7x7xf32, #tpu.memory_space<smem>>
    %108 = vector.extract_strided_slice %35 {offsets = [2, 0, 0], sizes = [16, 16, 2], strides = [1, 1, 1]} : vector<22x22x2xf32> to vector<16x16x2xf32>
    %109 = vector.broadcast %107 : f32 to vector<16x16x2xf32>
    %110 = arith.mulf %109, %108 : vector<16x16x2xf32>
    %111 = arith.addf %106, %110 : vector<16x16x2xf32>
    %c2_41 = arith.constant 2 : index
    %c1_42 = arith.constant 1 : index
    %112 = memref.load %arg4[%c2_41, %c1_42] : memref<7x7xf32, #tpu.memory_space<smem>>
    %113 = vector.extract_strided_slice %35 {offsets = [2, 1, 0], sizes = [16, 16, 2], strides = [1, 1, 1]} : vector<22x22x2xf32> to vector<16x16x2xf32>
    %114 = vector.broadcast %112 : f32 to vector<16x16x2xf32>
    %115 = arith.mulf %114, %113 : vector<16x16x2xf32>
    %116 = arith.addf %111, %115 : vector<16x16x2xf32>
    %c2_43 = arith.constant 2 : index
    %c2_44 = arith.constant 2 : index
    %117 = memref.load %arg4[%c2_43, %c2_44] : memref<7x7xf32, #tpu.memory_space<smem>>
    %118 = vector.extract_strided_slice %35 {offsets = [2, 2, 0], sizes = [16, 16, 2], strides = [1, 1, 1]} : vector<22x22x2xf32> to vector<16x16x2xf32>
    %119 = vector.broadcast %117 : f32 to vector<16x16x2xf32>
    %120 = arith.mulf %119, %118 : vector<16x16x2xf32>
    %121 = arith.addf %116, %120 : vector<16x16x2xf32>
    %c2_45 = arith.constant 2 : index
    %c3_46 = arith.constant 3 : index
    %122 = memref.load %arg4[%c2_45, %c3_46] : memref<7x7xf32, #tpu.memory_space<smem>>
    %123 = vector.extract_strided_slice %35 {offsets = [2, 3, 0], sizes = [16, 16, 2], strides = [1, 1, 1]} : vector<22x22x2xf32> to vector<16x16x2xf32>
    %124 = vector.broadcast %122 : f32 to vector<16x16x2xf32>
    %125 = arith.mulf %124, %123 : vector<16x16x2xf32>
    %126 = arith.addf %121, %125 : vector<16x16x2xf32>
    %c2_47 = arith.constant 2 : index
    %c4_48 = arith.constant 4 : index
    %127 = memref.load %arg4[%c2_47, %c4_48] : memref<7x7xf32, #tpu.memory_space<smem>>
    %128 = vector.extract_strided_slice %35 {offsets = [2, 4, 0], sizes = [16, 16, 2], strides = [1, 1, 1]} : vector<22x22x2xf32> to vector<16x16x2xf32>
    %129 = vector.broadcast %127 : f32 to vector<16x16x2xf32>
    %130 = arith.mulf %129, %128 : vector<16x16x2xf32>
    %131 = arith.addf %126, %130 : vector<16x16x2xf32>
    %c2_49 = arith.constant 2 : index
    %c5_50 = arith.constant 5 : index
    %132 = memref.load %arg4[%c2_49, %c5_50] : memref<7x7xf32, #tpu.memory_space<smem>>
    %133 = vector.extract_strided_slice %35 {offsets = [2, 5, 0], sizes = [16, 16, 2], strides = [1, 1, 1]} : vector<22x22x2xf32> to vector<16x16x2xf32>
    %134 = vector.broadcast %132 : f32 to vector<16x16x2xf32>
    %135 = arith.mulf %134, %133 : vector<16x16x2xf32>
    %136 = arith.addf %131, %135 : vector<16x16x2xf32>
    %c2_51 = arith.constant 2 : index
    %c6_52 = arith.constant 6 : index
    %137 = memref.load %arg4[%c2_51, %c6_52] : memref<7x7xf32, #tpu.memory_space<smem>>
    %138 = vector.extract_strided_slice %35 {offsets = [2, 6, 0], sizes = [16, 16, 2], strides = [1, 1, 1]} : vector<22x22x2xf32> to vector<16x16x2xf32>
    %139 = vector.broadcast %137 : f32 to vector<16x16x2xf32>
    %140 = arith.mulf %139, %138 : vector<16x16x2xf32>
    %141 = arith.addf %136, %140 : vector<16x16x2xf32>
    %c3_53 = arith.constant 3 : index
    %c0_54 = arith.constant 0 : index
    %142 = memref.load %arg4[%c3_53, %c0_54] : memref<7x7xf32, #tpu.memory_space<smem>>
    %143 = vector.extract_strided_slice %35 {offsets = [3, 0, 0], sizes = [16, 16, 2], strides = [1, 1, 1]} : vector<22x22x2xf32> to vector<16x16x2xf32>
    %144 = vector.broadcast %142 : f32 to vector<16x16x2xf32>
    %145 = arith.mulf %144, %143 : vector<16x16x2xf32>
    %146 = arith.addf %141, %145 : vector<16x16x2xf32>
    %c3_55 = arith.constant 3 : index
    %c1_56 = arith.constant 1 : index
    %147 = memref.load %arg4[%c3_55, %c1_56] : memref<7x7xf32, #tpu.memory_space<smem>>
    %148 = vector.extract_strided_slice %35 {offsets = [3, 1, 0], sizes = [16, 16, 2], strides = [1, 1, 1]} : vector<22x22x2xf32> to vector<16x16x2xf32>
    %149 = vector.broadcast %147 : f32 to vector<16x16x2xf32>
    %150 = arith.mulf %149, %148 : vector<16x16x2xf32>
    %151 = arith.addf %146, %150 : vector<16x16x2xf32>
    %c3_57 = arith.constant 3 : index
    %c2_58 = arith.constant 2 : index
    %152 = memref.load %arg4[%c3_57, %c2_58] : memref<7x7xf32, #tpu.memory_space<smem>>
    %153 = vector.extract_strided_slice %35 {offsets = [3, 2, 0], sizes = [16, 16, 2], strides = [1, 1, 1]} : vector<22x22x2xf32> to vector<16x16x2xf32>
    %154 = vector.broadcast %152 : f32 to vector<16x16x2xf32>
    %155 = arith.mulf %154, %153 : vector<16x16x2xf32>
    %156 = arith.addf %151, %155 : vector<16x16x2xf32>
    %c3_59 = arith.constant 3 : index
    %c3_60 = arith.constant 3 : index
    %157 = memref.load %arg4[%c3_59, %c3_60] : memref<7x7xf32, #tpu.memory_space<smem>>
    %158 = vector.extract_strided_slice %35 {offsets = [3, 3, 0], sizes = [16, 16, 2], strides = [1, 1, 1]} : vector<22x22x2xf32> to vector<16x16x2xf32>
    %159 = vector.broadcast %157 : f32 to vector<16x16x2xf32>
    %160 = arith.mulf %159, %158 : vector<16x16x2xf32>
    %161 = arith.addf %156, %160 : vector<16x16x2xf32>
    %c3_61 = arith.constant 3 : index
    %c4_62 = arith.constant 4 : index
    %162 = memref.load %arg4[%c3_61, %c4_62] : memref<7x7xf32, #tpu.memory_space<smem>>
    %163 = vector.extract_strided_slice %35 {offsets = [3, 4, 0], sizes = [16, 16, 2], strides = [1, 1, 1]} : vector<22x22x2xf32> to vector<16x16x2xf32>
    %164 = vector.broadcast %162 : f32 to vector<16x16x2xf32>
    %165 = arith.mulf %164, %163 : vector<16x16x2xf32>
    %166 = arith.addf %161, %165 : vector<16x16x2xf32>
    %c3_63 = arith.constant 3 : index
    %c5_64 = arith.constant 5 : index
    %167 = memref.load %arg4[%c3_63, %c5_64] : memref<7x7xf32, #tpu.memory_space<smem>>
    %168 = vector.extract_strided_slice %35 {offsets = [3, 5, 0], sizes = [16, 16, 2], strides = [1, 1, 1]} : vector<22x22x2xf32> to vector<16x16x2xf32>
    %169 = vector.broadcast %167 : f32 to vector<16x16x2xf32>
    %170 = arith.mulf %169, %168 : vector<16x16x2xf32>
    %171 = arith.addf %166, %170 : vector<16x16x2xf32>
    %c3_65 = arith.constant 3 : index
    %c6_66 = arith.constant 6 : index
    %172 = memref.load %arg4[%c3_65, %c6_66] : memref<7x7xf32, #tpu.memory_space<smem>>
    %173 = vector.extract_strided_slice %35 {offsets = [3, 6, 0], sizes = [16, 16, 2], strides = [1, 1, 1]} : vector<22x22x2xf32> to vector<16x16x2xf32>
    %174 = vector.broadcast %172 : f32 to vector<16x16x2xf32>
    %175 = arith.mulf %174, %173 : vector<16x16x2xf32>
    %176 = arith.addf %171, %175 : vector<16x16x2xf32>
    %c4_67 = arith.constant 4 : index
    %c0_68 = arith.constant 0 : index
    %177 = memref.load %arg4[%c4_67, %c0_68] : memref<7x7xf32, #tpu.memory_space<smem>>
    %178 = vector.extract_strided_slice %35 {offsets = [4, 0, 0], sizes = [16, 16, 2], strides = [1, 1, 1]} : vector<22x22x2xf32> to vector<16x16x2xf32>
    %179 = vector.broadcast %177 : f32 to vector<16x16x2xf32>
    %180 = arith.mulf %179, %178 : vector<16x16x2xf32>
    %181 = arith.addf %176, %180 : vector<16x16x2xf32>
    %c4_69 = arith.constant 4 : index
    %c1_70 = arith.constant 1 : index
    %182 = memref.load %arg4[%c4_69, %c1_70] : memref<7x7xf32, #tpu.memory_space<smem>>
    %183 = vector.extract_strided_slice %35 {offsets = [4, 1, 0], sizes = [16, 16, 2], strides = [1, 1, 1]} : vector<22x22x2xf32> to vector<16x16x2xf32>
    %184 = vector.broadcast %182 : f32 to vector<16x16x2xf32>
    %185 = arith.mulf %184, %183 : vector<16x16x2xf32>
    %186 = arith.addf %181, %185 : vector<16x16x2xf32>
    %c4_71 = arith.constant 4 : index
    %c2_72 = arith.constant 2 : index
    %187 = memref.load %arg4[%c4_71, %c2_72] : memref<7x7xf32, #tpu.memory_space<smem>>
    %188 = vector.extract_strided_slice %35 {offsets = [4, 2, 0], sizes = [16, 16, 2], strides = [1, 1, 1]} : vector<22x22x2xf32> to vector<16x16x2xf32>
    %189 = vector.broadcast %187 : f32 to vector<16x16x2xf32>
    %190 = arith.mulf %189, %188 : vector<16x16x2xf32>
    %191 = arith.addf %186, %190 : vector<16x16x2xf32>
    %c4_73 = arith.constant 4 : index
    %c3_74 = arith.constant 3 : index
    %192 = memref.load %arg4[%c4_73, %c3_74] : memref<7x7xf32, #tpu.memory_space<smem>>
    %193 = vector.extract_strided_slice %35 {offsets = [4, 3, 0], sizes = [16, 16, 2], strides = [1, 1, 1]} : vector<22x22x2xf32> to vector<16x16x2xf32>
    %194 = vector.broadcast %192 : f32 to vector<16x16x2xf32>
    %195 = arith.mulf %194, %193 : vector<16x16x2xf32>
    %196 = arith.addf %191, %195 : vector<16x16x2xf32>
    %c4_75 = arith.constant 4 : index
    %c4_76 = arith.constant 4 : index
    %197 = memref.load %arg4[%c4_75, %c4_76] : memref<7x7xf32, #tpu.memory_space<smem>>
    %198 = vector.extract_strided_slice %35 {offsets = [4, 4, 0], sizes = [16, 16, 2], strides = [1, 1, 1]} : vector<22x22x2xf32> to vector<16x16x2xf32>
    %199 = vector.broadcast %197 : f32 to vector<16x16x2xf32>
    %200 = arith.mulf %199, %198 : vector<16x16x2xf32>
    %201 = arith.addf %196, %200 : vector<16x16x2xf32>
    %c4_77 = arith.constant 4 : index
    %c5_78 = arith.constant 5 : index
    %202 = memref.load %arg4[%c4_77, %c5_78] : memref<7x7xf32, #tpu.memory_space<smem>>
    %203 = vector.extract_strided_slice %35 {offsets = [4, 5, 0], sizes = [16, 16, 2], strides = [1, 1, 1]} : vector<22x22x2xf32> to vector<16x16x2xf32>
    %204 = vector.broadcast %202 : f32 to vector<16x16x2xf32>
    %205 = arith.mulf %204, %203 : vector<16x16x2xf32>
    %206 = arith.addf %201, %205 : vector<16x16x2xf32>
    %c4_79 = arith.constant 4 : index
    %c6_80 = arith.constant 6 : index
    %207 = memref.load %arg4[%c4_79, %c6_80] : memref<7x7xf32, #tpu.memory_space<smem>>
    %208 = vector.extract_strided_slice %35 {offsets = [4, 6, 0], sizes = [16, 16, 2], strides = [1, 1, 1]} : vector<22x22x2xf32> to vector<16x16x2xf32>
    %209 = vector.broadcast %207 : f32 to vector<16x16x2xf32>
    %210 = arith.mulf %209, %208 : vector<16x16x2xf32>
    %211 = arith.addf %206, %210 : vector<16x16x2xf32>
    %c5_81 = arith.constant 5 : index
    %c0_82 = arith.constant 0 : index
    %212 = memref.load %arg4[%c5_81, %c0_82] : memref<7x7xf32, #tpu.memory_space<smem>>
    %213 = vector.extract_strided_slice %35 {offsets = [5, 0, 0], sizes = [16, 16, 2], strides = [1, 1, 1]} : vector<22x22x2xf32> to vector<16x16x2xf32>
    %214 = vector.broadcast %212 : f32 to vector<16x16x2xf32>
    %215 = arith.mulf %214, %213 : vector<16x16x2xf32>
    %216 = arith.addf %211, %215 : vector<16x16x2xf32>
    %c5_83 = arith.constant 5 : index
    %c1_84 = arith.constant 1 : index
    %217 = memref.load %arg4[%c5_83, %c1_84] : memref<7x7xf32, #tpu.memory_space<smem>>
    %218 = vector.extract_strided_slice %35 {offsets = [5, 1, 0], sizes = [16, 16, 2], strides = [1, 1, 1]} : vector<22x22x2xf32> to vector<16x16x2xf32>
    %219 = vector.broadcast %217 : f32 to vector<16x16x2xf32>
    %220 = arith.mulf %219, %218 : vector<16x16x2xf32>
    %221 = arith.addf %216, %220 : vector<16x16x2xf32>
    %c5_85 = arith.constant 5 : index
    %c2_86 = arith.constant 2 : index
    %222 = memref.load %arg4[%c5_85, %c2_86] : memref<7x7xf32, #tpu.memory_space<smem>>
    %223 = vector.extract_strided_slice %35 {offsets = [5, 2, 0], sizes = [16, 16, 2], strides = [1, 1, 1]} : vector<22x22x2xf32> to vector<16x16x2xf32>
    %224 = vector.broadcast %222 : f32 to vector<16x16x2xf32>
    %225 = arith.mulf %224, %223 : vector<16x16x2xf32>
    %226 = arith.addf %221, %225 : vector<16x16x2xf32>
    %c5_87 = arith.constant 5 : index
    %c3_88 = arith.constant 3 : index
    %227 = memref.load %arg4[%c5_87, %c3_88] : memref<7x7xf32, #tpu.memory_space<smem>>
    %228 = vector.extract_strided_slice %35 {offsets = [5, 3, 0], sizes = [16, 16, 2], strides = [1, 1, 1]} : vector<22x22x2xf32> to vector<16x16x2xf32>
    %229 = vector.broadcast %227 : f32 to vector<16x16x2xf32>
    %230 = arith.mulf %229, %228 : vector<16x16x2xf32>
    %231 = arith.addf %226, %230 : vector<16x16x2xf32>
    %c5_89 = arith.constant 5 : index
    %c4_90 = arith.constant 4 : index
    %232 = memref.load %arg4[%c5_89, %c4_90] : memref<7x7xf32, #tpu.memory_space<smem>>
    %233 = vector.extract_strided_slice %35 {offsets = [5, 4, 0], sizes = [16, 16, 2], strides = [1, 1, 1]} : vector<22x22x2xf32> to vector<16x16x2xf32>
    %234 = vector.broadcast %232 : f32 to vector<16x16x2xf32>
    %235 = arith.mulf %234, %233 : vector<16x16x2xf32>
    %236 = arith.addf %231, %235 : vector<16x16x2xf32>
    %c5_91 = arith.constant 5 : index
    %c5_92 = arith.constant 5 : index
    %237 = memref.load %arg4[%c5_91, %c5_92] : memref<7x7xf32, #tpu.memory_space<smem>>
    %238 = vector.extract_strided_slice %35 {offsets = [5, 5, 0], sizes = [16, 16, 2], strides = [1, 1, 1]} : vector<22x22x2xf32> to vector<16x16x2xf32>
    %239 = vector.broadcast %237 : f32 to vector<16x16x2xf32>
    %240 = arith.mulf %239, %238 : vector<16x16x2xf32>
    %241 = arith.addf %236, %240 : vector<16x16x2xf32>
    %c5_93 = arith.constant 5 : index
    %c6_94 = arith.constant 6 : index
    %242 = memref.load %arg4[%c5_93, %c6_94] : memref<7x7xf32, #tpu.memory_space<smem>>
    %243 = vector.extract_strided_slice %35 {offsets = [5, 6, 0], sizes = [16, 16, 2], strides = [1, 1, 1]} : vector<22x22x2xf32> to vector<16x16x2xf32>
    %244 = vector.broadcast %242 : f32 to vector<16x16x2xf32>
    %245 = arith.mulf %244, %243 : vector<16x16x2xf32>
    %246 = arith.addf %241, %245 : vector<16x16x2xf32>
    %c6_95 = arith.constant 6 : index
    %c0_96 = arith.constant 0 : index
    %247 = memref.load %arg4[%c6_95, %c0_96] : memref<7x7xf32, #tpu.memory_space<smem>>
    %248 = vector.extract_strided_slice %35 {offsets = [6, 0, 0], sizes = [16, 16, 2], strides = [1, 1, 1]} : vector<22x22x2xf32> to vector<16x16x2xf32>
    %249 = vector.broadcast %247 : f32 to vector<16x16x2xf32>
    %250 = arith.mulf %249, %248 : vector<16x16x2xf32>
    %251 = arith.addf %246, %250 : vector<16x16x2xf32>
    %c6_97 = arith.constant 6 : index
    %c1_98 = arith.constant 1 : index
    %252 = memref.load %arg4[%c6_97, %c1_98] : memref<7x7xf32, #tpu.memory_space<smem>>
    %253 = vector.extract_strided_slice %35 {offsets = [6, 1, 0], sizes = [16, 16, 2], strides = [1, 1, 1]} : vector<22x22x2xf32> to vector<16x16x2xf32>
    %254 = vector.broadcast %252 : f32 to vector<16x16x2xf32>
    %255 = arith.mulf %254, %253 : vector<16x16x2xf32>
    %256 = arith.addf %251, %255 : vector<16x16x2xf32>
    %c6_99 = arith.constant 6 : index
    %c2_100 = arith.constant 2 : index
    %257 = memref.load %arg4[%c6_99, %c2_100] : memref<7x7xf32, #tpu.memory_space<smem>>
    %258 = vector.extract_strided_slice %35 {offsets = [6, 2, 0], sizes = [16, 16, 2], strides = [1, 1, 1]} : vector<22x22x2xf32> to vector<16x16x2xf32>
    %259 = vector.broadcast %257 : f32 to vector<16x16x2xf32>
    %260 = arith.mulf %259, %258 : vector<16x16x2xf32>
    %261 = arith.addf %256, %260 : vector<16x16x2xf32>
    %c6_101 = arith.constant 6 : index
    %c3_102 = arith.constant 3 : index
    %262 = memref.load %arg4[%c6_101, %c3_102] : memref<7x7xf32, #tpu.memory_space<smem>>
    %263 = vector.extract_strided_slice %35 {offsets = [6, 3, 0], sizes = [16, 16, 2], strides = [1, 1, 1]} : vector<22x22x2xf32> to vector<16x16x2xf32>
    %264 = vector.broadcast %262 : f32 to vector<16x16x2xf32>
    %265 = arith.mulf %264, %263 : vector<16x16x2xf32>
    %266 = arith.addf %261, %265 : vector<16x16x2xf32>
    %c6_103 = arith.constant 6 : index
    %c4_104 = arith.constant 4 : index
    %267 = memref.load %arg4[%c6_103, %c4_104] : memref<7x7xf32, #tpu.memory_space<smem>>
    %268 = vector.extract_strided_slice %35 {offsets = [6, 4, 0], sizes = [16, 16, 2], strides = [1, 1, 1]} : vector<22x22x2xf32> to vector<16x16x2xf32>
    %269 = vector.broadcast %267 : f32 to vector<16x16x2xf32>
    %270 = arith.mulf %269, %268 : vector<16x16x2xf32>
    %271 = arith.addf %266, %270 : vector<16x16x2xf32>
    %c6_105 = arith.constant 6 : index
    %c5_106 = arith.constant 5 : index
    %272 = memref.load %arg4[%c6_105, %c5_106] : memref<7x7xf32, #tpu.memory_space<smem>>
    %273 = vector.extract_strided_slice %35 {offsets = [6, 5, 0], sizes = [16, 16, 2], strides = [1, 1, 1]} : vector<22x22x2xf32> to vector<16x16x2xf32>
    %274 = vector.broadcast %272 : f32 to vector<16x16x2xf32>
    %275 = arith.mulf %274, %273 : vector<16x16x2xf32>
    %276 = arith.addf %271, %275 : vector<16x16x2xf32>
    %c6_107 = arith.constant 6 : index
    %c6_108 = arith.constant 6 : index
    %277 = memref.load %arg4[%c6_107, %c6_108] : memref<7x7xf32, #tpu.memory_space<smem>>
    %278 = vector.extract_strided_slice %35 {offsets = [6, 6, 0], sizes = [16, 16, 2], strides = [1, 1, 1]} : vector<22x22x2xf32> to vector<16x16x2xf32>
    %279 = vector.broadcast %277 : f32 to vector<16x16x2xf32>
    %280 = arith.mulf %279, %278 : vector<16x16x2xf32>
    %281 = arith.addf %276, %280 : vector<16x16x2xf32>
    %282 = arith.negf %281 : vector<16x16x2xf32>
    %283 = math.exp %282 : vector<16x16x2xf32>
    %cst_109 = arith.constant 1.000000e+00 : f32
    %284 = vector.broadcast %cst_109 : f32 to vector<16x16x2xf32>
    %285 = arith.addf %284, %283 : vector<16x16x2xf32>
    %286 = arith.divf %284, %285 : vector<16x16x2xf32>
    %287 = vector.extract_strided_slice %286 {offsets = [0, 0, 0], sizes = [16, 16, 1], strides = [1, 1, 1]} : vector<16x16x2xf32> to vector<16x16x1xf32>
    %288 = vector.shape_cast %287 : vector<16x16x1xf32> to vector<16x16x1xf32>
    %289 = vector.broadcast %288 : vector<16x16x1xf32> to vector<16x16x32xf32>
    %290 = vector.extract_strided_slice %286 {offsets = [0, 0, 1], sizes = [16, 16, 1], strides = [1, 1, 1]} : vector<16x16x2xf32> to vector<16x16x1xf32>
    %291 = vector.shape_cast %290 : vector<16x16x1xf32> to vector<16x16x1xf32>
    %292 = vector.broadcast %291 : vector<16x16x1xf32> to vector<16x16x32xf32>
    %293 = tpu.concatenate %289, %292 in 2 : vector<16x16x32xf32>, vector<16x16x32xf32> -> vector<16x16x64xf32>
    %294 = arith.mulf %24, %293 : vector<16x16x64xf32>
    %295 = arith.addf %1, %294 : vector<16x16x64xf32>
    %c0_110 = arith.constant 0 : index
    %c0_111 = arith.constant 0 : index
    %c0_112 = arith.constant 0 : index
    %c0_113 = arith.constant 0 : index
    %296 = vector.load %arg5[%c0_110, %c0_111, %c0_112, %c0_113] : memref<1x16x16x64xf32, #tpu.memory_space<vmem>>, vector<1x16x16x64xf32>
    %297 = vector.shape_cast %296 : vector<1x16x16x64xf32> to vector<16x16x64xf32>
    %298 = vector.shape_cast %295 : vector<16x16x64xf32> to vector<1x16x16x64xf32>
    tpu.vector_store %arg5[%c0_110, %c0_111, %c0_112, %c0_113], %298 {strides = array<i32>} : memref<1x16x16x64xf32, #tpu.memory_space<vmem>>, vector<1x16x16x64xf32>,
    return
  }
  func.func @transform_0(%arg0: i32) -> (i32, i32, i32, i32) {
    %c0_i32 = arith.constant 0 : i32
    %c0_i32_0 = arith.constant 0 : i32
    %c0_i32_1 = arith.constant 0 : i32
    %c0_i32_2 = arith.constant 0 : i32
    return %arg0, %c0_i32, %c0_i32_0, %c0_i32_1 : i32, i32, i32, i32
  }
  func.func @transform_1(%arg0: i32) -> (i32, i32) {
    %c0_i32 = arith.constant 0 : i32
    %c0_i32_0 = arith.constant 0 : i32
    %c0_i32_1 = arith.constant 0 : i32
    return %c0_i32, %c0_i32_0 : i32, i32
  }
  func.func @transform_2(%arg0: i32) -> (i32, i32) {
    %c0_i32 = arith.constant 0 : i32
    %c0_i32_0 = arith.constant 0 : i32
    %c0_i32_1 = arith.constant 0 : i32
    return %c0_i32, %c0_i32_0 : i32, i32
  }
  func.func @transform_3(%arg0: i32) -> (i32, i32) {
    %c0_i32 = arith.constant 0 : i32
    %c0_i32_0 = arith.constant 0 : i32
    %c0_i32_1 = arith.constant 0 : i32
    return %c0_i32, %c0_i32_0 : i32, i32
  }
  func.func @transform_4(%arg0: i32) -> (i32, i32, i32, i32) {
    %c0_i32 = arith.constant 0 : i32
    %c0_i32_0 = arith.constant 0 : i32
    %c0_i32_1 = arith.constant 0 : i32
    %c0_i32_2 = arith.constant 0 : i32
    return %arg0, %c0_i32, %c0_i32_0, %c0_i32_1 : i32, i32, i32, i32
  }
}

</mosaic_0001>

<llo_original>
// kernel: tpu_custom_call.1
$region0: #{tpu_custom_call.1}
  #allocation0 [shape = 'u32[]', space=smem, size = 0x4, offset = 0x4, fixed_abs, tag = 'smem constant byte address 0x4 - core index']
  #allocation1 [shape = 'u32[72,128]{1,0:T(1,128)}', space=vmem, size = 0x9000, scoped, tag = 'internal scratch']
  %s0 = inlined_call_operand.hbm [shape: f32[1,16,16,64], index: 0, kind: input, shape index: {}]
  %s1 = inlined_call_operand.hbm [shape: f32[4,64], index: 1, kind: input, shape index: {}]
  %s2 = inlined_call_operand.hbm [shape: f32[4,64], index: 2, kind: input, shape index: {}]
  %s3 = inlined_call_operand.hbm [shape: f32[7,7], index: 3, kind: input, shape index: {}]
  %s4 = inlined_call_operand.hbm [shape: f32[1,16,16,64], index: 4, kind: output, shape index: {}]
  %s5 = sld [smem:[#allocation0]]
  $region42: #{tpu_custom_call.1} parent=0
    _
  %s7 = ssub.s32 1, %s5
  %s8 = scalar_select 0, %s7, %s5
  $region1: #{tpu_custom_call.1} parent=0
    #allocation2 [shape = 'u8[131072]{0}', space=vmem, size = 0x20000, scoped, tag = 'input window, operand 0, single buffered']
    #allocation3 [shape = 's32[1]{0}', space=sflag, size = 0x4, scoped, tag = 'scoped memory for tpu_custom_call.1']
    #allocation4 [shape = 's32[1]{0}', space=sflag, size = 0x4, scoped, tag = 'scoped memory for tpu_custom_call.1']
    #allocation5 [shape = 's32[1]{0}', space=sflag, size = 0x4, scoped, tag = 'scoped memory for tpu_custom_call.1']
    #allocation6 [shape = 'u8[2048]{0}', space=vmem, size = 0x800, scoped, tag = 'input window, operand 1, single buffered']
    #allocation7 [shape = 's32[1]{0}', space=sflag, size = 0x4, scoped, tag = 'scoped memory for tpu_custom_call.1']
    #allocation8 [shape = 'u8[2048]{0}', space=vmem, size = 0x800, scoped, tag = 'input window, operand 2, single buffered']
    #allocation9 [shape = 'u8[4096]{0}', space=smem, size = 0x1000, scoped, tag = 'input window, operand 3, single buffered']
    #allocation10 [shape = 'u8[131072]{0}', space=vmem, size = 0x20000, scoped, tag = 'output window, operand 0, single buffered']
    %9 = vsyncpa [#allocation3], 0
    %10 = vsyncpa [#allocation7], 0
    %11 = vsyncpa [#allocation5], 0
    %12 = vsyncpa [#allocation4], 0
    // Predicated region
    $region2: #{tpu_custom_call.1} parent=1 // pred_check
      _
    $region3: #{tpu_custom_call.1} parent=1 // pred_check_branch
      %14 = sbr.rel (0) target = $region5
    $region4: #{tpu_custom_call.1} parent=1 // pred_region
      %16 = vsyncadd [#allocation3], 0
      %s17 = sshll.u32 %s0, 4
      %s18 = int_to_ptr.hbm [resolvable:$true] %s17
      %s19 = sshll.u32 [#allocation2], 4
      %s20 = int_to_ptr.vmem [resolvable:$true] %s19
      %25 = dma.hbm_to_vmem [thread:$0]  %s18, 4096, %s20, [#allocation3], 128, 128, 8
    $region5: #{tpu_custom_call.1} parent=1 // pred_fallthru
      _
    // Predicated region
    $region6: #{tpu_custom_call.1} parent=1 // pred_check
      _
    $region7: #{tpu_custom_call.1} parent=1 // pred_check_branch
      %27 = sbr.rel (0) target = $region9
    $region8: #{tpu_custom_call.1} parent=1 // pred_region
      %29 = vsyncadd [#allocation7], 0
      %s31 = sshll.u32 %s1, 4
      %s32 = int_to_ptr.hbm [resolvable:$true] %s31
      %s33 = sshll.u32 [#allocation6], 4
      %s34 = int_to_ptr.vmem [resolvable:$true] %s33
      %36 = dma.hbm_to_vmem [thread:$0]  %s32, 64, %s34, [#allocation7]
    $region9: #{tpu_custom_call.1} parent=1 // pred_fallthru
      _
    // Predicated region
    $region10: #{tpu_custom_call.1} parent=1 // pred_check
      _
    $region11: #{tpu_custom_call.1} parent=1 // pred_check_branch
      %38 = sbr.rel (0) target = $region13
    $region12: #{tpu_custom_call.1} parent=1 // pred_region
      %40 = vsyncadd [#allocation7], 0
      %s42 = sshll.u32 %s2, 4
      %s43 = int_to_ptr.hbm [resolvable:$true] %s42
      %s44 = sshll.u32 [#allocation8], 4
      %s45 = int_to_ptr.vmem [resolvable:$true] %s44
      %47 = dma.hbm_to_vmem [thread:$0]  %s43, 64, %s45, [#allocation7]
    $region13: #{tpu_custom_call.1} parent=1 // pred_fallthru
      _
    // Predicated region
    $region14: #{tpu_custom_call.1} parent=1 // pred_check
      _
    $region15: #{tpu_custom_call.1} parent=1 // pred_check_branch
      %49 = sbr.rel (0) target = $region17
    $region16: #{tpu_custom_call.1} parent=1 // pred_region
      %51 = vsyncadd [#allocation5], 0
      %s53 = sshll.u32 %s3, 4
      %s54 = int_to_ptr.hbm [resolvable:$true] %s53
      %56 = dma.hbm_to_smem %s54, 128, [#allocation9], [#allocation5]
    $region17: #{tpu_custom_call.1} parent=1 // pred_fallthru
      _
    // Predicated region
    $region18: #{tpu_custom_call.1} parent=1 // pred_check
      _
    $region19: #{tpu_custom_call.1} parent=1 // pred_check_branch
      %58 = sbr.rel (0) target = $region21
    $region20: #{tpu_custom_call.1} parent=1 // pred_region
      %60 = dma.done [#allocation3], 4096
    $region21: #{tpu_custom_call.1} parent=1 // pred_fallthru
      _
    // Predicated region
    $region22: #{tpu_custom_call.1} parent=1 // pred_check
      _
    $region23: #{tpu_custom_call.1} parent=1 // pred_check_branch
      %62 = sbr.rel (0) target = $region25
    $region24: #{tpu_custom_call.1} parent=1 // pred_region
      %64 = dma.done [#allocation7], 64
    $region25: #{tpu_custom_call.1} parent=1 // pred_fallthru
      _
    // Predicated region
    $region26: #{tpu_custom_call.1} parent=1 // pred_check
      _
    $region27: #{tpu_custom_call.1} parent=1 // pred_check_branch
      %66 = sbr.rel (0) target = $region29
    $region28: #{tpu_custom_call.1} parent=1 // pred_region
      %68 = dma.done [#allocation7], 64
    $region29: #{tpu_custom_call.1} parent=1 // pred_fallthru
      _
    // Predicated region
    $region30: #{tpu_custom_call.1} parent=1 // pred_check
      _
    $region31: #{tpu_custom_call.1} parent=1 // pred_check_branch
      %70 = sbr.rel (0) target = $region33
    $region32: #{tpu_custom_call.1} parent=1 // pred_region
      %72 = dma.done [#allocation5], 128
    $region33: #{tpu_custom_call.1} parent=1 // pred_fallthru
      _
    %73 = sfence
    %v74 = vld [vmem:[#allocation2] sm:$0xff]
    %v75 = vld [vmem:[#allocation2 + $0x8] sm:$0xff]
    %v76 = vld [vmem:[#allocation2 + $0x10] sm:$0xff]
    %v77 = vld [vmem:[#allocation2 + $0x18] sm:$0xff]
    %v78 = vld [vmem:[#allocation2 + $0x20] sm:$0xff]
    %v79 = vld [vmem:[#allocation2 + $0x28] sm:$0xff]
    %v80 = vld [vmem:[#allocation2 + $0x30] sm:$0xff]
    %v81 = vld [vmem:[#allocation2 + $0x38] sm:$0xff]
    %v82 = vld [vmem:[#allocation2 + $0x40] sm:$0xff]
    %v83 = vld [vmem:[#allocation2 + $0x48] sm:$0xff]
    %v84 = vld [vmem:[#allocation2 + $0x50] sm:$0xff]
    %v85 = vld [vmem:[#allocation2 + $0x58] sm:$0xff]
    %v86 = vld [vmem:[#allocation2 + $0x60] sm:$0xff]
    %v87 = vld [vmem:[#allocation2 + $0x68] sm:$0xff]
    %v88 = vld [vmem:[#allocation2 + $0x70] sm:$0xff]
    %v89 = vld [vmem:[#allocation2 + $0x78] sm:$0xff]
    %v90 = vld [vmem:[#allocation2 + $0x80] sm:$0xff]
    %v91 = vld [vmem:[#allocation2 + $0x88] sm:$0xff]
    %v92 = vld [vmem:[#allocation2 + $0x90] sm:$0xff]
    %v93 = vld [vmem:[#allocation2 + $0x98] sm:$0xff]
    %v94 = vld [vmem:[#allocation2 + $0xa0] sm:$0xff]
    %v95 = vld [vmem:[#allocation2 + $0xa8] sm:$0xff]
    %v96 = vld [vmem:[#allocation2 + $0xb0] sm:$0xff]
    %v97 = vld [vmem:[#allocation2 + $0xb8] sm:$0xff]
    %v98 = vld [vmem:[#allocation2 + $0xc0] sm:$0xff]
    %v99 = vld [vmem:[#allocation2 + $0xc8] sm:$0xff]
    %v100 = vld [vmem:[#allocation2 + $0xd0] sm:$0xff]
    %v101 = vld [vmem:[#allocation2 + $0xd8] sm:$0xff]
    %v102 = vld [vmem:[#allocation2 + $0xe0] sm:$0xff]
    %v103 = vld [vmem:[#allocation2 + $0xe8] sm:$0xff]
    %v104 = vld [vmem:[#allocation2 + $0xf0] sm:$0xff]
    %v105 = vld [vmem:[#allocation2 + $0xf8] sm:$0xff]
    %vm106 = vcmask 523264
    %v107 = vsel %vm106, %v74, -inf
    %v108 = vsel %vm106, %v76, -inf
    %v109 = vsel %vm106, %v78, -inf
    %v110 = vmax.f32 %v107, %v109
    %v111 = vsel %vm106, %v80, -inf
    %v112 = vmax.f32 %v108, %v111
    %v113 = vsel %vm106, %v82, -inf
    %v114 = vmax.f32 %v110, %v113
    %v115 = vsel %vm106, %v84, -inf
    %v116 = vmax.f32 %v112, %v115
    %v117 = vsel %vm106, %v86, -inf
    %v118 = vmax.f32 %v114, %v117
    %v119 = vsel %vm106, %v88, -inf
    %v120 = vmax.f32 %v116, %v119
    %v121 = vsel %vm106, %v90, -inf
    %v122 = vmax.f32 %v118, %v121
    %v123 = vsel %vm106, %v92, -inf
    %v124 = vmax.f32 %v120, %v123
    %v125 = vsel %vm106, %v94, -inf
    %v126 = vmax.f32 %v122, %v125
    %v127 = vsel %vm106, %v96, -inf
    %v128 = vmax.f32 %v124, %v127
    %v129 = vsel %vm106, %v98, -inf
    %v130 = vmax.f32 %v126, %v129
    %v131 = vsel %vm106, %v100, -inf
    %v132 = vmax.f32 %v128, %v131
    %v133 = vsel %vm106, %v102, -inf
    %v134 = vmax.f32 %v130, %v133
    %v135 = vsel %vm106, %v104, -inf
    %v136 = vmax.f32 %v132, %v135
    %v137 = vmax.f32 %v134, %v136
    %v138 = vsel %vm106, %v75, -inf
    %v139 = vsel %vm106, %v77, -inf
    %v140 = vsel %vm106, %v79, -inf
    %v141 = vmax.f32 %v138, %v140
    %v142 = vsel %vm106, %v81, -inf
    %v143 = vmax.f32 %v139, %v142
    %v144 = vsel %vm106, %v83, -inf
    %v145 = vmax.f32 %v141, %v144
    %v146 = vsel %vm106, %v85, -inf
    %v147 = vmax.f32 %v143, %v146
    %v148 = vsel %vm106, %v87, -inf
    %v149 = vmax.f32 %v145, %v148
    %v150 = vsel %vm106, %v89, -inf
    %v151 = vmax.f32 %v147, %v150
    %v152 = vsel %vm106, %v91, -inf
    %v153 = vmax.f32 %v149, %v152
    %v154 = vsel %vm106, %v93, -inf
    %v155 = vmax.f32 %v151, %v154
    %v156 = vsel %vm106, %v95, -inf
    %v157 = vmax.f32 %v153, %v156
    %v158 = vsel %vm106, %v97, -inf
    %v159 = vmax.f32 %v155, %v158
    %v160 = vsel %vm106, %v99, -inf
    %v161 = vmax.f32 %v157, %v160
    %v162 = vsel %vm106, %v101, -inf
    %v163 = vmax.f32 %v159, %v162
    %v164 = vsel %vm106, %v103, -inf
    %v165 = vmax.f32 %v161, %v164
    %v166 = vsel %vm106, %v105, -inf
    %v167 = vmax.f32 %v163, %v166
    %v168 = vmax.f32 %v165, %v167
    %v169 = vsel %vm106, %v137, -inf
    %v170 = vsel %vm106, %v168, -inf
    %v171 = vmax.f32 %v169, %v170
    %v172 = vrot.slane %v171, 4
    %v173 = vmax.f32 %v171, %v172
    %v174 = vrot.slane %v173, 2
    %v175 = vmax.f32 %v173, %v174
    %v176 = vrot.slane %v175, 1
    %v177 = vmax.f32 %v175, %v176
    %v178 = vld [vmem:[#allocation6] sm:$0xf]
    %v179 = vmul.f32 %v178, %v177
    %vm180 = vcmask 519168
    %v181 = vsel %vm180, %v179, 0.0
    %182 = vadd.xlane.f32.xlu0 %v181
    %v183 = vpop.xlane.xlu0 %182
    %v184 = vmax.f32 %v183, 0.0
    %v185 = vld [vmem:[#allocation8] sm:$0xf]
    %v186 = vmul.f32 %v185, %v184
    %v187 = vsel %vm180, %v186, 0.0
    %v188 = vrot.slane %v187, 4
    %v189 = vadd.f32 %v187, %v188
    %v190 = vrot.slane %v189, 2
    %v191 = vadd.f32 %v189, %v190
    %v192 = vrot.slane %v191, 1
    %v193 = vadd.f32 %v191, %v192
    %v194 = vxor.u32 %v193, 2147483648
    %v195 = vmul.f32 %v194, 1.442695
    %v196 = vpow.pop %v195
    %v197 = vadd.f32 %v196, 1.0
    %v198 = vrcp.pop %v197
    %v199 = vmul.f32 %v197, %v198
    %v200 = vsub.f32 1.0, %v199
    %v201 = vmul.f32 %v198, %v200
    %v202 = vadd.f32 %v198, %v201
    %vm203 = vweird.f32 %v197
    %vm204 = vweird.f32 %v198
    %vm205 = vmor %vm203, %vm204
    %v206 = vsel %vm205, %v198, %v202
    %v207 = vand.u32 2147483647, %v197
    %vm208 = vcmp.eq.f32.partialorder %v207, 8.507059e+37
    %v209 = vand.u32 %v197, 2147483648
    %v210 = vor.u32 1.1754944e-38, %v209
    %v211 = vsel %vm208, %v210, %v206
    %v212 = vmul.f32 1.0, %v211
    %v213 = vmul.f32 %v74, %v212
    %v214 = vmul.f32 %v75, %v212
    %v215 = vmul.f32 %v76, %v212
    %v216 = vmul.f32 %v77, %v212
    %v217 = vmul.f32 %v78, %v212
    %v218 = vmul.f32 %v79, %v212
    %v219 = vmul.f32 %v80, %v212
    %v220 = vmul.f32 %v81, %v212
    %v221 = vmul.f32 %v82, %v212
    %v222 = vmul.f32 %v83, %v212
    %v223 = vmul.f32 %v84, %v212
    %v224 = vmul.f32 %v85, %v212
    %v225 = vmul.f32 %v86, %v212
    %v226 = vmul.f32 %v87, %v212
    %v227 = vmul.f32 %v88, %v212
    %v228 = vmul.f32 %v89, %v212
    %v229 = vmul.f32 %v90, %v212
    %v230 = vmul.f32 %v91, %v212
    %v231 = vmul.f32 %v92, %v212
    %v232 = vmul.f32 %v93, %v212
    %v233 = vmul.f32 %v94, %v212
    %v234 = vmul.f32 %v95, %v212
    %v235 = vmul.f32 %v96, %v212
    %v236 = vmul.f32 %v97, %v212
    %v237 = vmul.f32 %v98, %v212
    %v238 = vmul.f32 %v99, %v212
    %v239 = vmul.f32 %v100, %v212
    %v240 = vmul.f32 %v101, %v212
    %v241 = vmul.f32 %v102, %v212
    %v242 = vmul.f32 %v103, %v212
    %v243 = vmul.f32 %v104, %v212
    %v244 = vmul.f32 %v105, %v212
    %vm245 = vcmask 261120
    %v246 = vsel %vm245, %v213, -inf
    %247 = vmax.xlane.f32.xlu0 %v246
    %v248 = vpop.xlane.xlu0 %247
    %v249 = vsel %vm245, %v214, -inf
    %250 = vmax.xlane.f32.xlu0 %v249
    %v251 = vpop.xlane.xlu0 %250
    %v252 = vsel %vm245, %v215, -inf
    %253 = vmax.xlane.f32.xlu0 %v252
    %v254 = vpop.xlane.xlu0 %253
    %v255 = vsel %vm245, %v216, -inf
    %256 = vmax.xlane.f32.xlu0 %v255
    %v257 = vpop.xlane.xlu0 %256
    %v258 = vsel %vm245, %v217, -inf
    %259 = vmax.xlane.f32.xlu0 %v258
    %v260 = vpop.xlane.xlu0 %259
    %v261 = vsel %vm245, %v218, -inf
    %262 = vmax.xlane.f32.xlu0 %v261
    %v263 = vpop.xlane.xlu0 %262
    %v264 = vsel %vm245, %v219, -inf
    %265 = vmax.xlane.f32.xlu0 %v264
    %v266 = vpop.xlane.xlu0 %265
    %v267 = vsel %vm245, %v220, -inf
    %268 = vmax.xlane.f32.xlu0 %v267
    %v269 = vpop.xlane.xlu0 %268
    %v270 = vsel %vm245, %v221, -inf
    %271 = vmax.xlane.f32.xlu0 %v270
    %v272 = vpop.xlane.xlu0 %271
    %v273 = vsel %vm245, %v222, -inf
    %274 = vmax.xlane.f32.xlu0 %v273
    %v275 = vpop.xlane.xlu0 %274
    %v276 = vsel %vm245, %v223, -inf
    %277 = vmax.xlane.f32.xlu0 %v276
    %v278 = vpop.xlane.xlu0 %277
    %v279 = vsel %vm245, %v224, -inf
    %280 = vmax.xlane.f32.xlu0 %v279
    %v281 = vpop.xlane.xlu0 %280
    %v282 = vsel %vm245, %v225, -inf
    %283 = vmax.xlane.f32.xlu0 %v282
    %v284 = vpop.xlane.xlu0 %283
    %v285 = vsel %vm245, %v226, -inf
    %286 = vmax.xlane.f32.xlu0 %v285
    %v287 = vpop.xlane.xlu0 %286
    %v288 = vsel %vm245, %v227, -inf
    %289 = vmax.xlane.f32.xlu0 %v288
    %v290 = vpop.xlane.xlu0 %289
    %v291 = vsel %vm245, %v228, -inf
    %292 = vmax.xlane.f32.xlu0 %v291
    %v293 = vpop.xlane.xlu0 %292
    %v294 = vsel %vm245, %v229, -inf
    %295 = vmax.xlane.f32.xlu0 %v294
    %v296 = vpop.xlane.xlu0 %295
    %v297 = vsel %vm245, %v230, -inf
    %298 = vmax.xlane.f32.xlu0 %v297
    %v299 = vpop.xlane.xlu0 %298
    %v300 = vsel %vm245, %v231, -inf
    %301 = vmax.xlane.f32.xlu0 %v300
    %v302 = vpop.xlane.xlu0 %301
    %v303 = vsel %vm245, %v232, -inf
    %304 = vmax.xlane.f32.xlu0 %v303
    %v305 = vpop.xlane.xlu0 %304
    %v306 = vsel %vm245, %v233, -inf
    %307 = vmax.xlane.f32.xlu0 %v306
    %v308 = vpop.xlane.xlu0 %307
    %v309 = vsel %vm245, %v234, -inf
    %310 = vmax.xlane.f32.xlu0 %v309
    %v311 = vpop.xlane.xlu0 %310
    %v312 = vsel %vm245, %v235, -inf
    %313 = vmax.xlane.f32.xlu0 %v312
    %v314 = vpop.xlane.xlu0 %313
    %v315 = vsel %vm245, %v236, -inf
    %316 = vmax.xlane.f32.xlu0 %v315
    %v317 = vpop.xlane.xlu0 %316
    %v318 = vsel %vm245, %v237, -inf
    %319 = vmax.xlane.f32.xlu0 %v318
    %v320 = vpop.xlane.xlu0 %319
    %v321 = vsel %vm245, %v238, -inf
    %322 = vmax.xlane.f32.xlu0 %v321
    %v323 = vpop.xlane.xlu0 %322
    %v324 = vsel %vm245, %v239, -inf
    %325 = vmax.xlane.f32.xlu0 %v324
    %v326 = vpop.xlane.xlu0 %325
    %v327 = vsel %vm245, %v240, -inf
    %328 = vmax.xlane.f32.xlu0 %v327
    %v329 = vpop.xlane.xlu0 %328
    %v330 = vsel %vm245, %v241, -inf
    %331 = vmax.xlane.f32.xlu0 %v330
    %v332 = vpop.xlane.xlu0 %331
    %v333 = vsel %vm245, %v242, -inf
    %334 = vmax.xlane.f32.xlu0 %v333
    %v335 = vpop.xlane.xlu0 %334
    %v336 = vsel %vm245, %v243, -inf
    %337 = vmax.xlane.f32.xlu0 %v336
    %v338 = vpop.xlane.xlu0 %337
    %v339 = vsel %vm245, %v244, -inf
    %340 = vmax.xlane.f32.xlu0 %v339
    %v341 = vpop.xlane.xlu0 %340
    %vm342 = vcmask 523520
    %v343 = vsel %vm342, %v213, -inf
    %344 = vmax.xlane.f32.xlu0 %v343
    %v345 = vpop.xlane.xlu0 %344
    %v346 = vsel %vm342, %v214, -inf
    %347 = vmax.xlane.f32.xlu0 %v346
    %v348 = vpop.xlane.xlu0 %347
    %v349 = vsel %vm342, %v215, -inf
    %350 = vmax.xlane.f32.xlu0 %v349
    %v351 = vpop.xlane.xlu0 %350
    %v352 = vsel %vm342, %v216, -inf
    %353 = vmax.xlane.f32.xlu0 %v352
    %v354 = vpop.xlane.xlu0 %353
    %v355 = vsel %vm342, %v217, -inf
    %356 = vmax.xlane.f32.xlu0 %v355
    %v357 = vpop.xlane.xlu0 %356
    %v358 = vsel %vm342, %v218, -inf
    %359 = vmax.xlane.f32.xlu0 %v358
    %v360 = vpop.xlane.xlu0 %359
    %v361 = vsel %vm342, %v219, -inf
    %362 = vmax.xlane.f32.xlu0 %v361
    %v363 = vpop.xlane.xlu0 %362
    %v364 = vsel %vm342, %v220, -inf
    %365 = vmax.xlane.f32.xlu0 %v364
    %v366 = vpop.xlane.xlu0 %365
    %v367 = vsel %vm342, %v221, -inf
    %368 = vmax.xlane.f32.xlu0 %v367
    %v369 = vpop.xlane.xlu0 %368
    %v370 = vsel %vm342, %v222, -inf
    %371 = vmax.xlane.f32.xlu0 %v370
    %v372 = vpop.xlane.xlu0 %371
    %v373 = vsel %vm342, %v223, -inf
    %374 = vmax.xlane.f32.xlu0 %v373
    %v375 = vpop.xlane.xlu0 %374
    %v376 = vsel %vm342, %v224, -inf
    %377 = vmax.xlane.f32.xlu0 %v376
    %v378 = vpop.xlane.xlu0 %377
    %v379 = vsel %vm342, %v225, -inf
    %380 = vmax.xlane.f32.xlu0 %v379
    %v381 = vpop.xlane.xlu0 %380
    %v382 = vsel %vm342, %v226, -inf
    %383 = vmax.xlane.f32.xlu0 %v382
    %v384 = vpop.xlane.xlu0 %383
    %v385 = vsel %vm342, %v227, -inf
    %386 = vmax.xlane.f32.xlu0 %v385
    %v387 = vpop.xlane.xlu0 %386
    %v388 = vsel %vm342, %v228, -inf
    %389 = vmax.xlane.f32.xlu0 %v388
    %v390 = vpop.xlane.xlu0 %389
    %v391 = vsel %vm342, %v229, -inf
    %392 = vmax.xlane.f32.xlu0 %v391
    %v393 = vpop.xlane.xlu0 %392
    %v394 = vsel %vm342, %v230, -inf
    %395 = vmax.xlane.f32.xlu0 %v394
    %v396 = vpop.xlane.xlu0 %395
    %v397 = vsel %vm342, %v231, -inf
    %398 = vmax.xlane.f32.xlu0 %v397
    %v399 = vpop.xlane.xlu0 %398
    %v400 = vsel %vm342, %v232, -inf
    %401 = vmax.xlane.f32.xlu0 %v400
    %v402 = vpop.xlane.xlu0 %401
    %v403 = vsel %vm342, %v233, -inf
    %404 = vmax.xlane.f32.xlu0 %v403
    %v405 = vpop.xlane.xlu0 %404
    %v406 = vsel %vm342, %v234, -inf
    %407 = vmax.xlane.f32.xlu0 %v406
    %v408 = vpop.xlane.xlu0 %407
    %v409 = vsel %vm342, %v235, -inf
    %410 = vmax.xlane.f32.xlu0 %v409
    %v411 = vpop.xlane.xlu0 %410
    %v412 = vsel %vm342, %v236, -inf
    %413 = vmax.xlane.f32.xlu0 %v412
    %v414 = vpop.xlane.xlu0 %413
    %v415 = vsel %vm342, %v237, -inf
    %416 = vmax.xlane.f32.xlu0 %v415
    %v417 = vpop.xlane.xlu0 %416
    %v418 = vsel %vm342, %v238, -inf
    %419 = vmax.xlane.f32.xlu0 %v418
    %v420 = vpop.xlane.xlu0 %419
    %v421 = vsel %vm342, %v239, -inf
    %422 = vmax.xlane.f32.xlu0 %v421
    %v423 = vpop.xlane.xlu0 %422
    %v424 = vsel %vm342, %v240, -inf
    %425 = vmax.xlane.f32.xlu0 %v424
    %v426 = vpop.xlane.xlu0 %425
    %v427 = vsel %vm342, %v241, -inf
    %428 = vmax.xlane.f32.xlu0 %v427
    %v429 = vpop.xlane.xlu0 %428
    %v430 = vsel %vm342, %v242, -inf
    %431 = vmax.xlane.f32.xlu0 %v430
    %v432 = vpop.xlane.xlu0 %431
    %v433 = vsel %vm342, %v243, -inf
    %434 = vmax.xlane.f32.xlu0 %v433
    %v435 = vpop.xlane.xlu0 %434
    %v436 = vsel %vm342, %v244, -inf
    %437 = vmax.xlane.f32.xlu0 %v436
    %v438 = vpop.xlane.xlu0 %437
    %vm439 = vcmask 7168
    %v440 = vsel %vm439, %v248, %v345
    %v441 = vsel %vm439, %v251, %v348
    %v442 = vsel %vm439, %v254, %v351
    %v443 = vsel %vm439, %v257, %v354
    %v444 = vsel %vm439, %v260, %v357
    %v445 = vsel %vm439, %v263, %v360
    %v446 = vsel %vm439, %v266, %v363
    %v447 = vsel %vm439, %v269, %v366
    %v448 = vsel %vm439, %v272, %v369
    %v449 = vsel %vm439, %v275, %v372
    %v450 = vsel %vm439, %v278, %v375
    %v451 = vsel %vm439, %v281, %v378
    %v452 = vsel %vm439, %v284, %v381
    %v453 = vsel %vm439, %v287, %v384
    %v454 = vsel %vm439, %v290, %v387
    %v455 = vsel %vm439, %v293, %v390
    %v456 = vsel %vm439, %v296, %v393
    %v457 = vsel %vm439, %v299, %v396
    %v458 = vsel %vm439, %v302, %v399
    %v459 = vsel %vm439, %v305, %v402
    %v460 = vsel %vm439, %v308, %v405
    %v461 = vsel %vm439, %v311, %v408
    %v462 = vsel %vm439, %v314, %v411
    %v463 = vsel %vm439, %v317, %v414
    %v464 = vsel %vm439, %v320, %v417
    %v465 = vsel %vm439, %v323, %v420
    %v466 = vsel %vm439, %v326, %v423
    %v467 = vsel %vm439, %v329, %v426
    %v468 = vsel %vm439, %v332, %v429
    %v469 = vsel %vm439, %v335, %v432
    %v470 = vsel %vm439, %v338, %v435
    %v471 = vsel %vm439, %v341, %v438
    %vm505 = vcmask 1042432
    %v506 = vrot.slane 0.0, 5
    %v507 = vsel %vm505, %v506, %v506
    %v508 = vrot.slane %v440, 5
    %v509 = vrot.slane %v441, 5
    %v510 = vsel %vm505, %v508, %v509
    %v511 = vrot.slane %v442, 5
    %v512 = vrot.slane %v443, 5
    %v513 = vsel %vm505, %v511, %v512
    %v514 = vrot.slane %v444, 5
    %v515 = vrot.slane %v445, 5
    %v516 = vsel %vm505, %v514, %v515
    %v517 = vrot.slane %v446, 5
    %v518 = vrot.slane %v447, 5
    %v519 = vsel %vm505, %v517, %v518
    %v520 = vrot.slane %v448, 5
    %v521 = vrot.slane %v449, 5
    %v522 = vsel %vm505, %v520, %v521
    %v523 = vrot.slane %v450, 5
    %v524 = vrot.slane %v451, 5
    %v525 = vsel %vm505, %v523, %v524
    %v526 = vrot.slane %v452, 5
    %v527 = vrot.slane %v453, 5
    %v528 = vsel %vm505, %v526, %v527
    %v529 = vrot.slane %v454, 5
    %v530 = vrot.slane %v455, 5
    %v531 = vsel %vm505, %v529, %v530
    %v532 = vrot.slane %v456, 5
    %v533 = vrot.slane %v457, 5
    %v534 = vsel %vm505, %v532, %v533
    %v535 = vrot.slane %v458, 5
    %v536 = vrot.slane %v459, 5
    %v537 = vsel %vm505, %v535, %v536
    %v538 = vrot.slane %v460, 5
    %v539 = vrot.slane %v461, 5
    %v540 = vsel %vm505, %v538, %v539
    %v541 = vrot.slane %v462, 5
    %v542 = vrot.slane %v463, 5
    %v543 = vsel %vm505, %v541, %v542
    %v544 = vrot.slane %v464, 5
    %v545 = vrot.slane %v465, 5
    %v546 = vsel %vm505, %v544, %v545
    %v547 = vrot.slane %v466, 5
    %v548 = vrot.slane %v467, 5
    %v549 = vsel %vm505, %v547, %v548
    %v550 = vrot.slane %v468, 5
    %v551 = vrot.slane %v469, 5
    %v552 = vsel %vm505, %v550, %v551
    %v553 = vrot.slane %v470, 5
    %v554 = vrot.slane %v471, 5
    %v555 = vsel %vm505, %v553, %v554
    %v606 = vsel %vm505, 0.0, %v506
    %v607 = vsel %vm505, 0.0, %v508
    %v608 = vsel %vm505, 0.0, %v511
    %v609 = vsel %vm505, 0.0, %v514
    %v610 = vsel %vm505, 0.0, %v517
    %v611 = vsel %vm505, 0.0, %v520
    %v612 = vsel %vm505, 0.0, %v523
    %v613 = vsel %vm505, 0.0, %v526
    %v614 = vsel %vm505, 0.0, %v529
    %v615 = vsel %vm505, 0.0, %v532
    %v616 = vsel %vm505, 0.0, %v535
    %v617 = vsel %vm505, 0.0, %v538
    %v618 = vsel %vm505, 0.0, %v541
    %v619 = vsel %vm505, 0.0, %v544
    %v620 = vsel %vm505, 0.0, %v547
    %v621 = vsel %vm505, 0.0, %v550
    %v622 = vsel %vm505, 0.0, %v553
    %v623 = vsel %vm505, %v506, 0.0
    %v624 = vsel %vm505, %v509, 0.0
    %v625 = vsel %vm505, %v512, 0.0
    %v626 = vsel %vm505, %v515, 0.0
    %v627 = vsel %vm505, %v518, 0.0
    %v628 = vsel %vm505, %v521, 0.0
    %v629 = vsel %vm505, %v524, 0.0
    %v630 = vsel %vm505, %v527, 0.0
    %v631 = vsel %vm505, %v530, 0.0
    %v632 = vsel %vm505, %v533, 0.0
    %v633 = vsel %vm505, %v536, 0.0
    %v634 = vsel %vm505, %v539, 0.0
    %v635 = vsel %vm505, %v542, 0.0
    %v636 = vsel %vm505, %v545, 0.0
    %v637 = vsel %vm505, %v548, 0.0
    %v638 = vsel %vm505, %v551, 0.0
    %v639 = vsel %vm505, %v554, 0.0
    %s640 = sld [smem:[#allocation9]]
    %v641 = vstv %s640
    %v642 = vmul.f32 %v641, %v606
    %v643 = vmul.f32 %v641, %v507
    %v644 = vmul.f32 %v641, %v607
    %v645 = vmul.f32 %v641, %v510
    %v646 = vmul.f32 %v641, %v608
    %v647 = vmul.f32 %v641, %v513
    %v648 = vmul.f32 %v641, %v609
    %v649 = vmul.f32 %v641, %v516
    %v650 = vmul.f32 %v641, %v610
    %v651 = vmul.f32 %v641, %v519
    %v652 = vmul.f32 %v641, %v611
    %v653 = vmul.f32 %v641, %v522
    %v654 = vmul.f32 %v641, %v612
    %v655 = vmul.f32 %v641, %v525
    %v656 = vmul.f32 %v641, %v613
    %v657 = vmul.f32 %v641, %v528
    %v658 = vmul.f32 %v641, %v614
    %v659 = vmul.f32 %v641, %v531
    %v660 = vmul.f32 %v641, %v615
    %v661 = vmul.f32 %v641, %v534
    %v662 = vmul.f32 %v641, %v616
    %v663 = vmul.f32 %v641, %v537
    %v664 = vmul.f32 %v641, %v617
    %v665 = vmul.f32 %v641, %v540
    %v666 = vmul.f32 %v641, %v618
    %v667 = vmul.f32 %v641, %v543
    %v668 = vmul.f32 %v641, %v619
    %v669 = vmul.f32 %v641, %v546
    %v670 = vadd.f32 %v642, 0.0
    %v671 = vadd.f32 %v643, 0.0
    %v672 = vadd.f32 %v644, 0.0
    %v673 = vadd.f32 %v645, 0.0
    %v674 = vadd.f32 %v646, 0.0
    %v675 = vadd.f32 %v647, 0.0
    %v676 = vadd.f32 %v648, 0.0
    %v677 = vadd.f32 %v649, 0.0
    %v678 = vadd.f32 %v650, 0.0
    %v679 = vadd.f32 %v651, 0.0
    %v680 = vadd.f32 %v652, 0.0
    %v681 = vadd.f32 %v653, 0.0
    %v682 = vadd.f32 %v654, 0.0
    %v683 = vadd.f32 %v655, 0.0
    %v684 = vadd.f32 %v656, 0.0
    %v685 = vadd.f32 %v657, 0.0
    %v686 = vadd.f32 %v658, 0.0
    %v687 = vadd.f32 %v659, 0.0
    %v688 = vadd.f32 %v660, 0.0
    %v689 = vadd.f32 %v661, 0.0
    %v690 = vadd.f32 %v662, 0.0
    %v691 = vadd.f32 %v663, 0.0
    %v692 = vadd.f32 %v664, 0.0
    %v693 = vadd.f32 %v665, 0.0
    %v694 = vadd.f32 %v666, 0.0
    %v695 = vadd.f32 %v667, 0.0
    %v696 = vadd.f32 %v668, 0.0
    %v697 = vadd.f32 %v669, 0.0
    %s698 = sld [smem:[#allocation9 + $0x1]]
    %v699 = vstv %s698
    %v700 = vmul.f32 %v699, %v606
    %v701 = vmul.f32 %v699, %v507
    %v702 = vmul.f32 %v699, %v623
    %v703 = vmul.f32 %v699, %v607
    %v704 = vmul.f32 %v699, %v510
    %v705 = vmul.f32 %v699, %v624
    %v706 = vmul.f32 %v699, %v608
    %v707 = vmul.f32 %v699, %v513
    %v708 = vmul.f32 %v699, %v625
    %v709 = vmul.f32 %v699, %v609
    %v710 = vmul.f32 %v699, %v516
    %v711 = vmul.f32 %v699, %v626
    %v712 = vmul.f32 %v699, %v610
    %v713 = vmul.f32 %v699, %v519
    %v714 = vmul.f32 %v699, %v627
    %v715 = vmul.f32 %v699, %v611
    %v716 = vmul.f32 %v699, %v522
    %v717 = vmul.f32 %v699, %v628
    %v718 = vmul.f32 %v699, %v612
    %v719 = vmul.f32 %v699, %v525
    %v720 = vmul.f32 %v699, %v629
    %v721 = vmul.f32 %v699, %v613
    %v722 = vmul.f32 %v699, %v528
    %v723 = vmul.f32 %v699, %v630
    %v724 = vmul.f32 %v699, %v614
    %v725 = vmul.f32 %v699, %v531
    %v726 = vmul.f32 %v699, %v631
    %v727 = vmul.f32 %v699, %v615
    %v728 = vmul.f32 %v699, %v534
    %v729 = vmul.f32 %v699, %v632
    %v730 = vmul.f32 %v699, %v616
    %v731 = vmul.f32 %v699, %v537
    %v732 = vmul.f32 %v699, %v633
    %v733 = vmul.f32 %v699, %v617
    %v734 = vmul.f32 %v699, %v540
    %v735 = vmul.f32 %v699, %v634
    %v736 = vmul.f32 %v699, %v618
    %v737 = vmul.f32 %v699, %v543
    %v738 = vmul.f32 %v699, %v635
    %v739 = vmul.f32 %v699, %v619
    %v740 = vmul.f32 %v699, %v546
    %v741 = vmul.f32 %v699, %v636
    %vm784 = vcmask 1046528
    %v785 = vrot.slane %v700, 1
    %v786 = vrot.slane %v701, 1
    %v787 = vsel %vm784, %v785, %v786
    %v788 = vrot.slane %v702, 1
    %v789 = vsel %vm784, %v786, %v788
    %v790 = vrot.slane %v703, 1
    %v791 = vrot.slane %v704, 1
    %v792 = vsel %vm784, %v790, %v791
    %v793 = vrot.slane %v705, 1
    %v794 = vsel %vm784, %v791, %v793
    %v795 = vrot.slane %v706, 1
    %v796 = vrot.slane %v707, 1
    %v797 = vsel %vm784, %v795, %v796
    %v798 = vrot.slane %v708, 1
    %v799 = vsel %vm784, %v796, %v798
    %v800 = vrot.slane %v709, 1
    %v801 = vrot.slane %v710, 1
    %v802 = vsel %vm784, %v800, %v801
    %v803 = vrot.slane %v711, 1
    %v804 = vsel %vm784, %v801, %v803
    %v805 = vrot.slane %v712, 1
    %v806 = vrot.slane %v713, 1
    %v807 = vsel %vm784, %v805, %v806
    %v808 = vrot.slane %v714, 1
    %v809 = vsel %vm784, %v806, %v808
    %v810 = vrot.slane %v715, 1
    %v811 = vrot.slane %v716, 1
    %v812 = vsel %vm784, %v810, %v811
    %v813 = vrot.slane %v717, 1
    %v814 = vsel %vm784, %v811, %v813
    %v815 = vrot.slane %v718, 1
    %v816 = vrot.slane %v719, 1
    %v817 = vsel %vm784, %v815, %v816
    %v818 = vrot.slane %v720, 1
    %v819 = vsel %vm784, %v816, %v818
    %v820 = vrot.slane %v721, 1
    %v821 = vrot.slane %v722, 1
    %v822 = vsel %vm784, %v820, %v821
    %v823 = vrot.slane %v723, 1
    %v824 = vsel %vm784, %v821, %v823
    %v825 = vrot.slane %v724, 1
    %v826 = vrot.slane %v725, 1
    %v827 = vsel %vm784, %v825, %v826
    %v828 = vrot.slane %v726, 1
    %v829 = vsel %vm784, %v826, %v828
    %v830 = vrot.slane %v727, 1
    %v831 = vrot.slane %v728, 1
    %v832 = vsel %vm784, %v830, %v831
    %v833 = vrot.slane %v729, 1
    %v834 = vsel %vm784, %v831, %v833
    %v835 = vrot.slane %v730, 1
    %v836 = vrot.slane %v731, 1
    %v837 = vsel %vm784, %v835, %v836
    %v838 = vrot.slane %v732, 1
    %v839 = vsel %vm784, %v836, %v838
    %v840 = vrot.slane %v733, 1
    %v841 = vrot.slane %v734, 1
    %v842 = vsel %vm784, %v840, %v841
    %v843 = vrot.slane %v735, 1
    %v844 = vsel %vm784, %v841, %v843
    %v845 = vrot.slane %v736, 1
    %v846 = vrot.slane %v737, 1
    %v847 = vsel %vm784, %v845, %v846
    %v848 = vrot.slane %v738, 1
    %v849 = vsel %vm784, %v846, %v848
    %v850 = vrot.slane %v739, 1
    %v851 = vrot.slane %v740, 1
    %v852 = vsel %vm784, %v850, %v851
    %v853 = vrot.slane %v741, 1
    %v854 = vsel %vm784, %v851, %v853
    %v883 = vadd.f32 %v670, %v787
    %v884 = vadd.f32 %v671, %v789
    %v885 = vadd.f32 %v672, %v792
    %v886 = vadd.f32 %v673, %v794
    %v887 = vadd.f32 %v674, %v797
    %v888 = vadd.f32 %v675, %v799
    %v889 = vadd.f32 %v676, %v802
    %v890 = vadd.f32 %v677, %v804
    %v891 = vadd.f32 %v678, %v807
    %v892 = vadd.f32 %v679, %v809
    %v893 = vadd.f32 %v680, %v812
    %v894 = vadd.f32 %v681, %v814
    %v895 = vadd.f32 %v682, %v817
    %v896 = vadd.f32 %v683, %v819
    %v897 = vadd.f32 %v684, %v822
    %v898 = vadd.f32 %v685, %v824
    %v899 = vadd.f32 %v686, %v827
    %v900 = vadd.f32 %v687, %v829
    %v901 = vadd.f32 %v688, %v832
    %v902 = vadd.f32 %v689, %v834
    %v903 = vadd.f32 %v690, %v837
    %v904 = vadd.f32 %v691, %v839
    %v905 = vadd.f32 %v692, %v842
    %v906 = vadd.f32 %v693, %v844
    %v907 = vadd.f32 %v694, %v847
    %v908 = vadd.f32 %v695, %v849
    %v909 = vadd.f32 %v696, %v852
    %v910 = vadd.f32 %v697, %v854
    %s911 = sld [smem:[#allocation9 + $0x2]]
    %v912 = vstv %s911
    %v913 = vmul.f32 %v912, %v606
    %v914 = vmul.f32 %v912, %v507
    %v915 = vmul.f32 %v912, %v623
    %v916 = vmul.f32 %v912, %v607
    %v917 = vmul.f32 %v912, %v510
    %v918 = vmul.f32 %v912, %v624
    %v919 = vmul.f32 %v912, %v608
    %v920 = vmul.f32 %v912, %v513
    %v921 = vmul.f32 %v912, %v625
    %v922 = vmul.f32 %v912, %v609
    %v923 = vmul.f32 %v912, %v516
    %v924 = vmul.f32 %v912, %v626
    %v925 = vmul.f32 %v912, %v610
    %v926 = vmul.f32 %v912, %v519
    %v927 = vmul.f32 %v912, %v627
    %v928 = vmul.f32 %v912, %v611
    %v929 = vmul.f32 %v912, %v522
    %v930 = vmul.f32 %v912, %v628
    %v931 = vmul.f32 %v912, %v612
    %v932 = vmul.f32 %v912, %v525
    %v933 = vmul.f32 %v912, %v629
    %v934 = vmul.f32 %v912, %v613
    %v935 = vmul.f32 %v912, %v528
    %v936 = vmul.f32 %v912, %v630
    %v937 = vmul.f32 %v912, %v614
    %v938 = vmul.f32 %v912, %v531
    %v939 = vmul.f32 %v912, %v631
    %v940 = vmul.f32 %v912, %v615
    %v941 = vmul.f32 %v912, %v534
    %v942 = vmul.f32 %v912, %v632
    %v943 = vmul.f32 %v912, %v616
    %v944 = vmul.f32 %v912, %v537
    %v945 = vmul.f32 %v912, %v633
    %v946 = vmul.f32 %v912, %v617
    %v947 = vmul.f32 %v912, %v540
    %v948 = vmul.f32 %v912, %v634
    %v949 = vmul.f32 %v912, %v618
    %v950 = vmul.f32 %v912, %v543
    %v951 = vmul.f32 %v912, %v635
    %v952 = vmul.f32 %v912, %v619
    %v953 = vmul.f32 %v912, %v546
    %v954 = vmul.f32 %v912, %v636
    %vm997 = vcmask 1045504
    %v998 = vrot.slane %v913, 2
    %v999 = vrot.slane %v914, 2
    %v1000 = vsel %vm997, %v998, %v999
    %v1001 = vrot.slane %v915, 2
    %v1002 = vsel %vm997, %v999, %v1001
    %v1003 = vrot.slane %v916, 2
    %v1004 = vrot.slane %v917, 2
    %v1005 = vsel %vm997, %v1003, %v1004
    %v1006 = vrot.slane %v918, 2
    %v1007 = vsel %vm997, %v1004, %v1006
    %v1008 = vrot.slane %v919, 2
    %v1009 = vrot.slane %v920, 2
    %v1010 = vsel %vm997, %v1008, %v1009
    %v1011 = vrot.slane %v921, 2
    %v1012 = vsel %vm997, %v1009, %v1011
    %v1013 = vrot.slane %v922, 2
    %v1014 = vrot.slane %v923, 2
    %v1015 = vsel %vm997, %v1013, %v1014
    %v1016 = vrot.slane %v924, 2
    %v1017 = vsel %vm997, %v1014, %v1016
    %v1018 = vrot.slane %v925, 2
    %v1019 = vrot.slane %v926, 2
    %v1020 = vsel %vm997, %v1018, %v1019
    %v1021 = vrot.slane %v927, 2
    %v1022 = vsel %vm997, %v1019, %v1021
    %v1023 = vrot.slane %v928, 2
    %v1024 = vrot.slane %v929, 2
    %v1025 = vsel %vm997, %v1023, %v1024
    %v1026 = vrot.slane %v930, 2
    %v1027 = vsel %vm997, %v1024, %v1026
    %v1028 = vrot.slane %v931, 2
    %v1029 = vrot.slane %v932, 2
    %v1030 = vsel %vm997, %v1028, %v1029
    %v1031 = vrot.slane %v933, 2
    %v1032 = vsel %vm997, %v1029, %v1031
    %v1033 = vrot.slane %v934, 2
    %v1034 = vrot.slane %v935, 2
    %v1035 = vsel %vm997, %v1033, %v1034
    %v1036 = vrot.slane %v936, 2
    %v1037 = vsel %vm997, %v1034, %v1036
    %v1038 = vrot.slane %v937, 2
    %v1039 = vrot.slane %v938, 2
    %v1040 = vsel %vm997, %v1038, %v1039
    %v1041 = vrot.slane %v939, 2
    %v1042 = vsel %vm997, %v1039, %v1041
    %v1043 = vrot.slane %v940, 2
    %v1044 = vrot.slane %v941, 2
    %v1045 = vsel %vm997, %v1043, %v1044
    %v1046 = vrot.slane %v942, 2
    %v1047 = vsel %vm997, %v1044, %v1046
    %v1048 = vrot.slane %v943, 2
    %v1049 = vrot.slane %v944, 2
    %v1050 = vsel %vm997, %v1048, %v1049
    %v1051 = vrot.slane %v945, 2
    %v1052 = vsel %vm997, %v1049, %v1051
    %v1053 = vrot.slane %v946, 2
    %v1054 = vrot.slane %v947, 2
    %v1055 = vsel %vm997, %v1053, %v1054
    %v1056 = vrot.slane %v948, 2
    %v1057 = vsel %vm997, %v1054, %v1056
    %v1058 = vrot.slane %v949, 2
    %v1059 = vrot.slane %v950, 2
    %v1060 = vsel %vm997, %v1058, %v1059
    %v1061 = vrot.slane %v951, 2
    %v1062 = vsel %vm997, %v1059, %v1061
    %v1063 = vrot.slane %v952, 2
    %v1064 = vrot.slane %v953, 2
    %v1065 = vsel %vm997, %v1063, %v1064
    %v1066 = vrot.slane %v954, 2
    %v1067 = vsel %vm997, %v1064, %v1066
    %v1096 = vadd.f32 %v883, %v1000
    %v1097 = vadd.f32 %v884, %v1002
    %v1098 = vadd.f32 %v885, %v1005
    %v1099 = vadd.f32 %v886, %v1007
    %v1100 = vadd.f32 %v887, %v1010
    %v1101 = vadd.f32 %v888, %v1012
    %v1102 = vadd.f32 %v889, %v1015
    %v1103 = vadd.f32 %v890, %v1017
    %v1104 = vadd.f32 %v891, %v1020
    %v1105 = vadd.f32 %v892, %v1022
    %v1106 = vadd.f32 %v893, %v1025
    %v1107 = vadd.f32 %v894, %v1027
    %v1108 = vadd.f32 %v895, %v1030
    %v1109 = vadd.f32 %v896, %v1032
    %v1110 = vadd.f32 %v897, %v1035
    %v1111 = vadd.f32 %v898, %v1037
    %v1112 = vadd.f32 %v899, %v1040
    %v1113 = vadd.f32 %v900, %v1042
    %v1114 = vadd.f32 %v901, %v1045
    %v1115 = vadd.f32 %v902, %v1047
    %v1116 = vadd.f32 %v903, %v1050
    %v1117 = vadd.f32 %v904, %v1052
    %v1118 = vadd.f32 %v905, %v1055
    %v1119 = vadd.f32 %v906, %v1057
    %v1120 = vadd.f32 %v907, %v1060
    %v1121 = vadd.f32 %v908, %v1062
    %v1122 = vadd.f32 %v909, %v1065
    %v1123 = vadd.f32 %v910, %v1067
    %s1124 = sld [smem:[#allocation9 + $0x3]]
    %v1125 = vstv %s1124
    %v1126 = vmul.f32 %v1125, %v606
    %v1127 = vmul.f32 %v1125, %v507
    %v1128 = vmul.f32 %v1125, %v623
    %v1129 = vmul.f32 %v1125, %v607
    %v1130 = vmul.f32 %v1125, %v510
    %v1131 = vmul.f32 %v1125, %v624
    %v1132 = vmul.f32 %v1125, %v608
    %v1133 = vmul.f32 %v1125, %v513
    %v1134 = vmul.f32 %v1125, %v625
    %v1135 = vmul.f32 %v1125, %v609
    %v1136 = vmul.f32 %v1125, %v516
    %v1137 = vmul.f32 %v1125, %v626
    %v1138 = vmul.f32 %v1125, %v610
    %v1139 = vmul.f32 %v1125, %v519
    %v1140 = vmul.f32 %v1125, %v627
    %v1141 = vmul.f32 %v1125, %v611
    %v1142 = vmul.f32 %v1125, %v522
    %v1143 = vmul.f32 %v1125, %v628
    %v1144 = vmul.f32 %v1125, %v612
    %v1145 = vmul.f32 %v1125, %v525
    %v1146 = vmul.f32 %v1125, %v629
    %v1147 = vmul.f32 %v1125, %v613
    %v1148 = vmul.f32 %v1125, %v528
    %v1149 = vmul.f32 %v1125, %v630
    %v1150 = vmul.f32 %v1125, %v614
    %v1151 = vmul.f32 %v1125, %v531
    %v1152 = vmul.f32 %v1125, %v631
    %v1153 = vmul.f32 %v1125, %v615
    %v1154 = vmul.f32 %v1125, %v534
    %v1155 = vmul.f32 %v1125, %v632
    %v1156 = vmul.f32 %v1125, %v616
    %v1157 = vmul.f32 %v1125, %v537
    %v1158 = vmul.f32 %v1125, %v633
    %v1159 = vmul.f32 %v1125, %v617
    %v1160 = vmul.f32 %v1125, %v540
    %v1161 = vmul.f32 %v1125, %v634
    %v1162 = vmul.f32 %v1125, %v618
    %v1163 = vmul.f32 %v1125, %v543
    %v1164 = vmul.f32 %v1125, %v635
    %v1165 = vmul.f32 %v1125, %v619
    %v1166 = vmul.f32 %v1125, %v546
    %v1167 = vmul.f32 %v1125, %v636
    %vm1210 = vcmask 1044480
    %v1211 = vrot.slane %v1126, 3
    %v1212 = vrot.slane %v1127, 3
    %v1213 = vsel %vm1210, %v1211, %v1212
    %v1214 = vrot.slane %v1128, 3
    %v1215 = vsel %vm1210, %v1212, %v1214
    %v1216 = vrot.slane %v1129, 3
    %v1217 = vrot.slane %v1130, 3
    %v1218 = vsel %vm1210, %v1216, %v1217
    %v1219 = vrot.slane %v1131, 3
    %v1220 = vsel %vm1210, %v1217, %v1219
    %v1221 = vrot.slane %v1132, 3
    %v1222 = vrot.slane %v1133, 3
    %v1223 = vsel %vm1210, %v1221, %v1222
    %v1224 = vrot.slane %v1134, 3
    %v1225 = vsel %vm1210, %v1222, %v1224
    %v1226 = vrot.slane %v1135, 3
    %v1227 = vrot.slane %v1136, 3
    %v1228 = vsel %vm1210, %v1226, %v1227
    %v1229 = vrot.slane %v1137, 3
    %v1230 = vsel %vm1210, %v1227, %v1229
    %v1231 = vrot.slane %v1138, 3
    %v1232 = vrot.slane %v1139, 3
    %v1233 = vsel %vm1210, %v1231, %v1232
    %v1234 = vrot.slane %v1140, 3
    %v1235 = vsel %vm1210, %v1232, %v1234
    %v1236 = vrot.slane %v1141, 3
    %v1237 = vrot.slane %v1142, 3
    %v1238 = vsel %vm1210, %v1236, %v1237
    %v1239 = vrot.slane %v1143, 3
    %v1240 = vsel %vm1210, %v1237, %v1239
    %v1241 = vrot.slane %v1144, 3
    %v1242 = vrot.slane %v1145, 3
    %v1243 = vsel %vm1210, %v1241, %v1242
    %v1244 = vrot.slane %v1146, 3
    %v1245 = vsel %vm1210, %v1242, %v1244
    %v1246 = vrot.slane %v1147, 3
    %v1247 = vrot.slane %v1148, 3
    %v1248 = vsel %vm1210, %v1246, %v1247
    %v1249 = vrot.slane %v1149, 3
    %v1250 = vsel %vm1210, %v1247, %v1249
    %v1251 = vrot.slane %v1150, 3
    %v1252 = vrot.slane %v1151, 3
    %v1253 = vsel %vm1210, %v1251, %v1252
    %v1254 = vrot.slane %v1152, 3
    %v1255 = vsel %vm1210, %v1252, %v1254
    %v1256 = vrot.slane %v1153, 3
    %v1257 = vrot.slane %v1154, 3
    %v1258 = vsel %vm1210, %v1256, %v1257
    %v1259 = vrot.slane %v1155, 3
    %v1260 = vsel %vm1210, %v1257, %v1259
    %v1261 = vrot.slane %v1156, 3
    %v1262 = vrot.slane %v1157, 3
    %v1263 = vsel %vm1210, %v1261, %v1262
    %v1264 = vrot.slane %v1158, 3
    %v1265 = vsel %vm1210, %v1262, %v1264
    %v1266 = vrot.slane %v1159, 3
    %v1267 = vrot.slane %v1160, 3
    %v1268 = vsel %vm1210, %v1266, %v1267
    %v1269 = vrot.slane %v1161, 3
    %v1270 = vsel %vm1210, %v1267, %v1269
    %v1271 = vrot.slane %v1162, 3
    %v1272 = vrot.slane %v1163, 3
    %v1273 = vsel %vm1210, %v1271, %v1272
    %v1274 = vrot.slane %v1164, 3
    %v1275 = vsel %vm1210, %v1272, %v1274
    %v1276 = vrot.slane %v1165, 3
    %v1277 = vrot.slane %v1166, 3
    %v1278 = vsel %vm1210, %v1276, %v1277
    %v1279 = vrot.slane %v1167, 3
    %v1280 = vsel %vm1210, %v1277, %v1279
    %v1309 = vadd.f32 %v1096, %v1213
    %v1310 = vadd.f32 %v1097, %v1215
    %v1311 = vadd.f32 %v1098, %v1218
    %v1312 = vadd.f32 %v1099, %v1220
    %v1313 = vadd.f32 %v1100, %v1223
    %v1314 = vadd.f32 %v1101, %v1225
    %v1315 = vadd.f32 %v1102, %v1228
    %v1316 = vadd.f32 %v1103, %v1230
    %v1317 = vadd.f32 %v1104, %v1233
    %v1318 = vadd.f32 %v1105, %v1235
    %v1319 = vadd.f32 %v1106, %v1238
    %v1320 = vadd.f32 %v1107, %v1240
    %v1321 = vadd.f32 %v1108, %v1243
    %v1322 = vadd.f32 %v1109, %v1245
    %v1323 = vadd.f32 %v1110, %v1248
    %v1324 = vadd.f32 %v1111, %v1250
    %v1325 = vadd.f32 %v1112, %v1253
    %v1326 = vadd.f32 %v1113, %v1255
    %v1327 = vadd.f32 %v1114, %v1258
    %v1328 = vadd.f32 %v1115, %v1260
    %v1329 = vadd.f32 %v1116, %v1263
    %v1330 = vadd.f32 %v1117, %v1265
    %v1331 = vadd.f32 %v1118, %v1268
    %v1332 = vadd.f32 %v1119, %v1270
    %v1333 = vadd.f32 %v1120, %v1273
    %v1334 = vadd.f32 %v1121, %v1275
    %v1335 = vadd.f32 %v1122, %v1278
    %v1336 = vadd.f32 %v1123, %v1280
    %s1337 = sld [smem:[#allocation9 + $0x4]]
    %v1338 = vstv %s1337
    %v1339 = vmul.f32 %v1338, %v606
    %v1340 = vmul.f32 %v1338, %v507
    %v1341 = vmul.f32 %v1338, %v623
    %v1342 = vmul.f32 %v1338, %v607
    %v1343 = vmul.f32 %v1338, %v510
    %v1344 = vmul.f32 %v1338, %v624
    %v1345 = vmul.f32 %v1338, %v608
    %v1346 = vmul.f32 %v1338, %v513
    %v1347 = vmul.f32 %v1338, %v625
    %v1348 = vmul.f32 %v1338, %v609
    %v1349 = vmul.f32 %v1338, %v516
    %v1350 = vmul.f32 %v1338, %v626
    %v1351 = vmul.f32 %v1338, %v610
    %v1352 = vmul.f32 %v1338, %v519
    %v1353 = vmul.f32 %v1338, %v627
    %v1354 = vmul.f32 %v1338, %v611
    %v1355 = vmul.f32 %v1338, %v522
    %v1356 = vmul.f32 %v1338, %v628
    %v1357 = vmul.f32 %v1338, %v612
    %v1358 = vmul.f32 %v1338, %v525
    %v1359 = vmul.f32 %v1338, %v629
    %v1360 = vmul.f32 %v1338, %v613
    %v1361 = vmul.f32 %v1338, %v528
    %v1362 = vmul.f32 %v1338, %v630
    %v1363 = vmul.f32 %v1338, %v614
    %v1364 = vmul.f32 %v1338, %v531
    %v1365 = vmul.f32 %v1338, %v631
    %v1366 = vmul.f32 %v1338, %v615
    %v1367 = vmul.f32 %v1338, %v534
    %v1368 = vmul.f32 %v1338, %v632
    %v1369 = vmul.f32 %v1338, %v616
    %v1370 = vmul.f32 %v1338, %v537
    %v1371 = vmul.f32 %v1338, %v633
    %v1372 = vmul.f32 %v1338, %v617
    %v1373 = vmul.f32 %v1338, %v540
    %v1374 = vmul.f32 %v1338, %v634
    %v1375 = vmul.f32 %v1338, %v618
    %v1376 = vmul.f32 %v1338, %v543
    %v1377 = vmul.f32 %v1338, %v635
    %v1378 = vmul.f32 %v1338, %v619
    %v1379 = vmul.f32 %v1338, %v546
    %v1380 = vmul.f32 %v1338, %v636
    %vm1423 = vcmask 1043456
    %v1424 = vrot.slane %v1339, 4
    %v1425 = vrot.slane %v1340, 4
    %v1426 = vsel %vm1423, %v1424, %v1425
    %v1427 = vrot.slane %v1341, 4
    %v1428 = vsel %vm1423, %v1425, %v1427
    %v1429 = vrot.slane %v1342, 4
    %v1430 = vrot.slane %v1343, 4
    %v1431 = vsel %vm1423, %v1429, %v1430
    %v1432 = vrot.slane %v1344, 4
    %v1433 = vsel %vm1423, %v1430, %v1432
    %v1434 = vrot.slane %v1345, 4
    %v1435 = vrot.slane %v1346, 4
    %v1436 = vsel %vm1423, %v1434, %v1435
    %v1437 = vrot.slane %v1347, 4
    %v1438 = vsel %vm1423, %v1435, %v1437
    %v1439 = vrot.slane %v1348, 4
    %v1440 = vrot.slane %v1349, 4
    %v1441 = vsel %vm1423, %v1439, %v1440
    %v1442 = vrot.slane %v1350, 4
    %v1443 = vsel %vm1423, %v1440, %v1442
    %v1444 = vrot.slane %v1351, 4
    %v1445 = vrot.slane %v1352, 4
    %v1446 = vsel %vm1423, %v1444, %v1445
    %v1447 = vrot.slane %v1353, 4
    %v1448 = vsel %vm1423, %v1445, %v1447
    %v1449 = vrot.slane %v1354, 4
    %v1450 = vrot.slane %v1355, 4
    %v1451 = vsel %vm1423, %v1449, %v1450
    %v1452 = vrot.slane %v1356, 4
    %v1453 = vsel %vm1423, %v1450, %v1452
    %v1454 = vrot.slane %v1357, 4
    %v1455 = vrot.slane %v1358, 4
    %v1456 = vsel %vm1423, %v1454, %v1455
    %v1457 = vrot.slane %v1359, 4
    %v1458 = vsel %vm1423, %v1455, %v1457
    %v1459 = vrot.slane %v1360, 4
    %v1460 = vrot.slane %v1361, 4
    %v1461 = vsel %vm1423, %v1459, %v1460
    %v1462 = vrot.slane %v1362, 4
    %v1463 = vsel %vm1423, %v1460, %v1462
    %v1464 = vrot.slane %v1363, 4
    %v1465 = vrot.slane %v1364, 4
    %v1466 = vsel %vm1423, %v1464, %v1465
    %v1467 = vrot.slane %v1365, 4
    %v1468 = vsel %vm1423, %v1465, %v1467
    %v1469 = vrot.slane %v1366, 4
    %v1470 = vrot.slane %v1367, 4
    %v1471 = vsel %vm1423, %v1469, %v1470
    %v1472 = vrot.slane %v1368, 4
    %v1473 = vsel %vm1423, %v1470, %v1472
    %v1474 = vrot.slane %v1369, 4
    %v1475 = vrot.slane %v1370, 4
    %v1476 = vsel %vm1423, %v1474, %v1475
    %v1477 = vrot.slane %v1371, 4
    %v1478 = vsel %vm1423, %v1475, %v1477
    %v1479 = vrot.slane %v1372, 4
    %v1480 = vrot.slane %v1373, 4
    %v1481 = vsel %vm1423, %v1479, %v1480
    %v1482 = vrot.slane %v1374, 4
    %v1483 = vsel %vm1423, %v1480, %v1482
    %v1484 = vrot.slane %v1375, 4
    %v1485 = vrot.slane %v1376, 4
    %v1486 = vsel %vm1423, %v1484, %v1485
    %v1487 = vrot.slane %v1377, 4
    %v1488 = vsel %vm1423, %v1485, %v1487
    %v1489 = vrot.slane %v1378, 4
    %v1490 = vrot.slane %v1379, 4
    %v1491 = vsel %vm1423, %v1489, %v1490
    %v1492 = vrot.slane %v1380, 4
    %v1493 = vsel %vm1423, %v1490, %v1492
    %v1522 = vadd.f32 %v1309, %v1426
    %v1523 = vadd.f32 %v1310, %v1428
    %v1524 = vadd.f32 %v1311, %v1431
    %v1525 = vadd.f32 %v1312, %v1433
    %v1526 = vadd.f32 %v1313, %v1436
    %v1527 = vadd.f32 %v1314, %v1438
    %v1528 = vadd.f32 %v1315, %v1441
    %v1529 = vadd.f32 %v1316, %v1443
    %v1530 = vadd.f32 %v1317, %v1446
    %v1531 = vadd.f32 %v1318, %v1448
    %v1532 = vadd.f32 %v1319, %v1451
    %v1533 = vadd.f32 %v1320, %v1453
    %v1534 = vadd.f32 %v1321, %v1456
    %v1535 = vadd.f32 %v1322, %v1458
    %v1536 = vadd.f32 %v1323, %v1461
    %v1537 = vadd.f32 %v1324, %v1463
    %v1538 = vadd.f32 %v1325, %v1466
    %v1539 = vadd.f32 %v1326, %v1468
    %v1540 = vadd.f32 %v1327, %v1471
    %v1541 = vadd.f32 %v1328, %v1473
    %v1542 = vadd.f32 %v1329, %v1476
    %v1543 = vadd.f32 %v1330, %v1478
    %v1544 = vadd.f32 %v1331, %v1481
    %v1545 = vadd.f32 %v1332, %v1483
    %v1546 = vadd.f32 %v1333, %v1486
    %v1547 = vadd.f32 %v1334, %v1488
    %v1548 = vadd.f32 %v1335, %v1491
    %v1549 = vadd.f32 %v1336, %v1493
    %s1550 = sld [smem:[#allocation9 + $0x5]]
    %v1551 = vstv %s1550
    %v1552 = vmul.f32 %v1551, %v606
    %v1553 = vmul.f32 %v1551, %v507
    %v1554 = vmul.f32 %v1551, %v623
    %v1555 = vmul.f32 %v1551, %v607
    %v1556 = vmul.f32 %v1551, %v510
    %v1557 = vmul.f32 %v1551, %v624
    %v1558 = vmul.f32 %v1551, %v608
    %v1559 = vmul.f32 %v1551, %v513
    %v1560 = vmul.f32 %v1551, %v625
    %v1561 = vmul.f32 %v1551, %v609
    %v1562 = vmul.f32 %v1551, %v516
    %v1563 = vmul.f32 %v1551, %v626
    %v1564 = vmul.f32 %v1551, %v610
    %v1565 = vmul.f32 %v1551, %v519
    %v1566 = vmul.f32 %v1551, %v627
    %v1567 = vmul.f32 %v1551, %v611
    %v1568 = vmul.f32 %v1551, %v522
    %v1569 = vmul.f32 %v1551, %v628
    %v1570 = vmul.f32 %v1551, %v612
    %v1571 = vmul.f32 %v1551, %v525
    %v1572 = vmul.f32 %v1551, %v629
    %v1573 = vmul.f32 %v1551, %v613
    %v1574 = vmul.f32 %v1551, %v528
    %v1575 = vmul.f32 %v1551, %v630
    %v1576 = vmul.f32 %v1551, %v614
    %v1577 = vmul.f32 %v1551, %v531
    %v1578 = vmul.f32 %v1551, %v631
    %v1579 = vmul.f32 %v1551, %v615
    %v1580 = vmul.f32 %v1551, %v534
    %v1581 = vmul.f32 %v1551, %v632
    %v1582 = vmul.f32 %v1551, %v616
    %v1583 = vmul.f32 %v1551, %v537
    %v1584 = vmul.f32 %v1551, %v633
    %v1585 = vmul.f32 %v1551, %v617
    %v1586 = vmul.f32 %v1551, %v540
    %v1587 = vmul.f32 %v1551, %v634
    %v1588 = vmul.f32 %v1551, %v618
    %v1589 = vmul.f32 %v1551, %v543
    %v1590 = vmul.f32 %v1551, %v635
    %v1591 = vmul.f32 %v1551, %v619
    %v1592 = vmul.f32 %v1551, %v546
    %v1593 = vmul.f32 %v1551, %v636
    %v1636 = vrot.slane %v1552, 5
    %v1637 = vrot.slane %v1553, 5
    %v1638 = vsel %vm505, %v1636, %v1637
    %v1639 = vrot.slane %v1554, 5
    %v1640 = vsel %vm505, %v1637, %v1639
    %v1641 = vrot.slane %v1555, 5
    %v1642 = vrot.slane %v1556, 5
    %v1643 = vsel %vm505, %v1641, %v1642
    %v1644 = vrot.slane %v1557, 5
    %v1645 = vsel %vm505, %v1642, %v1644
    %v1646 = vrot.slane %v1558, 5
    %v1647 = vrot.slane %v1559, 5
    %v1648 = vsel %vm505, %v1646, %v1647
    %v1649 = vrot.slane %v1560, 5
    %v1650 = vsel %vm505, %v1647, %v1649
    %v1651 = vrot.slane %v1561, 5
    %v1652 = vrot.slane %v1562, 5
    %v1653 = vsel %vm505, %v1651, %v1652
    %v1654 = vrot.slane %v1563, 5
    %v1655 = vsel %vm505, %v1652, %v1654
    %v1656 = vrot.slane %v1564, 5
    %v1657 = vrot.slane %v1565, 5
    %v1658 = vsel %vm505, %v1656, %v1657
    %v1659 = vrot.slane %v1566, 5
    %v1660 = vsel %vm505, %v1657, %v1659
    %v1661 = vrot.slane %v1567, 5
    %v1662 = vrot.slane %v1568, 5
    %v1663 = vsel %vm505, %v1661, %v1662
    %v1664 = vrot.slane %v1569, 5
    %v1665 = vsel %vm505, %v1662, %v1664
    %v1666 = vrot.slane %v1570, 5
    %v1667 = vrot.slane %v1571, 5
    %v1668 = vsel %vm505, %v1666, %v1667
    %v1669 = vrot.slane %v1572, 5
    %v1670 = vsel %vm505, %v1667, %v1669
    %v1671 = vrot.slane %v1573, 5
    %v1672 = vrot.slane %v1574, 5
    %v1673 = vsel %vm505, %v1671, %v1672
    %v1674 = vrot.slane %v1575, 5
    %v1675 = vsel %vm505, %v1672, %v1674
    %v1676 = vrot.slane %v1576, 5
    %v1677 = vrot.slane %v1577, 5
    %v1678 = vsel %vm505, %v1676, %v1677
    %v1679 = vrot.slane %v1578, 5
    %v1680 = vsel %vm505, %v1677, %v1679
    %v1681 = vrot.slane %v1579, 5
    %v1682 = vrot.slane %v1580, 5
    %v1683 = vsel %vm505, %v1681, %v1682
    %v1684 = vrot.slane %v1581, 5
    %v1685 = vsel %vm505, %v1682, %v1684
    %v1686 = vrot.slane %v1582, 5
    %v1687 = vrot.slane %v1583, 5
    %v1688 = vsel %vm505, %v1686, %v1687
    %v1689 = vrot.slane %v1584, 5
    %v1690 = vsel %vm505, %v1687, %v1689
    %v1691 = vrot.slane %v1585, 5
    %v1692 = vrot.slane %v1586, 5
    %v1693 = vsel %vm505, %v1691, %v1692
    %v1694 = vrot.slane %v1587, 5
    %v1695 = vsel %vm505, %v1692, %v1694
    %v1696 = vrot.slane %v1588, 5
    %v1697 = vrot.slane %v1589, 5
    %v1698 = vsel %vm505, %v1696, %v1697
    %v1699 = vrot.slane %v1590, 5
    %v1700 = vsel %vm505, %v1697, %v1699
    %v1701 = vrot.slane %v1591, 5
    %v1702 = vrot.slane %v1592, 5
    %v1703 = vsel %vm505, %v1701, %v1702
    %v1704 = vrot.slane %v1593, 5
    %v1705 = vsel %vm505, %v1702, %v1704
    %v1734 = vadd.f32 %v1522, %v1638
    %v1735 = vadd.f32 %v1523, %v1640
    %v1736 = vadd.f32 %v1524, %v1643
    %v1737 = vadd.f32 %v1525, %v1645
    %v1738 = vadd.f32 %v1526, %v1648
    %v1739 = vadd.f32 %v1527, %v1650
    %v1740 = vadd.f32 %v1528, %v1653
    %v1741 = vadd.f32 %v1529, %v1655
    %v1742 = vadd.f32 %v1530, %v1658
    %v1743 = vadd.f32 %v1531, %v1660
    %v1744 = vadd.f32 %v1532, %v1663
    %v1745 = vadd.f32 %v1533, %v1665
    %v1746 = vadd.f32 %v1534, %v1668
    %v1747 = vadd.f32 %v1535, %v1670
    %v1748 = vadd.f32 %v1536, %v1673
    %v1749 = vadd.f32 %v1537, %v1675
    %v1750 = vadd.f32 %v1538, %v1678
    %v1751 = vadd.f32 %v1539, %v1680
    %v1752 = vadd.f32 %v1540, %v1683
    %v1753 = vadd.f32 %v1541, %v1685
    %v1754 = vadd.f32 %v1542, %v1688
    %v1755 = vadd.f32 %v1543, %v1690
    %v1756 = vadd.f32 %v1544, %v1693
    %v1757 = vadd.f32 %v1545, %v1695
    %v1758 = vadd.f32 %v1546, %v1698
    %v1759 = vadd.f32 %v1547, %v1700
    %v1760 = vadd.f32 %v1548, %v1703
    %v1761 = vadd.f32 %v1549, %v1705
    %s1762 = sld [smem:[#allocation9 + $0x6]]
    %v1763 = vstv %s1762
    %v1764 = vmul.f32 %v1763, %v606
    %v1765 = vmul.f32 %v1763, %v507
    %v1766 = vmul.f32 %v1763, %v623
    %v1767 = vmul.f32 %v1763, %v607
    %v1768 = vmul.f32 %v1763, %v510
    %v1769 = vmul.f32 %v1763, %v624
    %v1770 = vmul.f32 %v1763, %v608
    %v1771 = vmul.f32 %v1763, %v513
    %v1772 = vmul.f32 %v1763, %v625
    %v1773 = vmul.f32 %v1763, %v609
    %v1774 = vmul.f32 %v1763, %v516
    %v1775 = vmul.f32 %v1763, %v626
    %v1776 = vmul.f32 %v1763, %v610
    %v1777 = vmul.f32 %v1763, %v519
    %v1778 = vmul.f32 %v1763, %v627
    %v1779 = vmul.f32 %v1763, %v611
    %v1780 = vmul.f32 %v1763, %v522
    %v1781 = vmul.f32 %v1763, %v628
    %v1782 = vmul.f32 %v1763, %v612
    %v1783 = vmul.f32 %v1763, %v525
    %v1784 = vmul.f32 %v1763, %v629
    %v1785 = vmul.f32 %v1763, %v613
    %v1786 = vmul.f32 %v1763, %v528
    %v1787 = vmul.f32 %v1763, %v630
    %v1788 = vmul.f32 %v1763, %v614
    %v1789 = vmul.f32 %v1763, %v531
    %v1790 = vmul.f32 %v1763, %v631
    %v1791 = vmul.f32 %v1763, %v615
    %v1792 = vmul.f32 %v1763, %v534
    %v1793 = vmul.f32 %v1763, %v632
    %v1794 = vmul.f32 %v1763, %v616
    %v1795 = vmul.f32 %v1763, %v537
    %v1796 = vmul.f32 %v1763, %v633
    %v1797 = vmul.f32 %v1763, %v617
    %v1798 = vmul.f32 %v1763, %v540
    %v1799 = vmul.f32 %v1763, %v634
    %v1800 = vmul.f32 %v1763, %v618
    %v1801 = vmul.f32 %v1763, %v543
    %v1802 = vmul.f32 %v1763, %v635
    %v1803 = vmul.f32 %v1763, %v619
    %v1804 = vmul.f32 %v1763, %v546
    %v1805 = vmul.f32 %v1763, %v636
    %vm1848 = vcmask 1041408
    %v1849 = vrot.slane %v1764, 6
    %v1850 = vrot.slane %v1765, 6
    %v1851 = vsel %vm1848, %v1849, %v1850
    %v1852 = vrot.slane %v1766, 6
    %v1853 = vsel %vm1848, %v1850, %v1852
    %v1854 = vrot.slane %v1767, 6
    %v1855 = vrot.slane %v1768, 6
    %v1856 = vsel %vm1848, %v1854, %v1855
    %v1857 = vrot.slane %v1769, 6
    %v1858 = vsel %vm1848, %v1855, %v1857
    %v1859 = vrot.slane %v1770, 6
    %v1860 = vrot.slane %v1771, 6
    %v1861 = vsel %vm1848, %v1859, %v1860
    %v1862 = vrot.slane %v1772, 6
    %v1863 = vsel %vm1848, %v1860, %v1862
    %v1864 = vrot.slane %v1773, 6
    %v1865 = vrot.slane %v1774, 6
    %v1866 = vsel %vm1848, %v1864, %v1865
    %v1867 = vrot.slane %v1775, 6
    %v1868 = vsel %vm1848, %v1865, %v1867
    %v1869 = vrot.slane %v1776, 6
    %v1870 = vrot.slane %v1777, 6
    %v1871 = vsel %vm1848, %v1869, %v1870
    %v1872 = vrot.slane %v1778, 6
    %v1873 = vsel %vm1848, %v1870, %v1872
    %v1874 = vrot.slane %v1779, 6
    %v1875 = vrot.slane %v1780, 6
    %v1876 = vsel %vm1848, %v1874, %v1875
    %v1877 = vrot.slane %v1781, 6
    %v1878 = vsel %vm1848, %v1875, %v1877
    %v1879 = vrot.slane %v1782, 6
    %v1880 = vrot.slane %v1783, 6
    %v1881 = vsel %vm1848, %v1879, %v1880
    %v1882 = vrot.slane %v1784, 6
    %v1883 = vsel %vm1848, %v1880, %v1882
    %v1884 = vrot.slane %v1785, 6
    %v1885 = vrot.slane %v1786, 6
    %v1886 = vsel %vm1848, %v1884, %v1885
    %v1887 = vrot.slane %v1787, 6
    %v1888 = vsel %vm1848, %v1885, %v1887
    %v1889 = vrot.slane %v1788, 6
    %v1890 = vrot.slane %v1789, 6
    %v1891 = vsel %vm1848, %v1889, %v1890
    %v1892 = vrot.slane %v1790, 6
    %v1893 = vsel %vm1848, %v1890, %v1892
    %v1894 = vrot.slane %v1791, 6
    %v1895 = vrot.slane %v1792, 6
    %v1896 = vsel %vm1848, %v1894, %v1895
    %v1897 = vrot.slane %v1793, 6
    %v1898 = vsel %vm1848, %v1895, %v1897
    %v1899 = vrot.slane %v1794, 6
    %v1900 = vrot.slane %v1795, 6
    %v1901 = vsel %vm1848, %v1899, %v1900
    %v1902 = vrot.slane %v1796, 6
    %v1903 = vsel %vm1848, %v1900, %v1902
    %v1904 = vrot.slane %v1797, 6
    %v1905 = vrot.slane %v1798, 6
    %v1906 = vsel %vm1848, %v1904, %v1905
    %v1907 = vrot.slane %v1799, 6
    %v1908 = vsel %vm1848, %v1905, %v1907
    %v1909 = vrot.slane %v1800, 6
    %v1910 = vrot.slane %v1801, 6
    %v1911 = vsel %vm1848, %v1909, %v1910
    %v1912 = vrot.slane %v1802, 6
    %v1913 = vsel %vm1848, %v1910, %v1912
    %v1914 = vrot.slane %v1803, 6
    %v1915 = vrot.slane %v1804, 6
    %v1916 = vsel %vm1848, %v1914, %v1915
    %v1917 = vrot.slane %v1805, 6
    %v1918 = vsel %vm1848, %v1915, %v1917
    %v1947 = vadd.f32 %v1734, %v1851
    %v1948 = vadd.f32 %v1735, %v1853
    %v1949 = vadd.f32 %v1736, %v1856
    %v1950 = vadd.f32 %v1737, %v1858
    %v1951 = vadd.f32 %v1738, %v1861
    %v1952 = vadd.f32 %v1739, %v1863
    %v1953 = vadd.f32 %v1740, %v1866
    %v1954 = vadd.f32 %v1741, %v1868
    %v1955 = vadd.f32 %v1742, %v1871
    %v1956 = vadd.f32 %v1743, %v1873
    %v1957 = vadd.f32 %v1744, %v1876
    %v1958 = vadd.f32 %v1745, %v1878
    %v1959 = vadd.f32 %v1746, %v1881
    %v1960 = vadd.f32 %v1747, %v1883
    %v1961 = vadd.f32 %v1748, %v1886
    %v1962 = vadd.f32 %v1749, %v1888
    %v1963 = vadd.f32 %v1750, %v1891
    %v1964 = vadd.f32 %v1751, %v1893
    %v1965 = vadd.f32 %v1752, %v1896
    %v1966 = vadd.f32 %v1753, %v1898
    %v1967 = vadd.f32 %v1754, %v1901
    %v1968 = vadd.f32 %v1755, %v1903
    %v1969 = vadd.f32 %v1756, %v1906
    %v1970 = vadd.f32 %v1757, %v1908
    %v1971 = vadd.f32 %v1758, %v1911
    %v1972 = vadd.f32 %v1759, %v1913
    %v1973 = vadd.f32 %v1760, %v1916
    %v1974 = vadd.f32 %v1761, %v1918
    %s1975 = sld [smem:[#allocation9 + $0x80]]
    %v1976 = vstv %s1975
    %v1977 = vmul.f32 %v1976, %v606
    %v1978 = vmul.f32 %v1976, %v507
    %v1979 = vmul.f32 %v1976, %v607
    %v1980 = vmul.f32 %v1976, %v510
    %v1981 = vmul.f32 %v1976, %v608
    %v1982 = vmul.f32 %v1976, %v513
    %v1983 = vmul.f32 %v1976, %v609
    %v1984 = vmul.f32 %v1976, %v516
    %v1985 = vmul.f32 %v1976, %v610
    %v1986 = vmul.f32 %v1976, %v519
    %v1987 = vmul.f32 %v1976, %v611
    %v1988 = vmul.f32 %v1976, %v522
    %v1989 = vmul.f32 %v1976, %v612
    %v1990 = vmul.f32 %v1976, %v525
    %v1991 = vmul.f32 %v1976, %v613
    %v1992 = vmul.f32 %v1976, %v528
    %v1993 = vmul.f32 %v1976, %v614
    %v1994 = vmul.f32 %v1976, %v531
    %v1995 = vmul.f32 %v1976, %v615
    %v1996 = vmul.f32 %v1976, %v534
    %v1997 = vmul.f32 %v1976, %v616
    %v1998 = vmul.f32 %v1976, %v537
    %v1999 = vmul.f32 %v1976, %v617
    %v2000 = vmul.f32 %v1976, %v540
    %v2001 = vmul.f32 %v1976, %v618
    %v2002 = vmul.f32 %v1976, %v543
    %v2003 = vmul.f32 %v1976, %v619
    %v2004 = vmul.f32 %v1976, %v546
    %v2005 = vmul.f32 %v1976, %v620
    %v2006 = vmul.f32 %v1976, %v549
    %v2007 = vadd.f32 %v1947, %v1977
    %v2008 = vadd.f32 %v1948, %v1978
    %v2009 = vadd.f32 %v1947, %v1979
    %v2010 = vadd.f32 %v1948, %v1980
    %v2011 = vadd.f32 %v1949, %v1981
    %v2012 = vadd.f32 %v1950, %v1982
    %v2013 = vadd.f32 %v1951, %v1983
    %v2014 = vadd.f32 %v1952, %v1984
    %v2015 = vadd.f32 %v1953, %v1985
    %v2016 = vadd.f32 %v1954, %v1986
    %v2017 = vadd.f32 %v1955, %v1987
    %v2018 = vadd.f32 %v1956, %v1988
    %v2019 = vadd.f32 %v1957, %v1989
    %v2020 = vadd.f32 %v1958, %v1990
    %v2021 = vadd.f32 %v1959, %v1991
    %v2022 = vadd.f32 %v1960, %v1992
    %v2023 = vadd.f32 %v1961, %v1993
    %v2024 = vadd.f32 %v1962, %v1994
    %v2025 = vadd.f32 %v1963, %v1995
    %v2026 = vadd.f32 %v1964, %v1996
    %v2027 = vadd.f32 %v1965, %v1997
    %v2028 = vadd.f32 %v1966, %v1998
    %v2029 = vadd.f32 %v1967, %v1999
    %v2030 = vadd.f32 %v1968, %v2000
    %v2031 = vadd.f32 %v1969, %v2001
    %v2032 = vadd.f32 %v1970, %v2002
    %v2033 = vadd.f32 %v1971, %v2003
    %v2034 = vadd.f32 %v1972, %v2004
    %v2035 = vadd.f32 %v1973, %v2005
    %v2036 = vadd.f32 %v1974, %v2006
    %s2037 = sld [smem:[#allocation9 + $0x81]]
    %v2038 = vstv %s2037
    %v2039 = vmul.f32 %v2038, %v606
    %v2040 = vmul.f32 %v2038, %v507
    %v2041 = vmul.f32 %v2038, %v623
    %v2042 = vmul.f32 %v2038, %v607
    %v2043 = vmul.f32 %v2038, %v510
    %v2044 = vmul.f32 %v2038, %v624
    %v2045 = vmul.f32 %v2038, %v608
    %v2046 = vmul.f32 %v2038, %v513
    %v2047 = vmul.f32 %v2038, %v625
    %v2048 = vmul.f32 %v2038, %v609
    %v2049 = vmul.f32 %v2038, %v516
    %v2050 = vmul.f32 %v2038, %v626
    %v2051 = vmul.f32 %v2038, %v610
    %v2052 = vmul.f32 %v2038, %v519
    %v2053 = vmul.f32 %v2038, %v627
    %v2054 = vmul.f32 %v2038, %v611
    %v2055 = vmul.f32 %v2038, %v522
    %v2056 = vmul.f32 %v2038, %v628
    %v2057 = vmul.f32 %v2038, %v612
    %v2058 = vmul.f32 %v2038, %v525
    %v2059 = vmul.f32 %v2038, %v629
    %v2060 = vmul.f32 %v2038, %v613
    %v2061 = vmul.f32 %v2038, %v528
    %v2062 = vmul.f32 %v2038, %v630
    %v2063 = vmul.f32 %v2038, %v614
    %v2064 = vmul.f32 %v2038, %v531
    %v2065 = vmul.f32 %v2038, %v631
    %v2066 = vmul.f32 %v2038, %v615
    %v2067 = vmul.f32 %v2038, %v534
    %v2068 = vmul.f32 %v2038, %v632
    %v2069 = vmul.f32 %v2038, %v616
    %v2070 = vmul.f32 %v2038, %v537
    %v2071 = vmul.f32 %v2038, %v633
    %v2072 = vmul.f32 %v2038, %v617
    %v2073 = vmul.f32 %v2038, %v540
    %v2074 = vmul.f32 %v2038, %v634
    %v2075 = vmul.f32 %v2038, %v618
    %v2076 = vmul.f32 %v2038, %v543
    %v2077 = vmul.f32 %v2038, %v635
    %v2078 = vmul.f32 %v2038, %v619
    %v2079 = vmul.f32 %v2038, %v546
    %v2080 = vmul.f32 %v2038, %v636
    %v2081 = vmul.f32 %v2038, %v620
    %v2082 = vmul.f32 %v2038, %v549
    %v2083 = vmul.f32 %v2038, %v637
    %v2129 = vrot.slane %v2039, 1
    %v2130 = vrot.slane %v2040, 1
    %v2131 = vsel %vm784, %v2129, %v2130
    %v2132 = vrot.slane %v2041, 1
    %v2133 = vsel %vm784, %v2130, %v2132
    %v2134 = vrot.slane %v2042, 1
    %v2135 = vrot.slane %v2043, 1
    %v2136 = vsel %vm784, %v2134, %v2135
    %v2137 = vrot.slane %v2044, 1
    %v2138 = vsel %vm784, %v2135, %v2137
    %v2139 = vrot.slane %v2045, 1
    %v2140 = vrot.slane %v2046, 1
    %v2141 = vsel %vm784, %v2139, %v2140
    %v2142 = vrot.slane %v2047, 1
    %v2143 = vsel %vm784, %v2140, %v2142
    %v2144 = vrot.slane %v2048, 1
    %v2145 = vrot.slane %v2049, 1
    %v2146 = vsel %vm784, %v2144, %v2145
    %v2147 = vrot.slane %v2050, 1
    %v2148 = vsel %vm784, %v2145, %v2147
    %v2149 = vrot.slane %v2051, 1
    %v2150 = vrot.slane %v2052, 1
    %v2151 = vsel %vm784, %v2149, %v2150
    %v2152 = vrot.slane %v2053, 1
    %v2153 = vsel %vm784, %v2150, %v2152
    %v2154 = vrot.slane %v2054, 1
    %v2155 = vrot.slane %v2055, 1
    %v2156 = vsel %vm784, %v2154, %v2155
    %v2157 = vrot.slane %v2056, 1
    %v2158 = vsel %vm784, %v2155, %v2157
    %v2159 = vrot.slane %v2057, 1
    %v2160 = vrot.slane %v2058, 1
    %v2161 = vsel %vm784, %v2159, %v2160
    %v2162 = vrot.slane %v2059, 1
    %v2163 = vsel %vm784, %v2160, %v2162
    %v2164 = vrot.slane %v2060, 1
    %v2165 = vrot.slane %v2061, 1
    %v2166 = vsel %vm784, %v2164, %v2165
    %v2167 = vrot.slane %v2062, 1
    %v2168 = vsel %vm784, %v2165, %v2167
    %v2169 = vrot.slane %v2063, 1
    %v2170 = vrot.slane %v2064, 1
    %v2171 = vsel %vm784, %v2169, %v2170
    %v2172 = vrot.slane %v2065, 1
    %v2173 = vsel %vm784, %v2170, %v2172
    %v2174 = vrot.slane %v2066, 1
    %v2175 = vrot.slane %v2067, 1
    %v2176 = vsel %vm784, %v2174, %v2175
    %v2177 = vrot.slane %v2068, 1
    %v2178 = vsel %vm784, %v2175, %v2177
    %v2179 = vrot.slane %v2069, 1
    %v2180 = vrot.slane %v2070, 1
    %v2181 = vsel %vm784, %v2179, %v2180
    %v2182 = vrot.slane %v2071, 1
    %v2183 = vsel %vm784, %v2180, %v2182
    %v2184 = vrot.slane %v2072, 1
    %v2185 = vrot.slane %v2073, 1
    %v2186 = vsel %vm784, %v2184, %v2185
    %v2187 = vrot.slane %v2074, 1
    %v2188 = vsel %vm784, %v2185, %v2187
    %v2189 = vrot.slane %v2075, 1
    %v2190 = vrot.slane %v2076, 1
    %v2191 = vsel %vm784, %v2189, %v2190
    %v2192 = vrot.slane %v2077, 1
    %v2193 = vsel %vm784, %v2190, %v2192
    %v2194 = vrot.slane %v2078, 1
    %v2195 = vrot.slane %v2079, 1
    %v2196 = vsel %vm784, %v2194, %v2195
    %v2197 = vrot.slane %v2080, 1
    %v2198 = vsel %vm784, %v2195, %v2197
    %v2199 = vrot.slane %v2081, 1
    %v2200 = vrot.slane %v2082, 1
    %v2201 = vsel %vm784, %v2199, %v2200
    %v2202 = vrot.slane %v2083, 1
    %v2203 = vsel %vm784, %v2200, %v2202
    %v2234 = vadd.f32 %v2007, %v2131
    %v2235 = vadd.f32 %v2008, %v2133
    %v2236 = vadd.f32 %v2009, %v2136
    %v2237 = vadd.f32 %v2010, %v2138
    %v2238 = vadd.f32 %v2011, %v2141
    %v2239 = vadd.f32 %v2012, %v2143
    %v2240 = vadd.f32 %v2013, %v2146
    %v2241 = vadd.f32 %v2014, %v2148
    %v2242 = vadd.f32 %v2015, %v2151
    %v2243 = vadd.f32 %v2016, %v2153
    %v2244 = vadd.f32 %v2017, %v2156
    %v2245 = vadd.f32 %v2018, %v2158
    %v2246 = vadd.f32 %v2019, %v2161
    %v2247 = vadd.f32 %v2020, %v2163
    %v2248 = vadd.f32 %v2021, %v2166
    %v2249 = vadd.f32 %v2022, %v2168
    %v2250 = vadd.f32 %v2023, %v2171
    %v2251 = vadd.f32 %v2024, %v2173
    %v2252 = vadd.f32 %v2025, %v2176
    %v2253 = vadd.f32 %v2026, %v2178
    %v2254 = vadd.f32 %v2027, %v2181
    %v2255 = vadd.f32 %v2028, %v2183
    %v2256 = vadd.f32 %v2029, %v2186
    %v2257 = vadd.f32 %v2030, %v2188
    %v2258 = vadd.f32 %v2031, %v2191
    %v2259 = vadd.f32 %v2032, %v2193
    %v2260 = vadd.f32 %v2033, %v2196
    %v2261 = vadd.f32 %v2034, %v2198
    %v2262 = vadd.f32 %v2035, %v2201
    %v2263 = vadd.f32 %v2036, %v2203
    %s2264 = sld [smem:[#allocation9 + $0x82]]
    %v2265 = vstv %s2264
    %v2266 = vmul.f32 %v2265, %v606
    %v2267 = vmul.f32 %v2265, %v507
    %v2268 = vmul.f32 %v2265, %v623
    %v2269 = vmul.f32 %v2265, %v607
    %v2270 = vmul.f32 %v2265, %v510
    %v2271 = vmul.f32 %v2265, %v624
    %v2272 = vmul.f32 %v2265, %v608
    %v2273 = vmul.f32 %v2265, %v513
    %v2274 = vmul.f32 %v2265, %v625
    %v2275 = vmul.f32 %v2265, %v609
    %v2276 = vmul.f32 %v2265, %v516
    %v2277 = vmul.f32 %v2265, %v626
    %v2278 = vmul.f32 %v2265, %v610
    %v2279 = vmul.f32 %v2265, %v519
    %v2280 = vmul.f32 %v2265, %v627
    %v2281 = vmul.f32 %v2265, %v611
    %v2282 = vmul.f32 %v2265, %v522
    %v2283 = vmul.f32 %v2265, %v628
    %v2284 = vmul.f32 %v2265, %v612
    %v2285 = vmul.f32 %v2265, %v525
    %v2286 = vmul.f32 %v2265, %v629
    %v2287 = vmul.f32 %v2265, %v613
    %v2288 = vmul.f32 %v2265, %v528
    %v2289 = vmul.f32 %v2265, %v630
    %v2290 = vmul.f32 %v2265, %v614
    %v2291 = vmul.f32 %v2265, %v531
    %v2292 = vmul.f32 %v2265, %v631
    %v2293 = vmul.f32 %v2265, %v615
    %v2294 = vmul.f32 %v2265, %v534
    %v2295 = vmul.f32 %v2265, %v632
    %v2296 = vmul.f32 %v2265, %v616
    %v2297 = vmul.f32 %v2265, %v537
    %v2298 = vmul.f32 %v2265, %v633
    %v2299 = vmul.f32 %v2265, %v617
    %v2300 = vmul.f32 %v2265, %v540
    %v2301 = vmul.f32 %v2265, %v634
    %v2302 = vmul.f32 %v2265, %v618
    %v2303 = vmul.f32 %v2265, %v543
    %v2304 = vmul.f32 %v2265, %v635
    %v2305 = vmul.f32 %v2265, %v619
    %v2306 = vmul.f32 %v2265, %v546
    %v2307 = vmul.f32 %v2265, %v636
    %v2308 = vmul.f32 %v2265, %v620
    %v2309 = vmul.f32 %v2265, %v549
    %v2310 = vmul.f32 %v2265, %v637
    %v2356 = vrot.slane %v2266, 2
    %v2357 = vrot.slane %v2267, 2
    %v2358 = vsel %vm997, %v2356, %v2357
    %v2359 = vrot.slane %v2268, 2
    %v2360 = vsel %vm997, %v2357, %v2359
    %v2361 = vrot.slane %v2269, 2
    %v2362 = vrot.slane %v2270, 2
    %v2363 = vsel %vm997, %v2361, %v2362
    %v2364 = vrot.slane %v2271, 2
    %v2365 = vsel %vm997, %v2362, %v2364
    %v2366 = vrot.slane %v2272, 2
    %v2367 = vrot.slane %v2273, 2
    %v2368 = vsel %vm997, %v2366, %v2367
    %v2369 = vrot.slane %v2274, 2
    %v2370 = vsel %vm997, %v2367, %v2369
    %v2371 = vrot.slane %v2275, 2
    %v2372 = vrot.slane %v2276, 2
    %v2373 = vsel %vm997, %v2371, %v2372
    %v2374 = vrot.slane %v2277, 2
    %v2375 = vsel %vm997, %v2372, %v2374
    %v2376 = vrot.slane %v2278, 2
    %v2377 = vrot.slane %v2279, 2
    %v2378 = vsel %vm997, %v2376, %v2377
    %v2379 = vrot.slane %v2280, 2
    %v2380 = vsel %vm997, %v2377, %v2379
    %v2381 = vrot.slane %v2281, 2
    %v2382 = vrot.slane %v2282, 2
    %v2383 = vsel %vm997, %v2381, %v2382
    %v2384 = vrot.slane %v2283, 2
    %v2385 = vsel %vm997, %v2382, %v2384
    %v2386 = vrot.slane %v2284, 2
    %v2387 = vrot.slane %v2285, 2
    %v2388 = vsel %vm997, %v2386, %v2387
    %v2389 = vrot.slane %v2286, 2
    %v2390 = vsel %vm997, %v2387, %v2389
    %v2391 = vrot.slane %v2287, 2
    %v2392 = vrot.slane %v2288, 2
    %v2393 = vsel %vm997, %v2391, %v2392
    %v2394 = vrot.slane %v2289, 2
    %v2395 = vsel %vm997, %v2392, %v2394
    %v2396 = vrot.slane %v2290, 2
    %v2397 = vrot.slane %v2291, 2
    %v2398 = vsel %vm997, %v2396, %v2397
    %v2399 = vrot.slane %v2292, 2
    %v2400 = vsel %vm997, %v2397, %v2399
    %v2401 = vrot.slane %v2293, 2
    %v2402 = vrot.slane %v2294, 2
    %v2403 = vsel %vm997, %v2401, %v2402
    %v2404 = vrot.slane %v2295, 2
    %v2405 = vsel %vm997, %v2402, %v2404
    %v2406 = vrot.slane %v2296, 2
    %v2407 = vrot.slane %v2297, 2
    %v2408 = vsel %vm997, %v2406, %v2407
    %v2409 = vrot.slane %v2298, 2
    %v2410 = vsel %vm997, %v2407, %v2409
    %v2411 = vrot.slane %v2299, 2
    %v2412 = vrot.slane %v2300, 2
    %v2413 = vsel %vm997, %v2411, %v2412
    %v2414 = vrot.slane %v2301, 2
    %v2415 = vsel %vm997, %v2412, %v2414
    %v2416 = vrot.slane %v2302, 2
    %v2417 = vrot.slane %v2303, 2
    %v2418 = vsel %vm997, %v2416, %v2417
    %v2419 = vrot.slane %v2304, 2
    %v2420 = vsel %vm997, %v2417, %v2419
    %v2421 = vrot.slane %v2305, 2
    %v2422 = vrot.slane %v2306, 2
    %v2423 = vsel %vm997, %v2421, %v2422
    %v2424 = vrot.slane %v2307, 2
    %v2425 = vsel %vm997, %v2422, %v2424
    %v2426 = vrot.slane %v2308, 2
    %v2427 = vrot.slane %v2309, 2
    %v2428 = vsel %vm997, %v2426, %v2427
    %v2429 = vrot.slane %v2310, 2
    %v2430 = vsel %vm997, %v2427, %v2429
    %v2461 = vadd.f32 %v2234, %v2358
    %v2462 = vadd.f32 %v2235, %v2360
    %v2463 = vadd.f32 %v2236, %v2363
    %v2464 = vadd.f32 %v2237, %v2365
    %v2465 = vadd.f32 %v2238, %v2368
    %v2466 = vadd.f32 %v2239, %v2370
    %v2467 = vadd.f32 %v2240, %v2373
    %v2468 = vadd.f32 %v2241, %v2375
    %v2469 = vadd.f32 %v2242, %v2378
    %v2470 = vadd.f32 %v2243, %v2380
    %v2471 = vadd.f32 %v2244, %v2383
    %v2472 = vadd.f32 %v2245, %v2385
    %v2473 = vadd.f32 %v2246, %v2388
    %v2474 = vadd.f32 %v2247, %v2390
    %v2475 = vadd.f32 %v2248, %v2393
    %v2476 = vadd.f32 %v2249, %v2395
    %v2477 = vadd.f32 %v2250, %v2398
    %v2478 = vadd.f32 %v2251, %v2400
    %v2479 = vadd.f32 %v2252, %v2403
    %v2480 = vadd.f32 %v2253, %v2405
    %v2481 = vadd.f32 %v2254, %v2408
    %v2482 = vadd.f32 %v2255, %v2410
    %v2483 = vadd.f32 %v2256, %v2413
    %v2484 = vadd.f32 %v2257, %v2415
    %v2485 = vadd.f32 %v2258, %v2418
    %v2486 = vadd.f32 %v2259, %v2420
    %v2487 = vadd.f32 %v2260, %v2423
    %v2488 = vadd.f32 %v2261, %v2425
    %v2489 = vadd.f32 %v2262, %v2428
    %v2490 = vadd.f32 %v2263, %v2430
    %s2491 = sld [smem:[#allocation9 + $0x83]]
    %v2492 = vstv %s2491
    %v2493 = vmul.f32 %v2492, %v606
    %v2494 = vmul.f32 %v2492, %v507
    %v2495 = vmul.f32 %v2492, %v623
    %v2496 = vmul.f32 %v2492, %v607
    %v2497 = vmul.f32 %v2492, %v510
    %v2498 = vmul.f32 %v2492, %v624
    %v2499 = vmul.f32 %v2492, %v608
    %v2500 = vmul.f32 %v2492, %v513
    %v2501 = vmul.f32 %v2492, %v625
    %v2502 = vmul.f32 %v2492, %v609
    %v2503 = vmul.f32 %v2492, %v516
    %v2504 = vmul.f32 %v2492, %v626
    %v2505 = vmul.f32 %v2492, %v610
    %v2506 = vmul.f32 %v2492, %v519
    %v2507 = vmul.f32 %v2492, %v627
    %v2508 = vmul.f32 %v2492, %v611
    %v2509 = vmul.f32 %v2492, %v522
    %v2510 = vmul.f32 %v2492, %v628
    %v2511 = vmul.f32 %v2492, %v612
    %v2512 = vmul.f32 %v2492, %v525
    %v2513 = vmul.f32 %v2492, %v629
    %v2514 = vmul.f32 %v2492, %v613
    %v2515 = vmul.f32 %v2492, %v528
    %v2516 = vmul.f32 %v2492, %v630
    %v2517 = vmul.f32 %v2492, %v614
    %v2518 = vmul.f32 %v2492, %v531
    %v2519 = vmul.f32 %v2492, %v631
    %v2520 = vmul.f32 %v2492, %v615
    %v2521 = vmul.f32 %v2492, %v534
    %v2522 = vmul.f32 %v2492, %v632
    %v2523 = vmul.f32 %v2492, %v616
    %v2524 = vmul.f32 %v2492, %v537
    %v2525 = vmul.f32 %v2492, %v633
    %v2526 = vmul.f32 %v2492, %v617
    %v2527 = vmul.f32 %v2492, %v540
    %v2528 = vmul.f32 %v2492, %v634
    %v2529 = vmul.f32 %v2492, %v618
    %v2530 = vmul.f32 %v2492, %v543
    %v2531 = vmul.f32 %v2492, %v635
    %v2532 = vmul.f32 %v2492, %v619
    %v2533 = vmul.f32 %v2492, %v546
    %v2534 = vmul.f32 %v2492, %v636
    %v2535 = vmul.f32 %v2492, %v620
    %v2536 = vmul.f32 %v2492, %v549
    %v2537 = vmul.f32 %v2492, %v637
    %v2583 = vrot.slane %v2493, 3
    %v2584 = vrot.slane %v2494, 3
    %v2585 = vsel %vm1210, %v2583, %v2584
    %v2586 = vrot.slane %v2495, 3
    %v2587 = vsel %vm1210, %v2584, %v2586
    %v2588 = vrot.slane %v2496, 3
    %v2589 = vrot.slane %v2497, 3
    %v2590 = vsel %vm1210, %v2588, %v2589
    %v2591 = vrot.slane %v2498, 3
    %v2592 = vsel %vm1210, %v2589, %v2591
    %v2593 = vrot.slane %v2499, 3
    %v2594 = vrot.slane %v2500, 3
    %v2595 = vsel %vm1210, %v2593, %v2594
    %v2596 = vrot.slane %v2501, 3
    %v2597 = vsel %vm1210, %v2594, %v2596
    %v2598 = vrot.slane %v2502, 3
    %v2599 = vrot.slane %v2503, 3
    %v2600 = vsel %vm1210, %v2598, %v2599
    %v2601 = vrot.slane %v2504, 3
    %v2602 = vsel %vm1210, %v2599, %v2601
    %v2603 = vrot.slane %v2505, 3
    %v2604 = vrot.slane %v2506, 3
    %v2605 = vsel %vm1210, %v2603, %v2604
    %v2606 = vrot.slane %v2507, 3
    %v2607 = vsel %vm1210, %v2604, %v2606
    %v2608 = vrot.slane %v2508, 3
    %v2609 = vrot.slane %v2509, 3
    %v2610 = vsel %vm1210, %v2608, %v2609
    %v2611 = vrot.slane %v2510, 3
    %v2612 = vsel %vm1210, %v2609, %v2611
    %v2613 = vrot.slane %v2511, 3
    %v2614 = vrot.slane %v2512, 3
    %v2615 = vsel %vm1210, %v2613, %v2614
    %v2616 = vrot.slane %v2513, 3
    %v2617 = vsel %vm1210, %v2614, %v2616
    %v2618 = vrot.slane %v2514, 3
    %v2619 = vrot.slane %v2515, 3
    %v2620 = vsel %vm1210, %v2618, %v2619
    %v2621 = vrot.slane %v2516, 3
    %v2622 = vsel %vm1210, %v2619, %v2621
    %v2623 = vrot.slane %v2517, 3
    %v2624 = vrot.slane %v2518, 3
    %v2625 = vsel %vm1210, %v2623, %v2624
    %v2626 = vrot.slane %v2519, 3
    %v2627 = vsel %vm1210, %v2624, %v2626
    %v2628 = vrot.slane %v2520, 3
    %v2629 = vrot.slane %v2521, 3
    %v2630 = vsel %vm1210, %v2628, %v2629
    %v2631 = vrot.slane %v2522, 3
    %v2632 = vsel %vm1210, %v2629, %v2631
    %v2633 = vrot.slane %v2523, 3
    %v2634 = vrot.slane %v2524, 3
    %v2635 = vsel %vm1210, %v2633, %v2634
    %v2636 = vrot.slane %v2525, 3
    %v2637 = vsel %vm1210, %v2634, %v2636
    %v2638 = vrot.slane %v2526, 3
    %v2639 = vrot.slane %v2527, 3
    %v2640 = vsel %vm1210, %v2638, %v2639
    %v2641 = vrot.slane %v2528, 3
    %v2642 = vsel %vm1210, %v2639, %v2641
    %v2643 = vrot.slane %v2529, 3
    %v2644 = vrot.slane %v2530, 3
    %v2645 = vsel %vm1210, %v2643, %v2644
    %v2646 = vrot.slane %v2531, 3
    %v2647 = vsel %vm1210, %v2644, %v2646
    %v2648 = vrot.slane %v2532, 3
    %v2649 = vrot.slane %v2533, 3
    %v2650 = vsel %vm1210, %v2648, %v2649
    %v2651 = vrot.slane %v2534, 3
    %v2652 = vsel %vm1210, %v2649, %v2651
    %v2653 = vrot.slane %v2535, 3
    %v2654 = vrot.slane %v2536, 3
    %v2655 = vsel %vm1210, %v2653, %v2654
    %v2656 = vrot.slane %v2537, 3
    %v2657 = vsel %vm1210, %v2654, %v2656
    %v2688 = vadd.f32 %v2461, %v2585
    %v2689 = vadd.f32 %v2462, %v2587
    %v2690 = vadd.f32 %v2463, %v2590
    %v2691 = vadd.f32 %v2464, %v2592
    %v2692 = vadd.f32 %v2465, %v2595
    %v2693 = vadd.f32 %v2466, %v2597
    %v2694 = vadd.f32 %v2467, %v2600
    %v2695 = vadd.f32 %v2468, %v2602
    %v2696 = vadd.f32 %v2469, %v2605
    %v2697 = vadd.f32 %v2470, %v2607
    %v2698 = vadd.f32 %v2471, %v2610
    %v2699 = vadd.f32 %v2472, %v2612
    %v2700 = vadd.f32 %v2473, %v2615
    %v2701 = vadd.f32 %v2474, %v2617
    %v2702 = vadd.f32 %v2475, %v2620
    %v2703 = vadd.f32 %v2476, %v2622
    %v2704 = vadd.f32 %v2477, %v2625
    %v2705 = vadd.f32 %v2478, %v2627
    %v2706 = vadd.f32 %v2479, %v2630
    %v2707 = vadd.f32 %v2480, %v2632
    %v2708 = vadd.f32 %v2481, %v2635
    %v2709 = vadd.f32 %v2482, %v2637
    %v2710 = vadd.f32 %v2483, %v2640
    %v2711 = vadd.f32 %v2484, %v2642
    %v2712 = vadd.f32 %v2485, %v2645
    %v2713 = vadd.f32 %v2486, %v2647
    %v2714 = vadd.f32 %v2487, %v2650
    %v2715 = vadd.f32 %v2488, %v2652
    %v2716 = vadd.f32 %v2489, %v2655
    %v2717 = vadd.f32 %v2490, %v2657
    %s2718 = sld [smem:[#allocation9 + $0x84]]
    %v2719 = vstv %s2718
    %v2720 = vmul.f32 %v2719, %v606
    %v2721 = vmul.f32 %v2719, %v507
    %v2722 = vmul.f32 %v2719, %v623
    %v2723 = vmul.f32 %v2719, %v607
    %v2724 = vmul.f32 %v2719, %v510
    %v2725 = vmul.f32 %v2719, %v624
    %v2726 = vmul.f32 %v2719, %v608
    %v2727 = vmul.f32 %v2719, %v513
    %v2728 = vmul.f32 %v2719, %v625
    %v2729 = vmul.f32 %v2719, %v609
    %v2730 = vmul.f32 %v2719, %v516
    %v2731 = vmul.f32 %v2719, %v626
    %v2732 = vmul.f32 %v2719, %v610
    %v2733 = vmul.f32 %v2719, %v519
    %v2734 = vmul.f32 %v2719, %v627
    %v2735 = vmul.f32 %v2719, %v611
    %v2736 = vmul.f32 %v2719, %v522
    %v2737 = vmul.f32 %v2719, %v628
    %v2738 = vmul.f32 %v2719, %v612
    %v2739 = vmul.f32 %v2719, %v525
    %v2740 = vmul.f32 %v2719, %v629
    %v2741 = vmul.f32 %v2719, %v613
    %v2742 = vmul.f32 %v2719, %v528
    %v2743 = vmul.f32 %v2719, %v630
    %v2744 = vmul.f32 %v2719, %v614
    %v2745 = vmul.f32 %v2719, %v531
    %v2746 = vmul.f32 %v2719, %v631
    %v2747 = vmul.f32 %v2719, %v615
    %v2748 = vmul.f32 %v2719, %v534
    %v2749 = vmul.f32 %v2719, %v632
    %v2750 = vmul.f32 %v2719, %v616
    %v2751 = vmul.f32 %v2719, %v537
    %v2752 = vmul.f32 %v2719, %v633
    %v2753 = vmul.f32 %v2719, %v617
    %v2754 = vmul.f32 %v2719, %v540
    %v2755 = vmul.f32 %v2719, %v634
    %v2756 = vmul.f32 %v2719, %v618
    %v2757 = vmul.f32 %v2719, %v543
    %v2758 = vmul.f32 %v2719, %v635
    %v2759 = vmul.f32 %v2719, %v619
    %v2760 = vmul.f32 %v2719, %v546
    %v2761 = vmul.f32 %v2719, %v636
    %v2762 = vmul.f32 %v2719, %v620
    %v2763 = vmul.f32 %v2719, %v549
    %v2764 = vmul.f32 %v2719, %v637
    %v2810 = vrot.slane %v2720, 4
    %v2811 = vrot.slane %v2721, 4
    %v2812 = vsel %vm1423, %v2810, %v2811
    %v2813 = vrot.slane %v2722, 4
    %v2814 = vsel %vm1423, %v2811, %v2813
    %v2815 = vrot.slane %v2723, 4
    %v2816 = vrot.slane %v2724, 4
    %v2817 = vsel %vm1423, %v2815, %v2816
    %v2818 = vrot.slane %v2725, 4
    %v2819 = vsel %vm1423, %v2816, %v2818
    %v2820 = vrot.slane %v2726, 4
    %v2821 = vrot.slane %v2727, 4
    %v2822 = vsel %vm1423, %v2820, %v2821
    %v2823 = vrot.slane %v2728, 4
    %v2824 = vsel %vm1423, %v2821, %v2823
    %v2825 = vrot.slane %v2729, 4
    %v2826 = vrot.slane %v2730, 4
    %v2827 = vsel %vm1423, %v2825, %v2826
    %v2828 = vrot.slane %v2731, 4
    %v2829 = vsel %vm1423, %v2826, %v2828
    %v2830 = vrot.slane %v2732, 4
    %v2831 = vrot.slane %v2733, 4
    %v2832 = vsel %vm1423, %v2830, %v2831
    %v2833 = vrot.slane %v2734, 4
    %v2834 = vsel %vm1423, %v2831, %v2833
    %v2835 = vrot.slane %v2735, 4
    %v2836 = vrot.slane %v2736, 4
    %v2837 = vsel %vm1423, %v2835, %v2836
    %v2838 = vrot.slane %v2737, 4
    %v2839 = vsel %vm1423, %v2836, %v2838
    %v2840 = vrot.slane %v2738, 4
    %v2841 = vrot.slane %v2739, 4
    %v2842 = vsel %vm1423, %v2840, %v2841
    %v2843 = vrot.slane %v2740, 4
    %v2844 = vsel %vm1423, %v2841, %v2843
    %v2845 = vrot.slane %v2741, 4
    %v2846 = vrot.slane %v2742, 4
    %v2847 = vsel %vm1423, %v2845, %v2846
    %v2848 = vrot.slane %v2743, 4
    %v2849 = vsel %vm1423, %v2846, %v2848
    %v2850 = vrot.slane %v2744, 4
    %v2851 = vrot.slane %v2745, 4
    %v2852 = vsel %vm1423, %v2850, %v2851
    %v2853 = vrot.slane %v2746, 4
    %v2854 = vsel %vm1423, %v2851, %v2853
    %v2855 = vrot.slane %v2747, 4
    %v2856 = vrot.slane %v2748, 4
    %v2857 = vsel %vm1423, %v2855, %v2856
    %v2858 = vrot.slane %v2749, 4
    %v2859 = vsel %vm1423, %v2856, %v2858
    %v2860 = vrot.slane %v2750, 4
    %v2861 = vrot.slane %v2751, 4
    %v2862 = vsel %vm1423, %v2860, %v2861
    %v2863 = vrot.slane %v2752, 4
    %v2864 = vsel %vm1423, %v2861, %v2863
    %v2865 = vrot.slane %v2753, 4
    %v2866 = vrot.slane %v2754, 4
    %v2867 = vsel %vm1423, %v2865, %v2866
    %v2868 = vrot.slane %v2755, 4
    %v2869 = vsel %vm1423, %v2866, %v2868
    %v2870 = vrot.slane %v2756, 4
    %v2871 = vrot.slane %v2757, 4
    %v2872 = vsel %vm1423, %v2870, %v2871
    %v2873 = vrot.slane %v2758, 4
    %v2874 = vsel %vm1423, %v2871, %v2873
    %v2875 = vrot.slane %v2759, 4
    %v2876 = vrot.slane %v2760, 4
    %v2877 = vsel %vm1423, %v2875, %v2876
    %v2878 = vrot.slane %v2761, 4
    %v2879 = vsel %vm1423, %v2876, %v2878
    %v2880 = vrot.slane %v2762, 4
    %v2881 = vrot.slane %v2763, 4
    %v2882 = vsel %vm1423, %v2880, %v2881
    %v2883 = vrot.slane %v2764, 4
    %v2884 = vsel %vm1423, %v2881, %v2883
    %v2915 = vadd.f32 %v2688, %v2812
    %v2916 = vadd.f32 %v2689, %v2814
    %v2917 = vadd.f32 %v2690, %v2817
    %v2918 = vadd.f32 %v2691, %v2819
    %v2919 = vadd.f32 %v2692, %v2822
    %v2920 = vadd.f32 %v2693, %v2824
    %v2921 = vadd.f32 %v2694, %v2827
    %v2922 = vadd.f32 %v2695, %v2829
    %v2923 = vadd.f32 %v2696, %v2832
    %v2924 = vadd.f32 %v2697, %v2834
    %v2925 = vadd.f32 %v2698, %v2837
    %v2926 = vadd.f32 %v2699, %v2839
    %v2927 = vadd.f32 %v2700, %v2842
    %v2928 = vadd.f32 %v2701, %v2844
    %v2929 = vadd.f32 %v2702, %v2847
    %v2930 = vadd.f32 %v2703, %v2849
    %v2931 = vadd.f32 %v2704, %v2852
    %v2932 = vadd.f32 %v2705, %v2854
    %v2933 = vadd.f32 %v2706, %v2857
    %v2934 = vadd.f32 %v2707, %v2859
    %v2935 = vadd.f32 %v2708, %v2862
    %v2936 = vadd.f32 %v2709, %v2864
    %v2937 = vadd.f32 %v2710, %v2867
    %v2938 = vadd.f32 %v2711, %v2869
    %v2939 = vadd.f32 %v2712, %v2872
    %v2940 = vadd.f32 %v2713, %v2874
    %v2941 = vadd.f32 %v2714, %v2877
    %v2942 = vadd.f32 %v2715, %v2879
    %v2943 = vadd.f32 %v2716, %v2882
    %v2944 = vadd.f32 %v2717, %v2884
    %s2945 = sld [smem:[#allocation9 + $0x85]]
    %v2946 = vstv %s2945
    %v2947 = vmul.f32 %v2946, %v606
    %v2948 = vmul.f32 %v2946, %v507
    %v2949 = vmul.f32 %v2946, %v623
    %v2950 = vmul.f32 %v2946, %v607
    %v2951 = vmul.f32 %v2946, %v510
    %v2952 = vmul.f32 %v2946, %v624
    %v2953 = vmul.f32 %v2946, %v608
    %v2954 = vmul.f32 %v2946, %v513
    %v2955 = vmul.f32 %v2946, %v625
    %v2956 = vmul.f32 %v2946, %v609
    %v2957 = vmul.f32 %v2946, %v516
    %v2958 = vmul.f32 %v2946, %v626
    %v2959 = vmul.f32 %v2946, %v610
    %v2960 = vmul.f32 %v2946, %v519
    %v2961 = vmul.f32 %v2946, %v627
    %v2962 = vmul.f32 %v2946, %v611
    %v2963 = vmul.f32 %v2946, %v522
    %v2964 = vmul.f32 %v2946, %v628
    %v2965 = vmul.f32 %v2946, %v612
    %v2966 = vmul.f32 %v2946, %v525
    %v2967 = vmul.f32 %v2946, %v629
    %v2968 = vmul.f32 %v2946, %v613
    %v2969 = vmul.f32 %v2946, %v528
    %v2970 = vmul.f32 %v2946, %v630
    %v2971 = vmul.f32 %v2946, %v614
    %v2972 = vmul.f32 %v2946, %v531
    %v2973 = vmul.f32 %v2946, %v631
    %v2974 = vmul.f32 %v2946, %v615
    %v2975 = vmul.f32 %v2946, %v534
    %v2976 = vmul.f32 %v2946, %v632
    %v2977 = vmul.f32 %v2946, %v616
    %v2978 = vmul.f32 %v2946, %v537
    %v2979 = vmul.f32 %v2946, %v633
    %v2980 = vmul.f32 %v2946, %v617
    %v2981 = vmul.f32 %v2946, %v540
    %v2982 = vmul.f32 %v2946, %v634
    %v2983 = vmul.f32 %v2946, %v618
    %v2984 = vmul.f32 %v2946, %v543
    %v2985 = vmul.f32 %v2946, %v635
    %v2986 = vmul.f32 %v2946, %v619
    %v2987 = vmul.f32 %v2946, %v546
    %v2988 = vmul.f32 %v2946, %v636
    %v2989 = vmul.f32 %v2946, %v620
    %v2990 = vmul.f32 %v2946, %v549
    %v2991 = vmul.f32 %v2946, %v637
    %v3037 = vrot.slane %v2947, 5
    %v3038 = vrot.slane %v2948, 5
    %v3039 = vsel %vm505, %v3037, %v3038
    %v3040 = vrot.slane %v2949, 5
    %v3041 = vsel %vm505, %v3038, %v3040
    %v3042 = vrot.slane %v2950, 5
    %v3043 = vrot.slane %v2951, 5
    %v3044 = vsel %vm505, %v3042, %v3043
    %v3045 = vrot.slane %v2952, 5
    %v3046 = vsel %vm505, %v3043, %v3045
    %v3047 = vrot.slane %v2953, 5
    %v3048 = vrot.slane %v2954, 5
    %v3049 = vsel %vm505, %v3047, %v3048
    %v3050 = vrot.slane %v2955, 5
    %v3051 = vsel %vm505, %v3048, %v3050
    %v3052 = vrot.slane %v2956, 5
    %v3053 = vrot.slane %v2957, 5
    %v3054 = vsel %vm505, %v3052, %v3053
    %v3055 = vrot.slane %v2958, 5
    %v3056 = vsel %vm505, %v3053, %v3055
    %v3057 = vrot.slane %v2959, 5
    %v3058 = vrot.slane %v2960, 5
    %v3059 = vsel %vm505, %v3057, %v3058
    %v3060 = vrot.slane %v2961, 5
    %v3061 = vsel %vm505, %v3058, %v3060
    %v3062 = vrot.slane %v2962, 5
    %v3063 = vrot.slane %v2963, 5
    %v3064 = vsel %vm505, %v3062, %v3063
    %v3065 = vrot.slane %v2964, 5
    %v3066 = vsel %vm505, %v3063, %v3065
    %v3067 = vrot.slane %v2965, 5
    %v3068 = vrot.slane %v2966, 5
    %v3069 = vsel %vm505, %v3067, %v3068
    %v3070 = vrot.slane %v2967, 5
    %v3071 = vsel %vm505, %v3068, %v3070
    %v3072 = vrot.slane %v2968, 5
    %v3073 = vrot.slane %v2969, 5
    %v3074 = vsel %vm505, %v3072, %v3073
    %v3075 = vrot.slane %v2970, 5
    %v3076 = vsel %vm505, %v3073, %v3075
    %v3077 = vrot.slane %v2971, 5
    %v3078 = vrot.slane %v2972, 5
    %v3079 = vsel %vm505, %v3077, %v3078
    %v3080 = vrot.slane %v2973, 5
    %v3081 = vsel %vm505, %v3078, %v3080
    %v3082 = vrot.slane %v2974, 5
    %v3083 = vrot.slane %v2975, 5
    %v3084 = vsel %vm505, %v3082, %v3083
    %v3085 = vrot.slane %v2976, 5
    %v3086 = vsel %vm505, %v3083, %v3085
    %v3087 = vrot.slane %v2977, 5
    %v3088 = vrot.slane %v2978, 5
    %v3089 = vsel %vm505, %v3087, %v3088
    %v3090 = vrot.slane %v2979, 5
    %v3091 = vsel %vm505, %v3088, %v3090
    %v3092 = vrot.slane %v2980, 5
    %v3093 = vrot.slane %v2981, 5
    %v3094 = vsel %vm505, %v3092, %v3093
    %v3095 = vrot.slane %v2982, 5
    %v3096 = vsel %vm505, %v3093, %v3095
    %v3097 = vrot.slane %v2983, 5
    %v3098 = vrot.slane %v2984, 5
    %v3099 = vsel %vm505, %v3097, %v3098
    %v3100 = vrot.slane %v2985, 5
    %v3101 = vsel %vm505, %v3098, %v3100
    %v3102 = vrot.slane %v2986, 5
    %v3103 = vrot.slane %v2987, 5
    %v3104 = vsel %vm505, %v3102, %v3103
    %v3105 = vrot.slane %v2988, 5
    %v3106 = vsel %vm505, %v3103, %v3105
    %v3107 = vrot.slane %v2989, 5
    %v3108 = vrot.slane %v2990, 5
    %v3109 = vsel %vm505, %v3107, %v3108
    %v3110 = vrot.slane %v2991, 5
    %v3111 = vsel %vm505, %v3108, %v3110
    %v3142 = vadd.f32 %v2915, %v3039
    %v3143 = vadd.f32 %v2916, %v3041
    %v3144 = vadd.f32 %v2917, %v3044
    %v3145 = vadd.f32 %v2918, %v3046
    %v3146 = vadd.f32 %v2919, %v3049
    %v3147 = vadd.f32 %v2920, %v3051
    %v3148 = vadd.f32 %v2921, %v3054
    %v3149 = vadd.f32 %v2922, %v3056
    %v3150 = vadd.f32 %v2923, %v3059
    %v3151 = vadd.f32 %v2924, %v3061
    %v3152 = vadd.f32 %v2925, %v3064
    %v3153 = vadd.f32 %v2926, %v3066
    %v3154 = vadd.f32 %v2927, %v3069
    %v3155 = vadd.f32 %v2928, %v3071
    %v3156 = vadd.f32 %v2929, %v3074
    %v3157 = vadd.f32 %v2930, %v3076
    %v3158 = vadd.f32 %v2931, %v3079
    %v3159 = vadd.f32 %v2932, %v3081
    %v3160 = vadd.f32 %v2933, %v3084
    %v3161 = vadd.f32 %v2934, %v3086
    %v3162 = vadd.f32 %v2935, %v3089
    %v3163 = vadd.f32 %v2936, %v3091
    %v3164 = vadd.f32 %v2937, %v3094
    %v3165 = vadd.f32 %v2938, %v3096
    %v3166 = vadd.f32 %v2939, %v3099
    %v3167 = vadd.f32 %v2940, %v3101
    %v3168 = vadd.f32 %v2941, %v3104
    %v3169 = vadd.f32 %v2942, %v3106
    %v3170 = vadd.f32 %v2943, %v3109
    %v3171 = vadd.f32 %v2944, %v3111
    %s3172 = sld [smem:[#allocation9 + $0x86]]
    %v3173 = vstv %s3172
    %v3174 = vmul.f32 %v3173, %v606
    %v3175 = vmul.f32 %v3173, %v507
    %v3176 = vmul.f32 %v3173, %v623
    %v3177 = vmul.f32 %v3173, %v607
    %v3178 = vmul.f32 %v3173, %v510
    %v3179 = vmul.f32 %v3173, %v624
    %v3180 = vmul.f32 %v3173, %v608
    %v3181 = vmul.f32 %v3173, %v513
    %v3182 = vmul.f32 %v3173, %v625
    %v3183 = vmul.f32 %v3173, %v609
    %v3184 = vmul.f32 %v3173, %v516
    %v3185 = vmul.f32 %v3173, %v626
    %v3186 = vmul.f32 %v3173, %v610
    %v3187 = vmul.f32 %v3173, %v519
    %v3188 = vmul.f32 %v3173, %v627
    %v3189 = vmul.f32 %v3173, %v611
    %v3190 = vmul.f32 %v3173, %v522
    %v3191 = vmul.f32 %v3173, %v628
    %v3192 = vmul.f32 %v3173, %v612
    %v3193 = vmul.f32 %v3173, %v525
    %v3194 = vmul.f32 %v3173, %v629
    %v3195 = vmul.f32 %v3173, %v613
    %v3196 = vmul.f32 %v3173, %v528
    %v3197 = vmul.f32 %v3173, %v630
    %v3198 = vmul.f32 %v3173, %v614
    %v3199 = vmul.f32 %v3173, %v531
    %v3200 = vmul.f32 %v3173, %v631
    %v3201 = vmul.f32 %v3173, %v615
    %v3202 = vmul.f32 %v3173, %v534
    %v3203 = vmul.f32 %v3173, %v632
    %v3204 = vmul.f32 %v3173, %v616
    %v3205 = vmul.f32 %v3173, %v537
    %v3206 = vmul.f32 %v3173, %v633
    %v3207 = vmul.f32 %v3173, %v617
    %v3208 = vmul.f32 %v3173, %v540
    %v3209 = vmul.f32 %v3173, %v634
    %v3210 = vmul.f32 %v3173, %v618
    %v3211 = vmul.f32 %v3173, %v543
    %v3212 = vmul.f32 %v3173, %v635
    %v3213 = vmul.f32 %v3173, %v619
    %v3214 = vmul.f32 %v3173, %v546
    %v3215 = vmul.f32 %v3173, %v636
    %v3216 = vmul.f32 %v3173, %v620
    %v3217 = vmul.f32 %v3173, %v549
    %v3218 = vmul.f32 %v3173, %v637
    %v3264 = vrot.slane %v3174, 6
    %v3265 = vrot.slane %v3175, 6
    %v3266 = vsel %vm1848, %v3264, %v3265
    %v3267 = vrot.slane %v3176, 6
    %v3268 = vsel %vm1848, %v3265, %v3267
    %v3269 = vrot.slane %v3177, 6
    %v3270 = vrot.slane %v3178, 6
    %v3271 = vsel %vm1848, %v3269, %v3270
    %v3272 = vrot.slane %v3179, 6
    %v3273 = vsel %vm1848, %v3270, %v3272
    %v3274 = vrot.slane %v3180, 6
    %v3275 = vrot.slane %v3181, 6
    %v3276 = vsel %vm1848, %v3274, %v3275
    %v3277 = vrot.slane %v3182, 6
    %v3278 = vsel %vm1848, %v3275, %v3277
    %v3279 = vrot.slane %v3183, 6
    %v3280 = vrot.slane %v3184, 6
    %v3281 = vsel %vm1848, %v3279, %v3280
    %v3282 = vrot.slane %v3185, 6
    %v3283 = vsel %vm1848, %v3280, %v3282
    %v3284 = vrot.slane %v3186, 6
    %v3285 = vrot.slane %v3187, 6
    %v3286 = vsel %vm1848, %v3284, %v3285
    %v3287 = vrot.slane %v3188, 6
    %v3288 = vsel %vm1848, %v3285, %v3287
    %v3289 = vrot.slane %v3189, 6
    %v3290 = vrot.slane %v3190, 6
    %v3291 = vsel %vm1848, %v3289, %v3290
    %v3292 = vrot.slane %v3191, 6
    %v3293 = vsel %vm1848, %v3290, %v3292
    %v3294 = vrot.slane %v3192, 6
    %v3295 = vrot.slane %v3193, 6
    %v3296 = vsel %vm1848, %v3294, %v3295
    %v3297 = vrot.slane %v3194, 6
    %v3298 = vsel %vm1848, %v3295, %v3297
    %v3299 = vrot.slane %v3195, 6
    %v3300 = vrot.slane %v3196, 6
    %v3301 = vsel %vm1848, %v3299, %v3300
    %v3302 = vrot.slane %v3197, 6
    %v3303 = vsel %vm1848, %v3300, %v3302
    %v3304 = vrot.slane %v3198, 6
    %v3305 = vrot.slane %v3199, 6
    %v3306 = vsel %vm1848, %v3304, %v3305
    %v3307 = vrot.slane %v3200, 6
    %v3308 = vsel %vm1848, %v3305, %v3307
    %v3309 = vrot.slane %v3201, 6
    %v3310 = vrot.slane %v3202, 6
    %v3311 = vsel %vm1848, %v3309, %v3310
    %v3312 = vrot.slane %v3203, 6
    %v3313 = vsel %vm1848, %v3310, %v3312
    %v3314 = vrot.slane %v3204, 6
    %v3315 = vrot.slane %v3205, 6
    %v3316 = vsel %vm1848, %v3314, %v3315
    %v3317 = vrot.slane %v3206, 6
    %v3318 = vsel %vm1848, %v3315, %v3317
    %v3319 = vrot.slane %v3207, 6
    %v3320 = vrot.slane %v3208, 6
    %v3321 = vsel %vm1848, %v3319, %v3320
    %v3322 = vrot.slane %v3209, 6
    %v3323 = vsel %vm1848, %v3320, %v3322
    %v3324 = vrot.slane %v3210, 6
    %v3325 = vrot.slane %v3211, 6
    %v3326 = vsel %vm1848, %v3324, %v3325
    %v3327 = vrot.slane %v3212, 6
    %v3328 = vsel %vm1848, %v3325, %v3327
    %v3329 = vrot.slane %v3213, 6
    %v3330 = vrot.slane %v3214, 6
    %v3331 = vsel %vm1848, %v3329, %v3330
    %v3332 = vrot.slane %v3215, 6
    %v3333 = vsel %vm1848, %v3330, %v3332
    %v3334 = vrot.slane %v3216, 6
    %v3335 = vrot.slane %v3217, 6
    %v3336 = vsel %vm1848, %v3334, %v3335
    %v3337 = vrot.slane %v3218, 6
    %v3338 = vsel %vm1848, %v3335, %v3337
    %v3369 = vadd.f32 %v3142, %v3266
    %v3370 = vadd.f32 %v3143, %v3268
    %v3371 = vadd.f32 %v3144, %v3271
    %v3372 = vadd.f32 %v3145, %v3273
    %v3373 = vadd.f32 %v3146, %v3276
    %v3374 = vadd.f32 %v3147, %v3278
    %v3375 = vadd.f32 %v3148, %v3281
    %v3376 = vadd.f32 %v3149, %v3283
    %v3377 = vadd.f32 %v3150, %v3286
    %v3378 = vadd.f32 %v3151, %v3288
    %v3379 = vadd.f32 %v3152, %v3291
    %v3380 = vadd.f32 %v3153, %v3293
    %v3381 = vadd.f32 %v3154, %v3296
    %v3382 = vadd.f32 %v3155, %v3298
    %v3383 = vadd.f32 %v3156, %v3301
    %v3384 = vadd.f32 %v3157, %v3303
    %v3385 = vadd.f32 %v3158, %v3306
    %v3386 = vadd.f32 %v3159, %v3308
    %v3387 = vadd.f32 %v3160, %v3311
    %v3388 = vadd.f32 %v3161, %v3313
    %v3389 = vadd.f32 %v3162, %v3316
    %v3390 = vadd.f32 %v3163, %v3318
    %v3391 = vadd.f32 %v3164, %v3321
    %v3392 = vadd.f32 %v3165, %v3323
    %v3393 = vadd.f32 %v3166, %v3326
    %v3394 = vadd.f32 %v3167, %v3328
    %v3395 = vadd.f32 %v3168, %v3331
    %v3396 = vadd.f32 %v3169, %v3333
    %v3397 = vadd.f32 %v3170, %v3336
    %v3398 = vadd.f32 %v3171, %v3338
    %s3399 = sld [smem:[#allocation9 + $0x100]]
    %v3400 = vstv %s3399
    %v3401 = vmul.f32 %v3400, %v606
    %v3402 = vmul.f32 %v3400, %v507
    %v3403 = vmul.f32 %v3400, %v607
    %v3404 = vmul.f32 %v3400, %v510
    %v3405 = vmul.f32 %v3400, %v608
    %v3406 = vmul.f32 %v3400, %v513
    %v3407 = vmul.f32 %v3400, %v609
    %v3408 = vmul.f32 %v3400, %v516
    %v3409 = vmul.f32 %v3400, %v610
    %v3410 = vmul.f32 %v3400, %v519
    %v3411 = vmul.f32 %v3400, %v611
    %v3412 = vmul.f32 %v3400, %v522
    %v3413 = vmul.f32 %v3400, %v612
    %v3414 = vmul.f32 %v3400, %v525
    %v3415 = vmul.f32 %v3400, %v613
    %v3416 = vmul.f32 %v3400, %v528
    %v3417 = vmul.f32 %v3400, %v614
    %v3418 = vmul.f32 %v3400, %v531
    %v3419 = vmul.f32 %v3400, %v615
    %v3420 = vmul.f32 %v3400, %v534
    %v3421 = vmul.f32 %v3400, %v616
    %v3422 = vmul.f32 %v3400, %v537
    %v3423 = vmul.f32 %v3400, %v617
    %v3424 = vmul.f32 %v3400, %v540
    %v3425 = vmul.f32 %v3400, %v618
    %v3426 = vmul.f32 %v3400, %v543
    %v3427 = vmul.f32 %v3400, %v619
    %v3428 = vmul.f32 %v3400, %v546
    %v3429 = vmul.f32 %v3400, %v620
    %v3430 = vmul.f32 %v3400, %v549
    %v3431 = vmul.f32 %v3400, %v621
    %v3432 = vmul.f32 %v3400, %v552
    %v3433 = vadd.f32 %v3369, %v3401
    %v3434 = vadd.f32 %v3370, %v3402
    %v3435 = vadd.f32 %v3369, %v3403
    %v3436 = vadd.f32 %v3370, %v3404
    %v3437 = vadd.f32 %v3371, %v3405
    %v3438 = vadd.f32 %v3372, %v3406
    %v3439 = vadd.f32 %v3373, %v3407
    %v3440 = vadd.f32 %v3374, %v3408
    %v3441 = vadd.f32 %v3375, %v3409
    %v3442 = vadd.f32 %v3376, %v3410
    %v3443 = vadd.f32 %v3377, %v3411
    %v3444 = vadd.f32 %v3378, %v3412
    %v3445 = vadd.f32 %v3379, %v3413
    %v3446 = vadd.f32 %v3380, %v3414
    %v3447 = vadd.f32 %v3381, %v3415
    %v3448 = vadd.f32 %v3382, %v3416
    %v3449 = vadd.f32 %v3383, %v3417
    %v3450 = vadd.f32 %v3384, %v3418
    %v3451 = vadd.f32 %v3385, %v3419
    %v3452 = vadd.f32 %v3386, %v3420
    %v3453 = vadd.f32 %v3387, %v3421
    %v3454 = vadd.f32 %v3388, %v3422
    %v3455 = vadd.f32 %v3389, %v3423
    %v3456 = vadd.f32 %v3390, %v3424
    %v3457 = vadd.f32 %v3391, %v3425
    %v3458 = vadd.f32 %v3392, %v3426
    %v3459 = vadd.f32 %v3393, %v3427
    %v3460 = vadd.f32 %v3394, %v3428
    %v3461 = vadd.f32 %v3395, %v3429
    %v3462 = vadd.f32 %v3396, %v3430
    %v3463 = vadd.f32 %v3397, %v3431
    %v3464 = vadd.f32 %v3398, %v3432
    %s3465 = sld [smem:[#allocation9 + $0x101]]
    %v3466 = vstv %s3465
    %v3467 = vmul.f32 %v3466, %v606
    %v3468 = vmul.f32 %v3466, %v507
    %v3469 = vmul.f32 %v3466, %v623
    %v3470 = vmul.f32 %v3466, %v607
    %v3471 = vmul.f32 %v3466, %v510
    %v3472 = vmul.f32 %v3466, %v624
    %v3473 = vmul.f32 %v3466, %v608
    %v3474 = vmul.f32 %v3466, %v513
    %v3475 = vmul.f32 %v3466, %v625
    %v3476 = vmul.f32 %v3466, %v609
    %v3477 = vmul.f32 %v3466, %v516
    %v3478 = vmul.f32 %v3466, %v626
    %v3479 = vmul.f32 %v3466, %v610
    %v3480 = vmul.f32 %v3466, %v519
    %v3481 = vmul.f32 %v3466, %v627
    %v3482 = vmul.f32 %v3466, %v611
    %v3483 = vmul.f32 %v3466, %v522
    %v3484 = vmul.f32 %v3466, %v628
    %v3485 = vmul.f32 %v3466, %v612
    %v3486 = vmul.f32 %v3466, %v525
    %v3487 = vmul.f32 %v3466, %v629
    %v3488 = vmul.f32 %v3466, %v613
    %v3489 = vmul.f32 %v3466, %v528
    %v3490 = vmul.f32 %v3466, %v630
    %v3491 = vmul.f32 %v3466, %v614
    %v3492 = vmul.f32 %v3466, %v531
    %v3493 = vmul.f32 %v3466, %v631
    %v3494 = vmul.f32 %v3466, %v615
    %v3495 = vmul.f32 %v3466, %v534
    %v3496 = vmul.f32 %v3466, %v632
    %v3497 = vmul.f32 %v3466, %v616
    %v3498 = vmul.f32 %v3466, %v537
    %v3499 = vmul.f32 %v3466, %v633
    %v3500 = vmul.f32 %v3466, %v617
    %v3501 = vmul.f32 %v3466, %v540
    %v3502 = vmul.f32 %v3466, %v634
    %v3503 = vmul.f32 %v3466, %v618
    %v3504 = vmul.f32 %v3466, %v543
    %v3505 = vmul.f32 %v3466, %v635
    %v3506 = vmul.f32 %v3466, %v619
    %v3507 = vmul.f32 %v3466, %v546
    %v3508 = vmul.f32 %v3466, %v636
    %v3509 = vmul.f32 %v3466, %v620
    %v3510 = vmul.f32 %v3466, %v549
    %v3511 = vmul.f32 %v3466, %v637
    %v3512 = vmul.f32 %v3466, %v621
    %v3513 = vmul.f32 %v3466, %v552
    %v3514 = vmul.f32 %v3466, %v638
    %v3563 = vrot.slane %v3467, 1
    %v3564 = vrot.slane %v3468, 1
    %v3565 = vsel %vm784, %v3563, %v3564
    %v3566 = vrot.slane %v3469, 1
    %v3567 = vsel %vm784, %v3564, %v3566
    %v3568 = vrot.slane %v3470, 1
    %v3569 = vrot.slane %v3471, 1
    %v3570 = vsel %vm784, %v3568, %v3569
    %v3571 = vrot.slane %v3472, 1
    %v3572 = vsel %vm784, %v3569, %v3571
    %v3573 = vrot.slane %v3473, 1
    %v3574 = vrot.slane %v3474, 1
    %v3575 = vsel %vm784, %v3573, %v3574
    %v3576 = vrot.slane %v3475, 1
    %v3577 = vsel %vm784, %v3574, %v3576
    %v3578 = vrot.slane %v3476, 1
    %v3579 = vrot.slane %v3477, 1
    %v3580 = vsel %vm784, %v3578, %v3579
    %v3581 = vrot.slane %v3478, 1
    %v3582 = vsel %vm784, %v3579, %v3581
    %v3583 = vrot.slane %v3479, 1
    %v3584 = vrot.slane %v3480, 1
    %v3585 = vsel %vm784, %v3583, %v3584
    %v3586 = vrot.slane %v3481, 1
    %v3587 = vsel %vm784, %v3584, %v3586
    %v3588 = vrot.slane %v3482, 1
    %v3589 = vrot.slane %v3483, 1
    %v3590 = vsel %vm784, %v3588, %v3589
    %v3591 = vrot.slane %v3484, 1
    %v3592 = vsel %vm784, %v3589, %v3591
    %v3593 = vrot.slane %v3485, 1
    %v3594 = vrot.slane %v3486, 1
    %v3595 = vsel %vm784, %v3593, %v3594
    %v3596 = vrot.slane %v3487, 1
    %v3597 = vsel %vm784, %v3594, %v3596
    %v3598 = vrot.slane %v3488, 1
    %v3599 = vrot.slane %v3489, 1
    %v3600 = vsel %vm784, %v3598, %v3599
    %v3601 = vrot.slane %v3490, 1
    %v3602 = vsel %vm784, %v3599, %v3601
    %v3603 = vrot.slane %v3491, 1
    %v3604 = vrot.slane %v3492, 1
    %v3605 = vsel %vm784, %v3603, %v3604
    %v3606 = vrot.slane %v3493, 1
    %v3607 = vsel %vm784, %v3604, %v3606
    %v3608 = vrot.slane %v3494, 1
    %v3609 = vrot.slane %v3495, 1
    %v3610 = vsel %vm784, %v3608, %v3609
    %v3611 = vrot.slane %v3496, 1
    %v3612 = vsel %vm784, %v3609, %v3611
    %v3613 = vrot.slane %v3497, 1
    %v3614 = vrot.slane %v3498, 1
    %v3615 = vsel %vm784, %v3613, %v3614
    %v3616 = vrot.slane %v3499, 1
    %v3617 = vsel %vm784, %v3614, %v3616
    %v3618 = vrot.slane %v3500, 1
    %v3619 = vrot.slane %v3501, 1
    %v3620 = vsel %vm784, %v3618, %v3619
    %v3621 = vrot.slane %v3502, 1
    %v3622 = vsel %vm784, %v3619, %v3621
    %v3623 = vrot.slane %v3503, 1
    %v3624 = vrot.slane %v3504, 1
    %v3625 = vsel %vm784, %v3623, %v3624
    %v3626 = vrot.slane %v3505, 1
    %v3627 = vsel %vm784, %v3624, %v3626
    %v3628 = vrot.slane %v3506, 1
    %v3629 = vrot.slane %v3507, 1
    %v3630 = vsel %vm784, %v3628, %v3629
    %v3631 = vrot.slane %v3508, 1
    %v3632 = vsel %vm784, %v3629, %v3631
    %v3633 = vrot.slane %v3509, 1
    %v3634 = vrot.slane %v3510, 1
    %v3635 = vsel %vm784, %v3633, %v3634
    %v3636 = vrot.slane %v3511, 1
    %v3637 = vsel %vm784, %v3634, %v3636
    %v3638 = vrot.slane %v3512, 1
    %v3639 = vrot.slane %v3513, 1
    %v3640 = vsel %vm784, %v3638, %v3639
    %v3641 = vrot.slane %v3514, 1
    %v3642 = vsel %vm784, %v3639, %v3641
    %v3675 = vadd.f32 %v3433, %v3565
    %v3676 = vadd.f32 %v3434, %v3567
    %v3677 = vadd.f32 %v3435, %v3570
    %v3678 = vadd.f32 %v3436, %v3572
    %v3679 = vadd.f32 %v3437, %v3575
    %v3680 = vadd.f32 %v3438, %v3577
    %v3681 = vadd.f32 %v3439, %v3580
    %v3682 = vadd.f32 %v3440, %v3582
    %v3683 = vadd.f32 %v3441, %v3585
    %v3684 = vadd.f32 %v3442, %v3587
    %v3685 = vadd.f32 %v3443, %v3590
    %v3686 = vadd.f32 %v3444, %v3592
    %v3687 = vadd.f32 %v3445, %v3595
    %v3688 = vadd.f32 %v3446, %v3597
    %v3689 = vadd.f32 %v3447, %v3600
    %v3690 = vadd.f32 %v3448, %v3602
    %v3691 = vadd.f32 %v3449, %v3605
    %v3692 = vadd.f32 %v3450, %v3607
    %v3693 = vadd.f32 %v3451, %v3610
    %v3694 = vadd.f32 %v3452, %v3612
    %v3695 = vadd.f32 %v3453, %v3615
    %v3696 = vadd.f32 %v3454, %v3617
    %v3697 = vadd.f32 %v3455, %v3620
    %v3698 = vadd.f32 %v3456, %v3622
    %v3699 = vadd.f32 %v3457, %v3625
    %v3700 = vadd.f32 %v3458, %v3627
    %v3701 = vadd.f32 %v3459, %v3630
    %v3702 = vadd.f32 %v3460, %v3632
    %v3703 = vadd.f32 %v3461, %v3635
    %v3704 = vadd.f32 %v3462, %v3637
    %v3705 = vadd.f32 %v3463, %v3640
    %v3706 = vadd.f32 %v3464, %v3642
    %s3707 = sld [smem:[#allocation9 + $0x102]]
    %v3708 = vstv %s3707
    %v3709 = vmul.f32 %v3708, %v606
    %v3710 = vmul.f32 %v3708, %v507
    %v3711 = vmul.f32 %v3708, %v623
    %v3712 = vmul.f32 %v3708, %v607
    %v3713 = vmul.f32 %v3708, %v510
    %v3714 = vmul.f32 %v3708, %v624
    %v3715 = vmul.f32 %v3708, %v608
    %v3716 = vmul.f32 %v3708, %v513
    %v3717 = vmul.f32 %v3708, %v625
    %v3718 = vmul.f32 %v3708, %v609
    %v3719 = vmul.f32 %v3708, %v516
    %v3720 = vmul.f32 %v3708, %v626
    %v3721 = vmul.f32 %v3708, %v610
    %v3722 = vmul.f32 %v3708, %v519
    %v3723 = vmul.f32 %v3708, %v627
    %v3724 = vmul.f32 %v3708, %v611
    %v3725 = vmul.f32 %v3708, %v522
    %v3726 = vmul.f32 %v3708, %v628
    %v3727 = vmul.f32 %v3708, %v612
    %v3728 = vmul.f32 %v3708, %v525
    %v3729 = vmul.f32 %v3708, %v629
    %v3730 = vmul.f32 %v3708, %v613
    %v3731 = vmul.f32 %v3708, %v528
    %v3732 = vmul.f32 %v3708, %v630
    %v3733 = vmul.f32 %v3708, %v614
    %v3734 = vmul.f32 %v3708, %v531
    %v3735 = vmul.f32 %v3708, %v631
    %v3736 = vmul.f32 %v3708, %v615
    %v3737 = vmul.f32 %v3708, %v534
    %v3738 = vmul.f32 %v3708, %v632
    %v3739 = vmul.f32 %v3708, %v616
    %v3740 = vmul.f32 %v3708, %v537
    %v3741 = vmul.f32 %v3708, %v633
    %v3742 = vmul.f32 %v3708, %v617
    %v3743 = vmul.f32 %v3708, %v540
    %v3744 = vmul.f32 %v3708, %v634
    %v3745 = vmul.f32 %v3708, %v618
    %v3746 = vmul.f32 %v3708, %v543
    %v3747 = vmul.f32 %v3708, %v635
    %v3748 = vmul.f32 %v3708, %v619
    %v3749 = vmul.f32 %v3708, %v546
    %v3750 = vmul.f32 %v3708, %v636
    %v3751 = vmul.f32 %v3708, %v620
    %v3752 = vmul.f32 %v3708, %v549
    %v3753 = vmul.f32 %v3708, %v637
    %v3754 = vmul.f32 %v3708, %v621
    %v3755 = vmul.f32 %v3708, %v552
    %v3756 = vmul.f32 %v3708, %v638
    %v3805 = vrot.slane %v3709, 2
    %v3806 = vrot.slane %v3710, 2
    %v3807 = vsel %vm997, %v3805, %v3806
    %v3808 = vrot.slane %v3711, 2
    %v3809 = vsel %vm997, %v3806, %v3808
    %v3810 = vrot.slane %v3712, 2
    %v3811 = vrot.slane %v3713, 2
    %v3812 = vsel %vm997, %v3810, %v3811
    %v3813 = vrot.slane %v3714, 2
    %v3814 = vsel %vm997, %v3811, %v3813
    %v3815 = vrot.slane %v3715, 2
    %v3816 = vrot.slane %v3716, 2
    %v3817 = vsel %vm997, %v3815, %v3816
    %v3818 = vrot.slane %v3717, 2
    %v3819 = vsel %vm997, %v3816, %v3818
    %v3820 = vrot.slane %v3718, 2
    %v3821 = vrot.slane %v3719, 2
    %v3822 = vsel %vm997, %v3820, %v3821
    %v3823 = vrot.slane %v3720, 2
    %v3824 = vsel %vm997, %v3821, %v3823
    %v3825 = vrot.slane %v3721, 2
    %v3826 = vrot.slane %v3722, 2
    %v3827 = vsel %vm997, %v3825, %v3826
    %v3828 = vrot.slane %v3723, 2
    %v3829 = vsel %vm997, %v3826, %v3828
    %v3830 = vrot.slane %v3724, 2
    %v3831 = vrot.slane %v3725, 2
    %v3832 = vsel %vm997, %v3830, %v3831
    %v3833 = vrot.slane %v3726, 2
    %v3834 = vsel %vm997, %v3831, %v3833
    %v3835 = vrot.slane %v3727, 2
    %v3836 = vrot.slane %v3728, 2
    %v3837 = vsel %vm997, %v3835, %v3836
    %v3838 = vrot.slane %v3729, 2
    %v3839 = vsel %vm997, %v3836, %v3838
    %v3840 = vrot.slane %v3730, 2
    %v3841 = vrot.slane %v3731, 2
    %v3842 = vsel %vm997, %v3840, %v3841
    %v3843 = vrot.slane %v3732, 2
    %v3844 = vsel %vm997, %v3841, %v3843
    %v3845 = vrot.slane %v3733, 2
    %v3846 = vrot.slane %v3734, 2
    %v3847 = vsel %vm997, %v3845, %v3846
    %v3848 = vrot.slane %v3735, 2
    %v3849 = vsel %vm997, %v3846, %v3848
    %v3850 = vrot.slane %v3736, 2
    %v3851 = vrot.slane %v3737, 2
    %v3852 = vsel %vm997, %v3850, %v3851
    %v3853 = vrot.slane %v3738, 2
    %v3854 = vsel %vm997, %v3851, %v3853
    %v3855 = vrot.slane %v3739, 2
    %v3856 = vrot.slane %v3740, 2
    %v3857 = vsel %vm997, %v3855, %v3856
    %v3858 = vrot.slane %v3741, 2
    %v3859 = vsel %vm997, %v3856, %v3858
    %v3860 = vrot.slane %v3742, 2
    %v3861 = vrot.slane %v3743, 2
    %v3862 = vsel %vm997, %v3860, %v3861
    %v3863 = vrot.slane %v3744, 2
    %v3864 = vsel %vm997, %v3861, %v3863
    %v3865 = vrot.slane %v3745, 2
    %v3866 = vrot.slane %v3746, 2
    %v3867 = vsel %vm997, %v3865, %v3866
    %v3868 = vrot.slane %v3747, 2
    %v3869 = vsel %vm997, %v3866, %v3868
    %v3870 = vrot.slane %v3748, 2
    %v3871 = vrot.slane %v3749, 2
    %v3872 = vsel %vm997, %v3870, %v3871
    %v3873 = vrot.slane %v3750, 2
    %v3874 = vsel %vm997, %v3871, %v3873
    %v3875 = vrot.slane %v3751, 2
    %v3876 = vrot.slane %v3752, 2
    %v3877 = vsel %vm997, %v3875, %v3876
    %v3878 = vrot.slane %v3753, 2
    %v3879 = vsel %vm997, %v3876, %v3878
    %v3880 = vrot.slane %v3754, 2
    %v3881 = vrot.slane %v3755, 2
    %v3882 = vsel %vm997, %v3880, %v3881
    %v3883 = vrot.slane %v3756, 2
    %v3884 = vsel %vm997, %v3881, %v3883
    %v3917 = vadd.f32 %v3675, %v3807
    %v3918 = vadd.f32 %v3676, %v3809
    %v3919 = vadd.f32 %v3677, %v3812
    %v3920 = vadd.f32 %v3678, %v3814
    %v3921 = vadd.f32 %v3679, %v3817
    %v3922 = vadd.f32 %v3680, %v3819
    %v3923 = vadd.f32 %v3681, %v3822
    %v3924 = vadd.f32 %v3682, %v3824
    %v3925 = vadd.f32 %v3683, %v3827
    %v3926 = vadd.f32 %v3684, %v3829
    %v3927 = vadd.f32 %v3685, %v3832
    %v3928 = vadd.f32 %v3686, %v3834
    %v3929 = vadd.f32 %v3687, %v3837
    %v3930 = vadd.f32 %v3688, %v3839
    %v3931 = vadd.f32 %v3689, %v3842
    %v3932 = vadd.f32 %v3690, %v3844
    %v3933 = vadd.f32 %v3691, %v3847
    %v3934 = vadd.f32 %v3692, %v3849
    %v3935 = vadd.f32 %v3693, %v3852
    %v3936 = vadd.f32 %v3694, %v3854
    %v3937 = vadd.f32 %v3695, %v3857
    %v3938 = vadd.f32 %v3696, %v3859
    %v3939 = vadd.f32 %v3697, %v3862
    %v3940 = vadd.f32 %v3698, %v3864
    %v3941 = vadd.f32 %v3699, %v3867
    %v3942 = vadd.f32 %v3700, %v3869
    %v3943 = vadd.f32 %v3701, %v3872
    %v3944 = vadd.f32 %v3702, %v3874
    %v3945 = vadd.f32 %v3703, %v3877
    %v3946 = vadd.f32 %v3704, %v3879
    %v3947 = vadd.f32 %v3705, %v3882
    %v3948 = vadd.f32 %v3706, %v3884
    %s3949 = sld [smem:[#allocation9 + $0x103]]
    %v3950 = vstv %s3949
    %v3951 = vmul.f32 %v3950, %v606
    %v3952 = vmul.f32 %v3950, %v507
    %v3953 = vmul.f32 %v3950, %v623
    %v3954 = vmul.f32 %v3950, %v607
    %v3955 = vmul.f32 %v3950, %v510
    %v3956 = vmul.f32 %v3950, %v624
    %v3957 = vmul.f32 %v3950, %v608
    %v3958 = vmul.f32 %v3950, %v513
    %v3959 = vmul.f32 %v3950, %v625
    %v3960 = vmul.f32 %v3950, %v609
    %v3961 = vmul.f32 %v3950, %v516
    %v3962 = vmul.f32 %v3950, %v626
    %v3963 = vmul.f32 %v3950, %v610
    %v3964 = vmul.f32 %v3950, %v519
    %v3965 = vmul.f32 %v3950, %v627
    %v3966 = vmul.f32 %v3950, %v611
    %v3967 = vmul.f32 %v3950, %v522
    %v3968 = vmul.f32 %v3950, %v628
    %v3969 = vmul.f32 %v3950, %v612
    %v3970 = vmul.f32 %v3950, %v525
    %v3971 = vmul.f32 %v3950, %v629
    %v3972 = vmul.f32 %v3950, %v613
    %v3973 = vmul.f32 %v3950, %v528
    %v3974 = vmul.f32 %v3950, %v630
    %v3975 = vmul.f32 %v3950, %v614
    %v3976 = vmul.f32 %v3950, %v531
    %v3977 = vmul.f32 %v3950, %v631
    %v3978 = vmul.f32 %v3950, %v615
    %v3979 = vmul.f32 %v3950, %v534
    %v3980 = vmul.f32 %v3950, %v632
    %v3981 = vmul.f32 %v3950, %v616
    %v3982 = vmul.f32 %v3950, %v537
    %v3983 = vmul.f32 %v3950, %v633
    %v3984 = vmul.f32 %v3950, %v617
    %v3985 = vmul.f32 %v3950, %v540
    %v3986 = vmul.f32 %v3950, %v634
    %v3987 = vmul.f32 %v3950, %v618
    %v3988 = vmul.f32 %v3950, %v543
    %v3989 = vmul.f32 %v3950, %v635
    %v3990 = vmul.f32 %v3950, %v619
    %v3991 = vmul.f32 %v3950, %v546
    %v3992 = vmul.f32 %v3950, %v636
    %v3993 = vmul.f32 %v3950, %v620
    %v3994 = vmul.f32 %v3950, %v549
    %v3995 = vmul.f32 %v3950, %v637
    %v3996 = vmul.f32 %v3950, %v621
    %v3997 = vmul.f32 %v3950, %v552
    %v3998 = vmul.f32 %v3950, %v638
    %v4047 = vrot.slane %v3951, 3
    %v4048 = vrot.slane %v3952, 3
    %v4049 = vsel %vm1210, %v4047, %v4048
    %v4050 = vrot.slane %v3953, 3
    %v4051 = vsel %vm1210, %v4048, %v4050
    %v4052 = vrot.slane %v3954, 3
    %v4053 = vrot.slane %v3955, 3
    %v4054 = vsel %vm1210, %v4052, %v4053
    %v4055 = vrot.slane %v3956, 3
    %v4056 = vsel %vm1210, %v4053, %v4055
    %v4057 = vrot.slane %v3957, 3
    %v4058 = vrot.slane %v3958, 3
    %v4059 = vsel %vm1210, %v4057, %v4058
    %v4060 = vrot.slane %v3959, 3
    %v4061 = vsel %vm1210, %v4058, %v4060
    %v4062 = vrot.slane %v3960, 3
    %v4063 = vrot.slane %v3961, 3
    %v4064 = vsel %vm1210, %v4062, %v4063
    %v4065 = vrot.slane %v3962, 3
    %v4066 = vsel %vm1210, %v4063, %v4065
    %v4067 = vrot.slane %v3963, 3
    %v4068 = vrot.slane %v3964, 3
    %v4069 = vsel %vm1210, %v4067, %v4068
    %v4070 = vrot.slane %v3965, 3
    %v4071 = vsel %vm1210, %v4068, %v4070
    %v4072 = vrot.slane %v3966, 3
    %v4073 = vrot.slane %v3967, 3
    %v4074 = vsel %vm1210, %v4072, %v4073
    %v4075 = vrot.slane %v3968, 3
    %v4076 = vsel %vm1210, %v4073, %v4075
    %v4077 = vrot.slane %v3969, 3
    %v4078 = vrot.slane %v3970, 3
    %v4079 = vsel %vm1210, %v4077, %v4078
    %v4080 = vrot.slane %v3971, 3
    %v4081 = vsel %vm1210, %v4078, %v4080
    %v4082 = vrot.slane %v3972, 3
    %v4083 = vrot.slane %v3973, 3
    %v4084 = vsel %vm1210, %v4082, %v4083
    %v4085 = vrot.slane %v3974, 3
    %v4086 = vsel %vm1210, %v4083, %v4085
    %v4087 = vrot.slane %v3975, 3
    %v4088 = vrot.slane %v3976, 3
    %v4089 = vsel %vm1210, %v4087, %v4088
    %v4090 = vrot.slane %v3977, 3
    %v4091 = vsel %vm1210, %v4088, %v4090
    %v4092 = vrot.slane %v3978, 3
    %v4093 = vrot.slane %v3979, 3
    %v4094 = vsel %vm1210, %v4092, %v4093
    %v4095 = vrot.slane %v3980, 3
    %v4096 = vsel %vm1210, %v4093, %v4095
    %v4097 = vrot.slane %v3981, 3
    %v4098 = vrot.slane %v3982, 3
    %v4099 = vsel %vm1210, %v4097, %v4098
    %v4100 = vrot.slane %v3983, 3
    %v4101 = vsel %vm1210, %v4098, %v4100
    %v4102 = vrot.slane %v3984, 3
    %v4103 = vrot.slane %v3985, 3
    %v4104 = vsel %vm1210, %v4102, %v4103
    %v4105 = vrot.slane %v3986, 3
    %v4106 = vsel %vm1210, %v4103, %v4105
    %v4107 = vrot.slane %v3987, 3
    %v4108 = vrot.slane %v3988, 3
    %v4109 = vsel %vm1210, %v4107, %v4108
    %v4110 = vrot.slane %v3989, 3
    %v4111 = vsel %vm1210, %v4108, %v4110
    %v4112 = vrot.slane %v3990, 3
    %v4113 = vrot.slane %v3991, 3
    %v4114 = vsel %vm1210, %v4112, %v4113
    %v4115 = vrot.slane %v3992, 3
    %v4116 = vsel %vm1210, %v4113, %v4115
    %v4117 = vrot.slane %v3993, 3
    %v4118 = vrot.slane %v3994, 3
    %v4119 = vsel %vm1210, %v4117, %v4118
    %v4120 = vrot.slane %v3995, 3
    %v4121 = vsel %vm1210, %v4118, %v4120
    %v4122 = vrot.slane %v3996, 3
    %v4123 = vrot.slane %v3997, 3
    %v4124 = vsel %vm1210, %v4122, %v4123
    %v4125 = vrot.slane %v3998, 3
    %v4126 = vsel %vm1210, %v4123, %v4125
    %v4159 = vadd.f32 %v3917, %v4049
    %v4160 = vadd.f32 %v3918, %v4051
    %v4161 = vadd.f32 %v3919, %v4054
    %v4162 = vadd.f32 %v3920, %v4056
    %v4163 = vadd.f32 %v3921, %v4059
    %v4164 = vadd.f32 %v3922, %v4061
    %v4165 = vadd.f32 %v3923, %v4064
    %v4166 = vadd.f32 %v3924, %v4066
    %v4167 = vadd.f32 %v3925, %v4069
    %v4168 = vadd.f32 %v3926, %v4071
    %v4169 = vadd.f32 %v3927, %v4074
    %v4170 = vadd.f32 %v3928, %v4076
    %v4171 = vadd.f32 %v3929, %v4079
    %v4172 = vadd.f32 %v3930, %v4081
    %v4173 = vadd.f32 %v3931, %v4084
    %v4174 = vadd.f32 %v3932, %v4086
    %v4175 = vadd.f32 %v3933, %v4089
    %v4176 = vadd.f32 %v3934, %v4091
    %v4177 = vadd.f32 %v3935, %v4094
    %v4178 = vadd.f32 %v3936, %v4096
    %v4179 = vadd.f32 %v3937, %v4099
    %v4180 = vadd.f32 %v3938, %v4101
    %v4181 = vadd.f32 %v3939, %v4104
    %v4182 = vadd.f32 %v3940, %v4106
    %v4183 = vadd.f32 %v3941, %v4109
    %v4184 = vadd.f32 %v3942, %v4111
    %v4185 = vadd.f32 %v3943, %v4114
    %v4186 = vadd.f32 %v3944, %v4116
    %v4187 = vadd.f32 %v3945, %v4119
    %v4188 = vadd.f32 %v3946, %v4121
    %v4189 = vadd.f32 %v3947, %v4124
    %v4190 = vadd.f32 %v3948, %v4126
    %s4191 = sld [smem:[#allocation9 + $0x104]]
    %v4192 = vstv %s4191
    %v4193 = vmul.f32 %v4192, %v606
    %v4194 = vmul.f32 %v4192, %v507
    %v4195 = vmul.f32 %v4192, %v623
    %v4196 = vmul.f32 %v4192, %v607
    %v4197 = vmul.f32 %v4192, %v510
    %v4198 = vmul.f32 %v4192, %v624
    %v4199 = vmul.f32 %v4192, %v608
    %v4200 = vmul.f32 %v4192, %v513
    %v4201 = vmul.f32 %v4192, %v625
    %v4202 = vmul.f32 %v4192, %v609
    %v4203 = vmul.f32 %v4192, %v516
    %v4204 = vmul.f32 %v4192, %v626
    %v4205 = vmul.f32 %v4192, %v610
    %v4206 = vmul.f32 %v4192, %v519
    %v4207 = vmul.f32 %v4192, %v627
    %v4208 = vmul.f32 %v4192, %v611
    %v4209 = vmul.f32 %v4192, %v522
    %v4210 = vmul.f32 %v4192, %v628
    %v4211 = vmul.f32 %v4192, %v612
    %v4212 = vmul.f32 %v4192, %v525
    %v4213 = vmul.f32 %v4192, %v629
    %v4214 = vmul.f32 %v4192, %v613
    %v4215 = vmul.f32 %v4192, %v528
    %v4216 = vmul.f32 %v4192, %v630
    %v4217 = vmul.f32 %v4192, %v614
    %v4218 = vmul.f32 %v4192, %v531
    %v4219 = vmul.f32 %v4192, %v631
    %v4220 = vmul.f32 %v4192, %v615
    %v4221 = vmul.f32 %v4192, %v534
    %v4222 = vmul.f32 %v4192, %v632
    %v4223 = vmul.f32 %v4192, %v616
    %v4224 = vmul.f32 %v4192, %v537
    %v4225 = vmul.f32 %v4192, %v633
    %v4226 = vmul.f32 %v4192, %v617
    %v4227 = vmul.f32 %v4192, %v540
    %v4228 = vmul.f32 %v4192, %v634
    %v4229 = vmul.f32 %v4192, %v618
    %v4230 = vmul.f32 %v4192, %v543
    %v4231 = vmul.f32 %v4192, %v635
    %v4232 = vmul.f32 %v4192, %v619
    %v4233 = vmul.f32 %v4192, %v546
    %v4234 = vmul.f32 %v4192, %v636
    %v4235 = vmul.f32 %v4192, %v620
    %v4236 = vmul.f32 %v4192, %v549
    %v4237 = vmul.f32 %v4192, %v637
    %v4238 = vmul.f32 %v4192, %v621
    %v4239 = vmul.f32 %v4192, %v552
    %v4240 = vmul.f32 %v4192, %v638
    %v4289 = vrot.slane %v4193, 4
    %v4290 = vrot.slane %v4194, 4
    %v4291 = vsel %vm1423, %v4289, %v4290
    %v4292 = vrot.slane %v4195, 4
    %v4293 = vsel %vm1423, %v4290, %v4292
    %v4294 = vrot.slane %v4196, 4
    %v4295 = vrot.slane %v4197, 4
    %v4296 = vsel %vm1423, %v4294, %v4295
    %v4297 = vrot.slane %v4198, 4
    %v4298 = vsel %vm1423, %v4295, %v4297
    %v4299 = vrot.slane %v4199, 4
    %v4300 = vrot.slane %v4200, 4
    %v4301 = vsel %vm1423, %v4299, %v4300
    %v4302 = vrot.slane %v4201, 4
    %v4303 = vsel %vm1423, %v4300, %v4302
    %v4304 = vrot.slane %v4202, 4
    %v4305 = vrot.slane %v4203, 4
    %v4306 = vsel %vm1423, %v4304, %v4305
    %v4307 = vrot.slane %v4204, 4
    %v4308 = vsel %vm1423, %v4305, %v4307
    %v4309 = vrot.slane %v4205, 4
    %v4310 = vrot.slane %v4206, 4
    %v4311 = vsel %vm1423, %v4309, %v4310
    %v4312 = vrot.slane %v4207, 4
    %v4313 = vsel %vm1423, %v4310, %v4312
    %v4314 = vrot.slane %v4208, 4
    %v4315 = vrot.slane %v4209, 4
    %v4316 = vsel %vm1423, %v4314, %v4315
    %v4317 = vrot.slane %v4210, 4
    %v4318 = vsel %vm1423, %v4315, %v4317
    %v4319 = vrot.slane %v4211, 4
    %v4320 = vrot.slane %v4212, 4
    %v4321 = vsel %vm1423, %v4319, %v4320
    %v4322 = vrot.slane %v4213, 4
    %v4323 = vsel %vm1423, %v4320, %v4322
    %v4324 = vrot.slane %v4214, 4
    %v4325 = vrot.slane %v4215, 4
    %v4326 = vsel %vm1423, %v4324, %v4325
    %v4327 = vrot.slane %v4216, 4
    %v4328 = vsel %vm1423, %v4325, %v4327
    %v4329 = vrot.slane %v4217, 4
    %v4330 = vrot.slane %v4218, 4
    %v4331 = vsel %vm1423, %v4329, %v4330
    %v4332 = vrot.slane %v4219, 4
    %v4333 = vsel %vm1423, %v4330, %v4332
    %v4334 = vrot.slane %v4220, 4
    %v4335 = vrot.slane %v4221, 4
    %v4336 = vsel %vm1423, %v4334, %v4335
    %v4337 = vrot.slane %v4222, 4
    %v4338 = vsel %vm1423, %v4335, %v4337
    %v4339 = vrot.slane %v4223, 4
    %v4340 = vrot.slane %v4224, 4
    %v4341 = vsel %vm1423, %v4339, %v4340
    %v4342 = vrot.slane %v4225, 4
    %v4343 = vsel %vm1423, %v4340, %v4342
    %v4344 = vrot.slane %v4226, 4
    %v4345 = vrot.slane %v4227, 4
    %v4346 = vsel %vm1423, %v4344, %v4345
    %v4347 = vrot.slane %v4228, 4
    %v4348 = vsel %vm1423, %v4345, %v4347
    %v4349 = vrot.slane %v4229, 4
    %v4350 = vrot.slane %v4230, 4
    %v4351 = vsel %vm1423, %v4349, %v4350
    %v4352 = vrot.slane %v4231, 4
    %v4353 = vsel %vm1423, %v4350, %v4352
    %v4354 = vrot.slane %v4232, 4
    %v4355 = vrot.slane %v4233, 4
    %v4356 = vsel %vm1423, %v4354, %v4355
    %v4357 = vrot.slane %v4234, 4
    %v4358 = vsel %vm1423, %v4355, %v4357
    %v4359 = vrot.slane %v4235, 4
    %v4360 = vrot.slane %v4236, 4
    %v4361 = vsel %vm1423, %v4359, %v4360
    %v4362 = vrot.slane %v4237, 4
    %v4363 = vsel %vm1423, %v4360, %v4362
    %v4364 = vrot.slane %v4238, 4
    %v4365 = vrot.slane %v4239, 4
    %v4366 = vsel %vm1423, %v4364, %v4365
    %v4367 = vrot.slane %v4240, 4
    %v4368 = vsel %vm1423, %v4365, %v4367
    %v4401 = vadd.f32 %v4159, %v4291
    %v4402 = vadd.f32 %v4160, %v4293
    %v4403 = vadd.f32 %v4161, %v4296
    %v4404 = vadd.f32 %v4162, %v4298
    %v4405 = vadd.f32 %v4163, %v4301
    %v4406 = vadd.f32 %v4164, %v4303
    %v4407 = vadd.f32 %v4165, %v4306
    %v4408 = vadd.f32 %v4166, %v4308
    %v4409 = vadd.f32 %v4167, %v4311
    %v4410 = vadd.f32 %v4168, %v4313
    %v4411 = vadd.f32 %v4169, %v4316
    %v4412 = vadd.f32 %v4170, %v4318
    %v4413 = vadd.f32 %v4171, %v4321
    %v4414 = vadd.f32 %v4172, %v4323
    %v4415 = vadd.f32 %v4173, %v4326
    %v4416 = vadd.f32 %v4174, %v4328
    %v4417 = vadd.f32 %v4175, %v4331
    %v4418 = vadd.f32 %v4176, %v4333
    %v4419 = vadd.f32 %v4177, %v4336
    %v4420 = vadd.f32 %v4178, %v4338
    %v4421 = vadd.f32 %v4179, %v4341
    %v4422 = vadd.f32 %v4180, %v4343
    %v4423 = vadd.f32 %v4181, %v4346
    %v4424 = vadd.f32 %v4182, %v4348
    %v4425 = vadd.f32 %v4183, %v4351
    %v4426 = vadd.f32 %v4184, %v4353
    %v4427 = vadd.f32 %v4185, %v4356
    %v4428 = vadd.f32 %v4186, %v4358
    %v4429 = vadd.f32 %v4187, %v4361
    %v4430 = vadd.f32 %v4188, %v4363
    %v4431 = vadd.f32 %v4189, %v4366
    %v4432 = vadd.f32 %v4190, %v4368
    %s4433 = sld [smem:[#allocation9 + $0x105]]
    %v4434 = vstv %s4433
    %v4435 = vmul.f32 %v4434, %v606
    %v4436 = vmul.f32 %v4434, %v507
    %v4437 = vmul.f32 %v4434, %v623
    %v4438 = vmul.f32 %v4434, %v607
    %v4439 = vmul.f32 %v4434, %v510
    %v4440 = vmul.f32 %v4434, %v624
    %v4441 = vmul.f32 %v4434, %v608
    %v4442 = vmul.f32 %v4434, %v513
    %v4443 = vmul.f32 %v4434, %v625
    %v4444 = vmul.f32 %v4434, %v609
    %v4445 = vmul.f32 %v4434, %v516
    %v4446 = vmul.f32 %v4434, %v626
    %v4447 = vmul.f32 %v4434, %v610
    %v4448 = vmul.f32 %v4434, %v519
    %v4449 = vmul.f32 %v4434, %v627
    %v4450 = vmul.f32 %v4434, %v611
    %v4451 = vmul.f32 %v4434, %v522
    %v4452 = vmul.f32 %v4434, %v628
    %v4453 = vmul.f32 %v4434, %v612
    %v4454 = vmul.f32 %v4434, %v525
    %v4455 = vmul.f32 %v4434, %v629
    %v4456 = vmul.f32 %v4434, %v613
    %v4457 = vmul.f32 %v4434, %v528
    %v4458 = vmul.f32 %v4434, %v630
    %v4459 = vmul.f32 %v4434, %v614
    %v4460 = vmul.f32 %v4434, %v531
    %v4461 = vmul.f32 %v4434, %v631
    %v4462 = vmul.f32 %v4434, %v615
    %v4463 = vmul.f32 %v4434, %v534
    %v4464 = vmul.f32 %v4434, %v632
    %v4465 = vmul.f32 %v4434, %v616
    %v4466 = vmul.f32 %v4434, %v537
    %v4467 = vmul.f32 %v4434, %v633
    %v4468 = vmul.f32 %v4434, %v617
    %v4469 = vmul.f32 %v4434, %v540
    %v4470 = vmul.f32 %v4434, %v634
    %v4471 = vmul.f32 %v4434, %v618
    %v4472 = vmul.f32 %v4434, %v543
    %v4473 = vmul.f32 %v4434, %v635
    %v4474 = vmul.f32 %v4434, %v619
    %v4475 = vmul.f32 %v4434, %v546
    %v4476 = vmul.f32 %v4434, %v636
    %v4477 = vmul.f32 %v4434, %v620
    %v4478 = vmul.f32 %v4434, %v549
    %v4479 = vmul.f32 %v4434, %v637
    %v4480 = vmul.f32 %v4434, %v621
    %v4481 = vmul.f32 %v4434, %v552
    %v4482 = vmul.f32 %v4434, %v638
    %v4531 = vrot.slane %v4435, 5
    %v4532 = vrot.slane %v4436, 5
    %v4533 = vsel %vm505, %v4531, %v4532
    %v4534 = vrot.slane %v4437, 5
    %v4535 = vsel %vm505, %v4532, %v4534
    %v4536 = vrot.slane %v4438, 5
    %v4537 = vrot.slane %v4439, 5
    %v4538 = vsel %vm505, %v4536, %v4537
    %v4539 = vrot.slane %v4440, 5
    %v4540 = vsel %vm505, %v4537, %v4539
    %v4541 = vrot.slane %v4441, 5
    %v4542 = vrot.slane %v4442, 5
    %v4543 = vsel %vm505, %v4541, %v4542
    %v4544 = vrot.slane %v4443, 5
    %v4545 = vsel %vm505, %v4542, %v4544
    %v4546 = vrot.slane %v4444, 5
    %v4547 = vrot.slane %v4445, 5
    %v4548 = vsel %vm505, %v4546, %v4547
    %v4549 = vrot.slane %v4446, 5
    %v4550 = vsel %vm505, %v4547, %v4549
    %v4551 = vrot.slane %v4447, 5
    %v4552 = vrot.slane %v4448, 5
    %v4553 = vsel %vm505, %v4551, %v4552
    %v4554 = vrot.slane %v4449, 5
    %v4555 = vsel %vm505, %v4552, %v4554
    %v4556 = vrot.slane %v4450, 5
    %v4557 = vrot.slane %v4451, 5
    %v4558 = vsel %vm505, %v4556, %v4557
    %v4559 = vrot.slane %v4452, 5
    %v4560 = vsel %vm505, %v4557, %v4559
    %v4561 = vrot.slane %v4453, 5
    %v4562 = vrot.slane %v4454, 5
    %v4563 = vsel %vm505, %v4561, %v4562
    %v4564 = vrot.slane %v4455, 5
    %v4565 = vsel %vm505, %v4562, %v4564
    %v4566 = vrot.slane %v4456, 5
    %v4567 = vrot.slane %v4457, 5
    %v4568 = vsel %vm505, %v4566, %v4567
    %v4569 = vrot.slane %v4458, 5
    %v4570 = vsel %vm505, %v4567, %v4569
    %v4571 = vrot.slane %v4459, 5
    %v4572 = vrot.slane %v4460, 5
    %v4573 = vsel %vm505, %v4571, %v4572
    %v4574 = vrot.slane %v4461, 5
    %v4575 = vsel %vm505, %v4572, %v4574
    %v4576 = vrot.slane %v4462, 5
    %v4577 = vrot.slane %v4463, 5
    %v4578 = vsel %vm505, %v4576, %v4577
    %v4579 = vrot.slane %v4464, 5
    %v4580 = vsel %vm505, %v4577, %v4579
    %v4581 = vrot.slane %v4465, 5
    %v4582 = vrot.slane %v4466, 5
    %v4583 = vsel %vm505, %v4581, %v4582
    %v4584 = vrot.slane %v4467, 5
    %v4585 = vsel %vm505, %v4582, %v4584
    %v4586 = vrot.slane %v4468, 5
    %v4587 = vrot.slane %v4469, 5
    %v4588 = vsel %vm505, %v4586, %v4587
    %v4589 = vrot.slane %v4470, 5
    %v4590 = vsel %vm505, %v4587, %v4589
    %v4591 = vrot.slane %v4471, 5
    %v4592 = vrot.slane %v4472, 5
    %v4593 = vsel %vm505, %v4591, %v4592
    %v4594 = vrot.slane %v4473, 5
    %v4595 = vsel %vm505, %v4592, %v4594
    %v4596 = vrot.slane %v4474, 5
    %v4597 = vrot.slane %v4475, 5
    %v4598 = vsel %vm505, %v4596, %v4597
    %v4599 = vrot.slane %v4476, 5
    %v4600 = vsel %vm505, %v4597, %v4599
    %v4601 = vrot.slane %v4477, 5
    %v4602 = vrot.slane %v4478, 5
    %v4603 = vsel %vm505, %v4601, %v4602
    %v4604 = vrot.slane %v4479, 5
    %v4605 = vsel %vm505, %v4602, %v4604
    %v4606 = vrot.slane %v4480, 5
    %v4607 = vrot.slane %v4481, 5
    %v4608 = vsel %vm505, %v4606, %v4607
    %v4609 = vrot.slane %v4482, 5
    %v4610 = vsel %vm505, %v4607, %v4609
    %v4643 = vadd.f32 %v4401, %v4533
    %v4644 = vadd.f32 %v4402, %v4535
    %v4645 = vadd.f32 %v4403, %v4538
    %v4646 = vadd.f32 %v4404, %v4540
    %v4647 = vadd.f32 %v4405, %v4543
    %v4648 = vadd.f32 %v4406, %v4545
    %v4649 = vadd.f32 %v4407, %v4548
    %v4650 = vadd.f32 %v4408, %v4550
    %v4651 = vadd.f32 %v4409, %v4553
    %v4652 = vadd.f32 %v4410, %v4555
    %v4653 = vadd.f32 %v4411, %v4558
    %v4654 = vadd.f32 %v4412, %v4560
    %v4655 = vadd.f32 %v4413, %v4563
    %v4656 = vadd.f32 %v4414, %v4565
    %v4657 = vadd.f32 %v4415, %v4568
    %v4658 = vadd.f32 %v4416, %v4570
    %v4659 = vadd.f32 %v4417, %v4573
    %v4660 = vadd.f32 %v4418, %v4575
    %v4661 = vadd.f32 %v4419, %v4578
    %v4662 = vadd.f32 %v4420, %v4580
    %v4663 = vadd.f32 %v4421, %v4583
    %v4664 = vadd.f32 %v4422, %v4585
    %v4665 = vadd.f32 %v4423, %v4588
    %v4666 = vadd.f32 %v4424, %v4590
    %v4667 = vadd.f32 %v4425, %v4593
    %v4668 = vadd.f32 %v4426, %v4595
    %v4669 = vadd.f32 %v4427, %v4598
    %v4670 = vadd.f32 %v4428, %v4600
    %v4671 = vadd.f32 %v4429, %v4603
    %v4672 = vadd.f32 %v4430, %v4605
    %v4673 = vadd.f32 %v4431, %v4608
    %v4674 = vadd.f32 %v4432, %v4610
    %s4675 = sld [smem:[#allocation9 + $0x106]]
    %v4676 = vstv %s4675
    %v4677 = vmul.f32 %v4676, %v606
    %v4678 = vmul.f32 %v4676, %v507
    %v4679 = vmul.f32 %v4676, %v623
    %v4680 = vmul.f32 %v4676, %v607
    %v4681 = vmul.f32 %v4676, %v510
    %v4682 = vmul.f32 %v4676, %v624
    %v4683 = vmul.f32 %v4676, %v608
    %v4684 = vmul.f32 %v4676, %v513
    %v4685 = vmul.f32 %v4676, %v625
    %v4686 = vmul.f32 %v4676, %v609
    %v4687 = vmul.f32 %v4676, %v516
    %v4688 = vmul.f32 %v4676, %v626
    %v4689 = vmul.f32 %v4676, %v610
    %v4690 = vmul.f32 %v4676, %v519
    %v4691 = vmul.f32 %v4676, %v627
    %v4692 = vmul.f32 %v4676, %v611
    %v4693 = vmul.f32 %v4676, %v522
    %v4694 = vmul.f32 %v4676, %v628
    %v4695 = vmul.f32 %v4676, %v612
    %v4696 = vmul.f32 %v4676, %v525
    %v4697 = vmul.f32 %v4676, %v629
    %v4698 = vmul.f32 %v4676, %v613
    %v4699 = vmul.f32 %v4676, %v528
    %v4700 = vmul.f32 %v4676, %v630
    %v4701 = vmul.f32 %v4676, %v614
    %v4702 = vmul.f32 %v4676, %v531
    %v4703 = vmul.f32 %v4676, %v631
    %v4704 = vmul.f32 %v4676, %v615
    %v4705 = vmul.f32 %v4676, %v534
    %v4706 = vmul.f32 %v4676, %v632
    %v4707 = vmul.f32 %v4676, %v616
    %v4708 = vmul.f32 %v4676, %v537
    %v4709 = vmul.f32 %v4676, %v633
    %v4710 = vmul.f32 %v4676, %v617
    %v4711 = vmul.f32 %v4676, %v540
    %v4712 = vmul.f32 %v4676, %v634
    %v4713 = vmul.f32 %v4676, %v618
    %v4714 = vmul.f32 %v4676, %v543
    %v4715 = vmul.f32 %v4676, %v635
    %v4716 = vmul.f32 %v4676, %v619
    %v4717 = vmul.f32 %v4676, %v546
    %v4718 = vmul.f32 %v4676, %v636
    %v4719 = vmul.f32 %v4676, %v620
    %v4720 = vmul.f32 %v4676, %v549
    %v4721 = vmul.f32 %v4676, %v637
    %v4722 = vmul.f32 %v4676, %v621
    %v4723 = vmul.f32 %v4676, %v552
    %v4724 = vmul.f32 %v4676, %v638
    %v4773 = vrot.slane %v4677, 6
    %v4774 = vrot.slane %v4678, 6
    %v4775 = vsel %vm1848, %v4773, %v4774
    %v4776 = vrot.slane %v4679, 6
    %v4777 = vsel %vm1848, %v4774, %v4776
    %v4778 = vrot.slane %v4680, 6
    %v4779 = vrot.slane %v4681, 6
    %v4780 = vsel %vm1848, %v4778, %v4779
    %v4781 = vrot.slane %v4682, 6
    %v4782 = vsel %vm1848, %v4779, %v4781
    %v4783 = vrot.slane %v4683, 6
    %v4784 = vrot.slane %v4684, 6
    %v4785 = vsel %vm1848, %v4783, %v4784
    %v4786 = vrot.slane %v4685, 6
    %v4787 = vsel %vm1848, %v4784, %v4786
    %v4788 = vrot.slane %v4686, 6
    %v4789 = vrot.slane %v4687, 6
    %v4790 = vsel %vm1848, %v4788, %v4789
    %v4791 = vrot.slane %v4688, 6
    %v4792 = vsel %vm1848, %v4789, %v4791
    %v4793 = vrot.slane %v4689, 6
    %v4794 = vrot.slane %v4690, 6
    %v4795 = vsel %vm1848, %v4793, %v4794
    %v4796 = vrot.slane %v4691, 6
    %v4797 = vsel %vm1848, %v4794, %v4796
    %v4798 = vrot.slane %v4692, 6
    %v4799 = vrot.slane %v4693, 6
    %v4800 = vsel %vm1848, %v4798, %v4799
    %v4801 = vrot.slane %v4694, 6
    %v4802 = vsel %vm1848, %v4799, %v4801
    %v4803 = vrot.slane %v4695, 6
    %v4804 = vrot.slane %v4696, 6
    %v4805 = vsel %vm1848, %v4803, %v4804
    %v4806 = vrot.slane %v4697, 6
    %v4807 = vsel %vm1848, %v4804, %v4806
    %v4808 = vrot.slane %v4698, 6
    %v4809 = vrot.slane %v4699, 6
    %v4810 = vsel %vm1848, %v4808, %v4809
    %v4811 = vrot.slane %v4700, 6
    %v4812 = vsel %vm1848, %v4809, %v4811
    %v4813 = vrot.slane %v4701, 6
    %v4814 = vrot.slane %v4702, 6
    %v4815 = vsel %vm1848, %v4813, %v4814
    %v4816 = vrot.slane %v4703, 6
    %v4817 = vsel %vm1848, %v4814, %v4816
    %v4818 = vrot.slane %v4704, 6
    %v4819 = vrot.slane %v4705, 6
    %v4820 = vsel %vm1848, %v4818, %v4819
    %v4821 = vrot.slane %v4706, 6
    %v4822 = vsel %vm1848, %v4819, %v4821
    %v4823 = vrot.slane %v4707, 6
    %v4824 = vrot.slane %v4708, 6
    %v4825 = vsel %vm1848, %v4823, %v4824
    %v4826 = vrot.slane %v4709, 6
    %v4827 = vsel %vm1848, %v4824, %v4826
    %v4828 = vrot.slane %v4710, 6
    %v4829 = vrot.slane %v4711, 6
    %v4830 = vsel %vm1848, %v4828, %v4829
    %v4831 = vrot.slane %v4712, 6
    %v4832 = vsel %vm1848, %v4829, %v4831
    %v4833 = vrot.slane %v4713, 6
    %v4834 = vrot.slane %v4714, 6
    %v4835 = vsel %vm1848, %v4833, %v4834
    %v4836 = vrot.slane %v4715, 6
    %v4837 = vsel %vm1848, %v4834, %v4836
    %v4838 = vrot.slane %v4716, 6
    %v4839 = vrot.slane %v4717, 6
    %v4840 = vsel %vm1848, %v4838, %v4839
    %v4841 = vrot.slane %v4718, 6
    %v4842 = vsel %vm1848, %v4839, %v4841
    %v4843 = vrot.slane %v4719, 6
    %v4844 = vrot.slane %v4720, 6
    %v4845 = vsel %vm1848, %v4843, %v4844
    %v4846 = vrot.slane %v4721, 6
    %v4847 = vsel %vm1848, %v4844, %v4846
    %v4848 = vrot.slane %v4722, 6
    %v4849 = vrot.slane %v4723, 6
    %v4850 = vsel %vm1848, %v4848, %v4849
    %v4851 = vrot.slane %v4724, 6
    %v4852 = vsel %vm1848, %v4849, %v4851
    %v4885 = vadd.f32 %v4643, %v4775
    %v4886 = vadd.f32 %v4644, %v4777
    %v4887 = vadd.f32 %v4645, %v4780
    %v4888 = vadd.f32 %v4646, %v4782
    %v4889 = vadd.f32 %v4647, %v4785
    %v4890 = vadd.f32 %v4648, %v4787
    %v4891 = vadd.f32 %v4649, %v4790
    %v4892 = vadd.f32 %v4650, %v4792
    %v4893 = vadd.f32 %v4651, %v4795
    %v4894 = vadd.f32 %v4652, %v4797
    %v4895 = vadd.f32 %v4653, %v4800
    %v4896 = vadd.f32 %v4654, %v4802
    %v4897 = vadd.f32 %v4655, %v4805
    %v4898 = vadd.f32 %v4656, %v4807
    %v4899 = vadd.f32 %v4657, %v4810
    %v4900 = vadd.f32 %v4658, %v4812
    %v4901 = vadd.f32 %v4659, %v4815
    %v4902 = vadd.f32 %v4660, %v4817
    %v4903 = vadd.f32 %v4661, %v4820
    %v4904 = vadd.f32 %v4662, %v4822
    %v4905 = vadd.f32 %v4663, %v4825
    %v4906 = vadd.f32 %v4664, %v4827
    %v4907 = vadd.f32 %v4665, %v4830
    %v4908 = vadd.f32 %v4666, %v4832
    %v4909 = vadd.f32 %v4667, %v4835
    %v4910 = vadd.f32 %v4668, %v4837
    %v4911 = vadd.f32 %v4669, %v4840
    %v4912 = vadd.f32 %v4670, %v4842
    %v4913 = vadd.f32 %v4671, %v4845
    %v4914 = vadd.f32 %v4672, %v4847
    %v4915 = vadd.f32 %v4673, %v4850
    %v4916 = vadd.f32 %v4674, %v4852
    %s4917 = sld [smem:[#allocation9 + $0x180]]
    %v4918 = vstv %s4917
    %v4919 = vmul.f32 %v4918, %v607
    %v4920 = vmul.f32 %v4918, %v510
    %v4921 = vmul.f32 %v4918, %v608
    %v4922 = vmul.f32 %v4918, %v513
    %v4923 = vmul.f32 %v4918, %v609
    %v4924 = vmul.f32 %v4918, %v516
    %v4925 = vmul.f32 %v4918, %v610
    %v4926 = vmul.f32 %v4918, %v519
    %v4927 = vmul.f32 %v4918, %v611
    %v4928 = vmul.f32 %v4918, %v522
    %v4929 = vmul.f32 %v4918, %v612
    %v4930 = vmul.f32 %v4918, %v525
    %v4931 = vmul.f32 %v4918, %v613
    %v4932 = vmul.f32 %v4918, %v528
    %v4933 = vmul.f32 %v4918, %v614
    %v4934 = vmul.f32 %v4918, %v531
    %v4935 = vmul.f32 %v4918, %v615
    %v4936 = vmul.f32 %v4918, %v534
    %v4937 = vmul.f32 %v4918, %v616
    %v4938 = vmul.f32 %v4918, %v537
    %v4939 = vmul.f32 %v4918, %v617
    %v4940 = vmul.f32 %v4918, %v540
    %v4941 = vmul.f32 %v4918, %v618
    %v4942 = vmul.f32 %v4918, %v543
    %v4943 = vmul.f32 %v4918, %v619
    %v4944 = vmul.f32 %v4918, %v546
    %v4945 = vmul.f32 %v4918, %v620
    %v4946 = vmul.f32 %v4918, %v549
    %v4947 = vmul.f32 %v4918, %v621
    %v4948 = vmul.f32 %v4918, %v552
    %v4949 = vmul.f32 %v4918, %v622
    %v4950 = vmul.f32 %v4918, %v555
    %v4951 = vadd.f32 %v4885, %v4919
    %v4952 = vadd.f32 %v4886, %v4920
    %v4953 = vadd.f32 %v4887, %v4921
    %v4954 = vadd.f32 %v4888, %v4922
    %v4955 = vadd.f32 %v4889, %v4923
    %v4956 = vadd.f32 %v4890, %v4924
    %v4957 = vadd.f32 %v4891, %v4925
    %v4958 = vadd.f32 %v4892, %v4926
    %v4959 = vadd.f32 %v4893, %v4927
    %v4960 = vadd.f32 %v4894, %v4928
    %v4961 = vadd.f32 %v4895, %v4929
    %v4962 = vadd.f32 %v4896, %v4930
    %v4963 = vadd.f32 %v4897, %v4931
    %v4964 = vadd.f32 %v4898, %v4932
    %v4965 = vadd.f32 %v4899, %v4933
    %v4966 = vadd.f32 %v4900, %v4934
    %v4967 = vadd.f32 %v4901, %v4935
    %v4968 = vadd.f32 %v4902, %v4936
    %v4969 = vadd.f32 %v4903, %v4937
    %v4970 = vadd.f32 %v4904, %v4938
    %v4971 = vadd.f32 %v4905, %v4939
    %v4972 = vadd.f32 %v4906, %v4940
    %v4973 = vadd.f32 %v4907, %v4941
    %v4974 = vadd.f32 %v4908, %v4942
    %v4975 = vadd.f32 %v4909, %v4943
    %v4976 = vadd.f32 %v4910, %v4944
    %v4977 = vadd.f32 %v4911, %v4945
    %v4978 = vadd.f32 %v4912, %v4946
    %v4979 = vadd.f32 %v4913, %v4947
    %v4980 = vadd.f32 %v4914, %v4948
    %v4981 = vadd.f32 %v4915, %v4949
    %v4982 = vadd.f32 %v4916, %v4950
    %s4983 = sld [smem:[#allocation9 + $0x181]]
    %v4984 = vstv %s4983
    %v4985 = vmul.f32 %v4984, %v607
    %v4986 = vmul.f32 %v4984, %v510
    %v4987 = vmul.f32 %v4984, %v624
    %v4988 = vmul.f32 %v4984, %v608
    %v4989 = vmul.f32 %v4984, %v513
    %v4990 = vmul.f32 %v4984, %v625
    %v4991 = vmul.f32 %v4984, %v609
    %v4992 = vmul.f32 %v4984, %v516
    %v4993 = vmul.f32 %v4984, %v626
    %v4994 = vmul.f32 %v4984, %v610
    %v4995 = vmul.f32 %v4984, %v519
    %v4996 = vmul.f32 %v4984, %v627
    %v4997 = vmul.f32 %v4984, %v611
    %v4998 = vmul.f32 %v4984, %v522
    %v4999 = vmul.f32 %v4984, %v628
    %v5000 = vmul.f32 %v4984, %v612
    %v5001 = vmul.f32 %v4984, %v525
    %v5002 = vmul.f32 %v4984, %v629
    %v5003 = vmul.f32 %v4984, %v613
    %v5004 = vmul.f32 %v4984, %v528
    %v5005 = vmul.f32 %v4984, %v630
    %v5006 = vmul.f32 %v4984, %v614
    %v5007 = vmul.f32 %v4984, %v531
    %v5008 = vmul.f32 %v4984, %v631
    %v5009 = vmul.f32 %v4984, %v615
    %v5010 = vmul.f32 %v4984, %v534
    %v5011 = vmul.f32 %v4984, %v632
    %v5012 = vmul.f32 %v4984, %v616
    %v5013 = vmul.f32 %v4984, %v537
    %v5014 = vmul.f32 %v4984, %v633
    %v5015 = vmul.f32 %v4984, %v617
    %v5016 = vmul.f32 %v4984, %v540
    %v5017 = vmul.f32 %v4984, %v634
    %v5018 = vmul.f32 %v4984, %v618
    %v5019 = vmul.f32 %v4984, %v543
    %v5020 = vmul.f32 %v4984, %v635
    %v5021 = vmul.f32 %v4984, %v619
    %v5022 = vmul.f32 %v4984, %v546
    %v5023 = vmul.f32 %v4984, %v636
    %v5024 = vmul.f32 %v4984, %v620
    %v5025 = vmul.f32 %v4984, %v549
    %v5026 = vmul.f32 %v4984, %v637
    %v5027 = vmul.f32 %v4984, %v621
    %v5028 = vmul.f32 %v4984, %v552
    %v5029 = vmul.f32 %v4984, %v638
    %v5030 = vmul.f32 %v4984, %v622
    %v5031 = vmul.f32 %v4984, %v555
    %v5032 = vmul.f32 %v4984, %v639
    %v5081 = vrot.slane %v4985, 1
    %v5082 = vrot.slane %v4986, 1
    %v5083 = vsel %vm784, %v5081, %v5082
    %v5084 = vrot.slane %v4987, 1
    %v5085 = vsel %vm784, %v5082, %v5084
    %v5086 = vrot.slane %v4988, 1
    %v5087 = vrot.slane %v4989, 1
    %v5088 = vsel %vm784, %v5086, %v5087
    %v5089 = vrot.slane %v4990, 1
    %v5090 = vsel %vm784, %v5087, %v5089
    %v5091 = vrot.slane %v4991, 1
    %v5092 = vrot.slane %v4992, 1
    %v5093 = vsel %vm784, %v5091, %v5092
    %v5094 = vrot.slane %v4993, 1
    %v5095 = vsel %vm784, %v5092, %v5094
    %v5096 = vrot.slane %v4994, 1
    %v5097 = vrot.slane %v4995, 1
    %v5098 = vsel %vm784, %v5096, %v5097
    %v5099 = vrot.slane %v4996, 1
    %v5100 = vsel %vm784, %v5097, %v5099
    %v5101 = vrot.slane %v4997, 1
    %v5102 = vrot.slane %v4998, 1
    %v5103 = vsel %vm784, %v5101, %v5102
    %v5104 = vrot.slane %v4999, 1
    %v5105 = vsel %vm784, %v5102, %v5104
    %v5106 = vrot.slane %v5000, 1
    %v5107 = vrot.slane %v5001, 1
    %v5108 = vsel %vm784, %v5106, %v5107
    %v5109 = vrot.slane %v5002, 1
    %v5110 = vsel %vm784, %v5107, %v5109
    %v5111 = vrot.slane %v5003, 1
    %v5112 = vrot.slane %v5004, 1
    %v5113 = vsel %vm784, %v5111, %v5112
    %v5114 = vrot.slane %v5005, 1
    %v5115 = vsel %vm784, %v5112, %v5114
    %v5116 = vrot.slane %v5006, 1
    %v5117 = vrot.slane %v5007, 1
    %v5118 = vsel %vm784, %v5116, %v5117
    %v5119 = vrot.slane %v5008, 1
    %v5120 = vsel %vm784, %v5117, %v5119
    %v5121 = vrot.slane %v5009, 1
    %v5122 = vrot.slane %v5010, 1
    %v5123 = vsel %vm784, %v5121, %v5122
    %v5124 = vrot.slane %v5011, 1
    %v5125 = vsel %vm784, %v5122, %v5124
    %v5126 = vrot.slane %v5012, 1
    %v5127 = vrot.slane %v5013, 1
    %v5128 = vsel %vm784, %v5126, %v5127
    %v5129 = vrot.slane %v5014, 1
    %v5130 = vsel %vm784, %v5127, %v5129
    %v5131 = vrot.slane %v5015, 1
    %v5132 = vrot.slane %v5016, 1
    %v5133 = vsel %vm784, %v5131, %v5132
    %v5134 = vrot.slane %v5017, 1
    %v5135 = vsel %vm784, %v5132, %v5134
    %v5136 = vrot.slane %v5018, 1
    %v5137 = vrot.slane %v5019, 1
    %v5138 = vsel %vm784, %v5136, %v5137
    %v5139 = vrot.slane %v5020, 1
    %v5140 = vsel %vm784, %v5137, %v5139
    %v5141 = vrot.slane %v5021, 1
    %v5142 = vrot.slane %v5022, 1
    %v5143 = vsel %vm784, %v5141, %v5142
    %v5144 = vrot.slane %v5023, 1
    %v5145 = vsel %vm784, %v5142, %v5144
    %v5146 = vrot.slane %v5024, 1
    %v5147 = vrot.slane %v5025, 1
    %v5148 = vsel %vm784, %v5146, %v5147
    %v5149 = vrot.slane %v5026, 1
    %v5150 = vsel %vm784, %v5147, %v5149
    %v5151 = vrot.slane %v5027, 1
    %v5152 = vrot.slane %v5028, 1
    %v5153 = vsel %vm784, %v5151, %v5152
    %v5154 = vrot.slane %v5029, 1
    %v5155 = vsel %vm784, %v5152, %v5154
    %v5156 = vrot.slane %v5030, 1
    %v5157 = vrot.slane %v5031, 1
    %v5158 = vsel %vm784, %v5156, %v5157
    %v5159 = vrot.slane %v5032, 1
    %v5160 = vsel %vm784, %v5157, %v5159
    %v5193 = vadd.f32 %v4951, %v5083
    %v5194 = vadd.f32 %v4952, %v5085
    %v5195 = vadd.f32 %v4953, %v5088
    %v5196 = vadd.f32 %v4954, %v5090
    %v5197 = vadd.f32 %v4955, %v5093
    %v5198 = vadd.f32 %v4956, %v5095
    %v5199 = vadd.f32 %v4957, %v5098
    %v5200 = vadd.f32 %v4958, %v5100
    %v5201 = vadd.f32 %v4959, %v5103
    %v5202 = vadd.f32 %v4960, %v5105
    %v5203 = vadd.f32 %v4961, %v5108
    %v5204 = vadd.f32 %v4962, %v5110
    %v5205 = vadd.f32 %v4963, %v5113
    %v5206 = vadd.f32 %v4964, %v5115
    %v5207 = vadd.f32 %v4965, %v5118
    %v5208 = vadd.f32 %v4966, %v5120
    %v5209 = vadd.f32 %v4967, %v5123
    %v5210 = vadd.f32 %v4968, %v5125
    %v5211 = vadd.f32 %v4969, %v5128
    %v5212 = vadd.f32 %v4970, %v5130
    %v5213 = vadd.f32 %v4971, %v5133
    %v5214 = vadd.f32 %v4972, %v5135
    %v5215 = vadd.f32 %v4973, %v5138
    %v5216 = vadd.f32 %v4974, %v5140
    %v5217 = vadd.f32 %v4975, %v5143
    %v5218 = vadd.f32 %v4976, %v5145
    %v5219 = vadd.f32 %v4977, %v5148
    %v5220 = vadd.f32 %v4978, %v5150
    %v5221 = vadd.f32 %v4979, %v5153
    %v5222 = vadd.f32 %v4980, %v5155
    %v5223 = vadd.f32 %v4981, %v5158
    %v5224 = vadd.f32 %v4982, %v5160
    %s5225 = sld [smem:[#allocation9 + $0x182]]
    %v5226 = vstv %s5225
    %v5227 = vmul.f32 %v5226, %v607
    %v5228 = vmul.f32 %v5226, %v510
    %v5229 = vmul.f32 %v5226, %v624
    %v5230 = vmul.f32 %v5226, %v608
    %v5231 = vmul.f32 %v5226, %v513
    %v5232 = vmul.f32 %v5226, %v625
    %v5233 = vmul.f32 %v5226, %v609
    %v5234 = vmul.f32 %v5226, %v516
    %v5235 = vmul.f32 %v5226, %v626
    %v5236 = vmul.f32 %v5226, %v610
    %v5237 = vmul.f32 %v5226, %v519
    %v5238 = vmul.f32 %v5226, %v627
    %v5239 = vmul.f32 %v5226, %v611
    %v5240 = vmul.f32 %v5226, %v522
    %v5241 = vmul.f32 %v5226, %v628
    %v5242 = vmul.f32 %v5226, %v612
    %v5243 = vmul.f32 %v5226, %v525
    %v5244 = vmul.f32 %v5226, %v629
    %v5245 = vmul.f32 %v5226, %v613
    %v5246 = vmul.f32 %v5226, %v528
    %v5247 = vmul.f32 %v5226, %v630
    %v5248 = vmul.f32 %v5226, %v614
    %v5249 = vmul.f32 %v5226, %v531
    %v5250 = vmul.f32 %v5226, %v631
    %v5251 = vmul.f32 %v5226, %v615
    %v5252 = vmul.f32 %v5226, %v534
    %v5253 = vmul.f32 %v5226, %v632
    %v5254 = vmul.f32 %v5226, %v616
    %v5255 = vmul.f32 %v5226, %v537
    %v5256 = vmul.f32 %v5226, %v633
    %v5257 = vmul.f32 %v5226, %v617
    %v5258 = vmul.f32 %v5226, %v540
    %v5259 = vmul.f32 %v5226, %v634
    %v5260 = vmul.f32 %v5226, %v618
    %v5261 = vmul.f32 %v5226, %v543
    %v5262 = vmul.f32 %v5226, %v635
    %v5263 = vmul.f32 %v5226, %v619
    %v5264 = vmul.f32 %v5226, %v546
    %v5265 = vmul.f32 %v5226, %v636
    %v5266 = vmul.f32 %v5226, %v620
    %v5267 = vmul.f32 %v5226, %v549
    %v5268 = vmul.f32 %v5226, %v637
    %v5269 = vmul.f32 %v5226, %v621
    %v5270 = vmul.f32 %v5226, %v552
    %v5271 = vmul.f32 %v5226, %v638
    %v5272 = vmul.f32 %v5226, %v622
    %v5273 = vmul.f32 %v5226, %v555
    %v5274 = vmul.f32 %v5226, %v639
    %v5323 = vrot.slane %v5227, 2
    %v5324 = vrot.slane %v5228, 2
    %v5325 = vsel %vm997, %v5323, %v5324
    %v5326 = vrot.slane %v5229, 2
    %v5327 = vsel %vm997, %v5324, %v5326
    %v5328 = vrot.slane %v5230, 2
    %v5329 = vrot.slane %v5231, 2
    %v5330 = vsel %vm997, %v5328, %v5329
    %v5331 = vrot.slane %v5232, 2
    %v5332 = vsel %vm997, %v5329, %v5331
    %v5333 = vrot.slane %v5233, 2
    %v5334 = vrot.slane %v5234, 2
    %v5335 = vsel %vm997, %v5333, %v5334
    %v5336 = vrot.slane %v5235, 2
    %v5337 = vsel %vm997, %v5334, %v5336
    %v5338 = vrot.slane %v5236, 2
    %v5339 = vrot.slane %v5237, 2
    %v5340 = vsel %vm997, %v5338, %v5339
    %v5341 = vrot.slane %v5238, 2
    %v5342 = vsel %vm997, %v5339, %v5341
    %v5343 = vrot.slane %v5239, 2
    %v5344 = vrot.slane %v5240, 2
    %v5345 = vsel %vm997, %v5343, %v5344
    %v5346 = vrot.slane %v5241, 2
    %v5347 = vsel %vm997, %v5344, %v5346
    %v5348 = vrot.slane %v5242, 2
    %v5349 = vrot.slane %v5243, 2
    %v5350 = vsel %vm997, %v5348, %v5349
    %v5351 = vrot.slane %v5244, 2
    %v5352 = vsel %vm997, %v5349, %v5351
    %v5353 = vrot.slane %v5245, 2
    %v5354 = vrot.slane %v5246, 2
    %v5355 = vsel %vm997, %v5353, %v5354
    %v5356 = vrot.slane %v5247, 2
    %v5357 = vsel %vm997, %v5354, %v5356
    %v5358 = vrot.slane %v5248, 2
    %v5359 = vrot.slane %v5249, 2
    %v5360 = vsel %vm997, %v5358, %v5359
    %v5361 = vrot.slane %v5250, 2
    %v5362 = vsel %vm997, %v5359, %v5361
    %v5363 = vrot.slane %v5251, 2
    %v5364 = vrot.slane %v5252, 2
    %v5365 = vsel %vm997, %v5363, %v5364
    %v5366 = vrot.slane %v5253, 2
    %v5367 = vsel %vm997, %v5364, %v5366
    %v5368 = vrot.slane %v5254, 2
    %v5369 = vrot.slane %v5255, 2
    %v5370 = vsel %vm997, %v5368, %v5369
    %v5371 = vrot.slane %v5256, 2
    %v5372 = vsel %vm997, %v5369, %v5371
    %v5373 = vrot.slane %v5257, 2
    %v5374 = vrot.slane %v5258, 2
    %v5375 = vsel %vm997, %v5373, %v5374
    %v5376 = vrot.slane %v5259, 2
    %v5377 = vsel %vm997, %v5374, %v5376
    %v5378 = vrot.slane %v5260, 2
    %v5379 = vrot.slane %v5261, 2
    %v5380 = vsel %vm997, %v5378, %v5379
    %v5381 = vrot.slane %v5262, 2
    %v5382 = vsel %vm997, %v5379, %v5381
    %v5383 = vrot.slane %v5263, 2
    %v5384 = vrot.slane %v5264, 2
    %v5385 = vsel %vm997, %v5383, %v5384
    %v5386 = vrot.slane %v5265, 2
    %v5387 = vsel %vm997, %v5384, %v5386
    %v5388 = vrot.slane %v5266, 2
    %v5389 = vrot.slane %v5267, 2
    %v5390 = vsel %vm997, %v5388, %v5389
    %v5391 = vrot.slane %v5268, 2
    %v5392 = vsel %vm997, %v5389, %v5391
    %v5393 = vrot.slane %v5269, 2
    %v5394 = vrot.slane %v5270, 2
    %v5395 = vsel %vm997, %v5393, %v5394
    %v5396 = vrot.slane %v5271, 2
    %v5397 = vsel %vm997, %v5394, %v5396
    %v5398 = vrot.slane %v5272, 2
    %v5399 = vrot.slane %v5273, 2
    %v5400 = vsel %vm997, %v5398, %v5399
    %v5401 = vrot.slane %v5274, 2
    %v5402 = vsel %vm997, %v5399, %v5401
    %v5435 = vadd.f32 %v5193, %v5325
    %v5436 = vadd.f32 %v5194, %v5327
    %v5437 = vadd.f32 %v5195, %v5330
    %v5438 = vadd.f32 %v5196, %v5332
    %v5439 = vadd.f32 %v5197, %v5335
    %v5440 = vadd.f32 %v5198, %v5337
    %v5441 = vadd.f32 %v5199, %v5340
    %v5442 = vadd.f32 %v5200, %v5342
    %v5443 = vadd.f32 %v5201, %v5345
    %v5444 = vadd.f32 %v5202, %v5347
    %v5445 = vadd.f32 %v5203, %v5350
    %v5446 = vadd.f32 %v5204, %v5352
    %v5447 = vadd.f32 %v5205, %v5355
    %v5448 = vadd.f32 %v5206, %v5357
    %v5449 = vadd.f32 %v5207, %v5360
    %v5450 = vadd.f32 %v5208, %v5362
    %v5451 = vadd.f32 %v5209, %v5365
    %v5452 = vadd.f32 %v5210, %v5367
    %v5453 = vadd.f32 %v5211, %v5370
    %v5454 = vadd.f32 %v5212, %v5372
    %v5455 = vadd.f32 %v5213, %v5375
    %v5456 = vadd.f32 %v5214, %v5377
    %v5457 = vadd.f32 %v5215, %v5380
    %v5458 = vadd.f32 %v5216, %v5382
    %v5459 = vadd.f32 %v5217, %v5385
    %v5460 = vadd.f32 %v5218, %v5387
    %v5461 = vadd.f32 %v5219, %v5390
    %v5462 = vadd.f32 %v5220, %v5392
    %v5463 = vadd.f32 %v5221, %v5395
    %v5464 = vadd.f32 %v5222, %v5397
    %v5465 = vadd.f32 %v5223, %v5400
    %v5466 = vadd.f32 %v5224, %v5402
    %s5467 = sld [smem:[#allocation9 + $0x183]]
    %v5468 = vstv %s5467
    %v5469 = vmul.f32 %v5468, %v607
    %v5470 = vmul.f32 %v5468, %v510
    %v5471 = vmul.f32 %v5468, %v624
    %v5472 = vmul.f32 %v5468, %v608
    %v5473 = vmul.f32 %v5468, %v513
    %v5474 = vmul.f32 %v5468, %v625
    %v5475 = vmul.f32 %v5468, %v609
    %v5476 = vmul.f32 %v5468, %v516
    %v5477 = vmul.f32 %v5468, %v626
    %v5478 = vmul.f32 %v5468, %v610
    %v5479 = vmul.f32 %v5468, %v519
    %v5480 = vmul.f32 %v5468, %v627
    %v5481 = vmul.f32 %v5468, %v611
    %v5482 = vmul.f32 %v5468, %v522
    %v5483 = vmul.f32 %v5468, %v628
    %v5484 = vmul.f32 %v5468, %v612
    %v5485 = vmul.f32 %v5468, %v525
    %v5486 = vmul.f32 %v5468, %v629
    %v5487 = vmul.f32 %v5468, %v613
    %v5488 = vmul.f32 %v5468, %v528
    %v5489 = vmul.f32 %v5468, %v630
    %v5490 = vmul.f32 %v5468, %v614
    %v5491 = vmul.f32 %v5468, %v531
    %v5492 = vmul.f32 %v5468, %v631
    %v5493 = vmul.f32 %v5468, %v615
    %v5494 = vmul.f32 %v5468, %v534
    %v5495 = vmul.f32 %v5468, %v632
    %v5496 = vmul.f32 %v5468, %v616
    %v5497 = vmul.f32 %v5468, %v537
    %v5498 = vmul.f32 %v5468, %v633
    %v5499 = vmul.f32 %v5468, %v617
    %v5500 = vmul.f32 %v5468, %v540
    %v5501 = vmul.f32 %v5468, %v634
    %v5502 = vmul.f32 %v5468, %v618
    %v5503 = vmul.f32 %v5468, %v543
    %v5504 = vmul.f32 %v5468, %v635
    %v5505 = vmul.f32 %v5468, %v619
    %v5506 = vmul.f32 %v5468, %v546
    %v5507 = vmul.f32 %v5468, %v636
    %v5508 = vmul.f32 %v5468, %v620
    %v5509 = vmul.f32 %v5468, %v549
    %v5510 = vmul.f32 %v5468, %v637
    %v5511 = vmul.f32 %v5468, %v621
    %v5512 = vmul.f32 %v5468, %v552
    %v5513 = vmul.f32 %v5468, %v638
    %v5514 = vmul.f32 %v5468, %v622
    %v5515 = vmul.f32 %v5468, %v555
    %v5516 = vmul.f32 %v5468, %v639
    %v5565 = vrot.slane %v5469, 3
    %v5566 = vrot.slane %v5470, 3
    %v5567 = vsel %vm1210, %v5565, %v5566
    %v5568 = vrot.slane %v5471, 3
    %v5569 = vsel %vm1210, %v5566, %v5568
    %v5570 = vrot.slane %v5472, 3
    %v5571 = vrot.slane %v5473, 3
    %v5572 = vsel %vm1210, %v5570, %v5571
    %v5573 = vrot.slane %v5474, 3
    %v5574 = vsel %vm1210, %v5571, %v5573
    %v5575 = vrot.slane %v5475, 3
    %v5576 = vrot.slane %v5476, 3
    %v5577 = vsel %vm1210, %v5575, %v5576
    %v5578 = vrot.slane %v5477, 3
    %v5579 = vsel %vm1210, %v5576, %v5578
    %v5580 = vrot.slane %v5478, 3
    %v5581 = vrot.slane %v5479, 3
    %v5582 = vsel %vm1210, %v5580, %v5581
    %v5583 = vrot.slane %v5480, 3
    %v5584 = vsel %vm1210, %v5581, %v5583
    %v5585 = vrot.slane %v5481, 3
    %v5586 = vrot.slane %v5482, 3
    %v5587 = vsel %vm1210, %v5585, %v5586
    %v5588 = vrot.slane %v5483, 3
    %v5589 = vsel %vm1210, %v5586, %v5588
    %v5590 = vrot.slane %v5484, 3
    %v5591 = vrot.slane %v5485, 3
    %v5592 = vsel %vm1210, %v5590, %v5591
    %v5593 = vrot.slane %v5486, 3
    %v5594 = vsel %vm1210, %v5591, %v5593
    %v5595 = vrot.slane %v5487, 3
    %v5596 = vrot.slane %v5488, 3
    %v5597 = vsel %vm1210, %v5595, %v5596
    %v5598 = vrot.slane %v5489, 3
    %v5599 = vsel %vm1210, %v5596, %v5598
    %v5600 = vrot.slane %v5490, 3
    %v5601 = vrot.slane %v5491, 3
    %v5602 = vsel %vm1210, %v5600, %v5601
    %v5603 = vrot.slane %v5492, 3
    %v5604 = vsel %vm1210, %v5601, %v5603
    %v5605 = vrot.slane %v5493, 3
    %v5606 = vrot.slane %v5494, 3
    %v5607 = vsel %vm1210, %v5605, %v5606
    %v5608 = vrot.slane %v5495, 3
    %v5609 = vsel %vm1210, %v5606, %v5608
    %v5610 = vrot.slane %v5496, 3
    %v5611 = vrot.slane %v5497, 3
    %v5612 = vsel %vm1210, %v5610, %v5611
    %v5613 = vrot.slane %v5498, 3
    %v5614 = vsel %vm1210, %v5611, %v5613
    %v5615 = vrot.slane %v5499, 3
    %v5616 = vrot.slane %v5500, 3
    %v5617 = vsel %vm1210, %v5615, %v5616
    %v5618 = vrot.slane %v5501, 3
    %v5619 = vsel %vm1210, %v5616, %v5618
    %v5620 = vrot.slane %v5502, 3
    %v5621 = vrot.slane %v5503, 3
    %v5622 = vsel %vm1210, %v5620, %v5621
    %v5623 = vrot.slane %v5504, 3
    %v5624 = vsel %vm1210, %v5621, %v5623
    %v5625 = vrot.slane %v5505, 3
    %v5626 = vrot.slane %v5506, 3
    %v5627 = vsel %vm1210, %v5625, %v5626
    %v5628 = vrot.slane %v5507, 3
    %v5629 = vsel %vm1210, %v5626, %v5628
    %v5630 = vrot.slane %v5508, 3
    %v5631 = vrot.slane %v5509, 3
    %v5632 = vsel %vm1210, %v5630, %v5631
    %v5633 = vrot.slane %v5510, 3
    %v5634 = vsel %vm1210, %v5631, %v5633
    %v5635 = vrot.slane %v5511, 3
    %v5636 = vrot.slane %v5512, 3
    %v5637 = vsel %vm1210, %v5635, %v5636
    %v5638 = vrot.slane %v5513, 3
    %v5639 = vsel %vm1210, %v5636, %v5638
    %v5640 = vrot.slane %v5514, 3
    %v5641 = vrot.slane %v5515, 3
    %v5642 = vsel %vm1210, %v5640, %v5641
    %v5643 = vrot.slane %v5516, 3
    %v5644 = vsel %vm1210, %v5641, %v5643
    %v5677 = vadd.f32 %v5435, %v5567
    %v5678 = vadd.f32 %v5436, %v5569
    %v5679 = vadd.f32 %v5437, %v5572
    %v5680 = vadd.f32 %v5438, %v5574
    %v5681 = vadd.f32 %v5439, %v5577
    %v5682 = vadd.f32 %v5440, %v5579
    %v5683 = vadd.f32 %v5441, %v5582
    %v5684 = vadd.f32 %v5442, %v5584
    %v5685 = vadd.f32 %v5443, %v5587
    %v5686 = vadd.f32 %v5444, %v5589
    %v5687 = vadd.f32 %v5445, %v5592
    %v5688 = vadd.f32 %v5446, %v5594
    %v5689 = vadd.f32 %v5447, %v5597
    %v5690 = vadd.f32 %v5448, %v5599
    %v5691 = vadd.f32 %v5449, %v5602
    %v5692 = vadd.f32 %v5450, %v5604
    %v5693 = vadd.f32 %v5451, %v5607
    %v5694 = vadd.f32 %v5452, %v5609
    %v5695 = vadd.f32 %v5453, %v5612
    %v5696 = vadd.f32 %v5454, %v5614
    %v5697 = vadd.f32 %v5455, %v5617
    %v5698 = vadd.f32 %v5456, %v5619
    %v5699 = vadd.f32 %v5457, %v5622
    %v5700 = vadd.f32 %v5458, %v5624
    %v5701 = vadd.f32 %v5459, %v5627
    %v5702 = vadd.f32 %v5460, %v5629
    %v5703 = vadd.f32 %v5461, %v5632
    %v5704 = vadd.f32 %v5462, %v5634
    %v5705 = vadd.f32 %v5463, %v5637
    %v5706 = vadd.f32 %v5464, %v5639
    %v5707 = vadd.f32 %v5465, %v5642
    %v5708 = vadd.f32 %v5466, %v5644
    %s5709 = sld [smem:[#allocation9 + $0x184]]
    %v5710 = vstv %s5709
    %v5711 = vmul.f32 %v5710, %v607
    %v5712 = vmul.f32 %v5710, %v510
    %v5713 = vmul.f32 %v5710, %v624
    %v5714 = vmul.f32 %v5710, %v608
    %v5715 = vmul.f32 %v5710, %v513
    %v5716 = vmul.f32 %v5710, %v625
    %v5717 = vmul.f32 %v5710, %v609
    %v5718 = vmul.f32 %v5710, %v516
    %v5719 = vmul.f32 %v5710, %v626
    %v5720 = vmul.f32 %v5710, %v610
    %v5721 = vmul.f32 %v5710, %v519
    %v5722 = vmul.f32 %v5710, %v627
    %v5723 = vmul.f32 %v5710, %v611
    %v5724 = vmul.f32 %v5710, %v522
    %v5725 = vmul.f32 %v5710, %v628
    %v5726 = vmul.f32 %v5710, %v612
    %v5727 = vmul.f32 %v5710, %v525
    %v5728 = vmul.f32 %v5710, %v629
    %v5729 = vmul.f32 %v5710, %v613
    %v5730 = vmul.f32 %v5710, %v528
    %v5731 = vmul.f32 %v5710, %v630
    %v5732 = vmul.f32 %v5710, %v614
    %v5733 = vmul.f32 %v5710, %v531
    %v5734 = vmul.f32 %v5710, %v631
    %v5735 = vmul.f32 %v5710, %v615
    %v5736 = vmul.f32 %v5710, %v534
    %v5737 = vmul.f32 %v5710, %v632
    %v5738 = vmul.f32 %v5710, %v616
    %v5739 = vmul.f32 %v5710, %v537
    %v5740 = vmul.f32 %v5710, %v633
    %v5741 = vmul.f32 %v5710, %v617
    %v5742 = vmul.f32 %v5710, %v540
    %v5743 = vmul.f32 %v5710, %v634
    %v5744 = vmul.f32 %v5710, %v618
    %v5745 = vmul.f32 %v5710, %v543
    %v5746 = vmul.f32 %v5710, %v635
    %v5747 = vmul.f32 %v5710, %v619
    %v5748 = vmul.f32 %v5710, %v546
    %v5749 = vmul.f32 %v5710, %v636
    %v5750 = vmul.f32 %v5710, %v620
    %v5751 = vmul.f32 %v5710, %v549
    %v5752 = vmul.f32 %v5710, %v637
    %v5753 = vmul.f32 %v5710, %v621
    %v5754 = vmul.f32 %v5710, %v552
    %v5755 = vmul.f32 %v5710, %v638
    %v5756 = vmul.f32 %v5710, %v622
    %v5757 = vmul.f32 %v5710, %v555
    %v5758 = vmul.f32 %v5710, %v639
    %v5807 = vrot.slane %v5711, 4
    %v5808 = vrot.slane %v5712, 4
    %v5809 = vsel %vm1423, %v5807, %v5808
    %v5810 = vrot.slane %v5713, 4
    %v5811 = vsel %vm1423, %v5808, %v5810
    %v5812 = vrot.slane %v5714, 4
    %v5813 = vrot.slane %v5715, 4
    %v5814 = vsel %vm1423, %v5812, %v5813
    %v5815 = vrot.slane %v5716, 4
    %v5816 = vsel %vm1423, %v5813, %v5815
    %v5817 = vrot.slane %v5717, 4
    %v5818 = vrot.slane %v5718, 4
    %v5819 = vsel %vm1423, %v5817, %v5818
    %v5820 = vrot.slane %v5719, 4
    %v5821 = vsel %vm1423, %v5818, %v5820
    %v5822 = vrot.slane %v5720, 4
    %v5823 = vrot.slane %v5721, 4
    %v5824 = vsel %vm1423, %v5822, %v5823
    %v5825 = vrot.slane %v5722, 4
    %v5826 = vsel %vm1423, %v5823, %v5825
    %v5827 = vrot.slane %v5723, 4
    %v5828 = vrot.slane %v5724, 4
    %v5829 = vsel %vm1423, %v5827, %v5828
    %v5830 = vrot.slane %v5725, 4
    %v5831 = vsel %vm1423, %v5828, %v5830
    %v5832 = vrot.slane %v5726, 4
    %v5833 = vrot.slane %v5727, 4
    %v5834 = vsel %vm1423, %v5832, %v5833
    %v5835 = vrot.slane %v5728, 4
    %v5836 = vsel %vm1423, %v5833, %v5835
    %v5837 = vrot.slane %v5729, 4
    %v5838 = vrot.slane %v5730, 4
    %v5839 = vsel %vm1423, %v5837, %v5838
    %v5840 = vrot.slane %v5731, 4
    %v5841 = vsel %vm1423, %v5838, %v5840
    %v5842 = vrot.slane %v5732, 4
    %v5843 = vrot.slane %v5733, 4
    %v5844 = vsel %vm1423, %v5842, %v5843
    %v5845 = vrot.slane %v5734, 4
    %v5846 = vsel %vm1423, %v5843, %v5845
    %v5847 = vrot.slane %v5735, 4
    %v5848 = vrot.slane %v5736, 4
    %v5849 = vsel %vm1423, %v5847, %v5848
    %v5850 = vrot.slane %v5737, 4
    %v5851 = vsel %vm1423, %v5848, %v5850
    %v5852 = vrot.slane %v5738, 4
    %v5853 = vrot.slane %v5739, 4
    %v5854 = vsel %vm1423, %v5852, %v5853
    %v5855 = vrot.slane %v5740, 4
    %v5856 = vsel %vm1423, %v5853, %v5855
    %v5857 = vrot.slane %v5741, 4
    %v5858 = vrot.slane %v5742, 4
    %v5859 = vsel %vm1423, %v5857, %v5858
    %v5860 = vrot.slane %v5743, 4
    %v5861 = vsel %vm1423, %v5858, %v5860
    %v5862 = vrot.slane %v5744, 4
    %v5863 = vrot.slane %v5745, 4
    %v5864 = vsel %vm1423, %v5862, %v5863
    %v5865 = vrot.slane %v5746, 4
    %v5866 = vsel %vm1423, %v5863, %v5865
    %v5867 = vrot.slane %v5747, 4
    %v5868 = vrot.slane %v5748, 4
    %v5869 = vsel %vm1423, %v5867, %v5868
    %v5870 = vrot.slane %v5749, 4
    %v5871 = vsel %vm1423, %v5868, %v5870
    %v5872 = vrot.slane %v5750, 4
    %v5873 = vrot.slane %v5751, 4
    %v5874 = vsel %vm1423, %v5872, %v5873
    %v5875 = vrot.slane %v5752, 4
    %v5876 = vsel %vm1423, %v5873, %v5875
    %v5877 = vrot.slane %v5753, 4
    %v5878 = vrot.slane %v5754, 4
    %v5879 = vsel %vm1423, %v5877, %v5878
    %v5880 = vrot.slane %v5755, 4
    %v5881 = vsel %vm1423, %v5878, %v5880
    %v5882 = vrot.slane %v5756, 4
    %v5883 = vrot.slane %v5757, 4
    %v5884 = vsel %vm1423, %v5882, %v5883
    %v5885 = vrot.slane %v5758, 4
    %v5886 = vsel %vm1423, %v5883, %v5885
    %v5919 = vadd.f32 %v5677, %v5809
    %v5920 = vadd.f32 %v5678, %v5811
    %v5921 = vadd.f32 %v5679, %v5814
    %v5922 = vadd.f32 %v5680, %v5816
    %v5923 = vadd.f32 %v5681, %v5819
    %v5924 = vadd.f32 %v5682, %v5821
    %v5925 = vadd.f32 %v5683, %v5824
    %v5926 = vadd.f32 %v5684, %v5826
    %v5927 = vadd.f32 %v5685, %v5829
    %v5928 = vadd.f32 %v5686, %v5831
    %v5929 = vadd.f32 %v5687, %v5834
    %v5930 = vadd.f32 %v5688, %v5836
    %v5931 = vadd.f32 %v5689, %v5839
    %v5932 = vadd.f32 %v5690, %v5841
    %v5933 = vadd.f32 %v5691, %v5844
    %v5934 = vadd.f32 %v5692, %v5846
    %v5935 = vadd.f32 %v5693, %v5849
    %v5936 = vadd.f32 %v5694, %v5851
    %v5937 = vadd.f32 %v5695, %v5854
    %v5938 = vadd.f32 %v5696, %v5856
    %v5939 = vadd.f32 %v5697, %v5859
    %v5940 = vadd.f32 %v5698, %v5861
    %v5941 = vadd.f32 %v5699, %v5864
    %v5942 = vadd.f32 %v5700, %v5866
    %v5943 = vadd.f32 %v5701, %v5869
    %v5944 = vadd.f32 %v5702, %v5871
    %v5945 = vadd.f32 %v5703, %v5874
    %v5946 = vadd.f32 %v5704, %v5876
    %v5947 = vadd.f32 %v5705, %v5879
    %v5948 = vadd.f32 %v5706, %v5881
    %v5949 = vadd.f32 %v5707, %v5884
    %v5950 = vadd.f32 %v5708, %v5886
    %s5951 = sld [smem:[#allocation9 + $0x185]]
    %v5952 = vstv %s5951
    %v5953 = vmul.f32 %v5952, %v607
    %v5954 = vmul.f32 %v5952, %v510
    %v5955 = vmul.f32 %v5952, %v624
    %v5956 = vmul.f32 %v5952, %v608
    %v5957 = vmul.f32 %v5952, %v513
    %v5958 = vmul.f32 %v5952, %v625
    %v5959 = vmul.f32 %v5952, %v609
    %v5960 = vmul.f32 %v5952, %v516
    %v5961 = vmul.f32 %v5952, %v626
    %v5962 = vmul.f32 %v5952, %v610
    %v5963 = vmul.f32 %v5952, %v519
    %v5964 = vmul.f32 %v5952, %v627
    %v5965 = vmul.f32 %v5952, %v611
    %v5966 = vmul.f32 %v5952, %v522
    %v5967 = vmul.f32 %v5952, %v628
    %v5968 = vmul.f32 %v5952, %v612
    %v5969 = vmul.f32 %v5952, %v525
    %v5970 = vmul.f32 %v5952, %v629
    %v5971 = vmul.f32 %v5952, %v613
    %v5972 = vmul.f32 %v5952, %v528
    %v5973 = vmul.f32 %v5952, %v630
    %v5974 = vmul.f32 %v5952, %v614
    %v5975 = vmul.f32 %v5952, %v531
    %v5976 = vmul.f32 %v5952, %v631
    %v5977 = vmul.f32 %v5952, %v615
    %v5978 = vmul.f32 %v5952, %v534
    %v5979 = vmul.f32 %v5952, %v632
    %v5980 = vmul.f32 %v5952, %v616
    %v5981 = vmul.f32 %v5952, %v537
    %v5982 = vmul.f32 %v5952, %v633
    %v5983 = vmul.f32 %v5952, %v617
    %v5984 = vmul.f32 %v5952, %v540
    %v5985 = vmul.f32 %v5952, %v634
    %v5986 = vmul.f32 %v5952, %v618
    %v5987 = vmul.f32 %v5952, %v543
    %v5988 = vmul.f32 %v5952, %v635
    %v5989 = vmul.f32 %v5952, %v619
    %v5990 = vmul.f32 %v5952, %v546
    %v5991 = vmul.f32 %v5952, %v636
    %v5992 = vmul.f32 %v5952, %v620
    %v5993 = vmul.f32 %v5952, %v549
    %v5994 = vmul.f32 %v5952, %v637
    %v5995 = vmul.f32 %v5952, %v621
    %v5996 = vmul.f32 %v5952, %v552
    %v5997 = vmul.f32 %v5952, %v638
    %v5998 = vmul.f32 %v5952, %v622
    %v5999 = vmul.f32 %v5952, %v555
    %v6000 = vmul.f32 %v5952, %v639
    %v6049 = vrot.slane %v5953, 5
    %v6050 = vrot.slane %v5954, 5
    %v6051 = vsel %vm505, %v6049, %v6050
    %v6052 = vrot.slane %v5955, 5
    %v6053 = vsel %vm505, %v6050, %v6052
    %v6054 = vrot.slane %v5956, 5
    %v6055 = vrot.slane %v5957, 5
    %v6056 = vsel %vm505, %v6054, %v6055
    %v6057 = vrot.slane %v5958, 5
    %v6058 = vsel %vm505, %v6055, %v6057
    %v6059 = vrot.slane %v5959, 5
    %v6060 = vrot.slane %v5960, 5
    %v6061 = vsel %vm505, %v6059, %v6060
    %v6062 = vrot.slane %v5961, 5
    %v6063 = vsel %vm505, %v6060, %v6062
    %v6064 = vrot.slane %v5962, 5
    %v6065 = vrot.slane %v5963, 5
    %v6066 = vsel %vm505, %v6064, %v6065
    %v6067 = vrot.slane %v5964, 5
    %v6068 = vsel %vm505, %v6065, %v6067
    %v6069 = vrot.slane %v5965, 5
    %v6070 = vrot.slane %v5966, 5
    %v6071 = vsel %vm505, %v6069, %v6070
    %v6072 = vrot.slane %v5967, 5
    %v6073 = vsel %vm505, %v6070, %v6072
    %v6074 = vrot.slane %v5968, 5
    %v6075 = vrot.slane %v5969, 5
    %v6076 = vsel %vm505, %v6074, %v6075
    %v6077 = vrot.slane %v5970, 5
    %v6078 = vsel %vm505, %v6075, %v6077
    %v6079 = vrot.slane %v5971, 5
    %v6080 = vrot.slane %v5972, 5
    %v6081 = vsel %vm505, %v6079, %v6080
    %v6082 = vrot.slane %v5973, 5
    %v6083 = vsel %vm505, %v6080, %v6082
    %v6084 = vrot.slane %v5974, 5
    %v6085 = vrot.slane %v5975, 5
    %v6086 = vsel %vm505, %v6084, %v6085
    %v6087 = vrot.slane %v5976, 5
    %v6088 = vsel %vm505, %v6085, %v6087
    %v6089 = vrot.slane %v5977, 5
    %v6090 = vrot.slane %v5978, 5
    %v6091 = vsel %vm505, %v6089, %v6090
    %v6092 = vrot.slane %v5979, 5
    %v6093 = vsel %vm505, %v6090, %v6092
    %v6094 = vrot.slane %v5980, 5
    %v6095 = vrot.slane %v5981, 5
    %v6096 = vsel %vm505, %v6094, %v6095
    %v6097 = vrot.slane %v5982, 5
    %v6098 = vsel %vm505, %v6095, %v6097
    %v6099 = vrot.slane %v5983, 5
    %v6100 = vrot.slane %v5984, 5
    %v6101 = vsel %vm505, %v6099, %v6100
    %v6102 = vrot.slane %v5985, 5
    %v6103 = vsel %vm505, %v6100, %v6102
    %v6104 = vrot.slane %v5986, 5
    %v6105 = vrot.slane %v5987, 5
    %v6106 = vsel %vm505, %v6104, %v6105
    %v6107 = vrot.slane %v5988, 5
    %v6108 = vsel %vm505, %v6105, %v6107
    %v6109 = vrot.slane %v5989, 5
    %v6110 = vrot.slane %v5990, 5
    %v6111 = vsel %vm505, %v6109, %v6110
    %v6112 = vrot.slane %v5991, 5
    %v6113 = vsel %vm505, %v6110, %v6112
    %v6114 = vrot.slane %v5992, 5
    %v6115 = vrot.slane %v5993, 5
    %v6116 = vsel %vm505, %v6114, %v6115
    %v6117 = vrot.slane %v5994, 5
    %v6118 = vsel %vm505, %v6115, %v6117
    %v6119 = vrot.slane %v5995, 5
    %v6120 = vrot.slane %v5996, 5
    %v6121 = vsel %vm505, %v6119, %v6120
    %v6122 = vrot.slane %v5997, 5
    %v6123 = vsel %vm505, %v6120, %v6122
    %v6124 = vrot.slane %v5998, 5
    %v6125 = vrot.slane %v5999, 5
    %v6126 = vsel %vm505, %v6124, %v6125
    %v6127 = vrot.slane %v6000, 5
    %v6128 = vsel %vm505, %v6125, %v6127
    %v6161 = vadd.f32 %v5919, %v6051
    %v6162 = vadd.f32 %v5920, %v6053
    %v6163 = vadd.f32 %v5921, %v6056
    %v6164 = vadd.f32 %v5922, %v6058
    %v6165 = vadd.f32 %v5923, %v6061
    %v6166 = vadd.f32 %v5924, %v6063
    %v6167 = vadd.f32 %v5925, %v6066
    %v6168 = vadd.f32 %v5926, %v6068
    %v6169 = vadd.f32 %v5927, %v6071
    %v6170 = vadd.f32 %v5928, %v6073
    %v6171 = vadd.f32 %v5929, %v6076
    %v6172 = vadd.f32 %v5930, %v6078
    %v6173 = vadd.f32 %v5931, %v6081
    %v6174 = vadd.f32 %v5932, %v6083
    %v6175 = vadd.f32 %v5933, %v6086
    %v6176 = vadd.f32 %v5934, %v6088
    %v6177 = vadd.f32 %v5935, %v6091
    %v6178 = vadd.f32 %v5936, %v6093
    %v6179 = vadd.f32 %v5937, %v6096
    %v6180 = vadd.f32 %v5938, %v6098
    %v6181 = vadd.f32 %v5939, %v6101
    %v6182 = vadd.f32 %v5940, %v6103
    %v6183 = vadd.f32 %v5941, %v6106
    %v6184 = vadd.f32 %v5942, %v6108
    %v6185 = vadd.f32 %v5943, %v6111
    %v6186 = vadd.f32 %v5944, %v6113
    %v6187 = vadd.f32 %v5945, %v6116
    %v6188 = vadd.f32 %v5946, %v6118
    %v6189 = vadd.f32 %v5947, %v6121
    %v6190 = vadd.f32 %v5948, %v6123
    %v6191 = vadd.f32 %v5949, %v6126
    %v6192 = vadd.f32 %v5950, %v6128
    %s6193 = sld [smem:[#allocation9 + $0x186]]
    %v6194 = vstv %s6193
    %v6195 = vmul.f32 %v6194, %v607
    %v6196 = vmul.f32 %v6194, %v510
    %v6197 = vmul.f32 %v6194, %v624
    %v6198 = vmul.f32 %v6194, %v608
    %v6199 = vmul.f32 %v6194, %v513
    %v6200 = vmul.f32 %v6194, %v625
    %v6201 = vmul.f32 %v6194, %v609
    %v6202 = vmul.f32 %v6194, %v516
    %v6203 = vmul.f32 %v6194, %v626
    %v6204 = vmul.f32 %v6194, %v610
    %v6205 = vmul.f32 %v6194, %v519
    %v6206 = vmul.f32 %v6194, %v627
    %v6207 = vmul.f32 %v6194, %v611
    %v6208 = vmul.f32 %v6194, %v522
    %v6209 = vmul.f32 %v6194, %v628
    %v6210 = vmul.f32 %v6194, %v612
    %v6211 = vmul.f32 %v6194, %v525
    %v6212 = vmul.f32 %v6194, %v629
    %v6213 = vmul.f32 %v6194, %v613
    %v6214 = vmul.f32 %v6194, %v528
    %v6215 = vmul.f32 %v6194, %v630
    %v6216 = vmul.f32 %v6194, %v614
    %v6217 = vmul.f32 %v6194, %v531
    %v6218 = vmul.f32 %v6194, %v631
    %v6219 = vmul.f32 %v6194, %v615
    %v6220 = vmul.f32 %v6194, %v534
    %v6221 = vmul.f32 %v6194, %v632
    %v6222 = vmul.f32 %v6194, %v616
    %v6223 = vmul.f32 %v6194, %v537
    %v6224 = vmul.f32 %v6194, %v633
    %v6225 = vmul.f32 %v6194, %v617
    %v6226 = vmul.f32 %v6194, %v540
    %v6227 = vmul.f32 %v6194, %v634
    %v6228 = vmul.f32 %v6194, %v618
    %v6229 = vmul.f32 %v6194, %v543
    %v6230 = vmul.f32 %v6194, %v635
    %v6231 = vmul.f32 %v6194, %v619
    %v6232 = vmul.f32 %v6194, %v546
    %v6233 = vmul.f32 %v6194, %v636
    %v6234 = vmul.f32 %v6194, %v620
    %v6235 = vmul.f32 %v6194, %v549
    %v6236 = vmul.f32 %v6194, %v637
    %v6237 = vmul.f32 %v6194, %v621
    %v6238 = vmul.f32 %v6194, %v552
    %v6239 = vmul.f32 %v6194, %v638
    %v6240 = vmul.f32 %v6194, %v622
    %v6241 = vmul.f32 %v6194, %v555
    %v6242 = vmul.f32 %v6194, %v639
    %v6291 = vrot.slane %v6195, 6
    %v6292 = vrot.slane %v6196, 6
    %v6293 = vsel %vm1848, %v6291, %v6292
    %v6294 = vrot.slane %v6197, 6
    %v6295 = vsel %vm1848, %v6292, %v6294
    %v6296 = vrot.slane %v6198, 6
    %v6297 = vrot.slane %v6199, 6
    %v6298 = vsel %vm1848, %v6296, %v6297
    %v6299 = vrot.slane %v6200, 6
    %v6300 = vsel %vm1848, %v6297, %v6299
    %v6301 = vrot.slane %v6201, 6
    %v6302 = vrot.slane %v6202, 6
    %v6303 = vsel %vm1848, %v6301, %v6302
    %v6304 = vrot.slane %v6203, 6
    %v6305 = vsel %vm1848, %v6302, %v6304
    %v6306 = vrot.slane %v6204, 6
    %v6307 = vrot.slane %v6205, 6
    %v6308 = vsel %vm1848, %v6306, %v6307
    %v6309 = vrot.slane %v6206, 6
    %v6310 = vsel %vm1848, %v6307, %v6309
    %v6311 = vrot.slane %v6207, 6
    %v6312 = vrot.slane %v6208, 6
    %v6313 = vsel %vm1848, %v6311, %v6312
    %v6314 = vrot.slane %v6209, 6
    %v6315 = vsel %vm1848, %v6312, %v6314
    %v6316 = vrot.slane %v6210, 6
    %v6317 = vrot.slane %v6211, 6
    %v6318 = vsel %vm1848, %v6316, %v6317
    %v6319 = vrot.slane %v6212, 6
    %v6320 = vsel %vm1848, %v6317, %v6319
    %v6321 = vrot.slane %v6213, 6
    %v6322 = vrot.slane %v6214, 6
    %v6323 = vsel %vm1848, %v6321, %v6322
    %v6324 = vrot.slane %v6215, 6
    %v6325 = vsel %vm1848, %v6322, %v6324
    %v6326 = vrot.slane %v6216, 6
    %v6327 = vrot.slane %v6217, 6
    %v6328 = vsel %vm1848, %v6326, %v6327
    %v6329 = vrot.slane %v6218, 6
    %v6330 = vsel %vm1848, %v6327, %v6329
    %v6331 = vrot.slane %v6219, 6
    %v6332 = vrot.slane %v6220, 6
    %v6333 = vsel %vm1848, %v6331, %v6332
    %v6334 = vrot.slane %v6221, 6
    %v6335 = vsel %vm1848, %v6332, %v6334
    %v6336 = vrot.slane %v6222, 6
    %v6337 = vrot.slane %v6223, 6
    %v6338 = vsel %vm1848, %v6336, %v6337
    %v6339 = vrot.slane %v6224, 6
    %v6340 = vsel %vm1848, %v6337, %v6339
    %v6341 = vrot.slane %v6225, 6
    %v6342 = vrot.slane %v6226, 6
    %v6343 = vsel %vm1848, %v6341, %v6342
    %v6344 = vrot.slane %v6227, 6
    %v6345 = vsel %vm1848, %v6342, %v6344
    %v6346 = vrot.slane %v6228, 6
    %v6347 = vrot.slane %v6229, 6
    %v6348 = vsel %vm1848, %v6346, %v6347
    %v6349 = vrot.slane %v6230, 6
    %v6350 = vsel %vm1848, %v6347, %v6349
    %v6351 = vrot.slane %v6231, 6
    %v6352 = vrot.slane %v6232, 6
    %v6353 = vsel %vm1848, %v6351, %v6352
    %v6354 = vrot.slane %v6233, 6
    %v6355 = vsel %vm1848, %v6352, %v6354
    %v6356 = vrot.slane %v6234, 6
    %v6357 = vrot.slane %v6235, 6
    %v6358 = vsel %vm1848, %v6356, %v6357
    %v6359 = vrot.slane %v6236, 6
    %v6360 = vsel %vm1848, %v6357, %v6359
    %v6361 = vrot.slane %v6237, 6
    %v6362 = vrot.slane %v6238, 6
    %v6363 = vsel %vm1848, %v6361, %v6362
    %v6364 = vrot.slane %v6239, 6
    %v6365 = vsel %vm1848, %v6362, %v6364
    %v6366 = vrot.slane %v6240, 6
    %v6367 = vrot.slane %v6241, 6
    %v6368 = vsel %vm1848, %v6366, %v6367
    %v6369 = vrot.slane %v6242, 6
    %v6370 = vsel %vm1848, %v6367, %v6369
    %v6403 = vadd.f32 %v6161, %v6293
    %v6404 = vadd.f32 %v6162, %v6295
    %v6405 = vadd.f32 %v6163, %v6298
    %v6406 = vadd.f32 %v6164, %v6300
    %v6407 = vadd.f32 %v6165, %v6303
    %v6408 = vadd.f32 %v6166, %v6305
    %v6409 = vadd.f32 %v6167, %v6308
    %v6410 = vadd.f32 %v6168, %v6310
    %v6411 = vadd.f32 %v6169, %v6313
    %v6412 = vadd.f32 %v6170, %v6315
    %v6413 = vadd.f32 %v6171, %v6318
    %v6414 = vadd.f32 %v6172, %v6320
    %v6415 = vadd.f32 %v6173, %v6323
    %v6416 = vadd.f32 %v6174, %v6325
    %v6417 = vadd.f32 %v6175, %v6328
    %v6418 = vadd.f32 %v6176, %v6330
    %v6419 = vadd.f32 %v6177, %v6333
    %v6420 = vadd.f32 %v6178, %v6335
    %v6421 = vadd.f32 %v6179, %v6338
    %v6422 = vadd.f32 %v6180, %v6340
    %v6423 = vadd.f32 %v6181, %v6343
    %v6424 = vadd.f32 %v6182, %v6345
    %v6425 = vadd.f32 %v6183, %v6348
    %v6426 = vadd.f32 %v6184, %v6350
    %v6427 = vadd.f32 %v6185, %v6353
    %v6428 = vadd.f32 %v6186, %v6355
    %v6429 = vadd.f32 %v6187, %v6358
    %v6430 = vadd.f32 %v6188, %v6360
    %v6431 = vadd.f32 %v6189, %v6363
    %v6432 = vadd.f32 %v6190, %v6365
    %v6433 = vadd.f32 %v6191, %v6368
    %v6434 = vadd.f32 %v6192, %v6370
    %s6435 = sld [smem:[#allocation9 + $0x200]]
    %v6436 = vstv %s6435
    %v6437 = vmul.f32 %v6436, %v608
    %v6438 = vmul.f32 %v6436, %v513
    %v6439 = vmul.f32 %v6436, %v609
    %v6440 = vmul.f32 %v6436, %v516
    %v6441 = vmul.f32 %v6436, %v610
    %v6442 = vmul.f32 %v6436, %v519
    %v6443 = vmul.f32 %v6436, %v611
    %v6444 = vmul.f32 %v6436, %v522
    %v6445 = vmul.f32 %v6436, %v612
    %v6446 = vmul.f32 %v6436, %v525
    %v6447 = vmul.f32 %v6436, %v613
    %v6448 = vmul.f32 %v6436, %v528
    %v6449 = vmul.f32 %v6436, %v614
    %v6450 = vmul.f32 %v6436, %v531
    %v6451 = vmul.f32 %v6436, %v615
    %v6452 = vmul.f32 %v6436, %v534
    %v6453 = vmul.f32 %v6436, %v616
    %v6454 = vmul.f32 %v6436, %v537
    %v6455 = vmul.f32 %v6436, %v617
    %v6456 = vmul.f32 %v6436, %v540
    %v6457 = vmul.f32 %v6436, %v618
    %v6458 = vmul.f32 %v6436, %v543
    %v6459 = vmul.f32 %v6436, %v619
    %v6460 = vmul.f32 %v6436, %v546
    %v6461 = vmul.f32 %v6436, %v620
    %v6462 = vmul.f32 %v6436, %v549
    %v6463 = vmul.f32 %v6436, %v621
    %v6464 = vmul.f32 %v6436, %v552
    %v6465 = vmul.f32 %v6436, %v622
    %v6466 = vmul.f32 %v6436, %v555
    %v6467 = vmul.f32 %v6436, %v606
    %v6468 = vmul.f32 %v6436, %v507
    %v6469 = vadd.f32 %v6403, %v6437
    %v6470 = vadd.f32 %v6404, %v6438
    %v6471 = vadd.f32 %v6405, %v6439
    %v6472 = vadd.f32 %v6406, %v6440
    %v6473 = vadd.f32 %v6407, %v6441
    %v6474 = vadd.f32 %v6408, %v6442
    %v6475 = vadd.f32 %v6409, %v6443
    %v6476 = vadd.f32 %v6410, %v6444
    %v6477 = vadd.f32 %v6411, %v6445
    %v6478 = vadd.f32 %v6412, %v6446
    %v6479 = vadd.f32 %v6413, %v6447
    %v6480 = vadd.f32 %v6414, %v6448
    %v6481 = vadd.f32 %v6415, %v6449
    %v6482 = vadd.f32 %v6416, %v6450
    %v6483 = vadd.f32 %v6417, %v6451
    %v6484 = vadd.f32 %v6418, %v6452
    %v6485 = vadd.f32 %v6419, %v6453
    %v6486 = vadd.f32 %v6420, %v6454
    %v6487 = vadd.f32 %v6421, %v6455
    %v6488 = vadd.f32 %v6422, %v6456
    %v6489 = vadd.f32 %v6423, %v6457
    %v6490 = vadd.f32 %v6424, %v6458
    %v6491 = vadd.f32 %v6425, %v6459
    %v6492 = vadd.f32 %v6426, %v6460
    %v6493 = vadd.f32 %v6427, %v6461
    %v6494 = vadd.f32 %v6428, %v6462
    %v6495 = vadd.f32 %v6429, %v6463
    %v6496 = vadd.f32 %v6430, %v6464
    %v6497 = vadd.f32 %v6431, %v6465
    %v6498 = vadd.f32 %v6432, %v6466
    %v6499 = vadd.f32 %v6433, %v6467
    %v6500 = vadd.f32 %v6434, %v6468
    %s6501 = sld [smem:[#allocation9 + $0x201]]
    %v6502 = vstv %s6501
    %v6503 = vmul.f32 %v6502, %v608
    %v6504 = vmul.f32 %v6502, %v513
    %v6505 = vmul.f32 %v6502, %v625
    %v6506 = vmul.f32 %v6502, %v609
    %v6507 = vmul.f32 %v6502, %v516
    %v6508 = vmul.f32 %v6502, %v626
    %v6509 = vmul.f32 %v6502, %v610
    %v6510 = vmul.f32 %v6502, %v519
    %v6511 = vmul.f32 %v6502, %v627
    %v6512 = vmul.f32 %v6502, %v611
    %v6513 = vmul.f32 %v6502, %v522
    %v6514 = vmul.f32 %v6502, %v628
    %v6515 = vmul.f32 %v6502, %v612
    %v6516 = vmul.f32 %v6502, %v525
    %v6517 = vmul.f32 %v6502, %v629
    %v6518 = vmul.f32 %v6502, %v613
    %v6519 = vmul.f32 %v6502, %v528
    %v6520 = vmul.f32 %v6502, %v630
    %v6521 = vmul.f32 %v6502, %v614
    %v6522 = vmul.f32 %v6502, %v531
    %v6523 = vmul.f32 %v6502, %v631
    %v6524 = vmul.f32 %v6502, %v615
    %v6525 = vmul.f32 %v6502, %v534
    %v6526 = vmul.f32 %v6502, %v632
    %v6527 = vmul.f32 %v6502, %v616
    %v6528 = vmul.f32 %v6502, %v537
    %v6529 = vmul.f32 %v6502, %v633
    %v6530 = vmul.f32 %v6502, %v617
    %v6531 = vmul.f32 %v6502, %v540
    %v6532 = vmul.f32 %v6502, %v634
    %v6533 = vmul.f32 %v6502, %v618
    %v6534 = vmul.f32 %v6502, %v543
    %v6535 = vmul.f32 %v6502, %v635
    %v6536 = vmul.f32 %v6502, %v619
    %v6537 = vmul.f32 %v6502, %v546
    %v6538 = vmul.f32 %v6502, %v636
    %v6539 = vmul.f32 %v6502, %v620
    %v6540 = vmul.f32 %v6502, %v549
    %v6541 = vmul.f32 %v6502, %v637
    %v6542 = vmul.f32 %v6502, %v621
    %v6543 = vmul.f32 %v6502, %v552
    %v6544 = vmul.f32 %v6502, %v638
    %v6545 = vmul.f32 %v6502, %v622
    %v6546 = vmul.f32 %v6502, %v555
    %v6547 = vmul.f32 %v6502, %v639
    %v6548 = vmul.f32 %v6502, %v606
    %v6549 = vmul.f32 %v6502, %v507
    %v6550 = vmul.f32 %v6502, %v623
    %v6599 = vrot.slane %v6503, 1
    %v6600 = vrot.slane %v6504, 1
    %v6601 = vsel %vm784, %v6599, %v6600
    %v6602 = vrot.slane %v6505, 1
    %v6603 = vsel %vm784, %v6600, %v6602
    %v6604 = vrot.slane %v6506, 1
    %v6605 = vrot.slane %v6507, 1
    %v6606 = vsel %vm784, %v6604, %v6605
    %v6607 = vrot.slane %v6508, 1
    %v6608 = vsel %vm784, %v6605, %v6607
    %v6609 = vrot.slane %v6509, 1
    %v6610 = vrot.slane %v6510, 1
    %v6611 = vsel %vm784, %v6609, %v6610
    %v6612 = vrot.slane %v6511, 1
    %v6613 = vsel %vm784, %v6610, %v6612
    %v6614 = vrot.slane %v6512, 1
    %v6615 = vrot.slane %v6513, 1
    %v6616 = vsel %vm784, %v6614, %v6615
    %v6617 = vrot.slane %v6514, 1
    %v6618 = vsel %vm784, %v6615, %v6617
    %v6619 = vrot.slane %v6515, 1
    %v6620 = vrot.slane %v6516, 1
    %v6621 = vsel %vm784, %v6619, %v6620
    %v6622 = vrot.slane %v6517, 1
    %v6623 = vsel %vm784, %v6620, %v6622
    %v6624 = vrot.slane %v6518, 1
    %v6625 = vrot.slane %v6519, 1
    %v6626 = vsel %vm784, %v6624, %v6625
    %v6627 = vrot.slane %v6520, 1
    %v6628 = vsel %vm784, %v6625, %v6627
    %v6629 = vrot.slane %v6521, 1
    %v6630 = vrot.slane %v6522, 1
    %v6631 = vsel %vm784, %v6629, %v6630
    %v6632 = vrot.slane %v6523, 1
    %v6633 = vsel %vm784, %v6630, %v6632
    %v6634 = vrot.slane %v6524, 1
    %v6635 = vrot.slane %v6525, 1
    %v6636 = vsel %vm784, %v6634, %v6635
    %v6637 = vrot.slane %v6526, 1
    %v6638 = vsel %vm784, %v6635, %v6637
    %v6639 = vrot.slane %v6527, 1
    %v6640 = vrot.slane %v6528, 1
    %v6641 = vsel %vm784, %v6639, %v6640
    %v6642 = vrot.slane %v6529, 1
    %v6643 = vsel %vm784, %v6640, %v6642
    %v6644 = vrot.slane %v6530, 1
    %v6645 = vrot.slane %v6531, 1
    %v6646 = vsel %vm784, %v6644, %v6645
    %v6647 = vrot.slane %v6532, 1
    %v6648 = vsel %vm784, %v6645, %v6647
    %v6649 = vrot.slane %v6533, 1
    %v6650 = vrot.slane %v6534, 1
    %v6651 = vsel %vm784, %v6649, %v6650
    %v6652 = vrot.slane %v6535, 1
    %v6653 = vsel %vm784, %v6650, %v6652
    %v6654 = vrot.slane %v6536, 1
    %v6655 = vrot.slane %v6537, 1
    %v6656 = vsel %vm784, %v6654, %v6655
    %v6657 = vrot.slane %v6538, 1
    %v6658 = vsel %vm784, %v6655, %v6657
    %v6659 = vrot.slane %v6539, 1
    %v6660 = vrot.slane %v6540, 1
    %v6661 = vsel %vm784, %v6659, %v6660
    %v6662 = vrot.slane %v6541, 1
    %v6663 = vsel %vm784, %v6660, %v6662
    %v6664 = vrot.slane %v6542, 1
    %v6665 = vrot.slane %v6543, 1
    %v6666 = vsel %vm784, %v6664, %v6665
    %v6667 = vrot.slane %v6544, 1
    %v6668 = vsel %vm784, %v6665, %v6667
    %v6669 = vrot.slane %v6545, 1
    %v6670 = vrot.slane %v6546, 1
    %v6671 = vsel %vm784, %v6669, %v6670
    %v6672 = vrot.slane %v6547, 1
    %v6673 = vsel %vm784, %v6670, %v6672
    %v6674 = vrot.slane %v6548, 1
    %v6675 = vrot.slane %v6549, 1
    %v6676 = vsel %vm784, %v6674, %v6675
    %v6677 = vrot.slane %v6550, 1
    %v6678 = vsel %vm784, %v6675, %v6677
    %v6711 = vadd.f32 %v6469, %v6601
    %v6712 = vadd.f32 %v6470, %v6603
    %v6713 = vadd.f32 %v6471, %v6606
    %v6714 = vadd.f32 %v6472, %v6608
    %v6715 = vadd.f32 %v6473, %v6611
    %v6716 = vadd.f32 %v6474, %v6613
    %v6717 = vadd.f32 %v6475, %v6616
    %v6718 = vadd.f32 %v6476, %v6618
    %v6719 = vadd.f32 %v6477, %v6621
    %v6720 = vadd.f32 %v6478, %v6623
    %v6721 = vadd.f32 %v6479, %v6626
    %v6722 = vadd.f32 %v6480, %v6628
    %v6723 = vadd.f32 %v6481, %v6631
    %v6724 = vadd.f32 %v6482, %v6633
    %v6725 = vadd.f32 %v6483, %v6636
    %v6726 = vadd.f32 %v6484, %v6638
    %v6727 = vadd.f32 %v6485, %v6641
    %v6728 = vadd.f32 %v6486, %v6643
    %v6729 = vadd.f32 %v6487, %v6646
    %v6730 = vadd.f32 %v6488, %v6648
    %v6731 = vadd.f32 %v6489, %v6651
    %v6732 = vadd.f32 %v6490, %v6653
    %v6733 = vadd.f32 %v6491, %v6656
    %v6734 = vadd.f32 %v6492, %v6658
    %v6735 = vadd.f32 %v6493, %v6661
    %v6736 = vadd.f32 %v6494, %v6663
    %v6737 = vadd.f32 %v6495, %v6666
    %v6738 = vadd.f32 %v6496, %v6668
    %v6739 = vadd.f32 %v6497, %v6671
    %v6740 = vadd.f32 %v6498, %v6673
    %v6741 = vadd.f32 %v6499, %v6676
    %v6742 = vadd.f32 %v6500, %v6678
    %s6743 = sld [smem:[#allocation9 + $0x202]]
    %v6744 = vstv %s6743
    %v6745 = vmul.f32 %v6744, %v608
    %v6746 = vmul.f32 %v6744, %v513
    %v6747 = vmul.f32 %v6744, %v625
    %v6748 = vmul.f32 %v6744, %v609
    %v6749 = vmul.f32 %v6744, %v516
    %v6750 = vmul.f32 %v6744, %v626
    %v6751 = vmul.f32 %v6744, %v610
    %v6752 = vmul.f32 %v6744, %v519
    %v6753 = vmul.f32 %v6744, %v627
    %v6754 = vmul.f32 %v6744, %v611
    %v6755 = vmul.f32 %v6744, %v522
    %v6756 = vmul.f32 %v6744, %v628
    %v6757 = vmul.f32 %v6744, %v612
    %v6758 = vmul.f32 %v6744, %v525
    %v6759 = vmul.f32 %v6744, %v629
    %v6760 = vmul.f32 %v6744, %v613
    %v6761 = vmul.f32 %v6744, %v528
    %v6762 = vmul.f32 %v6744, %v630
    %v6763 = vmul.f32 %v6744, %v614
    %v6764 = vmul.f32 %v6744, %v531
    %v6765 = vmul.f32 %v6744, %v631
    %v6766 = vmul.f32 %v6744, %v615
    %v6767 = vmul.f32 %v6744, %v534
    %v6768 = vmul.f32 %v6744, %v632
    %v6769 = vmul.f32 %v6744, %v616
    %v6770 = vmul.f32 %v6744, %v537
    %v6771 = vmul.f32 %v6744, %v633
    %v6772 = vmul.f32 %v6744, %v617
    %v6773 = vmul.f32 %v6744, %v540
    %v6774 = vmul.f32 %v6744, %v634
    %v6775 = vmul.f32 %v6744, %v618
    %v6776 = vmul.f32 %v6744, %v543
    %v6777 = vmul.f32 %v6744, %v635
    %v6778 = vmul.f32 %v6744, %v619
    %v6779 = vmul.f32 %v6744, %v546
    %v6780 = vmul.f32 %v6744, %v636
    %v6781 = vmul.f32 %v6744, %v620
    %v6782 = vmul.f32 %v6744, %v549
    %v6783 = vmul.f32 %v6744, %v637
    %v6784 = vmul.f32 %v6744, %v621
    %v6785 = vmul.f32 %v6744, %v552
    %v6786 = vmul.f32 %v6744, %v638
    %v6787 = vmul.f32 %v6744, %v622
    %v6788 = vmul.f32 %v6744, %v555
    %v6789 = vmul.f32 %v6744, %v639
    %v6790 = vmul.f32 %v6744, %v606
    %v6791 = vmul.f32 %v6744, %v507
    %v6792 = vmul.f32 %v6744, %v623
    %v6841 = vrot.slane %v6745, 2
    %v6842 = vrot.slane %v6746, 2
    %v6843 = vsel %vm997, %v6841, %v6842
    %v6844 = vrot.slane %v6747, 2
    %v6845 = vsel %vm997, %v6842, %v6844
    %v6846 = vrot.slane %v6748, 2
    %v6847 = vrot.slane %v6749, 2
    %v6848 = vsel %vm997, %v6846, %v6847
    %v6849 = vrot.slane %v6750, 2
    %v6850 = vsel %vm997, %v6847, %v6849
    %v6851 = vrot.slane %v6751, 2
    %v6852 = vrot.slane %v6752, 2
    %v6853 = vsel %vm997, %v6851, %v6852
    %v6854 = vrot.slane %v6753, 2
    %v6855 = vsel %vm997, %v6852, %v6854
    %v6856 = vrot.slane %v6754, 2
    %v6857 = vrot.slane %v6755, 2
    %v6858 = vsel %vm997, %v6856, %v6857
    %v6859 = vrot.slane %v6756, 2
    %v6860 = vsel %vm997, %v6857, %v6859
    %v6861 = vrot.slane %v6757, 2
    %v6862 = vrot.slane %v6758, 2
    %v6863 = vsel %vm997, %v6861, %v6862
    %v6864 = vrot.slane %v6759, 2
    %v6865 = vsel %vm997, %v6862, %v6864
    %v6866 = vrot.slane %v6760, 2
    %v6867 = vrot.slane %v6761, 2
    %v6868 = vsel %vm997, %v6866, %v6867
    %v6869 = vrot.slane %v6762, 2
    %v6870 = vsel %vm997, %v6867, %v6869
    %v6871 = vrot.slane %v6763, 2
    %v6872 = vrot.slane %v6764, 2
    %v6873 = vsel %vm997, %v6871, %v6872
    %v6874 = vrot.slane %v6765, 2
    %v6875 = vsel %vm997, %v6872, %v6874
    %v6876 = vrot.slane %v6766, 2
    %v6877 = vrot.slane %v6767, 2
    %v6878 = vsel %vm997, %v6876, %v6877
    %v6879 = vrot.slane %v6768, 2
    %v6880 = vsel %vm997, %v6877, %v6879
    %v6881 = vrot.slane %v6769, 2
    %v6882 = vrot.slane %v6770, 2
    %v6883 = vsel %vm997, %v6881, %v6882
    %v6884 = vrot.slane %v6771, 2
    %v6885 = vsel %vm997, %v6882, %v6884
    %v6886 = vrot.slane %v6772, 2
    %v6887 = vrot.slane %v6773, 2
    %v6888 = vsel %vm997, %v6886, %v6887
    %v6889 = vrot.slane %v6774, 2
    %v6890 = vsel %vm997, %v6887, %v6889
    %v6891 = vrot.slane %v6775, 2
    %v6892 = vrot.slane %v6776, 2
    %v6893 = vsel %vm997, %v6891, %v6892
    %v6894 = vrot.slane %v6777, 2
    %v6895 = vsel %vm997, %v6892, %v6894
    %v6896 = vrot.slane %v6778, 2
    %v6897 = vrot.slane %v6779, 2
    %v6898 = vsel %vm997, %v6896, %v6897
    %v6899 = vrot.slane %v6780, 2
    %v6900 = vsel %vm997, %v6897, %v6899
    %v6901 = vrot.slane %v6781, 2
    %v6902 = vrot.slane %v6782, 2
    %v6903 = vsel %vm997, %v6901, %v6902
    %v6904 = vrot.slane %v6783, 2
    %v6905 = vsel %vm997, %v6902, %v6904
    %v6906 = vrot.slane %v6784, 2
    %v6907 = vrot.slane %v6785, 2
    %v6908 = vsel %vm997, %v6906, %v6907
    %v6909 = vrot.slane %v6786, 2
    %v6910 = vsel %vm997, %v6907, %v6909
    %v6911 = vrot.slane %v6787, 2
    %v6912 = vrot.slane %v6788, 2
    %v6913 = vsel %vm997, %v6911, %v6912
    %v6914 = vrot.slane %v6789, 2
    %v6915 = vsel %vm997, %v6912, %v6914
    %v6916 = vrot.slane %v6790, 2
    %v6917 = vrot.slane %v6791, 2
    %v6918 = vsel %vm997, %v6916, %v6917
    %v6919 = vrot.slane %v6792, 2
    %v6920 = vsel %vm997, %v6917, %v6919
    %v6953 = vadd.f32 %v6711, %v6843
    %v6954 = vadd.f32 %v6712, %v6845
    %v6955 = vadd.f32 %v6713, %v6848
    %v6956 = vadd.f32 %v6714, %v6850
    %v6957 = vadd.f32 %v6715, %v6853
    %v6958 = vadd.f32 %v6716, %v6855
    %v6959 = vadd.f32 %v6717, %v6858
    %v6960 = vadd.f32 %v6718, %v6860
    %v6961 = vadd.f32 %v6719, %v6863
    %v6962 = vadd.f32 %v6720, %v6865
    %v6963 = vadd.f32 %v6721, %v6868
    %v6964 = vadd.f32 %v6722, %v6870
    %v6965 = vadd.f32 %v6723, %v6873
    %v6966 = vadd.f32 %v6724, %v6875
    %v6967 = vadd.f32 %v6725, %v6878
    %v6968 = vadd.f32 %v6726, %v6880
    %v6969 = vadd.f32 %v6727, %v6883
    %v6970 = vadd.f32 %v6728, %v6885
    %v6971 = vadd.f32 %v6729, %v6888
    %v6972 = vadd.f32 %v6730, %v6890
    %v6973 = vadd.f32 %v6731, %v6893
    %v6974 = vadd.f32 %v6732, %v6895
    %v6975 = vadd.f32 %v6733, %v6898
    %v6976 = vadd.f32 %v6734, %v6900
    %v6977 = vadd.f32 %v6735, %v6903
    %v6978 = vadd.f32 %v6736, %v6905
    %v6979 = vadd.f32 %v6737, %v6908
    %v6980 = vadd.f32 %v6738, %v6910
    %v6981 = vadd.f32 %v6739, %v6913
    %v6982 = vadd.f32 %v6740, %v6915
    %v6983 = vadd.f32 %v6741, %v6918
    %v6984 = vadd.f32 %v6742, %v6920
    %s6985 = sld [smem:[#allocation9 + $0x203]]
    %v6986 = vstv %s6985
    %v6987 = vmul.f32 %v6986, %v608
    %v6988 = vmul.f32 %v6986, %v513
    %v6989 = vmul.f32 %v6986, %v625
    %v6990 = vmul.f32 %v6986, %v609
    %v6991 = vmul.f32 %v6986, %v516
    %v6992 = vmul.f32 %v6986, %v626
    %v6993 = vmul.f32 %v6986, %v610
    %v6994 = vmul.f32 %v6986, %v519
    %v6995 = vmul.f32 %v6986, %v627
    %v6996 = vmul.f32 %v6986, %v611
    %v6997 = vmul.f32 %v6986, %v522
    %v6998 = vmul.f32 %v6986, %v628
    %v6999 = vmul.f32 %v6986, %v612
    %v7000 = vmul.f32 %v6986, %v525
    %v7001 = vmul.f32 %v6986, %v629
    %v7002 = vmul.f32 %v6986, %v613
    %v7003 = vmul.f32 %v6986, %v528
    %v7004 = vmul.f32 %v6986, %v630
    %v7005 = vmul.f32 %v6986, %v614
    %v7006 = vmul.f32 %v6986, %v531
    %v7007 = vmul.f32 %v6986, %v631
    %v7008 = vmul.f32 %v6986, %v615
    %v7009 = vmul.f32 %v6986, %v534
    %v7010 = vmul.f32 %v6986, %v632
    %v7011 = vmul.f32 %v6986, %v616
    %v7012 = vmul.f32 %v6986, %v537
    %v7013 = vmul.f32 %v6986, %v633
    %v7014 = vmul.f32 %v6986, %v617
    %v7015 = vmul.f32 %v6986, %v540
    %v7016 = vmul.f32 %v6986, %v634
    %v7017 = vmul.f32 %v6986, %v618
    %v7018 = vmul.f32 %v6986, %v543
    %v7019 = vmul.f32 %v6986, %v635
    %v7020 = vmul.f32 %v6986, %v619
    %v7021 = vmul.f32 %v6986, %v546
    %v7022 = vmul.f32 %v6986, %v636
    %v7023 = vmul.f32 %v6986, %v620
    %v7024 = vmul.f32 %v6986, %v549
    %v7025 = vmul.f32 %v6986, %v637
    %v7026 = vmul.f32 %v6986, %v621
    %v7027 = vmul.f32 %v6986, %v552
    %v7028 = vmul.f32 %v6986, %v638
    %v7029 = vmul.f32 %v6986, %v622
    %v7030 = vmul.f32 %v6986, %v555
    %v7031 = vmul.f32 %v6986, %v639
    %v7032 = vmul.f32 %v6986, %v606
    %v7033 = vmul.f32 %v6986, %v507
    %v7034 = vmul.f32 %v6986, %v623
    %v7083 = vrot.slane %v6987, 3
    %v7084 = vrot.slane %v6988, 3
    %v7085 = vsel %vm1210, %v7083, %v7084
    %v7086 = vrot.slane %v6989, 3
    %v7087 = vsel %vm1210, %v7084, %v7086
    %v7088 = vrot.slane %v6990, 3
    %v7089 = vrot.slane %v6991, 3
    %v7090 = vsel %vm1210, %v7088, %v7089
    %v7091 = vrot.slane %v6992, 3
    %v7092 = vsel %vm1210, %v7089, %v7091
    %v7093 = vrot.slane %v6993, 3
    %v7094 = vrot.slane %v6994, 3
    %v7095 = vsel %vm1210, %v7093, %v7094
    %v7096 = vrot.slane %v6995, 3
    %v7097 = vsel %vm1210, %v7094, %v7096
    %v7098 = vrot.slane %v6996, 3
    %v7099 = vrot.slane %v6997, 3
    %v7100 = vsel %vm1210, %v7098, %v7099
    %v7101 = vrot.slane %v6998, 3
    %v7102 = vsel %vm1210, %v7099, %v7101
    %v7103 = vrot.slane %v6999, 3
    %v7104 = vrot.slane %v7000, 3
    %v7105 = vsel %vm1210, %v7103, %v7104
    %v7106 = vrot.slane %v7001, 3
    %v7107 = vsel %vm1210, %v7104, %v7106
    %v7108 = vrot.slane %v7002, 3
    %v7109 = vrot.slane %v7003, 3
    %v7110 = vsel %vm1210, %v7108, %v7109
    %v7111 = vrot.slane %v7004, 3
    %v7112 = vsel %vm1210, %v7109, %v7111
    %v7113 = vrot.slane %v7005, 3
    %v7114 = vrot.slane %v7006, 3
    %v7115 = vsel %vm1210, %v7113, %v7114
    %v7116 = vrot.slane %v7007, 3
    %v7117 = vsel %vm1210, %v7114, %v7116
    %v7118 = vrot.slane %v7008, 3
    %v7119 = vrot.slane %v7009, 3
    %v7120 = vsel %vm1210, %v7118, %v7119
    %v7121 = vrot.slane %v7010, 3
    %v7122 = vsel %vm1210, %v7119, %v7121
    %v7123 = vrot.slane %v7011, 3
    %v7124 = vrot.slane %v7012, 3
    %v7125 = vsel %vm1210, %v7123, %v7124
    %v7126 = vrot.slane %v7013, 3
    %v7127 = vsel %vm1210, %v7124, %v7126
    %v7128 = vrot.slane %v7014, 3
    %v7129 = vrot.slane %v7015, 3
    %v7130 = vsel %vm1210, %v7128, %v7129
    %v7131 = vrot.slane %v7016, 3
    %v7132 = vsel %vm1210, %v7129, %v7131
    %v7133 = vrot.slane %v7017, 3
    %v7134 = vrot.slane %v7018, 3
    %v7135 = vsel %vm1210, %v7133, %v7134
    %v7136 = vrot.slane %v7019, 3
    %v7137 = vsel %vm1210, %v7134, %v7136
    %v7138 = vrot.slane %v7020, 3
    %v7139 = vrot.slane %v7021, 3
    %v7140 = vsel %vm1210, %v7138, %v7139
    %v7141 = vrot.slane %v7022, 3
    %v7142 = vsel %vm1210, %v7139, %v7141
    %v7143 = vrot.slane %v7023, 3
    %v7144 = vrot.slane %v7024, 3
    %v7145 = vsel %vm1210, %v7143, %v7144
    %v7146 = vrot.slane %v7025, 3
    %v7147 = vsel %vm1210, %v7144, %v7146
    %v7148 = vrot.slane %v7026, 3
    %v7149 = vrot.slane %v7027, 3
    %v7150 = vsel %vm1210, %v7148, %v7149
    %v7151 = vrot.slane %v7028, 3
    %v7152 = vsel %vm1210, %v7149, %v7151
    %v7153 = vrot.slane %v7029, 3
    %v7154 = vrot.slane %v7030, 3
    %v7155 = vsel %vm1210, %v7153, %v7154
    %v7156 = vrot.slane %v7031, 3
    %v7157 = vsel %vm1210, %v7154, %v7156
    %v7158 = vrot.slane %v7032, 3
    %v7159 = vrot.slane %v7033, 3
    %v7160 = vsel %vm1210, %v7158, %v7159
    %v7161 = vrot.slane %v7034, 3
    %v7162 = vsel %vm1210, %v7159, %v7161
    %v7195 = vadd.f32 %v6953, %v7085
    %v7196 = vadd.f32 %v6954, %v7087
    %v7197 = vadd.f32 %v6955, %v7090
    %v7198 = vadd.f32 %v6956, %v7092
    %v7199 = vadd.f32 %v6957, %v7095
    %v7200 = vadd.f32 %v6958, %v7097
    %v7201 = vadd.f32 %v6959, %v7100
    %v7202 = vadd.f32 %v6960, %v7102
    %v7203 = vadd.f32 %v6961, %v7105
    %v7204 = vadd.f32 %v6962, %v7107
    %v7205 = vadd.f32 %v6963, %v7110
    %v7206 = vadd.f32 %v6964, %v7112
    %v7207 = vadd.f32 %v6965, %v7115
    %v7208 = vadd.f32 %v6966, %v7117
    %v7209 = vadd.f32 %v6967, %v7120
    %v7210 = vadd.f32 %v6968, %v7122
    %v7211 = vadd.f32 %v6969, %v7125
    %v7212 = vadd.f32 %v6970, %v7127
    %v7213 = vadd.f32 %v6971, %v7130
    %v7214 = vadd.f32 %v6972, %v7132
    %v7215 = vadd.f32 %v6973, %v7135
    %v7216 = vadd.f32 %v6974, %v7137
    %v7217 = vadd.f32 %v6975, %v7140
    %v7218 = vadd.f32 %v6976, %v7142
    %v7219 = vadd.f32 %v6977, %v7145
    %v7220 = vadd.f32 %v6978, %v7147
    %v7221 = vadd.f32 %v6979, %v7150
    %v7222 = vadd.f32 %v6980, %v7152
    %v7223 = vadd.f32 %v6981, %v7155
    %v7224 = vadd.f32 %v6982, %v7157
    %v7225 = vadd.f32 %v6983, %v7160
    %v7226 = vadd.f32 %v6984, %v7162
    %s7227 = sld [smem:[#allocation9 + $0x204]]
    %v7228 = vstv %s7227
    %v7229 = vmul.f32 %v7228, %v608
    %v7230 = vmul.f32 %v7228, %v513
    %v7231 = vmul.f32 %v7228, %v625
    %v7232 = vmul.f32 %v7228, %v609
    %v7233 = vmul.f32 %v7228, %v516
    %v7234 = vmul.f32 %v7228, %v626
    %v7235 = vmul.f32 %v7228, %v610
    %v7236 = vmul.f32 %v7228, %v519
    %v7237 = vmul.f32 %v7228, %v627
    %v7238 = vmul.f32 %v7228, %v611
    %v7239 = vmul.f32 %v7228, %v522
    %v7240 = vmul.f32 %v7228, %v628
    %v7241 = vmul.f32 %v7228, %v612
    %v7242 = vmul.f32 %v7228, %v525
    %v7243 = vmul.f32 %v7228, %v629
    %v7244 = vmul.f32 %v7228, %v613
    %v7245 = vmul.f32 %v7228, %v528
    %v7246 = vmul.f32 %v7228, %v630
    %v7247 = vmul.f32 %v7228, %v614
    %v7248 = vmul.f32 %v7228, %v531
    %v7249 = vmul.f32 %v7228, %v631
    %v7250 = vmul.f32 %v7228, %v615
    %v7251 = vmul.f32 %v7228, %v534
    %v7252 = vmul.f32 %v7228, %v632
    %v7253 = vmul.f32 %v7228, %v616
    %v7254 = vmul.f32 %v7228, %v537
    %v7255 = vmul.f32 %v7228, %v633
    %v7256 = vmul.f32 %v7228, %v617
    %v7257 = vmul.f32 %v7228, %v540
    %v7258 = vmul.f32 %v7228, %v634
    %v7259 = vmul.f32 %v7228, %v618
    %v7260 = vmul.f32 %v7228, %v543
    %v7261 = vmul.f32 %v7228, %v635
    %v7262 = vmul.f32 %v7228, %v619
    %v7263 = vmul.f32 %v7228, %v546
    %v7264 = vmul.f32 %v7228, %v636
    %v7265 = vmul.f32 %v7228, %v620
    %v7266 = vmul.f32 %v7228, %v549
    %v7267 = vmul.f32 %v7228, %v637
    %v7268 = vmul.f32 %v7228, %v621
    %v7269 = vmul.f32 %v7228, %v552
    %v7270 = vmul.f32 %v7228, %v638
    %v7271 = vmul.f32 %v7228, %v622
    %v7272 = vmul.f32 %v7228, %v555
    %v7273 = vmul.f32 %v7228, %v639
    %v7274 = vmul.f32 %v7228, %v606
    %v7275 = vmul.f32 %v7228, %v507
    %v7276 = vmul.f32 %v7228, %v623
    %v7325 = vrot.slane %v7229, 4
    %v7326 = vrot.slane %v7230, 4
    %v7327 = vsel %vm1423, %v7325, %v7326
    %v7328 = vrot.slane %v7231, 4
    %v7329 = vsel %vm1423, %v7326, %v7328
    %v7330 = vrot.slane %v7232, 4
    %v7331 = vrot.slane %v7233, 4
    %v7332 = vsel %vm1423, %v7330, %v7331
    %v7333 = vrot.slane %v7234, 4
    %v7334 = vsel %vm1423, %v7331, %v7333
    %v7335 = vrot.slane %v7235, 4
    %v7336 = vrot.slane %v7236, 4
    %v7337 = vsel %vm1423, %v7335, %v7336
    %v7338 = vrot.slane %v7237, 4
    %v7339 = vsel %vm1423, %v7336, %v7338
    %v7340 = vrot.slane %v7238, 4
    %v7341 = vrot.slane %v7239, 4
    %v7342 = vsel %vm1423, %v7340, %v7341
    %v7343 = vrot.slane %v7240, 4
    %v7344 = vsel %vm1423, %v7341, %v7343
    %v7345 = vrot.slane %v7241, 4
    %v7346 = vrot.slane %v7242, 4
    %v7347 = vsel %vm1423, %v7345, %v7346
    %v7348 = vrot.slane %v7243, 4
    %v7349 = vsel %vm1423, %v7346, %v7348
    %v7350 = vrot.slane %v7244, 4
    %v7351 = vrot.slane %v7245, 4
    %v7352 = vsel %vm1423, %v7350, %v7351
    %v7353 = vrot.slane %v7246, 4
    %v7354 = vsel %vm1423, %v7351, %v7353
    %v7355 = vrot.slane %v7247, 4
    %v7356 = vrot.slane %v7248, 4
    %v7357 = vsel %vm1423, %v7355, %v7356
    %v7358 = vrot.slane %v7249, 4
    %v7359 = vsel %vm1423, %v7356, %v7358
    %v7360 = vrot.slane %v7250, 4
    %v7361 = vrot.slane %v7251, 4
    %v7362 = vsel %vm1423, %v7360, %v7361
    %v7363 = vrot.slane %v7252, 4
    %v7364 = vsel %vm1423, %v7361, %v7363
    %v7365 = vrot.slane %v7253, 4
    %v7366 = vrot.slane %v7254, 4
    %v7367 = vsel %vm1423, %v7365, %v7366
    %v7368 = vrot.slane %v7255, 4
    %v7369 = vsel %vm1423, %v7366, %v7368
    %v7370 = vrot.slane %v7256, 4
    %v7371 = vrot.slane %v7257, 4
    %v7372 = vsel %vm1423, %v7370, %v7371
    %v7373 = vrot.slane %v7258, 4
    %v7374 = vsel %vm1423, %v7371, %v7373
    %v7375 = vrot.slane %v7259, 4
    %v7376 = vrot.slane %v7260, 4
    %v7377 = vsel %vm1423, %v7375, %v7376
    %v7378 = vrot.slane %v7261, 4
    %v7379 = vsel %vm1423, %v7376, %v7378
    %v7380 = vrot.slane %v7262, 4
    %v7381 = vrot.slane %v7263, 4
    %v7382 = vsel %vm1423, %v7380, %v7381
    %v7383 = vrot.slane %v7264, 4
    %v7384 = vsel %vm1423, %v7381, %v7383
    %v7385 = vrot.slane %v7265, 4
    %v7386 = vrot.slane %v7266, 4
    %v7387 = vsel %vm1423, %v7385, %v7386
    %v7388 = vrot.slane %v7267, 4
    %v7389 = vsel %vm1423, %v7386, %v7388
    %v7390 = vrot.slane %v7268, 4
    %v7391 = vrot.slane %v7269, 4
    %v7392 = vsel %vm1423, %v7390, %v7391
    %v7393 = vrot.slane %v7270, 4
    %v7394 = vsel %vm1423, %v7391, %v7393
    %v7395 = vrot.slane %v7271, 4
    %v7396 = vrot.slane %v7272, 4
    %v7397 = vsel %vm1423, %v7395, %v7396
    %v7398 = vrot.slane %v7273, 4
    %v7399 = vsel %vm1423, %v7396, %v7398
    %v7400 = vrot.slane %v7274, 4
    %v7401 = vrot.slane %v7275, 4
    %v7402 = vsel %vm1423, %v7400, %v7401
    %v7403 = vrot.slane %v7276, 4
    %v7404 = vsel %vm1423, %v7401, %v7403
    %v7437 = vadd.f32 %v7195, %v7327
    %v7438 = vadd.f32 %v7196, %v7329
    %v7439 = vadd.f32 %v7197, %v7332
    %v7440 = vadd.f32 %v7198, %v7334
    %v7441 = vadd.f32 %v7199, %v7337
    %v7442 = vadd.f32 %v7200, %v7339
    %v7443 = vadd.f32 %v7201, %v7342
    %v7444 = vadd.f32 %v7202, %v7344
    %v7445 = vadd.f32 %v7203, %v7347
    %v7446 = vadd.f32 %v7204, %v7349
    %v7447 = vadd.f32 %v7205, %v7352
    %v7448 = vadd.f32 %v7206, %v7354
    %v7449 = vadd.f32 %v7207, %v7357
    %v7450 = vadd.f32 %v7208, %v7359
    %v7451 = vadd.f32 %v7209, %v7362
    %v7452 = vadd.f32 %v7210, %v7364
    %v7453 = vadd.f32 %v7211, %v7367
    %v7454 = vadd.f32 %v7212, %v7369
    %v7455 = vadd.f32 %v7213, %v7372
    %v7456 = vadd.f32 %v7214, %v7374
    %v7457 = vadd.f32 %v7215, %v7377
    %v7458 = vadd.f32 %v7216, %v7379
    %v7459 = vadd.f32 %v7217, %v7382
    %v7460 = vadd.f32 %v7218, %v7384
    %v7461 = vadd.f32 %v7219, %v7387
    %v7462 = vadd.f32 %v7220, %v7389
    %v7463 = vadd.f32 %v7221, %v7392
    %v7464 = vadd.f32 %v7222, %v7394
    %v7465 = vadd.f32 %v7223, %v7397
    %v7466 = vadd.f32 %v7224, %v7399
    %v7467 = vadd.f32 %v7225, %v7402
    %v7468 = vadd.f32 %v7226, %v7404
    %s7469 = sld [smem:[#allocation9 + $0x205]]
    %v7470 = vstv %s7469
    %v7471 = vmul.f32 %v7470, %v608
    %v7472 = vmul.f32 %v7470, %v513
    %v7473 = vmul.f32 %v7470, %v625
    %v7474 = vmul.f32 %v7470, %v609
    %v7475 = vmul.f32 %v7470, %v516
    %v7476 = vmul.f32 %v7470, %v626
    %v7477 = vmul.f32 %v7470, %v610
    %v7478 = vmul.f32 %v7470, %v519
    %v7479 = vmul.f32 %v7470, %v627
    %v7480 = vmul.f32 %v7470, %v611
    %v7481 = vmul.f32 %v7470, %v522
    %v7482 = vmul.f32 %v7470, %v628
    %v7483 = vmul.f32 %v7470, %v612
    %v7484 = vmul.f32 %v7470, %v525
    %v7485 = vmul.f32 %v7470, %v629
    %v7486 = vmul.f32 %v7470, %v613
    %v7487 = vmul.f32 %v7470, %v528
    %v7488 = vmul.f32 %v7470, %v630
    %v7489 = vmul.f32 %v7470, %v614
    %v7490 = vmul.f32 %v7470, %v531
    %v7491 = vmul.f32 %v7470, %v631
    %v7492 = vmul.f32 %v7470, %v615
    %v7493 = vmul.f32 %v7470, %v534
    %v7494 = vmul.f32 %v7470, %v632
    %v7495 = vmul.f32 %v7470, %v616
    %v7496 = vmul.f32 %v7470, %v537
    %v7497 = vmul.f32 %v7470, %v633
    %v7498 = vmul.f32 %v7470, %v617
    %v7499 = vmul.f32 %v7470, %v540
    %v7500 = vmul.f32 %v7470, %v634
    %v7501 = vmul.f32 %v7470, %v618
    %v7502 = vmul.f32 %v7470, %v543
    %v7503 = vmul.f32 %v7470, %v635
    %v7504 = vmul.f32 %v7470, %v619
    %v7505 = vmul.f32 %v7470, %v546
    %v7506 = vmul.f32 %v7470, %v636
    %v7507 = vmul.f32 %v7470, %v620
    %v7508 = vmul.f32 %v7470, %v549
    %v7509 = vmul.f32 %v7470, %v637
    %v7510 = vmul.f32 %v7470, %v621
    %v7511 = vmul.f32 %v7470, %v552
    %v7512 = vmul.f32 %v7470, %v638
    %v7513 = vmul.f32 %v7470, %v622
    %v7514 = vmul.f32 %v7470, %v555
    %v7515 = vmul.f32 %v7470, %v639
    %v7516 = vmul.f32 %v7470, %v606
    %v7517 = vmul.f32 %v7470, %v507
    %v7518 = vmul.f32 %v7470, %v623
    %v7567 = vrot.slane %v7471, 5
    %v7568 = vrot.slane %v7472, 5
    %v7569 = vsel %vm505, %v7567, %v7568
    %v7570 = vrot.slane %v7473, 5
    %v7571 = vsel %vm505, %v7568, %v7570
    %v7572 = vrot.slane %v7474, 5
    %v7573 = vrot.slane %v7475, 5
    %v7574 = vsel %vm505, %v7572, %v7573
    %v7575 = vrot.slane %v7476, 5
    %v7576 = vsel %vm505, %v7573, %v7575
    %v7577 = vrot.slane %v7477, 5
    %v7578 = vrot.slane %v7478, 5
    %v7579 = vsel %vm505, %v7577, %v7578
    %v7580 = vrot.slane %v7479, 5
    %v7581 = vsel %vm505, %v7578, %v7580
    %v7582 = vrot.slane %v7480, 5
    %v7583 = vrot.slane %v7481, 5
    %v7584 = vsel %vm505, %v7582, %v7583
    %v7585 = vrot.slane %v7482, 5
    %v7586 = vsel %vm505, %v7583, %v7585
    %v7587 = vrot.slane %v7483, 5
    %v7588 = vrot.slane %v7484, 5
    %v7589 = vsel %vm505, %v7587, %v7588
    %v7590 = vrot.slane %v7485, 5
    %v7591 = vsel %vm505, %v7588, %v7590
    %v7592 = vrot.slane %v7486, 5
    %v7593 = vrot.slane %v7487, 5
    %v7594 = vsel %vm505, %v7592, %v7593
    %v7595 = vrot.slane %v7488, 5
    %v7596 = vsel %vm505, %v7593, %v7595
    %v7597 = vrot.slane %v7489, 5
    %v7598 = vrot.slane %v7490, 5
    %v7599 = vsel %vm505, %v7597, %v7598
    %v7600 = vrot.slane %v7491, 5
    %v7601 = vsel %vm505, %v7598, %v7600
    %v7602 = vrot.slane %v7492, 5
    %v7603 = vrot.slane %v7493, 5
    %v7604 = vsel %vm505, %v7602, %v7603
    %v7605 = vrot.slane %v7494, 5
    %v7606 = vsel %vm505, %v7603, %v7605
    %v7607 = vrot.slane %v7495, 5
    %v7608 = vrot.slane %v7496, 5
    %v7609 = vsel %vm505, %v7607, %v7608
    %v7610 = vrot.slane %v7497, 5
    %v7611 = vsel %vm505, %v7608, %v7610
    %v7612 = vrot.slane %v7498, 5
    %v7613 = vrot.slane %v7499, 5
    %v7614 = vsel %vm505, %v7612, %v7613
    %v7615 = vrot.slane %v7500, 5
    %v7616 = vsel %vm505, %v7613, %v7615
    %v7617 = vrot.slane %v7501, 5
    %v7618 = vrot.slane %v7502, 5
    %v7619 = vsel %vm505, %v7617, %v7618
    %v7620 = vrot.slane %v7503, 5
    %v7621 = vsel %vm505, %v7618, %v7620
    %v7622 = vrot.slane %v7504, 5
    %v7623 = vrot.slane %v7505, 5
    %v7624 = vsel %vm505, %v7622, %v7623
    %v7625 = vrot.slane %v7506, 5
    %v7626 = vsel %vm505, %v7623, %v7625
    %v7627 = vrot.slane %v7507, 5
    %v7628 = vrot.slane %v7508, 5
    %v7629 = vsel %vm505, %v7627, %v7628
    %v7630 = vrot.slane %v7509, 5
    %v7631 = vsel %vm505, %v7628, %v7630
    %v7632 = vrot.slane %v7510, 5
    %v7633 = vrot.slane %v7511, 5
    %v7634 = vsel %vm505, %v7632, %v7633
    %v7635 = vrot.slane %v7512, 5
    %v7636 = vsel %vm505, %v7633, %v7635
    %v7637 = vrot.slane %v7513, 5
    %v7638 = vrot.slane %v7514, 5
    %v7639 = vsel %vm505, %v7637, %v7638
    %v7640 = vrot.slane %v7515, 5
    %v7641 = vsel %vm505, %v7638, %v7640
    %v7642 = vrot.slane %v7516, 5
    %v7643 = vrot.slane %v7517, 5
    %v7644 = vsel %vm505, %v7642, %v7643
    %v7645 = vrot.slane %v7518, 5
    %v7646 = vsel %vm505, %v7643, %v7645
    %v7679 = vadd.f32 %v7437, %v7569
    %v7680 = vadd.f32 %v7438, %v7571
    %v7681 = vadd.f32 %v7439, %v7574
    %v7682 = vadd.f32 %v7440, %v7576
    %v7683 = vadd.f32 %v7441, %v7579
    %v7684 = vadd.f32 %v7442, %v7581
    %v7685 = vadd.f32 %v7443, %v7584
    %v7686 = vadd.f32 %v7444, %v7586
    %v7687 = vadd.f32 %v7445, %v7589
    %v7688 = vadd.f32 %v7446, %v7591
    %v7689 = vadd.f32 %v7447, %v7594
    %v7690 = vadd.f32 %v7448, %v7596
    %v7691 = vadd.f32 %v7449, %v7599
    %v7692 = vadd.f32 %v7450, %v7601
    %v7693 = vadd.f32 %v7451, %v7604
    %v7694 = vadd.f32 %v7452, %v7606
    %v7695 = vadd.f32 %v7453, %v7609
    %v7696 = vadd.f32 %v7454, %v7611
    %v7697 = vadd.f32 %v7455, %v7614
    %v7698 = vadd.f32 %v7456, %v7616
    %v7699 = vadd.f32 %v7457, %v7619
    %v7700 = vadd.f32 %v7458, %v7621
    %v7701 = vadd.f32 %v7459, %v7624
    %v7702 = vadd.f32 %v7460, %v7626
    %v7703 = vadd.f32 %v7461, %v7629
    %v7704 = vadd.f32 %v7462, %v7631
    %v7705 = vadd.f32 %v7463, %v7634
    %v7706 = vadd.f32 %v7464, %v7636
    %v7707 = vadd.f32 %v7465, %v7639
    %v7708 = vadd.f32 %v7466, %v7641
    %v7709 = vadd.f32 %v7467, %v7644
    %v7710 = vadd.f32 %v7468, %v7646
    %s7711 = sld [smem:[#allocation9 + $0x206]]
    %v7712 = vstv %s7711
    %v7713 = vmul.f32 %v7712, %v608
    %v7714 = vmul.f32 %v7712, %v513
    %v7715 = vmul.f32 %v7712, %v625
    %v7716 = vmul.f32 %v7712, %v609
    %v7717 = vmul.f32 %v7712, %v516
    %v7718 = vmul.f32 %v7712, %v626
    %v7719 = vmul.f32 %v7712, %v610
    %v7720 = vmul.f32 %v7712, %v519
    %v7721 = vmul.f32 %v7712, %v627
    %v7722 = vmul.f32 %v7712, %v611
    %v7723 = vmul.f32 %v7712, %v522
    %v7724 = vmul.f32 %v7712, %v628
    %v7725 = vmul.f32 %v7712, %v612
    %v7726 = vmul.f32 %v7712, %v525
    %v7727 = vmul.f32 %v7712, %v629
    %v7728 = vmul.f32 %v7712, %v613
    %v7729 = vmul.f32 %v7712, %v528
    %v7730 = vmul.f32 %v7712, %v630
    %v7731 = vmul.f32 %v7712, %v614
    %v7732 = vmul.f32 %v7712, %v531
    %v7733 = vmul.f32 %v7712, %v631
    %v7734 = vmul.f32 %v7712, %v615
    %v7735 = vmul.f32 %v7712, %v534
    %v7736 = vmul.f32 %v7712, %v632
    %v7737 = vmul.f32 %v7712, %v616
    %v7738 = vmul.f32 %v7712, %v537
    %v7739 = vmul.f32 %v7712, %v633
    %v7740 = vmul.f32 %v7712, %v617
    %v7741 = vmul.f32 %v7712, %v540
    %v7742 = vmul.f32 %v7712, %v634
    %v7743 = vmul.f32 %v7712, %v618
    %v7744 = vmul.f32 %v7712, %v543
    %v7745 = vmul.f32 %v7712, %v635
    %v7746 = vmul.f32 %v7712, %v619
    %v7747 = vmul.f32 %v7712, %v546
    %v7748 = vmul.f32 %v7712, %v636
    %v7749 = vmul.f32 %v7712, %v620
    %v7750 = vmul.f32 %v7712, %v549
    %v7751 = vmul.f32 %v7712, %v637
    %v7752 = vmul.f32 %v7712, %v621
    %v7753 = vmul.f32 %v7712, %v552
    %v7754 = vmul.f32 %v7712, %v638
    %v7755 = vmul.f32 %v7712, %v622
    %v7756 = vmul.f32 %v7712, %v555
    %v7757 = vmul.f32 %v7712, %v639
    %v7758 = vmul.f32 %v7712, %v606
    %v7759 = vmul.f32 %v7712, %v507
    %v7760 = vmul.f32 %v7712, %v623
    %v7809 = vrot.slane %v7713, 6
    %v7810 = vrot.slane %v7714, 6
    %v7811 = vsel %vm1848, %v7809, %v7810
    %v7812 = vrot.slane %v7715, 6
    %v7813 = vsel %vm1848, %v7810, %v7812
    %v7814 = vrot.slane %v7716, 6
    %v7815 = vrot.slane %v7717, 6
    %v7816 = vsel %vm1848, %v7814, %v7815
    %v7817 = vrot.slane %v7718, 6
    %v7818 = vsel %vm1848, %v7815, %v7817
    %v7819 = vrot.slane %v7719, 6
    %v7820 = vrot.slane %v7720, 6
    %v7821 = vsel %vm1848, %v7819, %v7820
    %v7822 = vrot.slane %v7721, 6
    %v7823 = vsel %vm1848, %v7820, %v7822
    %v7824 = vrot.slane %v7722, 6
    %v7825 = vrot.slane %v7723, 6
    %v7826 = vsel %vm1848, %v7824, %v7825
    %v7827 = vrot.slane %v7724, 6
    %v7828 = vsel %vm1848, %v7825, %v7827
    %v7829 = vrot.slane %v7725, 6
    %v7830 = vrot.slane %v7726, 6
    %v7831 = vsel %vm1848, %v7829, %v7830
    %v7832 = vrot.slane %v7727, 6
    %v7833 = vsel %vm1848, %v7830, %v7832
    %v7834 = vrot.slane %v7728, 6
    %v7835 = vrot.slane %v7729, 6
    %v7836 = vsel %vm1848, %v7834, %v7835
    %v7837 = vrot.slane %v7730, 6
    %v7838 = vsel %vm1848, %v7835, %v7837
    %v7839 = vrot.slane %v7731, 6
    %v7840 = vrot.slane %v7732, 6
    %v7841 = vsel %vm1848, %v7839, %v7840
    %v7842 = vrot.slane %v7733, 6
    %v7843 = vsel %vm1848, %v7840, %v7842
    %v7844 = vrot.slane %v7734, 6
    %v7845 = vrot.slane %v7735, 6
    %v7846 = vsel %vm1848, %v7844, %v7845
    %v7847 = vrot.slane %v7736, 6
    %v7848 = vsel %vm1848, %v7845, %v7847
    %v7849 = vrot.slane %v7737, 6
    %v7850 = vrot.slane %v7738, 6
    %v7851 = vsel %vm1848, %v7849, %v7850
    %v7852 = vrot.slane %v7739, 6
    %v7853 = vsel %vm1848, %v7850, %v7852
    %v7854 = vrot.slane %v7740, 6
    %v7855 = vrot.slane %v7741, 6
    %v7856 = vsel %vm1848, %v7854, %v7855
    %v7857 = vrot.slane %v7742, 6
    %v7858 = vsel %vm1848, %v7855, %v7857
    %v7859 = vrot.slane %v7743, 6
    %v7860 = vrot.slane %v7744, 6
    %v7861 = vsel %vm1848, %v7859, %v7860
    %v7862 = vrot.slane %v7745, 6
    %v7863 = vsel %vm1848, %v7860, %v7862
    %v7864 = vrot.slane %v7746, 6
    %v7865 = vrot.slane %v7747, 6
    %v7866 = vsel %vm1848, %v7864, %v7865
    %v7867 = vrot.slane %v7748, 6
    %v7868 = vsel %vm1848, %v7865, %v7867
    %v7869 = vrot.slane %v7749, 6
    %v7870 = vrot.slane %v7750, 6
    %v7871 = vsel %vm1848, %v7869, %v7870
    %v7872 = vrot.slane %v7751, 6
    %v7873 = vsel %vm1848, %v7870, %v7872
    %v7874 = vrot.slane %v7752, 6
    %v7875 = vrot.slane %v7753, 6
    %v7876 = vsel %vm1848, %v7874, %v7875
    %v7877 = vrot.slane %v7754, 6
    %v7878 = vsel %vm1848, %v7875, %v7877
    %v7879 = vrot.slane %v7755, 6
    %v7880 = vrot.slane %v7756, 6
    %v7881 = vsel %vm1848, %v7879, %v7880
    %v7882 = vrot.slane %v7757, 6
    %v7883 = vsel %vm1848, %v7880, %v7882
    %v7884 = vrot.slane %v7758, 6
    %v7885 = vrot.slane %v7759, 6
    %v7886 = vsel %vm1848, %v7884, %v7885
    %v7887 = vrot.slane %v7760, 6
    %v7888 = vsel %vm1848, %v7885, %v7887
    %v7921 = vadd.f32 %v7679, %v7811
    %v7922 = vadd.f32 %v7680, %v7813
    %v7923 = vadd.f32 %v7681, %v7816
    %v7924 = vadd.f32 %v7682, %v7818
    %v7925 = vadd.f32 %v7683, %v7821
    %v7926 = vadd.f32 %v7684, %v7823
    %v7927 = vadd.f32 %v7685, %v7826
    %v7928 = vadd.f32 %v7686, %v7828
    %v7929 = vadd.f32 %v7687, %v7831
    %v7930 = vadd.f32 %v7688, %v7833
    %v7931 = vadd.f32 %v7689, %v7836
    %v7932 = vadd.f32 %v7690, %v7838
    %v7933 = vadd.f32 %v7691, %v7841
    %v7934 = vadd.f32 %v7692, %v7843
    %v7935 = vadd.f32 %v7693, %v7846
    %v7936 = vadd.f32 %v7694, %v7848
    %v7937 = vadd.f32 %v7695, %v7851
    %v7938 = vadd.f32 %v7696, %v7853
    %v7939 = vadd.f32 %v7697, %v7856
    %v7940 = vadd.f32 %v7698, %v7858
    %v7941 = vadd.f32 %v7699, %v7861
    %v7942 = vadd.f32 %v7700, %v7863
    %v7943 = vadd.f32 %v7701, %v7866
    %v7944 = vadd.f32 %v7702, %v7868
    %v7945 = vadd.f32 %v7703, %v7871
    %v7946 = vadd.f32 %v7704, %v7873
    %v7947 = vadd.f32 %v7705, %v7876
    %v7948 = vadd.f32 %v7706, %v7878
    %v7949 = vadd.f32 %v7707, %v7881
    %v7950 = vadd.f32 %v7708, %v7883
    %v7951 = vadd.f32 %v7709, %v7886
    %v7952 = vadd.f32 %v7710, %v7888
    %s7953 = sld [smem:[#allocation9 + $0x280]]
    %v7954 = vstv %s7953
    %v7955 = vmul.f32 %v7954, %v609
    %v7956 = vmul.f32 %v7954, %v516
    %v7957 = vmul.f32 %v7954, %v610
    %v7958 = vmul.f32 %v7954, %v519
    %v7959 = vmul.f32 %v7954, %v611
    %v7960 = vmul.f32 %v7954, %v522
    %v7961 = vmul.f32 %v7954, %v612
    %v7962 = vmul.f32 %v7954, %v525
    %v7963 = vmul.f32 %v7954, %v613
    %v7964 = vmul.f32 %v7954, %v528
    %v7965 = vmul.f32 %v7954, %v614
    %v7966 = vmul.f32 %v7954, %v531
    %v7967 = vmul.f32 %v7954, %v615
    %v7968 = vmul.f32 %v7954, %v534
    %v7969 = vmul.f32 %v7954, %v616
    %v7970 = vmul.f32 %v7954, %v537
    %v7971 = vmul.f32 %v7954, %v617
    %v7972 = vmul.f32 %v7954, %v540
    %v7973 = vmul.f32 %v7954, %v618
    %v7974 = vmul.f32 %v7954, %v543
    %v7975 = vmul.f32 %v7954, %v619
    %v7976 = vmul.f32 %v7954, %v546
    %v7977 = vmul.f32 %v7954, %v620
    %v7978 = vmul.f32 %v7954, %v549
    %v7979 = vmul.f32 %v7954, %v621
    %v7980 = vmul.f32 %v7954, %v552
    %v7981 = vmul.f32 %v7954, %v622
    %v7982 = vmul.f32 %v7954, %v555
    %v7983 = vmul.f32 %v7954, %v606
    %v7984 = vmul.f32 %v7954, %v507
    %v7985 = vadd.f32 %v7921, %v7955
    %v7986 = vadd.f32 %v7922, %v7956
    %v7987 = vadd.f32 %v7923, %v7957
    %v7988 = vadd.f32 %v7924, %v7958
    %v7989 = vadd.f32 %v7925, %v7959
    %v7990 = vadd.f32 %v7926, %v7960
    %v7991 = vadd.f32 %v7927, %v7961
    %v7992 = vadd.f32 %v7928, %v7962
    %v7993 = vadd.f32 %v7929, %v7963
    %v7994 = vadd.f32 %v7930, %v7964
    %v7995 = vadd.f32 %v7931, %v7965
    %v7996 = vadd.f32 %v7932, %v7966
    %v7997 = vadd.f32 %v7933, %v7967
    %v7998 = vadd.f32 %v7934, %v7968
    %v7999 = vadd.f32 %v7935, %v7969
    %v8000 = vadd.f32 %v7936, %v7970
    %v8001 = vadd.f32 %v7937, %v7971
    %v8002 = vadd.f32 %v7938, %v7972
    %v8003 = vadd.f32 %v7939, %v7973
    %v8004 = vadd.f32 %v7940, %v7974
    %v8005 = vadd.f32 %v7941, %v7975
    %v8006 = vadd.f32 %v7942, %v7976
    %v8007 = vadd.f32 %v7943, %v7977
    %v8008 = vadd.f32 %v7944, %v7978
    %v8009 = vadd.f32 %v7945, %v7979
    %v8010 = vadd.f32 %v7946, %v7980
    %v8011 = vadd.f32 %v7947, %v7981
    %v8012 = vadd.f32 %v7948, %v7982
    %v8013 = vadd.f32 %v7949, %v7983
    %v8014 = vadd.f32 %v7950, %v7984
    %v8015 = vadd.f32 %v7951, %v7983
    %v8016 = vadd.f32 %v7952, %v7984
    %s8017 = sld [smem:[#allocation9 + $0x281]]
    %v8018 = vstv %s8017
    %v8019 = vmul.f32 %v8018, %v609
    %v8020 = vmul.f32 %v8018, %v516
    %v8021 = vmul.f32 %v8018, %v626
    %v8022 = vmul.f32 %v8018, %v610
    %v8023 = vmul.f32 %v8018, %v519
    %v8024 = vmul.f32 %v8018, %v627
    %v8025 = vmul.f32 %v8018, %v611
    %v8026 = vmul.f32 %v8018, %v522
    %v8027 = vmul.f32 %v8018, %v628
    %v8028 = vmul.f32 %v8018, %v612
    %v8029 = vmul.f32 %v8018, %v525
    %v8030 = vmul.f32 %v8018, %v629
    %v8031 = vmul.f32 %v8018, %v613
    %v8032 = vmul.f32 %v8018, %v528
    %v8033 = vmul.f32 %v8018, %v630
    %v8034 = vmul.f32 %v8018, %v614
    %v8035 = vmul.f32 %v8018, %v531
    %v8036 = vmul.f32 %v8018, %v631
    %v8037 = vmul.f32 %v8018, %v615
    %v8038 = vmul.f32 %v8018, %v534
    %v8039 = vmul.f32 %v8018, %v632
    %v8040 = vmul.f32 %v8018, %v616
    %v8041 = vmul.f32 %v8018, %v537
    %v8042 = vmul.f32 %v8018, %v633
    %v8043 = vmul.f32 %v8018, %v617
    %v8044 = vmul.f32 %v8018, %v540
    %v8045 = vmul.f32 %v8018, %v634
    %v8046 = vmul.f32 %v8018, %v618
    %v8047 = vmul.f32 %v8018, %v543
    %v8048 = vmul.f32 %v8018, %v635
    %v8049 = vmul.f32 %v8018, %v619
    %v8050 = vmul.f32 %v8018, %v546
    %v8051 = vmul.f32 %v8018, %v636
    %v8052 = vmul.f32 %v8018, %v620
    %v8053 = vmul.f32 %v8018, %v549
    %v8054 = vmul.f32 %v8018, %v637
    %v8055 = vmul.f32 %v8018, %v621
    %v8056 = vmul.f32 %v8018, %v552
    %v8057 = vmul.f32 %v8018, %v638
    %v8058 = vmul.f32 %v8018, %v622
    %v8059 = vmul.f32 %v8018, %v555
    %v8060 = vmul.f32 %v8018, %v639
    %v8061 = vmul.f32 %v8018, %v606
    %v8062 = vmul.f32 %v8018, %v507
    %v8063 = vmul.f32 %v8018, %v623
    %v8109 = vrot.slane %v8019, 1
    %v8110 = vrot.slane %v8020, 1
    %v8111 = vsel %vm784, %v8109, %v8110
    %v8112 = vrot.slane %v8021, 1
    %v8113 = vsel %vm784, %v8110, %v8112
    %v8114 = vrot.slane %v8022, 1
    %v8115 = vrot.slane %v8023, 1
    %v8116 = vsel %vm784, %v8114, %v8115
    %v8117 = vrot.slane %v8024, 1
    %v8118 = vsel %vm784, %v8115, %v8117
    %v8119 = vrot.slane %v8025, 1
    %v8120 = vrot.slane %v8026, 1
    %v8121 = vsel %vm784, %v8119, %v8120
    %v8122 = vrot.slane %v8027, 1
    %v8123 = vsel %vm784, %v8120, %v8122
    %v8124 = vrot.slane %v8028, 1
    %v8125 = vrot.slane %v8029, 1
    %v8126 = vsel %vm784, %v8124, %v8125
    %v8127 = vrot.slane %v8030, 1
    %v8128 = vsel %vm784, %v8125, %v8127
    %v8129 = vrot.slane %v8031, 1
    %v8130 = vrot.slane %v8032, 1
    %v8131 = vsel %vm784, %v8129, %v8130
    %v8132 = vrot.slane %v8033, 1
    %v8133 = vsel %vm784, %v8130, %v8132
    %v8134 = vrot.slane %v8034, 1
    %v8135 = vrot.slane %v8035, 1
    %v8136 = vsel %vm784, %v8134, %v8135
    %v8137 = vrot.slane %v8036, 1
    %v8138 = vsel %vm784, %v8135, %v8137
    %v8139 = vrot.slane %v8037, 1
    %v8140 = vrot.slane %v8038, 1
    %v8141 = vsel %vm784, %v8139, %v8140
    %v8142 = vrot.slane %v8039, 1
    %v8143 = vsel %vm784, %v8140, %v8142
    %v8144 = vrot.slane %v8040, 1
    %v8145 = vrot.slane %v8041, 1
    %v8146 = vsel %vm784, %v8144, %v8145
    %v8147 = vrot.slane %v8042, 1
    %v8148 = vsel %vm784, %v8145, %v8147
    %v8149 = vrot.slane %v8043, 1
    %v8150 = vrot.slane %v8044, 1
    %v8151 = vsel %vm784, %v8149, %v8150
    %v8152 = vrot.slane %v8045, 1
    %v8153 = vsel %vm784, %v8150, %v8152
    %v8154 = vrot.slane %v8046, 1
    %v8155 = vrot.slane %v8047, 1
    %v8156 = vsel %vm784, %v8154, %v8155
    %v8157 = vrot.slane %v8048, 1
    %v8158 = vsel %vm784, %v8155, %v8157
    %v8159 = vrot.slane %v8049, 1
    %v8160 = vrot.slane %v8050, 1
    %v8161 = vsel %vm784, %v8159, %v8160
    %v8162 = vrot.slane %v8051, 1
    %v8163 = vsel %vm784, %v8160, %v8162
    %v8164 = vrot.slane %v8052, 1
    %v8165 = vrot.slane %v8053, 1
    %v8166 = vsel %vm784, %v8164, %v8165
    %v8167 = vrot.slane %v8054, 1
    %v8168 = vsel %vm784, %v8165, %v8167
    %v8169 = vrot.slane %v8055, 1
    %v8170 = vrot.slane %v8056, 1
    %v8171 = vsel %vm784, %v8169, %v8170
    %v8172 = vrot.slane %v8057, 1
    %v8173 = vsel %vm784, %v8170, %v8172
    %v8174 = vrot.slane %v8058, 1
    %v8175 = vrot.slane %v8059, 1
    %v8176 = vsel %vm784, %v8174, %v8175
    %v8177 = vrot.slane %v8060, 1
    %v8178 = vsel %vm784, %v8175, %v8177
    %v8179 = vrot.slane %v8061, 1
    %v8180 = vrot.slane %v8062, 1
    %v8181 = vsel %vm784, %v8179, %v8180
    %v8182 = vrot.slane %v8063, 1
    %v8183 = vsel %vm784, %v8180, %v8182
    %v8214 = vadd.f32 %v7985, %v8111
    %v8215 = vadd.f32 %v7986, %v8113
    %v8216 = vadd.f32 %v7987, %v8116
    %v8217 = vadd.f32 %v7988, %v8118
    %v8218 = vadd.f32 %v7989, %v8121
    %v8219 = vadd.f32 %v7990, %v8123
    %v8220 = vadd.f32 %v7991, %v8126
    %v8221 = vadd.f32 %v7992, %v8128
    %v8222 = vadd.f32 %v7993, %v8131
    %v8223 = vadd.f32 %v7994, %v8133
    %v8224 = vadd.f32 %v7995, %v8136
    %v8225 = vadd.f32 %v7996, %v8138
    %v8226 = vadd.f32 %v7997, %v8141
    %v8227 = vadd.f32 %v7998, %v8143
    %v8228 = vadd.f32 %v7999, %v8146
    %v8229 = vadd.f32 %v8000, %v8148
    %v8230 = vadd.f32 %v8001, %v8151
    %v8231 = vadd.f32 %v8002, %v8153
    %v8232 = vadd.f32 %v8003, %v8156
    %v8233 = vadd.f32 %v8004, %v8158
    %v8234 = vadd.f32 %v8005, %v8161
    %v8235 = vadd.f32 %v8006, %v8163
    %v8236 = vadd.f32 %v8007, %v8166
    %v8237 = vadd.f32 %v8008, %v8168
    %v8238 = vadd.f32 %v8009, %v8171
    %v8239 = vadd.f32 %v8010, %v8173
    %v8240 = vadd.f32 %v8011, %v8176
    %v8241 = vadd.f32 %v8012, %v8178
    %v8242 = vadd.f32 %v8013, %v8181
    %v8243 = vadd.f32 %v8014, %v8183
    %v8244 = vadd.f32 %v8015, %v8181
    %v8245 = vadd.f32 %v8016, %v8183
    %s8246 = sld [smem:[#allocation9 + $0x282]]
    %v8247 = vstv %s8246
    %v8248 = vmul.f32 %v8247, %v609
    %v8249 = vmul.f32 %v8247, %v516
    %v8250 = vmul.f32 %v8247, %v626
    %v8251 = vmul.f32 %v8247, %v610
    %v8252 = vmul.f32 %v8247, %v519
    %v8253 = vmul.f32 %v8247, %v627
    %v8254 = vmul.f32 %v8247, %v611
    %v8255 = vmul.f32 %v8247, %v522
    %v8256 = vmul.f32 %v8247, %v628
    %v8257 = vmul.f32 %v8247, %v612
    %v8258 = vmul.f32 %v8247, %v525
    %v8259 = vmul.f32 %v8247, %v629
    %v8260 = vmul.f32 %v8247, %v613
    %v8261 = vmul.f32 %v8247, %v528
    %v8262 = vmul.f32 %v8247, %v630
    %v8263 = vmul.f32 %v8247, %v614
    %v8264 = vmul.f32 %v8247, %v531
    %v8265 = vmul.f32 %v8247, %v631
    %v8266 = vmul.f32 %v8247, %v615
    %v8267 = vmul.f32 %v8247, %v534
    %v8268 = vmul.f32 %v8247, %v632
    %v8269 = vmul.f32 %v8247, %v616
    %v8270 = vmul.f32 %v8247, %v537
    %v8271 = vmul.f32 %v8247, %v633
    %v8272 = vmul.f32 %v8247, %v617
    %v8273 = vmul.f32 %v8247, %v540
    %v8274 = vmul.f32 %v8247, %v634
    %v8275 = vmul.f32 %v8247, %v618
    %v8276 = vmul.f32 %v8247, %v543
    %v8277 = vmul.f32 %v8247, %v635
    %v8278 = vmul.f32 %v8247, %v619
    %v8279 = vmul.f32 %v8247, %v546
    %v8280 = vmul.f32 %v8247, %v636
    %v8281 = vmul.f32 %v8247, %v620
    %v8282 = vmul.f32 %v8247, %v549
    %v8283 = vmul.f32 %v8247, %v637
    %v8284 = vmul.f32 %v8247, %v621
    %v8285 = vmul.f32 %v8247, %v552
    %v8286 = vmul.f32 %v8247, %v638
    %v8287 = vmul.f32 %v8247, %v622
    %v8288 = vmul.f32 %v8247, %v555
    %v8289 = vmul.f32 %v8247, %v639
    %v8290 = vmul.f32 %v8247, %v606
    %v8291 = vmul.f32 %v8247, %v507
    %v8292 = vmul.f32 %v8247, %v623
    %v8338 = vrot.slane %v8248, 2
    %v8339 = vrot.slane %v8249, 2
    %v8340 = vsel %vm997, %v8338, %v8339
    %v8341 = vrot.slane %v8250, 2
    %v8342 = vsel %vm997, %v8339, %v8341
    %v8343 = vrot.slane %v8251, 2
    %v8344 = vrot.slane %v8252, 2
    %v8345 = vsel %vm997, %v8343, %v8344
    %v8346 = vrot.slane %v8253, 2
    %v8347 = vsel %vm997, %v8344, %v8346
    %v8348 = vrot.slane %v8254, 2
    %v8349 = vrot.slane %v8255, 2
    %v8350 = vsel %vm997, %v8348, %v8349
    %v8351 = vrot.slane %v8256, 2
    %v8352 = vsel %vm997, %v8349, %v8351
    %v8353 = vrot.slane %v8257, 2
    %v8354 = vrot.slane %v8258, 2
    %v8355 = vsel %vm997, %v8353, %v8354
    %v8356 = vrot.slane %v8259, 2
    %v8357 = vsel %vm997, %v8354, %v8356
    %v8358 = vrot.slane %v8260, 2
    %v8359 = vrot.slane %v8261, 2
    %v8360 = vsel %vm997, %v8358, %v8359
    %v8361 = vrot.slane %v8262, 2
    %v8362 = vsel %vm997, %v8359, %v8361
    %v8363 = vrot.slane %v8263, 2
    %v8364 = vrot.slane %v8264, 2
    %v8365 = vsel %vm997, %v8363, %v8364
    %v8366 = vrot.slane %v8265, 2
    %v8367 = vsel %vm997, %v8364, %v8366
    %v8368 = vrot.slane %v8266, 2
    %v8369 = vrot.slane %v8267, 2
    %v8370 = vsel %vm997, %v8368, %v8369
    %v8371 = vrot.slane %v8268, 2
    %v8372 = vsel %vm997, %v8369, %v8371
    %v8373 = vrot.slane %v8269, 2
    %v8374 = vrot.slane %v8270, 2
    %v8375 = vsel %vm997, %v8373, %v8374
    %v8376 = vrot.slane %v8271, 2
    %v8377 = vsel %vm997, %v8374, %v8376
    %v8378 = vrot.slane %v8272, 2
    %v8379 = vrot.slane %v8273, 2
    %v8380 = vsel %vm997, %v8378, %v8379
    %v8381 = vrot.slane %v8274, 2
    %v8382 = vsel %vm997, %v8379, %v8381
    %v8383 = vrot.slane %v8275, 2
    %v8384 = vrot.slane %v8276, 2
    %v8385 = vsel %vm997, %v8383, %v8384
    %v8386 = vrot.slane %v8277, 2
    %v8387 = vsel %vm997, %v8384, %v8386
    %v8388 = vrot.slane %v8278, 2
    %v8389 = vrot.slane %v8279, 2
    %v8390 = vsel %vm997, %v8388, %v8389
    %v8391 = vrot.slane %v8280, 2
    %v8392 = vsel %vm997, %v8389, %v8391
    %v8393 = vrot.slane %v8281, 2
    %v8394 = vrot.slane %v8282, 2
    %v8395 = vsel %vm997, %v8393, %v8394
    %v8396 = vrot.slane %v8283, 2
    %v8397 = vsel %vm997, %v8394, %v8396
    %v8398 = vrot.slane %v8284, 2
    %v8399 = vrot.slane %v8285, 2
    %v8400 = vsel %vm997, %v8398, %v8399
    %v8401 = vrot.slane %v8286, 2
    %v8402 = vsel %vm997, %v8399, %v8401
    %v8403 = vrot.slane %v8287, 2
    %v8404 = vrot.slane %v8288, 2
    %v8405 = vsel %vm997, %v8403, %v8404
    %v8406 = vrot.slane %v8289, 2
    %v8407 = vsel %vm997, %v8404, %v8406
    %v8408 = vrot.slane %v8290, 2
    %v8409 = vrot.slane %v8291, 2
    %v8410 = vsel %vm997, %v8408, %v8409
    %v8411 = vrot.slane %v8292, 2
    %v8412 = vsel %vm997, %v8409, %v8411
    %v8443 = vadd.f32 %v8214, %v8340
    %v8444 = vadd.f32 %v8215, %v8342
    %v8445 = vadd.f32 %v8216, %v8345
    %v8446 = vadd.f32 %v8217, %v8347
    %v8447 = vadd.f32 %v8218, %v8350
    %v8448 = vadd.f32 %v8219, %v8352
    %v8449 = vadd.f32 %v8220, %v8355
    %v8450 = vadd.f32 %v8221, %v8357
    %v8451 = vadd.f32 %v8222, %v8360
    %v8452 = vadd.f32 %v8223, %v8362
    %v8453 = vadd.f32 %v8224, %v8365
    %v8454 = vadd.f32 %v8225, %v8367
    %v8455 = vadd.f32 %v8226, %v8370
    %v8456 = vadd.f32 %v8227, %v8372
    %v8457 = vadd.f32 %v8228, %v8375
    %v8458 = vadd.f32 %v8229, %v8377
    %v8459 = vadd.f32 %v8230, %v8380
    %v8460 = vadd.f32 %v8231, %v8382
    %v8461 = vadd.f32 %v8232, %v8385
    %v8462 = vadd.f32 %v8233, %v8387
    %v8463 = vadd.f32 %v8234, %v8390
    %v8464 = vadd.f32 %v8235, %v8392
    %v8465 = vadd.f32 %v8236, %v8395
    %v8466 = vadd.f32 %v8237, %v8397
    %v8467 = vadd.f32 %v8238, %v8400
    %v8468 = vadd.f32 %v8239, %v8402
    %v8469 = vadd.f32 %v8240, %v8405
    %v8470 = vadd.f32 %v8241, %v8407
    %v8471 = vadd.f32 %v8242, %v8410
    %v8472 = vadd.f32 %v8243, %v8412
    %v8473 = vadd.f32 %v8244, %v8410
    %v8474 = vadd.f32 %v8245, %v8412
    %s8475 = sld [smem:[#allocation9 + $0x283]]
    %v8476 = vstv %s8475
    %v8477 = vmul.f32 %v8476, %v609
    %v8478 = vmul.f32 %v8476, %v516
    %v8479 = vmul.f32 %v8476, %v626
    %v8480 = vmul.f32 %v8476, %v610
    %v8481 = vmul.f32 %v8476, %v519
    %v8482 = vmul.f32 %v8476, %v627
    %v8483 = vmul.f32 %v8476, %v611
    %v8484 = vmul.f32 %v8476, %v522
    %v8485 = vmul.f32 %v8476, %v628
    %v8486 = vmul.f32 %v8476, %v612
    %v8487 = vmul.f32 %v8476, %v525
    %v8488 = vmul.f32 %v8476, %v629
    %v8489 = vmul.f32 %v8476, %v613
    %v8490 = vmul.f32 %v8476, %v528
    %v8491 = vmul.f32 %v8476, %v630
    %v8492 = vmul.f32 %v8476, %v614
    %v8493 = vmul.f32 %v8476, %v531
    %v8494 = vmul.f32 %v8476, %v631
    %v8495 = vmul.f32 %v8476, %v615
    %v8496 = vmul.f32 %v8476, %v534
    %v8497 = vmul.f32 %v8476, %v632
    %v8498 = vmul.f32 %v8476, %v616
    %v8499 = vmul.f32 %v8476, %v537
    %v8500 = vmul.f32 %v8476, %v633
    %v8501 = vmul.f32 %v8476, %v617
    %v8502 = vmul.f32 %v8476, %v540
    %v8503 = vmul.f32 %v8476, %v634
    %v8504 = vmul.f32 %v8476, %v618
    %v8505 = vmul.f32 %v8476, %v543
    %v8506 = vmul.f32 %v8476, %v635
    %v8507 = vmul.f32 %v8476, %v619
    %v8508 = vmul.f32 %v8476, %v546
    %v8509 = vmul.f32 %v8476, %v636
    %v8510 = vmul.f32 %v8476, %v620
    %v8511 = vmul.f32 %v8476, %v549
    %v8512 = vmul.f32 %v8476, %v637
    %v8513 = vmul.f32 %v8476, %v621
    %v8514 = vmul.f32 %v8476, %v552
    %v8515 = vmul.f32 %v8476, %v638
    %v8516 = vmul.f32 %v8476, %v622
    %v8517 = vmul.f32 %v8476, %v555
    %v8518 = vmul.f32 %v8476, %v639
    %v8519 = vmul.f32 %v8476, %v606
    %v8520 = vmul.f32 %v8476, %v507
    %v8521 = vmul.f32 %v8476, %v623
    %v8567 = vrot.slane %v8477, 3
    %v8568 = vrot.slane %v8478, 3
    %v8569 = vsel %vm1210, %v8567, %v8568
    %v8570 = vrot.slane %v8479, 3
    %v8571 = vsel %vm1210, %v8568, %v8570
    %v8572 = vrot.slane %v8480, 3
    %v8573 = vrot.slane %v8481, 3
    %v8574 = vsel %vm1210, %v8572, %v8573
    %v8575 = vrot.slane %v8482, 3
    %v8576 = vsel %vm1210, %v8573, %v8575
    %v8577 = vrot.slane %v8483, 3
    %v8578 = vrot.slane %v8484, 3
    %v8579 = vsel %vm1210, %v8577, %v8578
    %v8580 = vrot.slane %v8485, 3
    %v8581 = vsel %vm1210, %v8578, %v8580
    %v8582 = vrot.slane %v8486, 3
    %v8583 = vrot.slane %v8487, 3
    %v8584 = vsel %vm1210, %v8582, %v8583
    %v8585 = vrot.slane %v8488, 3
    %v8586 = vsel %vm1210, %v8583, %v8585
    %v8587 = vrot.slane %v8489, 3
    %v8588 = vrot.slane %v8490, 3
    %v8589 = vsel %vm1210, %v8587, %v8588
    %v8590 = vrot.slane %v8491, 3
    %v8591 = vsel %vm1210, %v8588, %v8590
    %v8592 = vrot.slane %v8492, 3
    %v8593 = vrot.slane %v8493, 3
    %v8594 = vsel %vm1210, %v8592, %v8593
    %v8595 = vrot.slane %v8494, 3
    %v8596 = vsel %vm1210, %v8593, %v8595
    %v8597 = vrot.slane %v8495, 3
    %v8598 = vrot.slane %v8496, 3
    %v8599 = vsel %vm1210, %v8597, %v8598
    %v8600 = vrot.slane %v8497, 3
    %v8601 = vsel %vm1210, %v8598, %v8600
    %v8602 = vrot.slane %v8498, 3
    %v8603 = vrot.slane %v8499, 3
    %v8604 = vsel %vm1210, %v8602, %v8603
    %v8605 = vrot.slane %v8500, 3
    %v8606 = vsel %vm1210, %v8603, %v8605
    %v8607 = vrot.slane %v8501, 3
    %v8608 = vrot.slane %v8502, 3
    %v8609 = vsel %vm1210, %v8607, %v8608
    %v8610 = vrot.slane %v8503, 3
    %v8611 = vsel %vm1210, %v8608, %v8610
    %v8612 = vrot.slane %v8504, 3
    %v8613 = vrot.slane %v8505, 3
    %v8614 = vsel %vm1210, %v8612, %v8613
    %v8615 = vrot.slane %v8506, 3
    %v8616 = vsel %vm1210, %v8613, %v8615
    %v8617 = vrot.slane %v8507, 3
    %v8618 = vrot.slane %v8508, 3
    %v8619 = vsel %vm1210, %v8617, %v8618
    %v8620 = vrot.slane %v8509, 3
    %v8621 = vsel %vm1210, %v8618, %v8620
    %v8622 = vrot.slane %v8510, 3
    %v8623 = vrot.slane %v8511, 3
    %v8624 = vsel %vm1210, %v8622, %v8623
    %v8625 = vrot.slane %v8512, 3
    %v8626 = vsel %vm1210, %v8623, %v8625
    %v8627 = vrot.slane %v8513, 3
    %v8628 = vrot.slane %v8514, 3
    %v8629 = vsel %vm1210, %v8627, %v8628
    %v8630 = vrot.slane %v8515, 3
    %v8631 = vsel %vm1210, %v8628, %v8630
    %v8632 = vrot.slane %v8516, 3
    %v8633 = vrot.slane %v8517, 3
    %v8634 = vsel %vm1210, %v8632, %v8633
    %v8635 = vrot.slane %v8518, 3
    %v8636 = vsel %vm1210, %v8633, %v8635
    %v8637 = vrot.slane %v8519, 3
    %v8638 = vrot.slane %v8520, 3
    %v8639 = vsel %vm1210, %v8637, %v8638
    %v8640 = vrot.slane %v8521, 3
    %v8641 = vsel %vm1210, %v8638, %v8640
    %v8672 = vadd.f32 %v8443, %v8569
    %v8673 = vadd.f32 %v8444, %v8571
    %v8674 = vadd.f32 %v8445, %v8574
    %v8675 = vadd.f32 %v8446, %v8576
    %v8676 = vadd.f32 %v8447, %v8579
    %v8677 = vadd.f32 %v8448, %v8581
    %v8678 = vadd.f32 %v8449, %v8584
    %v8679 = vadd.f32 %v8450, %v8586
    %v8680 = vadd.f32 %v8451, %v8589
    %v8681 = vadd.f32 %v8452, %v8591
    %v8682 = vadd.f32 %v8453, %v8594
    %v8683 = vadd.f32 %v8454, %v8596
    %v8684 = vadd.f32 %v8455, %v8599
    %v8685 = vadd.f32 %v8456, %v8601
    %v8686 = vadd.f32 %v8457, %v8604
    %v8687 = vadd.f32 %v8458, %v8606
    %v8688 = vadd.f32 %v8459, %v8609
    %v8689 = vadd.f32 %v8460, %v8611
    %v8690 = vadd.f32 %v8461, %v8614
    %v8691 = vadd.f32 %v8462, %v8616
    %v8692 = vadd.f32 %v8463, %v8619
    %v8693 = vadd.f32 %v8464, %v8621
    %v8694 = vadd.f32 %v8465, %v8624
    %v8695 = vadd.f32 %v8466, %v8626
    %v8696 = vadd.f32 %v8467, %v8629
    %v8697 = vadd.f32 %v8468, %v8631
    %v8698 = vadd.f32 %v8469, %v8634
    %v8699 = vadd.f32 %v8470, %v8636
    %v8700 = vadd.f32 %v8471, %v8639
    %v8701 = vadd.f32 %v8472, %v8641
    %v8702 = vadd.f32 %v8473, %v8639
    %v8703 = vadd.f32 %v8474, %v8641
    %s8704 = sld [smem:[#allocation9 + $0x284]]
    %v8705 = vstv %s8704
    %v8706 = vmul.f32 %v8705, %v609
    %v8707 = vmul.f32 %v8705, %v516
    %v8708 = vmul.f32 %v8705, %v626
    %v8709 = vmul.f32 %v8705, %v610
    %v8710 = vmul.f32 %v8705, %v519
    %v8711 = vmul.f32 %v8705, %v627
    %v8712 = vmul.f32 %v8705, %v611
    %v8713 = vmul.f32 %v8705, %v522
    %v8714 = vmul.f32 %v8705, %v628
    %v8715 = vmul.f32 %v8705, %v612
    %v8716 = vmul.f32 %v8705, %v525
    %v8717 = vmul.f32 %v8705, %v629
    %v8718 = vmul.f32 %v8705, %v613
    %v8719 = vmul.f32 %v8705, %v528
    %v8720 = vmul.f32 %v8705, %v630
    %v8721 = vmul.f32 %v8705, %v614
    %v8722 = vmul.f32 %v8705, %v531
    %v8723 = vmul.f32 %v8705, %v631
    %v8724 = vmul.f32 %v8705, %v615
    %v8725 = vmul.f32 %v8705, %v534
    %v8726 = vmul.f32 %v8705, %v632
    %v8727 = vmul.f32 %v8705, %v616
    %v8728 = vmul.f32 %v8705, %v537
    %v8729 = vmul.f32 %v8705, %v633
    %v8730 = vmul.f32 %v8705, %v617
    %v8731 = vmul.f32 %v8705, %v540
    %v8732 = vmul.f32 %v8705, %v634
    %v8733 = vmul.f32 %v8705, %v618
    %v8734 = vmul.f32 %v8705, %v543
    %v8735 = vmul.f32 %v8705, %v635
    %v8736 = vmul.f32 %v8705, %v619
    %v8737 = vmul.f32 %v8705, %v546
    %v8738 = vmul.f32 %v8705, %v636
    %v8739 = vmul.f32 %v8705, %v620
    %v8740 = vmul.f32 %v8705, %v549
    %v8741 = vmul.f32 %v8705, %v637
    %v8742 = vmul.f32 %v8705, %v621
    %v8743 = vmul.f32 %v8705, %v552
    %v8744 = vmul.f32 %v8705, %v638
    %v8745 = vmul.f32 %v8705, %v622
    %v8746 = vmul.f32 %v8705, %v555
    %v8747 = vmul.f32 %v8705, %v639
    %v8748 = vmul.f32 %v8705, %v606
    %v8749 = vmul.f32 %v8705, %v507
    %v8750 = vmul.f32 %v8705, %v623
    %v8796 = vrot.slane %v8706, 4
    %v8797 = vrot.slane %v8707, 4
    %v8798 = vsel %vm1423, %v8796, %v8797
    %v8799 = vrot.slane %v8708, 4
    %v8800 = vsel %vm1423, %v8797, %v8799
    %v8801 = vrot.slane %v8709, 4
    %v8802 = vrot.slane %v8710, 4
    %v8803 = vsel %vm1423, %v8801, %v8802
    %v8804 = vrot.slane %v8711, 4
    %v8805 = vsel %vm1423, %v8802, %v8804
    %v8806 = vrot.slane %v8712, 4
    %v8807 = vrot.slane %v8713, 4
    %v8808 = vsel %vm1423, %v8806, %v8807
    %v8809 = vrot.slane %v8714, 4
    %v8810 = vsel %vm1423, %v8807, %v8809
    %v8811 = vrot.slane %v8715, 4
    %v8812 = vrot.slane %v8716, 4
    %v8813 = vsel %vm1423, %v8811, %v8812
    %v8814 = vrot.slane %v8717, 4
    %v8815 = vsel %vm1423, %v8812, %v8814
    %v8816 = vrot.slane %v8718, 4
    %v8817 = vrot.slane %v8719, 4
    %v8818 = vsel %vm1423, %v8816, %v8817
    %v8819 = vrot.slane %v8720, 4
    %v8820 = vsel %vm1423, %v8817, %v8819
    %v8821 = vrot.slane %v8721, 4
    %v8822 = vrot.slane %v8722, 4
    %v8823 = vsel %vm1423, %v8821, %v8822
    %v8824 = vrot.slane %v8723, 4
    %v8825 = vsel %vm1423, %v8822, %v8824
    %v8826 = vrot.slane %v8724, 4
    %v8827 = vrot.slane %v8725, 4
    %v8828 = vsel %vm1423, %v8826, %v8827
    %v8829 = vrot.slane %v8726, 4
    %v8830 = vsel %vm1423, %v8827, %v8829
    %v8831 = vrot.slane %v8727, 4
    %v8832 = vrot.slane %v8728, 4
    %v8833 = vsel %vm1423, %v8831, %v8832
    %v8834 = vrot.slane %v8729, 4
    %v8835 = vsel %vm1423, %v8832, %v8834
    %v8836 = vrot.slane %v8730, 4
    %v8837 = vrot.slane %v8731, 4
    %v8838 = vsel %vm1423, %v8836, %v8837
    %v8839 = vrot.slane %v8732, 4
    %v8840 = vsel %vm1423, %v8837, %v8839
    %v8841 = vrot.slane %v8733, 4
    %v8842 = vrot.slane %v8734, 4
    %v8843 = vsel %vm1423, %v8841, %v8842
    %v8844 = vrot.slane %v8735, 4
    %v8845 = vsel %vm1423, %v8842, %v8844
    %v8846 = vrot.slane %v8736, 4
    %v8847 = vrot.slane %v8737, 4
    %v8848 = vsel %vm1423, %v8846, %v8847
    %v8849 = vrot.slane %v8738, 4
    %v8850 = vsel %vm1423, %v8847, %v8849
    %v8851 = vrot.slane %v8739, 4
    %v8852 = vrot.slane %v8740, 4
    %v8853 = vsel %vm1423, %v8851, %v8852
    %v8854 = vrot.slane %v8741, 4
    %v8855 = vsel %vm1423, %v8852, %v8854
    %v8856 = vrot.slane %v8742, 4
    %v8857 = vrot.slane %v8743, 4
    %v8858 = vsel %vm1423, %v8856, %v8857
    %v8859 = vrot.slane %v8744, 4
    %v8860 = vsel %vm1423, %v8857, %v8859
    %v8861 = vrot.slane %v8745, 4
    %v8862 = vrot.slane %v8746, 4
    %v8863 = vsel %vm1423, %v8861, %v8862
    %v8864 = vrot.slane %v8747, 4
    %v8865 = vsel %vm1423, %v8862, %v8864
    %v8866 = vrot.slane %v8748, 4
    %v8867 = vrot.slane %v8749, 4
    %v8868 = vsel %vm1423, %v8866, %v8867
    %v8869 = vrot.slane %v8750, 4
    %v8870 = vsel %vm1423, %v8867, %v8869
    %v8901 = vadd.f32 %v8672, %v8798
    %v8902 = vadd.f32 %v8673, %v8800
    %v8903 = vadd.f32 %v8674, %v8803
    %v8904 = vadd.f32 %v8675, %v8805
    %v8905 = vadd.f32 %v8676, %v8808
    %v8906 = vadd.f32 %v8677, %v8810
    %v8907 = vadd.f32 %v8678, %v8813
    %v8908 = vadd.f32 %v8679, %v8815
    %v8909 = vadd.f32 %v8680, %v8818
    %v8910 = vadd.f32 %v8681, %v8820
    %v8911 = vadd.f32 %v8682, %v8823
    %v8912 = vadd.f32 %v8683, %v8825
    %v8913 = vadd.f32 %v8684, %v8828
    %v8914 = vadd.f32 %v8685, %v8830
    %v8915 = vadd.f32 %v8686, %v8833
    %v8916 = vadd.f32 %v8687, %v8835
    %v8917 = vadd.f32 %v8688, %v8838
    %v8918 = vadd.f32 %v8689, %v8840
    %v8919 = vadd.f32 %v8690, %v8843
    %v8920 = vadd.f32 %v8691, %v8845
    %v8921 = vadd.f32 %v8692, %v8848
    %v8922 = vadd.f32 %v8693, %v8850
    %v8923 = vadd.f32 %v8694, %v8853
    %v8924 = vadd.f32 %v8695, %v8855
    %v8925 = vadd.f32 %v8696, %v8858
    %v8926 = vadd.f32 %v8697, %v8860
    %v8927 = vadd.f32 %v8698, %v8863
    %v8928 = vadd.f32 %v8699, %v8865
    %v8929 = vadd.f32 %v8700, %v8868
    %v8930 = vadd.f32 %v8701, %v8870
    %v8931 = vadd.f32 %v8702, %v8868
    %v8932 = vadd.f32 %v8703, %v8870
    %s8933 = sld [smem:[#allocation9 + $0x285]]
    %v8934 = vstv %s8933
    %v8935 = vmul.f32 %v8934, %v609
    %v8936 = vmul.f32 %v8934, %v516
    %v8937 = vmul.f32 %v8934, %v626
    %v8938 = vmul.f32 %v8934, %v610
    %v8939 = vmul.f32 %v8934, %v519
    %v8940 = vmul.f32 %v8934, %v627
    %v8941 = vmul.f32 %v8934, %v611
    %v8942 = vmul.f32 %v8934, %v522
    %v8943 = vmul.f32 %v8934, %v628
    %v8944 = vmul.f32 %v8934, %v612
    %v8945 = vmul.f32 %v8934, %v525
    %v8946 = vmul.f32 %v8934, %v629
    %v8947 = vmul.f32 %v8934, %v613
    %v8948 = vmul.f32 %v8934, %v528
    %v8949 = vmul.f32 %v8934, %v630
    %v8950 = vmul.f32 %v8934, %v614
    %v8951 = vmul.f32 %v8934, %v531
    %v8952 = vmul.f32 %v8934, %v631
    %v8953 = vmul.f32 %v8934, %v615
    %v8954 = vmul.f32 %v8934, %v534
    %v8955 = vmul.f32 %v8934, %v632
    %v8956 = vmul.f32 %v8934, %v616
    %v8957 = vmul.f32 %v8934, %v537
    %v8958 = vmul.f32 %v8934, %v633
    %v8959 = vmul.f32 %v8934, %v617
    %v8960 = vmul.f32 %v8934, %v540
    %v8961 = vmul.f32 %v8934, %v634
    %v8962 = vmul.f32 %v8934, %v618
    %v8963 = vmul.f32 %v8934, %v543
    %v8964 = vmul.f32 %v8934, %v635
    %v8965 = vmul.f32 %v8934, %v619
    %v8966 = vmul.f32 %v8934, %v546
    %v8967 = vmul.f32 %v8934, %v636
    %v8968 = vmul.f32 %v8934, %v620
    %v8969 = vmul.f32 %v8934, %v549
    %v8970 = vmul.f32 %v8934, %v637
    %v8971 = vmul.f32 %v8934, %v621
    %v8972 = vmul.f32 %v8934, %v552
    %v8973 = vmul.f32 %v8934, %v638
    %v8974 = vmul.f32 %v8934, %v622
    %v8975 = vmul.f32 %v8934, %v555
    %v8976 = vmul.f32 %v8934, %v639
    %v8977 = vmul.f32 %v8934, %v606
    %v8978 = vmul.f32 %v8934, %v507
    %v8979 = vmul.f32 %v8934, %v623
    %v9025 = vrot.slane %v8935, 5
    %v9026 = vrot.slane %v8936, 5
    %v9027 = vsel %vm505, %v9025, %v9026
    %v9028 = vrot.slane %v8937, 5
    %v9029 = vsel %vm505, %v9026, %v9028
    %v9030 = vrot.slane %v8938, 5
    %v9031 = vrot.slane %v8939, 5
    %v9032 = vsel %vm505, %v9030, %v9031
    %v9033 = vrot.slane %v8940, 5
    %v9034 = vsel %vm505, %v9031, %v9033
    %v9035 = vrot.slane %v8941, 5
    %v9036 = vrot.slane %v8942, 5
    %v9037 = vsel %vm505, %v9035, %v9036
    %v9038 = vrot.slane %v8943, 5
    %v9039 = vsel %vm505, %v9036, %v9038
    %v9040 = vrot.slane %v8944, 5
    %v9041 = vrot.slane %v8945, 5
    %v9042 = vsel %vm505, %v9040, %v9041
    %v9043 = vrot.slane %v8946, 5
    %v9044 = vsel %vm505, %v9041, %v9043
    %v9045 = vrot.slane %v8947, 5
    %v9046 = vrot.slane %v8948, 5
    %v9047 = vsel %vm505, %v9045, %v9046
    %v9048 = vrot.slane %v8949, 5
    %v9049 = vsel %vm505, %v9046, %v9048
    %v9050 = vrot.slane %v8950, 5
    %v9051 = vrot.slane %v8951, 5
    %v9052 = vsel %vm505, %v9050, %v9051
    %v9053 = vrot.slane %v8952, 5
    %v9054 = vsel %vm505, %v9051, %v9053
    %v9055 = vrot.slane %v8953, 5
    %v9056 = vrot.slane %v8954, 5
    %v9057 = vsel %vm505, %v9055, %v9056
    %v9058 = vrot.slane %v8955, 5
    %v9059 = vsel %vm505, %v9056, %v9058
    %v9060 = vrot.slane %v8956, 5
    %v9061 = vrot.slane %v8957, 5
    %v9062 = vsel %vm505, %v9060, %v9061
    %v9063 = vrot.slane %v8958, 5
    %v9064 = vsel %vm505, %v9061, %v9063
    %v9065 = vrot.slane %v8959, 5
    %v9066 = vrot.slane %v8960, 5
    %v9067 = vsel %vm505, %v9065, %v9066
    %v9068 = vrot.slane %v8961, 5
    %v9069 = vsel %vm505, %v9066, %v9068
    %v9070 = vrot.slane %v8962, 5
    %v9071 = vrot.slane %v8963, 5
    %v9072 = vsel %vm505, %v9070, %v9071
    %v9073 = vrot.slane %v8964, 5
    %v9074 = vsel %vm505, %v9071, %v9073
    %v9075 = vrot.slane %v8965, 5
    %v9076 = vrot.slane %v8966, 5
    %v9077 = vsel %vm505, %v9075, %v9076
    %v9078 = vrot.slane %v8967, 5
    %v9079 = vsel %vm505, %v9076, %v9078
    %v9080 = vrot.slane %v8968, 5
    %v9081 = vrot.slane %v8969, 5
    %v9082 = vsel %vm505, %v9080, %v9081
    %v9083 = vrot.slane %v8970, 5
    %v9084 = vsel %vm505, %v9081, %v9083
    %v9085 = vrot.slane %v8971, 5
    %v9086 = vrot.slane %v8972, 5
    %v9087 = vsel %vm505, %v9085, %v9086
    %v9088 = vrot.slane %v8973, 5
    %v9089 = vsel %vm505, %v9086, %v9088
    %v9090 = vrot.slane %v8974, 5
    %v9091 = vrot.slane %v8975, 5
    %v9092 = vsel %vm505, %v9090, %v9091
    %v9093 = vrot.slane %v8976, 5
    %v9094 = vsel %vm505, %v9091, %v9093
    %v9095 = vrot.slane %v8977, 5
    %v9096 = vrot.slane %v8978, 5
    %v9097 = vsel %vm505, %v9095, %v9096
    %v9098 = vrot.slane %v8979, 5
    %v9099 = vsel %vm505, %v9096, %v9098
    %v9130 = vadd.f32 %v8901, %v9027
    %v9131 = vadd.f32 %v8902, %v9029
    %v9132 = vadd.f32 %v8903, %v9032
    %v9133 = vadd.f32 %v8904, %v9034
    %v9134 = vadd.f32 %v8905, %v9037
    %v9135 = vadd.f32 %v8906, %v9039
    %v9136 = vadd.f32 %v8907, %v9042
    %v9137 = vadd.f32 %v8908, %v9044
    %v9138 = vadd.f32 %v8909, %v9047
    %v9139 = vadd.f32 %v8910, %v9049
    %v9140 = vadd.f32 %v8911, %v9052
    %v9141 = vadd.f32 %v8912, %v9054
    %v9142 = vadd.f32 %v8913, %v9057
    %v9143 = vadd.f32 %v8914, %v9059
    %v9144 = vadd.f32 %v8915, %v9062
    %v9145 = vadd.f32 %v8916, %v9064
    %v9146 = vadd.f32 %v8917, %v9067
    %v9147 = vadd.f32 %v8918, %v9069
    %v9148 = vadd.f32 %v8919, %v9072
    %v9149 = vadd.f32 %v8920, %v9074
    %v9150 = vadd.f32 %v8921, %v9077
    %v9151 = vadd.f32 %v8922, %v9079
    %v9152 = vadd.f32 %v8923, %v9082
    %v9153 = vadd.f32 %v8924, %v9084
    %v9154 = vadd.f32 %v8925, %v9087
    %v9155 = vadd.f32 %v8926, %v9089
    %v9156 = vadd.f32 %v8927, %v9092
    %v9157 = vadd.f32 %v8928, %v9094
    %v9158 = vadd.f32 %v8929, %v9097
    %v9159 = vadd.f32 %v8930, %v9099
    %v9160 = vadd.f32 %v8931, %v9097
    %v9161 = vadd.f32 %v8932, %v9099
    %s9162 = sld [smem:[#allocation9 + $0x286]]
    %v9163 = vstv %s9162
    %v9164 = vmul.f32 %v9163, %v609
    %v9165 = vmul.f32 %v9163, %v516
    %v9166 = vmul.f32 %v9163, %v626
    %v9167 = vmul.f32 %v9163, %v610
    %v9168 = vmul.f32 %v9163, %v519
    %v9169 = vmul.f32 %v9163, %v627
    %v9170 = vmul.f32 %v9163, %v611
    %v9171 = vmul.f32 %v9163, %v522
    %v9172 = vmul.f32 %v9163, %v628
    %v9173 = vmul.f32 %v9163, %v612
    %v9174 = vmul.f32 %v9163, %v525
    %v9175 = vmul.f32 %v9163, %v629
    %v9176 = vmul.f32 %v9163, %v613
    %v9177 = vmul.f32 %v9163, %v528
    %v9178 = vmul.f32 %v9163, %v630
    %v9179 = vmul.f32 %v9163, %v614
    %v9180 = vmul.f32 %v9163, %v531
    %v9181 = vmul.f32 %v9163, %v631
    %v9182 = vmul.f32 %v9163, %v615
    %v9183 = vmul.f32 %v9163, %v534
    %v9184 = vmul.f32 %v9163, %v632
    %v9185 = vmul.f32 %v9163, %v616
    %v9186 = vmul.f32 %v9163, %v537
    %v9187 = vmul.f32 %v9163, %v633
    %v9188 = vmul.f32 %v9163, %v617
    %v9189 = vmul.f32 %v9163, %v540
    %v9190 = vmul.f32 %v9163, %v634
    %v9191 = vmul.f32 %v9163, %v618
    %v9192 = vmul.f32 %v9163, %v543
    %v9193 = vmul.f32 %v9163, %v635
    %v9194 = vmul.f32 %v9163, %v619
    %v9195 = vmul.f32 %v9163, %v546
    %v9196 = vmul.f32 %v9163, %v636
    %v9197 = vmul.f32 %v9163, %v620
    %v9198 = vmul.f32 %v9163, %v549
    %v9199 = vmul.f32 %v9163, %v637
    %v9200 = vmul.f32 %v9163, %v621
    %v9201 = vmul.f32 %v9163, %v552
    %v9202 = vmul.f32 %v9163, %v638
    %v9203 = vmul.f32 %v9163, %v622
    %v9204 = vmul.f32 %v9163, %v555
    %v9205 = vmul.f32 %v9163, %v639
    %v9206 = vmul.f32 %v9163, %v606
    %v9207 = vmul.f32 %v9163, %v507
    %v9208 = vmul.f32 %v9163, %v623
    %v9254 = vrot.slane %v9164, 6
    %v9255 = vrot.slane %v9165, 6
    %v9256 = vsel %vm1848, %v9254, %v9255
    %v9257 = vrot.slane %v9166, 6
    %v9258 = vsel %vm1848, %v9255, %v9257
    %v9259 = vrot.slane %v9167, 6
    %v9260 = vrot.slane %v9168, 6
    %v9261 = vsel %vm1848, %v9259, %v9260
    %v9262 = vrot.slane %v9169, 6
    %v9263 = vsel %vm1848, %v9260, %v9262
    %v9264 = vrot.slane %v9170, 6
    %v9265 = vrot.slane %v9171, 6
    %v9266 = vsel %vm1848, %v9264, %v9265
    %v9267 = vrot.slane %v9172, 6
    %v9268 = vsel %vm1848, %v9265, %v9267
    %v9269 = vrot.slane %v9173, 6
    %v9270 = vrot.slane %v9174, 6
    %v9271 = vsel %vm1848, %v9269, %v9270
    %v9272 = vrot.slane %v9175, 6
    %v9273 = vsel %vm1848, %v9270, %v9272
    %v9274 = vrot.slane %v9176, 6
    %v9275 = vrot.slane %v9177, 6
    %v9276 = vsel %vm1848, %v9274, %v9275
    %v9277 = vrot.slane %v9178, 6
    %v9278 = vsel %vm1848, %v9275, %v9277
    %v9279 = vrot.slane %v9179, 6
    %v9280 = vrot.slane %v9180, 6
    %v9281 = vsel %vm1848, %v9279, %v9280
    %v9282 = vrot.slane %v9181, 6
    %v9283 = vsel %vm1848, %v9280, %v9282
    %v9284 = vrot.slane %v9182, 6
    %v9285 = vrot.slane %v9183, 6
    %v9286 = vsel %vm1848, %v9284, %v9285
    %v9287 = vrot.slane %v9184, 6
    %v9288 = vsel %vm1848, %v9285, %v9287
    %v9289 = vrot.slane %v9185, 6
    %v9290 = vrot.slane %v9186, 6
    %v9291 = vsel %vm1848, %v9289, %v9290
    %v9292 = vrot.slane %v9187, 6
    %v9293 = vsel %vm1848, %v9290, %v9292
    %v9294 = vrot.slane %v9188, 6
    %v9295 = vrot.slane %v9189, 6
    %v9296 = vsel %vm1848, %v9294, %v9295
    %v9297 = vrot.slane %v9190, 6
    %v9298 = vsel %vm1848, %v9295, %v9297
    %v9299 = vrot.slane %v9191, 6
    %v9300 = vrot.slane %v9192, 6
    %v9301 = vsel %vm1848, %v9299, %v9300
    %v9302 = vrot.slane %v9193, 6
    %v9303 = vsel %vm1848, %v9300, %v9302
    %v9304 = vrot.slane %v9194, 6
    %v9305 = vrot.slane %v9195, 6
    %v9306 = vsel %vm1848, %v9304, %v9305
    %v9307 = vrot.slane %v9196, 6
    %v9308 = vsel %vm1848, %v9305, %v9307
    %v9309 = vrot.slane %v9197, 6
    %v9310 = vrot.slane %v9198, 6
    %v9311 = vsel %vm1848, %v9309, %v9310
    %v9312 = vrot.slane %v9199, 6
    %v9313 = vsel %vm1848, %v9310, %v9312
    %v9314 = vrot.slane %v9200, 6
    %v9315 = vrot.slane %v9201, 6
    %v9316 = vsel %vm1848, %v9314, %v9315
    %v9317 = vrot.slane %v9202, 6
    %v9318 = vsel %vm1848, %v9315, %v9317
    %v9319 = vrot.slane %v9203, 6
    %v9320 = vrot.slane %v9204, 6
    %v9321 = vsel %vm1848, %v9319, %v9320
    %v9322 = vrot.slane %v9205, 6
    %v9323 = vsel %vm1848, %v9320, %v9322
    %v9324 = vrot.slane %v9206, 6
    %v9325 = vrot.slane %v9207, 6
    %v9326 = vsel %vm1848, %v9324, %v9325
    %v9327 = vrot.slane %v9208, 6
    %v9328 = vsel %vm1848, %v9325, %v9327
    %v9359 = vadd.f32 %v9130, %v9256
    %v9360 = vadd.f32 %v9131, %v9258
    %v9361 = vadd.f32 %v9132, %v9261
    %v9362 = vadd.f32 %v9133, %v9263
    %v9363 = vadd.f32 %v9134, %v9266
    %v9364 = vadd.f32 %v9135, %v9268
    %v9365 = vadd.f32 %v9136, %v9271
    %v9366 = vadd.f32 %v9137, %v9273
    %v9367 = vadd.f32 %v9138, %v9276
    %v9368 = vadd.f32 %v9139, %v9278
    %v9369 = vadd.f32 %v9140, %v9281
    %v9370 = vadd.f32 %v9141, %v9283
    %v9371 = vadd.f32 %v9142, %v9286
    %v9372 = vadd.f32 %v9143, %v9288
    %v9373 = vadd.f32 %v9144, %v9291
    %v9374 = vadd.f32 %v9145, %v9293
    %v9375 = vadd.f32 %v9146, %v9296
    %v9376 = vadd.f32 %v9147, %v9298
    %v9377 = vadd.f32 %v9148, %v9301
    %v9378 = vadd.f32 %v9149, %v9303
    %v9379 = vadd.f32 %v9150, %v9306
    %v9380 = vadd.f32 %v9151, %v9308
    %v9381 = vadd.f32 %v9152, %v9311
    %v9382 = vadd.f32 %v9153, %v9313
    %v9383 = vadd.f32 %v9154, %v9316
    %v9384 = vadd.f32 %v9155, %v9318
    %v9385 = vadd.f32 %v9156, %v9321
    %v9386 = vadd.f32 %v9157, %v9323
    %v9387 = vadd.f32 %v9158, %v9326
    %v9388 = vadd.f32 %v9159, %v9328
    %v9389 = vadd.f32 %v9160, %v9326
    %v9390 = vadd.f32 %v9161, %v9328
    %s9391 = sld [smem:[#allocation9 + $0x300]]
    %v9392 = vstv %s9391
    %v9393 = vmul.f32 %v9392, %v610
    %v9394 = vmul.f32 %v9392, %v519
    %v9395 = vmul.f32 %v9392, %v611
    %v9396 = vmul.f32 %v9392, %v522
    %v9397 = vmul.f32 %v9392, %v612
    %v9398 = vmul.f32 %v9392, %v525
    %v9399 = vmul.f32 %v9392, %v613
    %v9400 = vmul.f32 %v9392, %v528
    %v9401 = vmul.f32 %v9392, %v614
    %v9402 = vmul.f32 %v9392, %v531
    %v9403 = vmul.f32 %v9392, %v615
    %v9404 = vmul.f32 %v9392, %v534
    %v9405 = vmul.f32 %v9392, %v616
    %v9406 = vmul.f32 %v9392, %v537
    %v9407 = vmul.f32 %v9392, %v617
    %v9408 = vmul.f32 %v9392, %v540
    %v9409 = vmul.f32 %v9392, %v618
    %v9410 = vmul.f32 %v9392, %v543
    %v9411 = vmul.f32 %v9392, %v619
    %v9412 = vmul.f32 %v9392, %v546
    %v9413 = vmul.f32 %v9392, %v620
    %v9414 = vmul.f32 %v9392, %v549
    %v9415 = vmul.f32 %v9392, %v621
    %v9416 = vmul.f32 %v9392, %v552
    %v9417 = vmul.f32 %v9392, %v622
    %v9418 = vmul.f32 %v9392, %v555
    %v9419 = vmul.f32 %v9392, %v606
    %v9420 = vmul.f32 %v9392, %v507
    %v9421 = vadd.f32 %v9359, %v9393
    %v9422 = vadd.f32 %v9360, %v9394
    %v9423 = vadd.f32 %v9361, %v9395
    %v9424 = vadd.f32 %v9362, %v9396
    %v9425 = vadd.f32 %v9363, %v9397
    %v9426 = vadd.f32 %v9364, %v9398
    %v9427 = vadd.f32 %v9365, %v9399
    %v9428 = vadd.f32 %v9366, %v9400
    %v9429 = vadd.f32 %v9367, %v9401
    %v9430 = vadd.f32 %v9368, %v9402
    %v9431 = vadd.f32 %v9369, %v9403
    %v9432 = vadd.f32 %v9370, %v9404
    %v9433 = vadd.f32 %v9371, %v9405
    %v9434 = vadd.f32 %v9372, %v9406
    %v9435 = vadd.f32 %v9373, %v9407
    %v9436 = vadd.f32 %v9374, %v9408
    %v9437 = vadd.f32 %v9375, %v9409
    %v9438 = vadd.f32 %v9376, %v9410
    %v9439 = vadd.f32 %v9377, %v9411
    %v9440 = vadd.f32 %v9378, %v9412
    %v9441 = vadd.f32 %v9379, %v9413
    %v9442 = vadd.f32 %v9380, %v9414
    %v9443 = vadd.f32 %v9381, %v9415
    %v9444 = vadd.f32 %v9382, %v9416
    %v9445 = vadd.f32 %v9383, %v9417
    %v9446 = vadd.f32 %v9384, %v9418
    %v9447 = vadd.f32 %v9385, %v9419
    %v9448 = vadd.f32 %v9386, %v9420
    %v9449 = vadd.f32 %v9387, %v9419
    %v9450 = vadd.f32 %v9388, %v9420
    %v9451 = vadd.f32 %v9389, %v9419
    %v9452 = vadd.f32 %v9390, %v9420
    %s9453 = sld [smem:[#allocation9 + $0x301]]
    %v9454 = vstv %s9453
    %v9455 = vmul.f32 %v9454, %v610
    %v9456 = vmul.f32 %v9454, %v519
    %v9457 = vmul.f32 %v9454, %v627
    %v9458 = vmul.f32 %v9454, %v611
    %v9459 = vmul.f32 %v9454, %v522
    %v9460 = vmul.f32 %v9454, %v628
    %v9461 = vmul.f32 %v9454, %v612
    %v9462 = vmul.f32 %v9454, %v525
    %v9463 = vmul.f32 %v9454, %v629
    %v9464 = vmul.f32 %v9454, %v613
    %v9465 = vmul.f32 %v9454, %v528
    %v9466 = vmul.f32 %v9454, %v630
    %v9467 = vmul.f32 %v9454, %v614
    %v9468 = vmul.f32 %v9454, %v531
    %v9469 = vmul.f32 %v9454, %v631
    %v9470 = vmul.f32 %v9454, %v615
    %v9471 = vmul.f32 %v9454, %v534
    %v9472 = vmul.f32 %v9454, %v632
    %v9473 = vmul.f32 %v9454, %v616
    %v9474 = vmul.f32 %v9454, %v537
    %v9475 = vmul.f32 %v9454, %v633
    %v9476 = vmul.f32 %v9454, %v617
    %v9477 = vmul.f32 %v9454, %v540
    %v9478 = vmul.f32 %v9454, %v634
    %v9479 = vmul.f32 %v9454, %v618
    %v9480 = vmul.f32 %v9454, %v543
    %v9481 = vmul.f32 %v9454, %v635
    %v9482 = vmul.f32 %v9454, %v619
    %v9483 = vmul.f32 %v9454, %v546
    %v9484 = vmul.f32 %v9454, %v636
    %v9485 = vmul.f32 %v9454, %v620
    %v9486 = vmul.f32 %v9454, %v549
    %v9487 = vmul.f32 %v9454, %v637
    %v9488 = vmul.f32 %v9454, %v621
    %v9489 = vmul.f32 %v9454, %v552
    %v9490 = vmul.f32 %v9454, %v638
    %v9491 = vmul.f32 %v9454, %v622
    %v9492 = vmul.f32 %v9454, %v555
    %v9493 = vmul.f32 %v9454, %v639
    %v9494 = vmul.f32 %v9454, %v606
    %v9495 = vmul.f32 %v9454, %v507
    %v9496 = vmul.f32 %v9454, %v623
    %v9539 = vrot.slane %v9455, 1
    %v9540 = vrot.slane %v9456, 1
    %v9541 = vsel %vm784, %v9539, %v9540
    %v9542 = vrot.slane %v9457, 1
    %v9543 = vsel %vm784, %v9540, %v9542
    %v9544 = vrot.slane %v9458, 1
    %v9545 = vrot.slane %v9459, 1
    %v9546 = vsel %vm784, %v9544, %v9545
    %v9547 = vrot.slane %v9460, 1
    %v9548 = vsel %vm784, %v9545, %v9547
    %v9549 = vrot.slane %v9461, 1
    %v9550 = vrot.slane %v9462, 1
    %v9551 = vsel %vm784, %v9549, %v9550
    %v9552 = vrot.slane %v9463, 1
    %v9553 = vsel %vm784, %v9550, %v9552
    %v9554 = vrot.slane %v9464, 1
    %v9555 = vrot.slane %v9465, 1
    %v9556 = vsel %vm784, %v9554, %v9555
    %v9557 = vrot.slane %v9466, 1
    %v9558 = vsel %vm784, %v9555, %v9557
    %v9559 = vrot.slane %v9467, 1
    %v9560 = vrot.slane %v9468, 1
    %v9561 = vsel %vm784, %v9559, %v9560
    %v9562 = vrot.slane %v9469, 1
    %v9563 = vsel %vm784, %v9560, %v9562
    %v9564 = vrot.slane %v9470, 1
    %v9565 = vrot.slane %v9471, 1
    %v9566 = vsel %vm784, %v9564, %v9565
    %v9567 = vrot.slane %v9472, 1
    %v9568 = vsel %vm784, %v9565, %v9567
    %v9569 = vrot.slane %v9473, 1
    %v9570 = vrot.slane %v9474, 1
    %v9571 = vsel %vm784, %v9569, %v9570
    %v9572 = vrot.slane %v9475, 1
    %v9573 = vsel %vm784, %v9570, %v9572
    %v9574 = vrot.slane %v9476, 1
    %v9575 = vrot.slane %v9477, 1
    %v9576 = vsel %vm784, %v9574, %v9575
    %v9577 = vrot.slane %v9478, 1
    %v9578 = vsel %vm784, %v9575, %v9577
    %v9579 = vrot.slane %v9479, 1
    %v9580 = vrot.slane %v9480, 1
    %v9581 = vsel %vm784, %v9579, %v9580
    %v9582 = vrot.slane %v9481, 1
    %v9583 = vsel %vm784, %v9580, %v9582
    %v9584 = vrot.slane %v9482, 1
    %v9585 = vrot.slane %v9483, 1
    %v9586 = vsel %vm784, %v9584, %v9585
    %v9587 = vrot.slane %v9484, 1
    %v9588 = vsel %vm784, %v9585, %v9587
    %v9589 = vrot.slane %v9485, 1
    %v9590 = vrot.slane %v9486, 1
    %v9591 = vsel %vm784, %v9589, %v9590
    %v9592 = vrot.slane %v9487, 1
    %v9593 = vsel %vm784, %v9590, %v9592
    %v9594 = vrot.slane %v9488, 1
    %v9595 = vrot.slane %v9489, 1
    %v9596 = vsel %vm784, %v9594, %v9595
    %v9597 = vrot.slane %v9490, 1
    %v9598 = vsel %vm784, %v9595, %v9597
    %v9599 = vrot.slane %v9491, 1
    %v9600 = vrot.slane %v9492, 1
    %v9601 = vsel %vm784, %v9599, %v9600
    %v9602 = vrot.slane %v9493, 1
    %v9603 = vsel %vm784, %v9600, %v9602
    %v9604 = vrot.slane %v9494, 1
    %v9605 = vrot.slane %v9495, 1
    %v9606 = vsel %vm784, %v9604, %v9605
    %v9607 = vrot.slane %v9496, 1
    %v9608 = vsel %vm784, %v9605, %v9607
    %v9637 = vadd.f32 %v9421, %v9541
    %v9638 = vadd.f32 %v9422, %v9543
    %v9639 = vadd.f32 %v9423, %v9546
    %v9640 = vadd.f32 %v9424, %v9548
    %v9641 = vadd.f32 %v9425, %v9551
    %v9642 = vadd.f32 %v9426, %v9553
    %v9643 = vadd.f32 %v9427, %v9556
    %v9644 = vadd.f32 %v9428, %v9558
    %v9645 = vadd.f32 %v9429, %v9561
    %v9646 = vadd.f32 %v9430, %v9563
    %v9647 = vadd.f32 %v9431, %v9566
    %v9648 = vadd.f32 %v9432, %v9568
    %v9649 = vadd.f32 %v9433, %v9571
    %v9650 = vadd.f32 %v9434, %v9573
    %v9651 = vadd.f32 %v9435, %v9576
    %v9652 = vadd.f32 %v9436, %v9578
    %v9653 = vadd.f32 %v9437, %v9581
    %v9654 = vadd.f32 %v9438, %v9583
    %v9655 = vadd.f32 %v9439, %v9586
    %v9656 = vadd.f32 %v9440, %v9588
    %v9657 = vadd.f32 %v9441, %v9591
    %v9658 = vadd.f32 %v9442, %v9593
    %v9659 = vadd.f32 %v9443, %v9596
    %v9660 = vadd.f32 %v9444, %v9598
    %v9661 = vadd.f32 %v9445, %v9601
    %v9662 = vadd.f32 %v9446, %v9603
    %v9663 = vadd.f32 %v9447, %v9606
    %v9664 = vadd.f32 %v9448, %v9608
    %v9665 = vadd.f32 %v9449, %v9606
    %v9666 = vadd.f32 %v9450, %v9608
    %v9667 = vadd.f32 %v9451, %v9606
    %v9668 = vadd.f32 %v9452, %v9608
    %s9669 = sld [smem:[#allocation9 + $0x302]]
    %v9670 = vstv %s9669
    %v9671 = vmul.f32 %v9670, %v610
    %v9672 = vmul.f32 %v9670, %v519
    %v9673 = vmul.f32 %v9670, %v627
    %v9674 = vmul.f32 %v9670, %v611
    %v9675 = vmul.f32 %v9670, %v522
    %v9676 = vmul.f32 %v9670, %v628
    %v9677 = vmul.f32 %v9670, %v612
    %v9678 = vmul.f32 %v9670, %v525
    %v9679 = vmul.f32 %v9670, %v629
    %v9680 = vmul.f32 %v9670, %v613
    %v9681 = vmul.f32 %v9670, %v528
    %v9682 = vmul.f32 %v9670, %v630
    %v9683 = vmul.f32 %v9670, %v614
    %v9684 = vmul.f32 %v9670, %v531
    %v9685 = vmul.f32 %v9670, %v631
    %v9686 = vmul.f32 %v9670, %v615
    %v9687 = vmul.f32 %v9670, %v534
    %v9688 = vmul.f32 %v9670, %v632
    %v9689 = vmul.f32 %v9670, %v616
    %v9690 = vmul.f32 %v9670, %v537
    %v9691 = vmul.f32 %v9670, %v633
    %v9692 = vmul.f32 %v9670, %v617
    %v9693 = vmul.f32 %v9670, %v540
    %v9694 = vmul.f32 %v9670, %v634
    %v9695 = vmul.f32 %v9670, %v618
    %v9696 = vmul.f32 %v9670, %v543
    %v9697 = vmul.f32 %v9670, %v635
    %v9698 = vmul.f32 %v9670, %v619
    %v9699 = vmul.f32 %v9670, %v546
    %v9700 = vmul.f32 %v9670, %v636
    %v9701 = vmul.f32 %v9670, %v620
    %v9702 = vmul.f32 %v9670, %v549
    %v9703 = vmul.f32 %v9670, %v637
    %v9704 = vmul.f32 %v9670, %v621
    %v9705 = vmul.f32 %v9670, %v552
    %v9706 = vmul.f32 %v9670, %v638
    %v9707 = vmul.f32 %v9670, %v622
    %v9708 = vmul.f32 %v9670, %v555
    %v9709 = vmul.f32 %v9670, %v639
    %v9710 = vmul.f32 %v9670, %v606
    %v9711 = vmul.f32 %v9670, %v507
    %v9712 = vmul.f32 %v9670, %v623
    %v9755 = vrot.slane %v9671, 2
    %v9756 = vrot.slane %v9672, 2
    %v9757 = vsel %vm997, %v9755, %v9756
    %v9758 = vrot.slane %v9673, 2
    %v9759 = vsel %vm997, %v9756, %v9758
    %v9760 = vrot.slane %v9674, 2
    %v9761 = vrot.slane %v9675, 2
    %v9762 = vsel %vm997, %v9760, %v9761
    %v9763 = vrot.slane %v9676, 2
    %v9764 = vsel %vm997, %v9761, %v9763
    %v9765 = vrot.slane %v9677, 2
    %v9766 = vrot.slane %v9678, 2
    %v9767 = vsel %vm997, %v9765, %v9766
    %v9768 = vrot.slane %v9679, 2
    %v9769 = vsel %vm997, %v9766, %v9768
    %v9770 = vrot.slane %v9680, 2
    %v9771 = vrot.slane %v9681, 2
    %v9772 = vsel %vm997, %v9770, %v9771
    %v9773 = vrot.slane %v9682, 2
    %v9774 = vsel %vm997, %v9771, %v9773
    %v9775 = vrot.slane %v9683, 2
    %v9776 = vrot.slane %v9684, 2
    %v9777 = vsel %vm997, %v9775, %v9776
    %v9778 = vrot.slane %v9685, 2
    %v9779 = vsel %vm997, %v9776, %v9778
    %v9780 = vrot.slane %v9686, 2
    %v9781 = vrot.slane %v9687, 2
    %v9782 = vsel %vm997, %v9780, %v9781
    %v9783 = vrot.slane %v9688, 2
    %v9784 = vsel %vm997, %v9781, %v9783
    %v9785 = vrot.slane %v9689, 2
    %v9786 = vrot.slane %v9690, 2
    %v9787 = vsel %vm997, %v9785, %v9786
    %v9788 = vrot.slane %v9691, 2
    %v9789 = vsel %vm997, %v9786, %v9788
    %v9790 = vrot.slane %v9692, 2
    %v9791 = vrot.slane %v9693, 2
    %v9792 = vsel %vm997, %v9790, %v9791
    %v9793 = vrot.slane %v9694, 2
    %v9794 = vsel %vm997, %v9791, %v9793
    %v9795 = vrot.slane %v9695, 2
    %v9796 = vrot.slane %v9696, 2
    %v9797 = vsel %vm997, %v9795, %v9796
    %v9798 = vrot.slane %v9697, 2
    %v9799 = vsel %vm997, %v9796, %v9798
    %v9800 = vrot.slane %v9698, 2
    %v9801 = vrot.slane %v9699, 2
    %v9802 = vsel %vm997, %v9800, %v9801
    %v9803 = vrot.slane %v9700, 2
    %v9804 = vsel %vm997, %v9801, %v9803
    %v9805 = vrot.slane %v9701, 2
    %v9806 = vrot.slane %v9702, 2
    %v9807 = vsel %vm997, %v9805, %v9806
    %v9808 = vrot.slane %v9703, 2
    %v9809 = vsel %vm997, %v9806, %v9808
    %v9810 = vrot.slane %v9704, 2
    %v9811 = vrot.slane %v9705, 2
    %v9812 = vsel %vm997, %v9810, %v9811
    %v9813 = vrot.slane %v9706, 2
    %v9814 = vsel %vm997, %v9811, %v9813
    %v9815 = vrot.slane %v9707, 2
    %v9816 = vrot.slane %v9708, 2
    %v9817 = vsel %vm997, %v9815, %v9816
    %v9818 = vrot.slane %v9709, 2
    %v9819 = vsel %vm997, %v9816, %v9818
    %v9820 = vrot.slane %v9710, 2
    %v9821 = vrot.slane %v9711, 2
    %v9822 = vsel %vm997, %v9820, %v9821
    %v9823 = vrot.slane %v9712, 2
    %v9824 = vsel %vm997, %v9821, %v9823
    %v9853 = vadd.f32 %v9637, %v9757
    %v9854 = vadd.f32 %v9638, %v9759
    %v9855 = vadd.f32 %v9639, %v9762
    %v9856 = vadd.f32 %v9640, %v9764
    %v9857 = vadd.f32 %v9641, %v9767
    %v9858 = vadd.f32 %v9642, %v9769
    %v9859 = vadd.f32 %v9643, %v9772
    %v9860 = vadd.f32 %v9644, %v9774
    %v9861 = vadd.f32 %v9645, %v9777
    %v9862 = vadd.f32 %v9646, %v9779
    %v9863 = vadd.f32 %v9647, %v9782
    %v9864 = vadd.f32 %v9648, %v9784
    %v9865 = vadd.f32 %v9649, %v9787
    %v9866 = vadd.f32 %v9650, %v9789
    %v9867 = vadd.f32 %v9651, %v9792
    %v9868 = vadd.f32 %v9652, %v9794
    %v9869 = vadd.f32 %v9653, %v9797
    %v9870 = vadd.f32 %v9654, %v9799
    %v9871 = vadd.f32 %v9655, %v9802
    %v9872 = vadd.f32 %v9656, %v9804
    %v9873 = vadd.f32 %v9657, %v9807
    %v9874 = vadd.f32 %v9658, %v9809
    %v9875 = vadd.f32 %v9659, %v9812
    %v9876 = vadd.f32 %v9660, %v9814
    %v9877 = vadd.f32 %v9661, %v9817
    %v9878 = vadd.f32 %v9662, %v9819
    %v9879 = vadd.f32 %v9663, %v9822
    %v9880 = vadd.f32 %v9664, %v9824
    %v9881 = vadd.f32 %v9665, %v9822
    %v9882 = vadd.f32 %v9666, %v9824
    %v9883 = vadd.f32 %v9667, %v9822
    %v9884 = vadd.f32 %v9668, %v9824
    %s9885 = sld [smem:[#allocation9 + $0x303]]
    %v9886 = vstv %s9885
    %v9887 = vmul.f32 %v9886, %v610
    %v9888 = vmul.f32 %v9886, %v519
    %v9889 = vmul.f32 %v9886, %v627
    %v9890 = vmul.f32 %v9886, %v611
    %v9891 = vmul.f32 %v9886, %v522
    %v9892 = vmul.f32 %v9886, %v628
    %v9893 = vmul.f32 %v9886, %v612
    %v9894 = vmul.f32 %v9886, %v525
    %v9895 = vmul.f32 %v9886, %v629
    %v9896 = vmul.f32 %v9886, %v613
    %v9897 = vmul.f32 %v9886, %v528
    %v9898 = vmul.f32 %v9886, %v630
    %v9899 = vmul.f32 %v9886, %v614
    %v9900 = vmul.f32 %v9886, %v531
    %v9901 = vmul.f32 %v9886, %v631
    %v9902 = vmul.f32 %v9886, %v615
    %v9903 = vmul.f32 %v9886, %v534
    %v9904 = vmul.f32 %v9886, %v632
    %v9905 = vmul.f32 %v9886, %v616
    %v9906 = vmul.f32 %v9886, %v537
    %v9907 = vmul.f32 %v9886, %v633
    %v9908 = vmul.f32 %v9886, %v617
    %v9909 = vmul.f32 %v9886, %v540
    %v9910 = vmul.f32 %v9886, %v634
    %v9911 = vmul.f32 %v9886, %v618
    %v9912 = vmul.f32 %v9886, %v543
    %v9913 = vmul.f32 %v9886, %v635
    %v9914 = vmul.f32 %v9886, %v619
    %v9915 = vmul.f32 %v9886, %v546
    %v9916 = vmul.f32 %v9886, %v636
    %v9917 = vmul.f32 %v9886, %v620
    %v9918 = vmul.f32 %v9886, %v549
    %v9919 = vmul.f32 %v9886, %v637
    %v9920 = vmul.f32 %v9886, %v621
    %v9921 = vmul.f32 %v9886, %v552
    %v9922 = vmul.f32 %v9886, %v638
    %v9923 = vmul.f32 %v9886, %v622
    %v9924 = vmul.f32 %v9886, %v555
    %v9925 = vmul.f32 %v9886, %v639
    %v9926 = vmul.f32 %v9886, %v606
    %v9927 = vmul.f32 %v9886, %v507
    %v9928 = vmul.f32 %v9886, %v623
    %v9971 = vrot.slane %v9887, 3
    %v9972 = vrot.slane %v9888, 3
    %v9973 = vsel %vm1210, %v9971, %v9972
    %v9974 = vrot.slane %v9889, 3
    %v9975 = vsel %vm1210, %v9972, %v9974
    %v9976 = vrot.slane %v9890, 3
    %v9977 = vrot.slane %v9891, 3
    %v9978 = vsel %vm1210, %v9976, %v9977
    %v9979 = vrot.slane %v9892, 3
    %v9980 = vsel %vm1210, %v9977, %v9979
    %v9981 = vrot.slane %v9893, 3
    %v9982 = vrot.slane %v9894, 3
    %v9983 = vsel %vm1210, %v9981, %v9982
    %v9984 = vrot.slane %v9895, 3
    %v9985 = vsel %vm1210, %v9982, %v9984
    %v9986 = vrot.slane %v9896, 3
    %v9987 = vrot.slane %v9897, 3
    %v9988 = vsel %vm1210, %v9986, %v9987
    %v9989 = vrot.slane %v9898, 3
    %v9990 = vsel %vm1210, %v9987, %v9989
    %v9991 = vrot.slane %v9899, 3
    %v9992 = vrot.slane %v9900, 3
    %v9993 = vsel %vm1210, %v9991, %v9992
    %v9994 = vrot.slane %v9901, 3
    %v9995 = vsel %vm1210, %v9992, %v9994
    %v9996 = vrot.slane %v9902, 3
    %v9997 = vrot.slane %v9903, 3
    %v9998 = vsel %vm1210, %v9996, %v9997
    %v9999 = vrot.slane %v9904, 3
    %v10000 = vsel %vm1210, %v9997, %v9999
    %v10001 = vrot.slane %v9905, 3
    %v10002 = vrot.slane %v9906, 3
    %v10003 = vsel %vm1210, %v10001, %v10002
    %v10004 = vrot.slane %v9907, 3
    %v10005 = vsel %vm1210, %v10002, %v10004
    %v10006 = vrot.slane %v9908, 3
    %v10007 = vrot.slane %v9909, 3
    %v10008 = vsel %vm1210, %v10006, %v10007
    %v10009 = vrot.slane %v9910, 3
    %v10010 = vsel %vm1210, %v10007, %v10009
    %v10011 = vrot.slane %v9911, 3
    %v10012 = vrot.slane %v9912, 3
    %v10013 = vsel %vm1210, %v10011, %v10012
    %v10014 = vrot.slane %v9913, 3
    %v10015 = vsel %vm1210, %v10012, %v10014
    %v10016 = vrot.slane %v9914, 3
    %v10017 = vrot.slane %v9915, 3
    %v10018 = vsel %vm1210, %v10016, %v10017
    %v10019 = vrot.slane %v9916, 3
    %v10020 = vsel %vm1210, %v10017, %v10019
    %v10021 = vrot.slane %v9917, 3
    %v10022 = vrot.slane %v9918, 3
    %v10023 = vsel %vm1210, %v10021, %v10022
    %v10024 = vrot.slane %v9919, 3
    %v10025 = vsel %vm1210, %v10022, %v10024
    %v10026 = vrot.slane %v9920, 3
    %v10027 = vrot.slane %v9921, 3
    %v10028 = vsel %vm1210, %v10026, %v10027
    %v10029 = vrot.slane %v9922, 3
    %v10030 = vsel %vm1210, %v10027, %v10029
    %v10031 = vrot.slane %v9923, 3
    %v10032 = vrot.slane %v9924, 3
    %v10033 = vsel %vm1210, %v10031, %v10032
    %v10034 = vrot.slane %v9925, 3
    %v10035 = vsel %vm1210, %v10032, %v10034
    %v10036 = vrot.slane %v9926, 3
    %v10037 = vrot.slane %v9927, 3
    %v10038 = vsel %vm1210, %v10036, %v10037
    %v10039 = vrot.slane %v9928, 3
    %v10040 = vsel %vm1210, %v10037, %v10039
    %v10069 = vadd.f32 %v9853, %v9973
    %v10070 = vadd.f32 %v9854, %v9975
    %v10071 = vadd.f32 %v9855, %v9978
    %v10072 = vadd.f32 %v9856, %v9980
    %v10073 = vadd.f32 %v9857, %v9983
    %v10074 = vadd.f32 %v9858, %v9985
    %v10075 = vadd.f32 %v9859, %v9988
    %v10076 = vadd.f32 %v9860, %v9990
    %v10077 = vadd.f32 %v9861, %v9993
    %v10078 = vadd.f32 %v9862, %v9995
    %v10079 = vadd.f32 %v9863, %v9998
    %v10080 = vadd.f32 %v9864, %v10000
    %v10081 = vadd.f32 %v9865, %v10003
    %v10082 = vadd.f32 %v9866, %v10005
    %v10083 = vadd.f32 %v9867, %v10008
    %v10084 = vadd.f32 %v9868, %v10010
    %v10085 = vadd.f32 %v9869, %v10013
    %v10086 = vadd.f32 %v9870, %v10015
    %v10087 = vadd.f32 %v9871, %v10018
    %v10088 = vadd.f32 %v9872, %v10020
    %v10089 = vadd.f32 %v9873, %v10023
    %v10090 = vadd.f32 %v9874, %v10025
    %v10091 = vadd.f32 %v9875, %v10028
    %v10092 = vadd.f32 %v9876, %v10030
    %v10093 = vadd.f32 %v9877, %v10033
    %v10094 = vadd.f32 %v9878, %v10035
    %v10095 = vadd.f32 %v9879, %v10038
    %v10096 = vadd.f32 %v9880, %v10040
    %v10097 = vadd.f32 %v9881, %v10038
    %v10098 = vadd.f32 %v9882, %v10040
    %v10099 = vadd.f32 %v9883, %v10038
    %v10100 = vadd.f32 %v9884, %v10040
    %s10101 = sld [smem:[#allocation9 + $0x304]]
    %v10102 = vstv %s10101
    %v10103 = vmul.f32 %v10102, %v610
    %v10104 = vmul.f32 %v10102, %v519
    %v10105 = vmul.f32 %v10102, %v627
    %v10106 = vmul.f32 %v10102, %v611
    %v10107 = vmul.f32 %v10102, %v522
    %v10108 = vmul.f32 %v10102, %v628
    %v10109 = vmul.f32 %v10102, %v612
    %v10110 = vmul.f32 %v10102, %v525
    %v10111 = vmul.f32 %v10102, %v629
    %v10112 = vmul.f32 %v10102, %v613
    %v10113 = vmul.f32 %v10102, %v528
    %v10114 = vmul.f32 %v10102, %v630
    %v10115 = vmul.f32 %v10102, %v614
    %v10116 = vmul.f32 %v10102, %v531
    %v10117 = vmul.f32 %v10102, %v631
    %v10118 = vmul.f32 %v10102, %v615
    %v10119 = vmul.f32 %v10102, %v534
    %v10120 = vmul.f32 %v10102, %v632
    %v10121 = vmul.f32 %v10102, %v616
    %v10122 = vmul.f32 %v10102, %v537
    %v10123 = vmul.f32 %v10102, %v633
    %v10124 = vmul.f32 %v10102, %v617
    %v10125 = vmul.f32 %v10102, %v540
    %v10126 = vmul.f32 %v10102, %v634
    %v10127 = vmul.f32 %v10102, %v618
    %v10128 = vmul.f32 %v10102, %v543
    %v10129 = vmul.f32 %v10102, %v635
    %v10130 = vmul.f32 %v10102, %v619
    %v10131 = vmul.f32 %v10102, %v546
    %v10132 = vmul.f32 %v10102, %v636
    %v10133 = vmul.f32 %v10102, %v620
    %v10134 = vmul.f32 %v10102, %v549
    %v10135 = vmul.f32 %v10102, %v637
    %v10136 = vmul.f32 %v10102, %v621
    %v10137 = vmul.f32 %v10102, %v552
    %v10138 = vmul.f32 %v10102, %v638
    %v10139 = vmul.f32 %v10102, %v622
    %v10140 = vmul.f32 %v10102, %v555
    %v10141 = vmul.f32 %v10102, %v639
    %v10142 = vmul.f32 %v10102, %v606
    %v10143 = vmul.f32 %v10102, %v507
    %v10144 = vmul.f32 %v10102, %v623
    %v10187 = vrot.slane %v10103, 4
    %v10188 = vrot.slane %v10104, 4
    %v10189 = vsel %vm1423, %v10187, %v10188
    %v10190 = vrot.slane %v10105, 4
    %v10191 = vsel %vm1423, %v10188, %v10190
    %v10192 = vrot.slane %v10106, 4
    %v10193 = vrot.slane %v10107, 4
    %v10194 = vsel %vm1423, %v10192, %v10193
    %v10195 = vrot.slane %v10108, 4
    %v10196 = vsel %vm1423, %v10193, %v10195
    %v10197 = vrot.slane %v10109, 4
    %v10198 = vrot.slane %v10110, 4
    %v10199 = vsel %vm1423, %v10197, %v10198
    %v10200 = vrot.slane %v10111, 4
    %v10201 = vsel %vm1423, %v10198, %v10200
    %v10202 = vrot.slane %v10112, 4
    %v10203 = vrot.slane %v10113, 4
    %v10204 = vsel %vm1423, %v10202, %v10203
    %v10205 = vrot.slane %v10114, 4
    %v10206 = vsel %vm1423, %v10203, %v10205
    %v10207 = vrot.slane %v10115, 4
    %v10208 = vrot.slane %v10116, 4
    %v10209 = vsel %vm1423, %v10207, %v10208
    %v10210 = vrot.slane %v10117, 4
    %v10211 = vsel %vm1423, %v10208, %v10210
    %v10212 = vrot.slane %v10118, 4
    %v10213 = vrot.slane %v10119, 4
    %v10214 = vsel %vm1423, %v10212, %v10213
    %v10215 = vrot.slane %v10120, 4
    %v10216 = vsel %vm1423, %v10213, %v10215
    %v10217 = vrot.slane %v10121, 4
    %v10218 = vrot.slane %v10122, 4
    %v10219 = vsel %vm1423, %v10217, %v10218
    %v10220 = vrot.slane %v10123, 4
    %v10221 = vsel %vm1423, %v10218, %v10220
    %v10222 = vrot.slane %v10124, 4
    %v10223 = vrot.slane %v10125, 4
    %v10224 = vsel %vm1423, %v10222, %v10223
    %v10225 = vrot.slane %v10126, 4
    %v10226 = vsel %vm1423, %v10223, %v10225
    %v10227 = vrot.slane %v10127, 4
    %v10228 = vrot.slane %v10128, 4
    %v10229 = vsel %vm1423, %v10227, %v10228
    %v10230 = vrot.slane %v10129, 4
    %v10231 = vsel %vm1423, %v10228, %v10230
    %v10232 = vrot.slane %v10130, 4
    %v10233 = vrot.slane %v10131, 4
    %v10234 = vsel %vm1423, %v10232, %v10233
    %v10235 = vrot.slane %v10132, 4
    %v10236 = vsel %vm1423, %v10233, %v10235
    %v10237 = vrot.slane %v10133, 4
    %v10238 = vrot.slane %v10134, 4
    %v10239 = vsel %vm1423, %v10237, %v10238
    %v10240 = vrot.slane %v10135, 4
    %v10241 = vsel %vm1423, %v10238, %v10240
    %v10242 = vrot.slane %v10136, 4
    %v10243 = vrot.slane %v10137, 4
    %v10244 = vsel %vm1423, %v10242, %v10243
    %v10245 = vrot.slane %v10138, 4
    %v10246 = vsel %vm1423, %v10243, %v10245
    %v10247 = vrot.slane %v10139, 4
    %v10248 = vrot.slane %v10140, 4
    %v10249 = vsel %vm1423, %v10247, %v10248
    %v10250 = vrot.slane %v10141, 4
    %v10251 = vsel %vm1423, %v10248, %v10250
    %v10252 = vrot.slane %v10142, 4
    %v10253 = vrot.slane %v10143, 4
    %v10254 = vsel %vm1423, %v10252, %v10253
    %v10255 = vrot.slane %v10144, 4
    %v10256 = vsel %vm1423, %v10253, %v10255
    %v10285 = vadd.f32 %v10069, %v10189
    %v10286 = vadd.f32 %v10070, %v10191
    %v10287 = vadd.f32 %v10071, %v10194
    %v10288 = vadd.f32 %v10072, %v10196
    %v10289 = vadd.f32 %v10073, %v10199
    %v10290 = vadd.f32 %v10074, %v10201
    %v10291 = vadd.f32 %v10075, %v10204
    %v10292 = vadd.f32 %v10076, %v10206
    %v10293 = vadd.f32 %v10077, %v10209
    %v10294 = vadd.f32 %v10078, %v10211
    %v10295 = vadd.f32 %v10079, %v10214
    %v10296 = vadd.f32 %v10080, %v10216
    %v10297 = vadd.f32 %v10081, %v10219
    %v10298 = vadd.f32 %v10082, %v10221
    %v10299 = vadd.f32 %v10083, %v10224
    %v10300 = vadd.f32 %v10084, %v10226
    %v10301 = vadd.f32 %v10085, %v10229
    %v10302 = vadd.f32 %v10086, %v10231
    %v10303 = vadd.f32 %v10087, %v10234
    %v10304 = vadd.f32 %v10088, %v10236
    %v10305 = vadd.f32 %v10089, %v10239
    %v10306 = vadd.f32 %v10090, %v10241
    %v10307 = vadd.f32 %v10091, %v10244
    %v10308 = vadd.f32 %v10092, %v10246
    %v10309 = vadd.f32 %v10093, %v10249
    %v10310 = vadd.f32 %v10094, %v10251
    %v10311 = vadd.f32 %v10095, %v10254
    %v10312 = vadd.f32 %v10096, %v10256
    %v10313 = vadd.f32 %v10097, %v10254
    %v10314 = vadd.f32 %v10098, %v10256
    %v10315 = vadd.f32 %v10099, %v10254
    %v10316 = vadd.f32 %v10100, %v10256
    %s10317 = sld [smem:[#allocation9 + $0x305]]
    %v10318 = vstv %s10317
    %v10319 = vmul.f32 %v10318, %v610
    %v10320 = vmul.f32 %v10318, %v519
    %v10321 = vmul.f32 %v10318, %v627
    %v10322 = vmul.f32 %v10318, %v611
    %v10323 = vmul.f32 %v10318, %v522
    %v10324 = vmul.f32 %v10318, %v628
    %v10325 = vmul.f32 %v10318, %v612
    %v10326 = vmul.f32 %v10318, %v525
    %v10327 = vmul.f32 %v10318, %v629
    %v10328 = vmul.f32 %v10318, %v613
    %v10329 = vmul.f32 %v10318, %v528
    %v10330 = vmul.f32 %v10318, %v630
    %v10331 = vmul.f32 %v10318, %v614
    %v10332 = vmul.f32 %v10318, %v531
    %v10333 = vmul.f32 %v10318, %v631
    %v10334 = vmul.f32 %v10318, %v615
    %v10335 = vmul.f32 %v10318, %v534
    %v10336 = vmul.f32 %v10318, %v632
    %v10337 = vmul.f32 %v10318, %v616
    %v10338 = vmul.f32 %v10318, %v537
    %v10339 = vmul.f32 %v10318, %v633
    %v10340 = vmul.f32 %v10318, %v617
    %v10341 = vmul.f32 %v10318, %v540
    %v10342 = vmul.f32 %v10318, %v634
    %v10343 = vmul.f32 %v10318, %v618
    %v10344 = vmul.f32 %v10318, %v543
    %v10345 = vmul.f32 %v10318, %v635
    %v10346 = vmul.f32 %v10318, %v619
    %v10347 = vmul.f32 %v10318, %v546
    %v10348 = vmul.f32 %v10318, %v636
    %v10349 = vmul.f32 %v10318, %v620
    %v10350 = vmul.f32 %v10318, %v549
    %v10351 = vmul.f32 %v10318, %v637
    %v10352 = vmul.f32 %v10318, %v621
    %v10353 = vmul.f32 %v10318, %v552
    %v10354 = vmul.f32 %v10318, %v638
    %v10355 = vmul.f32 %v10318, %v622
    %v10356 = vmul.f32 %v10318, %v555
    %v10357 = vmul.f32 %v10318, %v639
    %v10358 = vmul.f32 %v10318, %v606
    %v10359 = vmul.f32 %v10318, %v507
    %v10360 = vmul.f32 %v10318, %v623
    %v10403 = vrot.slane %v10319, 5
    %v10404 = vrot.slane %v10320, 5
    %v10405 = vsel %vm505, %v10403, %v10404
    %v10406 = vrot.slane %v10321, 5
    %v10407 = vsel %vm505, %v10404, %v10406
    %v10408 = vrot.slane %v10322, 5
    %v10409 = vrot.slane %v10323, 5
    %v10410 = vsel %vm505, %v10408, %v10409
    %v10411 = vrot.slane %v10324, 5
    %v10412 = vsel %vm505, %v10409, %v10411
    %v10413 = vrot.slane %v10325, 5
    %v10414 = vrot.slane %v10326, 5
    %v10415 = vsel %vm505, %v10413, %v10414
    %v10416 = vrot.slane %v10327, 5
    %v10417 = vsel %vm505, %v10414, %v10416
    %v10418 = vrot.slane %v10328, 5
    %v10419 = vrot.slane %v10329, 5
    %v10420 = vsel %vm505, %v10418, %v10419
    %v10421 = vrot.slane %v10330, 5
    %v10422 = vsel %vm505, %v10419, %v10421
    %v10423 = vrot.slane %v10331, 5
    %v10424 = vrot.slane %v10332, 5
    %v10425 = vsel %vm505, %v10423, %v10424
    %v10426 = vrot.slane %v10333, 5
    %v10427 = vsel %vm505, %v10424, %v10426
    %v10428 = vrot.slane %v10334, 5
    %v10429 = vrot.slane %v10335, 5
    %v10430 = vsel %vm505, %v10428, %v10429
    %v10431 = vrot.slane %v10336, 5
    %v10432 = vsel %vm505, %v10429, %v10431
    %v10433 = vrot.slane %v10337, 5
    %v10434 = vrot.slane %v10338, 5
    %v10435 = vsel %vm505, %v10433, %v10434
    %v10436 = vrot.slane %v10339, 5
    %v10437 = vsel %vm505, %v10434, %v10436
    %v10438 = vrot.slane %v10340, 5
    %v10439 = vrot.slane %v10341, 5
    %v10440 = vsel %vm505, %v10438, %v10439
    %v10441 = vrot.slane %v10342, 5
    %v10442 = vsel %vm505, %v10439, %v10441
    %v10443 = vrot.slane %v10343, 5
    %v10444 = vrot.slane %v10344, 5
    %v10445 = vsel %vm505, %v10443, %v10444
    %v10446 = vrot.slane %v10345, 5
    %v10447 = vsel %vm505, %v10444, %v10446
    %v10448 = vrot.slane %v10346, 5
    %v10449 = vrot.slane %v10347, 5
    %v10450 = vsel %vm505, %v10448, %v10449
    %v10451 = vrot.slane %v10348, 5
    %v10452 = vsel %vm505, %v10449, %v10451
    %v10453 = vrot.slane %v10349, 5
    %v10454 = vrot.slane %v10350, 5
    %v10455 = vsel %vm505, %v10453, %v10454
    %v10456 = vrot.slane %v10351, 5
    %v10457 = vsel %vm505, %v10454, %v10456
    %v10458 = vrot.slane %v10352, 5
    %v10459 = vrot.slane %v10353, 5
    %v10460 = vsel %vm505, %v10458, %v10459
    %v10461 = vrot.slane %v10354, 5
    %v10462 = vsel %vm505, %v10459, %v10461
    %v10463 = vrot.slane %v10355, 5
    %v10464 = vrot.slane %v10356, 5
    %v10465 = vsel %vm505, %v10463, %v10464
    %v10466 = vrot.slane %v10357, 5
    %v10467 = vsel %vm505, %v10464, %v10466
    %v10468 = vrot.slane %v10358, 5
    %v10469 = vrot.slane %v10359, 5
    %v10470 = vsel %vm505, %v10468, %v10469
    %v10471 = vrot.slane %v10360, 5
    %v10472 = vsel %vm505, %v10469, %v10471
    %v10501 = vadd.f32 %v10285, %v10405
    %v10502 = vadd.f32 %v10286, %v10407
    %v10503 = vadd.f32 %v10287, %v10410
    %v10504 = vadd.f32 %v10288, %v10412
    %v10505 = vadd.f32 %v10289, %v10415
    %v10506 = vadd.f32 %v10290, %v10417
    %v10507 = vadd.f32 %v10291, %v10420
    %v10508 = vadd.f32 %v10292, %v10422
    %v10509 = vadd.f32 %v10293, %v10425
    %v10510 = vadd.f32 %v10294, %v10427
    %v10511 = vadd.f32 %v10295, %v10430
    %v10512 = vadd.f32 %v10296, %v10432
    %v10513 = vadd.f32 %v10297, %v10435
    %v10514 = vadd.f32 %v10298, %v10437
    %v10515 = vadd.f32 %v10299, %v10440
    %v10516 = vadd.f32 %v10300, %v10442
    %v10517 = vadd.f32 %v10301, %v10445
    %v10518 = vadd.f32 %v10302, %v10447
    %v10519 = vadd.f32 %v10303, %v10450
    %v10520 = vadd.f32 %v10304, %v10452
    %v10521 = vadd.f32 %v10305, %v10455
    %v10522 = vadd.f32 %v10306, %v10457
    %v10523 = vadd.f32 %v10307, %v10460
    %v10524 = vadd.f32 %v10308, %v10462
    %v10525 = vadd.f32 %v10309, %v10465
    %v10526 = vadd.f32 %v10310, %v10467
    %v10527 = vadd.f32 %v10311, %v10470
    %v10528 = vadd.f32 %v10312, %v10472
    %v10529 = vadd.f32 %v10313, %v10470
    %v10530 = vadd.f32 %v10314, %v10472
    %v10531 = vadd.f32 %v10315, %v10470
    %v10532 = vadd.f32 %v10316, %v10472
    %s10533 = sld [smem:[#allocation9 + $0x306]]
    %v10534 = vstv %s10533
    %v10535 = vmul.f32 %v10534, %v610
    %v10536 = vmul.f32 %v10534, %v519
    %v10537 = vmul.f32 %v10534, %v627
    %v10538 = vmul.f32 %v10534, %v611
    %v10539 = vmul.f32 %v10534, %v522
    %v10540 = vmul.f32 %v10534, %v628
    %v10541 = vmul.f32 %v10534, %v612
    %v10542 = vmul.f32 %v10534, %v525
    %v10543 = vmul.f32 %v10534, %v629
    %v10544 = vmul.f32 %v10534, %v613
    %v10545 = vmul.f32 %v10534, %v528
    %v10546 = vmul.f32 %v10534, %v630
    %v10547 = vmul.f32 %v10534, %v614
    %v10548 = vmul.f32 %v10534, %v531
    %v10549 = vmul.f32 %v10534, %v631
    %v10550 = vmul.f32 %v10534, %v615
    %v10551 = vmul.f32 %v10534, %v534
    %v10552 = vmul.f32 %v10534, %v632
    %v10553 = vmul.f32 %v10534, %v616
    %v10554 = vmul.f32 %v10534, %v537
    %v10555 = vmul.f32 %v10534, %v633
    %v10556 = vmul.f32 %v10534, %v617
    %v10557 = vmul.f32 %v10534, %v540
    %v10558 = vmul.f32 %v10534, %v634
    %v10559 = vmul.f32 %v10534, %v618
    %v10560 = vmul.f32 %v10534, %v543
    %v10561 = vmul.f32 %v10534, %v635
    %v10562 = vmul.f32 %v10534, %v619
    %v10563 = vmul.f32 %v10534, %v546
    %v10564 = vmul.f32 %v10534, %v636
    %v10565 = vmul.f32 %v10534, %v620
    %v10566 = vmul.f32 %v10534, %v549
    %v10567 = vmul.f32 %v10534, %v637
    %v10568 = vmul.f32 %v10534, %v621
    %v10569 = vmul.f32 %v10534, %v552
    %v10570 = vmul.f32 %v10534, %v638
    %v10571 = vmul.f32 %v10534, %v622
    %v10572 = vmul.f32 %v10534, %v555
    %v10573 = vmul.f32 %v10534, %v639
    %v10574 = vmul.f32 %v10534, %v606
    %v10575 = vmul.f32 %v10534, %v507
    %v10576 = vmul.f32 %v10534, %v623
    %v10619 = vrot.slane %v10535, 6
    %v10620 = vrot.slane %v10536, 6
    %v10621 = vsel %vm1848, %v10619, %v10620
    %v10622 = vrot.slane %v10537, 6
    %v10623 = vsel %vm1848, %v10620, %v10622
    %v10624 = vrot.slane %v10538, 6
    %v10625 = vrot.slane %v10539, 6
    %v10626 = vsel %vm1848, %v10624, %v10625
    %v10627 = vrot.slane %v10540, 6
    %v10628 = vsel %vm1848, %v10625, %v10627
    %v10629 = vrot.slane %v10541, 6
    %v10630 = vrot.slane %v10542, 6
    %v10631 = vsel %vm1848, %v10629, %v10630
    %v10632 = vrot.slane %v10543, 6
    %v10633 = vsel %vm1848, %v10630, %v10632
    %v10634 = vrot.slane %v10544, 6
    %v10635 = vrot.slane %v10545, 6
    %v10636 = vsel %vm1848, %v10634, %v10635
    %v10637 = vrot.slane %v10546, 6
    %v10638 = vsel %vm1848, %v10635, %v10637
    %v10639 = vrot.slane %v10547, 6
    %v10640 = vrot.slane %v10548, 6
    %v10641 = vsel %vm1848, %v10639, %v10640
    %v10642 = vrot.slane %v10549, 6
    %v10643 = vsel %vm1848, %v10640, %v10642
    %v10644 = vrot.slane %v10550, 6
    %v10645 = vrot.slane %v10551, 6
    %v10646 = vsel %vm1848, %v10644, %v10645
    %v10647 = vrot.slane %v10552, 6
    %v10648 = vsel %vm1848, %v10645, %v10647
    %v10649 = vrot.slane %v10553, 6
    %v10650 = vrot.slane %v10554, 6
    %v10651 = vsel %vm1848, %v10649, %v10650
    %v10652 = vrot.slane %v10555, 6
    %v10653 = vsel %vm1848, %v10650, %v10652
    %v10654 = vrot.slane %v10556, 6
    %v10655 = vrot.slane %v10557, 6
    %v10656 = vsel %vm1848, %v10654, %v10655
    %v10657 = vrot.slane %v10558, 6
    %v10658 = vsel %vm1848, %v10655, %v10657
    %v10659 = vrot.slane %v10559, 6
    %v10660 = vrot.slane %v10560, 6
    %v10661 = vsel %vm1848, %v10659, %v10660
    %v10662 = vrot.slane %v10561, 6
    %v10663 = vsel %vm1848, %v10660, %v10662
    %v10664 = vrot.slane %v10562, 6
    %v10665 = vrot.slane %v10563, 6
    %v10666 = vsel %vm1848, %v10664, %v10665
    %v10667 = vrot.slane %v10564, 6
    %v10668 = vsel %vm1848, %v10665, %v10667
    %v10669 = vrot.slane %v10565, 6
    %v10670 = vrot.slane %v10566, 6
    %v10671 = vsel %vm1848, %v10669, %v10670
    %v10672 = vrot.slane %v10567, 6
    %v10673 = vsel %vm1848, %v10670, %v10672
    %v10674 = vrot.slane %v10568, 6
    %v10675 = vrot.slane %v10569, 6
    %v10676 = vsel %vm1848, %v10674, %v10675
    %v10677 = vrot.slane %v10570, 6
    %v10678 = vsel %vm1848, %v10675, %v10677
    %v10679 = vrot.slane %v10571, 6
    %v10680 = vrot.slane %v10572, 6
    %v10681 = vsel %vm1848, %v10679, %v10680
    %v10682 = vrot.slane %v10573, 6
    %v10683 = vsel %vm1848, %v10680, %v10682
    %v10684 = vrot.slane %v10574, 6
    %v10685 = vrot.slane %v10575, 6
    %v10686 = vsel %vm1848, %v10684, %v10685
    %v10687 = vrot.slane %v10576, 6
    %v10688 = vsel %vm1848, %v10685, %v10687
    %v10717 = vadd.f32 %v10501, %v10621
    %v10718 = vadd.f32 %v10502, %v10623
    %v10719 = vadd.f32 %v10503, %v10626
    %v10720 = vadd.f32 %v10504, %v10628
    %v10721 = vadd.f32 %v10505, %v10631
    %v10722 = vadd.f32 %v10506, %v10633
    %v10723 = vadd.f32 %v10507, %v10636
    %v10724 = vadd.f32 %v10508, %v10638
    %v10725 = vadd.f32 %v10509, %v10641
    %v10726 = vadd.f32 %v10510, %v10643
    %v10727 = vadd.f32 %v10511, %v10646
    %v10728 = vadd.f32 %v10512, %v10648
    %v10729 = vadd.f32 %v10513, %v10651
    %v10730 = vadd.f32 %v10514, %v10653
    %v10731 = vadd.f32 %v10515, %v10656
    %v10732 = vadd.f32 %v10516, %v10658
    %v10733 = vadd.f32 %v10517, %v10661
    %v10734 = vadd.f32 %v10518, %v10663
    %v10735 = vadd.f32 %v10519, %v10666
    %v10736 = vadd.f32 %v10520, %v10668
    %v10737 = vadd.f32 %v10521, %v10671
    %v10738 = vadd.f32 %v10522, %v10673
    %v10739 = vadd.f32 %v10523, %v10676
    %v10740 = vadd.f32 %v10524, %v10678
    %v10741 = vadd.f32 %v10525, %v10681
    %v10742 = vadd.f32 %v10526, %v10683
    %v10743 = vadd.f32 %v10527, %v10686
    %v10744 = vadd.f32 %v10528, %v10688
    %v10745 = vadd.f32 %v10529, %v10686
    %v10746 = vadd.f32 %v10530, %v10688
    %v10747 = vadd.f32 %v10531, %v10686
    %v10748 = vadd.f32 %v10532, %v10688
    %v10749 = vxor.u32 %v10717, 2147483648
    %v10750 = vxor.u32 %v10718, 2147483648
    %v10751 = vxor.u32 %v10719, 2147483648
    %v10752 = vxor.u32 %v10720, 2147483648
    %v10753 = vxor.u32 %v10721, 2147483648
    %v10754 = vxor.u32 %v10722, 2147483648
    %v10755 = vxor.u32 %v10723, 2147483648
    %v10756 = vxor.u32 %v10724, 2147483648
    %v10757 = vxor.u32 %v10725, 2147483648
    %v10758 = vxor.u32 %v10726, 2147483648
    %v10759 = vxor.u32 %v10727, 2147483648
    %v10760 = vxor.u32 %v10728, 2147483648
    %v10761 = vxor.u32 %v10729, 2147483648
    %v10762 = vxor.u32 %v10730, 2147483648
    %v10763 = vxor.u32 %v10731, 2147483648
    %v10764 = vxor.u32 %v10732, 2147483648
    %v10765 = vxor.u32 %v10733, 2147483648
    %v10766 = vxor.u32 %v10734, 2147483648
    %v10767 = vxor.u32 %v10735, 2147483648
    %v10768 = vxor.u32 %v10736, 2147483648
    %v10769 = vxor.u32 %v10737, 2147483648
    %v10770 = vxor.u32 %v10738, 2147483648
    %v10771 = vxor.u32 %v10739, 2147483648
    %v10772 = vxor.u32 %v10740, 2147483648
    %v10773 = vxor.u32 %v10741, 2147483648
    %v10774 = vxor.u32 %v10742, 2147483648
    %v10775 = vxor.u32 %v10743, 2147483648
    %v10776 = vxor.u32 %v10744, 2147483648
    %v10777 = vxor.u32 %v10745, 2147483648
    %v10778 = vxor.u32 %v10746, 2147483648
    %v10779 = vxor.u32 %v10747, 2147483648
    %v10780 = vxor.u32 %v10748, 2147483648
    %v10781 = vmul.f32 %v10749, 1.442695
    %v10782 = vpow.pop %v10781
    %v10783 = vmul.f32 %v10750, 1.442695
    %v10784 = vpow.pop %v10783
    %v10785 = vmul.f32 %v10751, 1.442695
    %v10786 = vpow.pop %v10785
    %v10787 = vmul.f32 %v10752, 1.442695
    %v10788 = vpow.pop %v10787
    %v10789 = vmul.f32 %v10753, 1.442695
    %v10790 = vpow.pop %v10789
    %v10791 = vmul.f32 %v10754, 1.442695
    %v10792 = vpow.pop %v10791
    %v10793 = vmul.f32 %v10755, 1.442695
    %v10794 = vpow.pop %v10793
    %v10795 = vmul.f32 %v10756, 1.442695
    %v10796 = vpow.pop %v10795
    %v10797 = vmul.f32 %v10757, 1.442695
    %v10798 = vpow.pop %v10797
    %v10799 = vmul.f32 %v10758, 1.442695
    %v10800 = vpow.pop %v10799
    %v10801 = vmul.f32 %v10759, 1.442695
    %v10802 = vpow.pop %v10801
    %v10803 = vmul.f32 %v10760, 1.442695
    %v10804 = vpow.pop %v10803
    %v10805 = vmul.f32 %v10761, 1.442695
    %v10806 = vpow.pop %v10805
    %v10807 = vmul.f32 %v10762, 1.442695
    %v10808 = vpow.pop %v10807
    %v10809 = vmul.f32 %v10763, 1.442695
    %v10810 = vpow.pop %v10809
    %v10811 = vmul.f32 %v10764, 1.442695
    %v10812 = vpow.pop %v10811
    %v10813 = vmul.f32 %v10765, 1.442695
    %v10814 = vpow.pop %v10813
    %v10815 = vmul.f32 %v10766, 1.442695
    %v10816 = vpow.pop %v10815
    %v10817 = vmul.f32 %v10767, 1.442695
    %v10818 = vpow.pop %v10817
    %v10819 = vmul.f32 %v10768, 1.442695
    %v10820 = vpow.pop %v10819
    %v10821 = vmul.f32 %v10769, 1.442695
    %v10822 = vpow.pop %v10821
    %v10823 = vmul.f32 %v10770, 1.442695
    %v10824 = vpow.pop %v10823
    %v10825 = vmul.f32 %v10771, 1.442695
    %v10826 = vpow.pop %v10825
    %v10827 = vmul.f32 %v10772, 1.442695
    %v10828 = vpow.pop %v10827
    %v10829 = vmul.f32 %v10773, 1.442695
    %v10830 = vpow.pop %v10829
    %v10831 = vmul.f32 %v10774, 1.442695
    %v10832 = vpow.pop %v10831
    %v10833 = vmul.f32 %v10775, 1.442695
    %v10834 = vpow.pop %v10833
    %v10835 = vmul.f32 %v10776, 1.442695
    %v10836 = vpow.pop %v10835
    %v10837 = vmul.f32 %v10777, 1.442695
    %v10838 = vpow.pop %v10837
    %v10839 = vmul.f32 %v10778, 1.442695
    %v10840 = vpow.pop %v10839
    %v10841 = vmul.f32 %v10779, 1.442695
    %v10842 = vpow.pop %v10841
    %v10843 = vmul.f32 %v10780, 1.442695
    %v10844 = vpow.pop %v10843
    %v10845 = vadd.f32 %v10782, 1.0
    %v10846 = vadd.f32 %v10784, 1.0
    %v10847 = vadd.f32 %v10786, 1.0
    %v10848 = vadd.f32 %v10788, 1.0
    %v10849 = vadd.f32 %v10790, 1.0
    %v10850 = vadd.f32 %v10792, 1.0
    %v10851 = vadd.f32 %v10794, 1.0
    %v10852 = vadd.f32 %v10796, 1.0
    %v10853 = vadd.f32 %v10798, 1.0
    %v10854 = vadd.f32 %v10800, 1.0
    %v10855 = vadd.f32 %v10802, 1.0
    %v10856 = vadd.f32 %v10804, 1.0
    %v10857 = vadd.f32 %v10806, 1.0
    %v10858 = vadd.f32 %v10808, 1.0
    %v10859 = vadd.f32 %v10810, 1.0
    %v10860 = vadd.f32 %v10812, 1.0
    %v10861 = vadd.f32 %v10814, 1.0
    %v10862 = vadd.f32 %v10816, 1.0
    %v10863 = vadd.f32 %v10818, 1.0
    %v10864 = vadd.f32 %v10820, 1.0
    %v10865 = vadd.f32 %v10822, 1.0
    %v10866 = vadd.f32 %v10824, 1.0
    %v10867 = vadd.f32 %v10826, 1.0
    %v10868 = vadd.f32 %v10828, 1.0
    %v10869 = vadd.f32 %v10830, 1.0
    %v10870 = vadd.f32 %v10832, 1.0
    %v10871 = vadd.f32 %v10834, 1.0
    %v10872 = vadd.f32 %v10836, 1.0
    %v10873 = vadd.f32 %v10838, 1.0
    %v10874 = vadd.f32 %v10840, 1.0
    %v10875 = vadd.f32 %v10842, 1.0
    %v10876 = vadd.f32 %v10844, 1.0
    %v10877 = vrcp.pop %v10845
    %v10878 = vmul.f32 %v10845, %v10877
    %v10879 = vsub.f32 1.0, %v10878
    %v10880 = vmul.f32 %v10877, %v10879
    %v10881 = vadd.f32 %v10877, %v10880
    %vm10882 = vweird.f32 %v10845
    %vm10883 = vweird.f32 %v10877
    %vm10884 = vmor %vm10882, %vm10883
    %v10885 = vsel %vm10884, %v10877, %v10881
    %v10886 = vand.u32 2147483647, %v10845
    %vm10887 = vcmp.eq.f32.partialorder %v10886, 8.507059e+37
    %v10888 = vand.u32 %v10845, 2147483648
    %v10889 = vor.u32 1.1754944e-38, %v10888
    %v10890 = vsel %vm10887, %v10889, %v10885
    %v10891 = vmul.f32 1.0, %v10890
    %v10892 = vrcp.pop %v10846
    %v10893 = vmul.f32 %v10846, %v10892
    %v10894 = vsub.f32 1.0, %v10893
    %v10895 = vmul.f32 %v10892, %v10894
    %v10896 = vadd.f32 %v10892, %v10895
    %vm10897 = vweird.f32 %v10846
    %vm10898 = vweird.f32 %v10892
    %vm10899 = vmor %vm10897, %vm10898
    %v10900 = vsel %vm10899, %v10892, %v10896
    %v10901 = vand.u32 2147483647, %v10846
    %vm10902 = vcmp.eq.f32.partialorder %v10901, 8.507059e+37
    %v10903 = vand.u32 %v10846, 2147483648
    %v10904 = vor.u32 1.1754944e-38, %v10903
    %v10905 = vsel %vm10902, %v10904, %v10900
    %v10906 = vmul.f32 1.0, %v10905
    %v10907 = vrcp.pop %v10847
    %v10908 = vmul.f32 %v10847, %v10907
    %v10909 = vsub.f32 1.0, %v10908
    %v10910 = vmul.f32 %v10907, %v10909
    %v10911 = vadd.f32 %v10907, %v10910
    %vm10912 = vweird.f32 %v10847
    %vm10913 = vweird.f32 %v10907
    %vm10914 = vmor %vm10912, %vm10913
    %v10915 = vsel %vm10914, %v10907, %v10911
    %v10916 = vand.u32 2147483647, %v10847
    %vm10917 = vcmp.eq.f32.partialorder %v10916, 8.507059e+37
    %v10918 = vand.u32 %v10847, 2147483648
    %v10919 = vor.u32 1.1754944e-38, %v10918
    %v10920 = vsel %vm10917, %v10919, %v10915
    %v10921 = vmul.f32 1.0, %v10920
    %v10922 = vrcp.pop %v10848
    %v10923 = vmul.f32 %v10848, %v10922
    %v10924 = vsub.f32 1.0, %v10923
    %v10925 = vmul.f32 %v10922, %v10924
    %v10926 = vadd.f32 %v10922, %v10925
    %vm10927 = vweird.f32 %v10848
    %vm10928 = vweird.f32 %v10922
    %vm10929 = vmor %vm10927, %vm10928
    %v10930 = vsel %vm10929, %v10922, %v10926
    %v10931 = vand.u32 2147483647, %v10848
    %vm10932 = vcmp.eq.f32.partialorder %v10931, 8.507059e+37
    %v10933 = vand.u32 %v10848, 2147483648
    %v10934 = vor.u32 1.1754944e-38, %v10933
    %v10935 = vsel %vm10932, %v10934, %v10930
    %v10936 = vmul.f32 1.0, %v10935
    %v10937 = vrcp.pop %v10849
    %v10938 = vmul.f32 %v10849, %v10937
    %v10939 = vsub.f32 1.0, %v10938
    %v10940 = vmul.f32 %v10937, %v10939
    %v10941 = vadd.f32 %v10937, %v10940
    %vm10942 = vweird.f32 %v10849
    %vm10943 = vweird.f32 %v10937
    %vm10944 = vmor %vm10942, %vm10943
    %v10945 = vsel %vm10944, %v10937, %v10941
    %v10946 = vand.u32 2147483647, %v10849
    %vm10947 = vcmp.eq.f32.partialorder %v10946, 8.507059e+37
    %v10948 = vand.u32 %v10849, 2147483648
    %v10949 = vor.u32 1.1754944e-38, %v10948
    %v10950 = vsel %vm10947, %v10949, %v10945
    %v10951 = vmul.f32 1.0, %v10950
    %v10952 = vrcp.pop %v10850
    %v10953 = vmul.f32 %v10850, %v10952
    %v10954 = vsub.f32 1.0, %v10953
    %v10955 = vmul.f32 %v10952, %v10954
    %v10956 = vadd.f32 %v10952, %v10955
    %vm10957 = vweird.f32 %v10850
    %vm10958 = vweird.f32 %v10952
    %vm10959 = vmor %vm10957, %vm10958
    %v10960 = vsel %vm10959, %v10952, %v10956
    %v10961 = vand.u32 2147483647, %v10850
    %vm10962 = vcmp.eq.f32.partialorder %v10961, 8.507059e+37
    %v10963 = vand.u32 %v10850, 2147483648
    %v10964 = vor.u32 1.1754944e-38, %v10963
    %v10965 = vsel %vm10962, %v10964, %v10960
    %v10966 = vmul.f32 1.0, %v10965
    %v10967 = vrcp.pop %v10851
    %v10968 = vmul.f32 %v10851, %v10967
    %v10969 = vsub.f32 1.0, %v10968
    %v10970 = vmul.f32 %v10967, %v10969
    %v10971 = vadd.f32 %v10967, %v10970
    %vm10972 = vweird.f32 %v10851
    %vm10973 = vweird.f32 %v10967
    %vm10974 = vmor %vm10972, %vm10973
    %v10975 = vsel %vm10974, %v10967, %v10971
    %v10976 = vand.u32 2147483647, %v10851
    %vm10977 = vcmp.eq.f32.partialorder %v10976, 8.507059e+37
    %v10978 = vand.u32 %v10851, 2147483648
    %v10979 = vor.u32 1.1754944e-38, %v10978
    %v10980 = vsel %vm10977, %v10979, %v10975
    %v10981 = vmul.f32 1.0, %v10980
    %v10982 = vrcp.pop %v10852
    %v10983 = vmul.f32 %v10852, %v10982
    %v10984 = vsub.f32 1.0, %v10983
    %v10985 = vmul.f32 %v10982, %v10984
    %v10986 = vadd.f32 %v10982, %v10985
    %vm10987 = vweird.f32 %v10852
    %vm10988 = vweird.f32 %v10982
    %vm10989 = vmor %vm10987, %vm10988
    %v10990 = vsel %vm10989, %v10982, %v10986
    %v10991 = vand.u32 2147483647, %v10852
    %vm10992 = vcmp.eq.f32.partialorder %v10991, 8.507059e+37
    %v10993 = vand.u32 %v10852, 2147483648
    %v10994 = vor.u32 1.1754944e-38, %v10993
    %v10995 = vsel %vm10992, %v10994, %v10990
    %v10996 = vmul.f32 1.0, %v10995
    %v10997 = vrcp.pop %v10853
    %v10998 = vmul.f32 %v10853, %v10997
    %v10999 = vsub.f32 1.0, %v10998
    %v11000 = vmul.f32 %v10997, %v10999
    %v11001 = vadd.f32 %v10997, %v11000
    %vm11002 = vweird.f32 %v10853
    %vm11003 = vweird.f32 %v10997
    %vm11004 = vmor %vm11002, %vm11003
    %v11005 = vsel %vm11004, %v10997, %v11001
    %v11006 = vand.u32 2147483647, %v10853
    %vm11007 = vcmp.eq.f32.partialorder %v11006, 8.507059e+37
    %v11008 = vand.u32 %v10853, 2147483648
    %v11009 = vor.u32 1.1754944e-38, %v11008
    %v11010 = vsel %vm11007, %v11009, %v11005
    %v11011 = vmul.f32 1.0, %v11010
    %v11012 = vrcp.pop %v10854
    %v11013 = vmul.f32 %v10854, %v11012
    %v11014 = vsub.f32 1.0, %v11013
    %v11015 = vmul.f32 %v11012, %v11014
    %v11016 = vadd.f32 %v11012, %v11015
    %vm11017 = vweird.f32 %v10854
    %vm11018 = vweird.f32 %v11012
    %vm11019 = vmor %vm11017, %vm11018
    %v11020 = vsel %vm11019, %v11012, %v11016
    %v11021 = vand.u32 2147483647, %v10854
    %vm11022 = vcmp.eq.f32.partialorder %v11021, 8.507059e+37
    %v11023 = vand.u32 %v10854, 2147483648
    %v11024 = vor.u32 1.1754944e-38, %v11023
    %v11025 = vsel %vm11022, %v11024, %v11020
    %v11026 = vmul.f32 1.0, %v11025
    %v11027 = vrcp.pop %v10855
    %v11028 = vmul.f32 %v10855, %v11027
    %v11029 = vsub.f32 1.0, %v11028
    %v11030 = vmul.f32 %v11027, %v11029
    %v11031 = vadd.f32 %v11027, %v11030
    %vm11032 = vweird.f32 %v10855
    %vm11033 = vweird.f32 %v11027
    %vm11034 = vmor %vm11032, %vm11033
    %v11035 = vsel %vm11034, %v11027, %v11031
    %v11036 = vand.u32 2147483647, %v10855
    %vm11037 = vcmp.eq.f32.partialorder %v11036, 8.507059e+37
    %v11038 = vand.u32 %v10855, 2147483648
    %v11039 = vor.u32 1.1754944e-38, %v11038
    %v11040 = vsel %vm11037, %v11039, %v11035
    %v11041 = vmul.f32 1.0, %v11040
    %v11042 = vrcp.pop %v10856
    %v11043 = vmul.f32 %v10856, %v11042
    %v11044 = vsub.f32 1.0, %v11043
    %v11045 = vmul.f32 %v11042, %v11044
    %v11046 = vadd.f32 %v11042, %v11045
    %vm11047 = vweird.f32 %v10856
    %vm11048 = vweird.f32 %v11042
    %vm11049 = vmor %vm11047, %vm11048
    %v11050 = vsel %vm11049, %v11042, %v11046
    %v11051 = vand.u32 2147483647, %v10856
    %vm11052 = vcmp.eq.f32.partialorder %v11051, 8.507059e+37
    %v11053 = vand.u32 %v10856, 2147483648
    %v11054 = vor.u32 1.1754944e-38, %v11053
    %v11055 = vsel %vm11052, %v11054, %v11050
    %v11056 = vmul.f32 1.0, %v11055
    %v11057 = vrcp.pop %v10857
    %v11058 = vmul.f32 %v10857, %v11057
    %v11059 = vsub.f32 1.0, %v11058
    %v11060 = vmul.f32 %v11057, %v11059
    %v11061 = vadd.f32 %v11057, %v11060
    %vm11062 = vweird.f32 %v10857
    %vm11063 = vweird.f32 %v11057
    %vm11064 = vmor %vm11062, %vm11063
    %v11065 = vsel %vm11064, %v11057, %v11061
    %v11066 = vand.u32 2147483647, %v10857
    %vm11067 = vcmp.eq.f32.partialorder %v11066, 8.507059e+37
    %v11068 = vand.u32 %v10857, 2147483648
    %v11069 = vor.u32 1.1754944e-38, %v11068
    %v11070 = vsel %vm11067, %v11069, %v11065
    %v11071 = vmul.f32 1.0, %v11070
    %v11072 = vrcp.pop %v10858
    %v11073 = vmul.f32 %v10858, %v11072
    %v11074 = vsub.f32 1.0, %v11073
    %v11075 = vmul.f32 %v11072, %v11074
    %v11076 = vadd.f32 %v11072, %v11075
    %vm11077 = vweird.f32 %v10858
    %vm11078 = vweird.f32 %v11072
    %vm11079 = vmor %vm11077, %vm11078
    %v11080 = vsel %vm11079, %v11072, %v11076
    %v11081 = vand.u32 2147483647, %v10858
    %vm11082 = vcmp.eq.f32.partialorder %v11081, 8.507059e+37
    %v11083 = vand.u32 %v10858, 2147483648
    %v11084 = vor.u32 1.1754944e-38, %v11083
    %v11085 = vsel %vm11082, %v11084, %v11080
    %v11086 = vmul.f32 1.0, %v11085
    %v11087 = vrcp.pop %v10859
    %v11088 = vmul.f32 %v10859, %v11087
    %v11089 = vsub.f32 1.0, %v11088
    %v11090 = vmul.f32 %v11087, %v11089
    %v11091 = vadd.f32 %v11087, %v11090
    %vm11092 = vweird.f32 %v10859
    %vm11093 = vweird.f32 %v11087
    %vm11094 = vmor %vm11092, %vm11093
    %v11095 = vsel %vm11094, %v11087, %v11091
    %v11096 = vand.u32 2147483647, %v10859
    %vm11097 = vcmp.eq.f32.partialorder %v11096, 8.507059e+37
    %v11098 = vand.u32 %v10859, 2147483648
    %v11099 = vor.u32 1.1754944e-38, %v11098
    %v11100 = vsel %vm11097, %v11099, %v11095
    %v11101 = vmul.f32 1.0, %v11100
    %v11102 = vrcp.pop %v10860
    %v11103 = vmul.f32 %v10860, %v11102
    %v11104 = vsub.f32 1.0, %v11103
    %v11105 = vmul.f32 %v11102, %v11104
    %v11106 = vadd.f32 %v11102, %v11105
    %vm11107 = vweird.f32 %v10860
    %vm11108 = vweird.f32 %v11102
    %vm11109 = vmor %vm11107, %vm11108
    %v11110 = vsel %vm11109, %v11102, %v11106
    %v11111 = vand.u32 2147483647, %v10860
    %vm11112 = vcmp.eq.f32.partialorder %v11111, 8.507059e+37
    %v11113 = vand.u32 %v10860, 2147483648
    %v11114 = vor.u32 1.1754944e-38, %v11113
    %v11115 = vsel %vm11112, %v11114, %v11110
    %v11116 = vmul.f32 1.0, %v11115
    %v11117 = vrcp.pop %v10861
    %v11118 = vmul.f32 %v10861, %v11117
    %v11119 = vsub.f32 1.0, %v11118
    %v11120 = vmul.f32 %v11117, %v11119
    %v11121 = vadd.f32 %v11117, %v11120
    %vm11122 = vweird.f32 %v10861
    %vm11123 = vweird.f32 %v11117
    %vm11124 = vmor %vm11122, %vm11123
    %v11125 = vsel %vm11124, %v11117, %v11121
    %v11126 = vand.u32 2147483647, %v10861
    %vm11127 = vcmp.eq.f32.partialorder %v11126, 8.507059e+37
    %v11128 = vand.u32 %v10861, 2147483648
    %v11129 = vor.u32 1.1754944e-38, %v11128
    %v11130 = vsel %vm11127, %v11129, %v11125
    %v11131 = vmul.f32 1.0, %v11130
    %v11132 = vrcp.pop %v10862
    %v11133 = vmul.f32 %v10862, %v11132
    %v11134 = vsub.f32 1.0, %v11133
    %v11135 = vmul.f32 %v11132, %v11134
    %v11136 = vadd.f32 %v11132, %v11135
    %vm11137 = vweird.f32 %v10862
    %vm11138 = vweird.f32 %v11132
    %vm11139 = vmor %vm11137, %vm11138
    %v11140 = vsel %vm11139, %v11132, %v11136
    %v11141 = vand.u32 2147483647, %v10862
    %vm11142 = vcmp.eq.f32.partialorder %v11141, 8.507059e+37
    %v11143 = vand.u32 %v10862, 2147483648
    %v11144 = vor.u32 1.1754944e-38, %v11143
    %v11145 = vsel %vm11142, %v11144, %v11140
    %v11146 = vmul.f32 1.0, %v11145
    %v11147 = vrcp.pop %v10863
    %v11148 = vmul.f32 %v10863, %v11147
    %v11149 = vsub.f32 1.0, %v11148
    %v11150 = vmul.f32 %v11147, %v11149
    %v11151 = vadd.f32 %v11147, %v11150
    %vm11152 = vweird.f32 %v10863
    %vm11153 = vweird.f32 %v11147
    %vm11154 = vmor %vm11152, %vm11153
    %v11155 = vsel %vm11154, %v11147, %v11151
    %v11156 = vand.u32 2147483647, %v10863
    %vm11157 = vcmp.eq.f32.partialorder %v11156, 8.507059e+37
    %v11158 = vand.u32 %v10863, 2147483648
    %v11159 = vor.u32 1.1754944e-38, %v11158
    %v11160 = vsel %vm11157, %v11159, %v11155
    %v11161 = vmul.f32 1.0, %v11160
    %v11162 = vrcp.pop %v10864
    %v11163 = vmul.f32 %v10864, %v11162
    %v11164 = vsub.f32 1.0, %v11163
    %v11165 = vmul.f32 %v11162, %v11164
    %v11166 = vadd.f32 %v11162, %v11165
    %vm11167 = vweird.f32 %v10864
    %vm11168 = vweird.f32 %v11162
    %vm11169 = vmor %vm11167, %vm11168
    %v11170 = vsel %vm11169, %v11162, %v11166
    %v11171 = vand.u32 2147483647, %v10864
    %vm11172 = vcmp.eq.f32.partialorder %v11171, 8.507059e+37
    %v11173 = vand.u32 %v10864, 2147483648
    %v11174 = vor.u32 1.1754944e-38, %v11173
    %v11175 = vsel %vm11172, %v11174, %v11170
    %v11176 = vmul.f32 1.0, %v11175
    %v11177 = vrcp.pop %v10865
    %v11178 = vmul.f32 %v10865, %v11177
    %v11179 = vsub.f32 1.0, %v11178
    %v11180 = vmul.f32 %v11177, %v11179
    %v11181 = vadd.f32 %v11177, %v11180
    %vm11182 = vweird.f32 %v10865
    %vm11183 = vweird.f32 %v11177
    %vm11184 = vmor %vm11182, %vm11183
    %v11185 = vsel %vm11184, %v11177, %v11181
    %v11186 = vand.u32 2147483647, %v10865
    %vm11187 = vcmp.eq.f32.partialorder %v11186, 8.507059e+37
    %v11188 = vand.u32 %v10865, 2147483648
    %v11189 = vor.u32 1.1754944e-38, %v11188
    %v11190 = vsel %vm11187, %v11189, %v11185
    %v11191 = vmul.f32 1.0, %v11190
    %v11192 = vrcp.pop %v10866
    %v11193 = vmul.f32 %v10866, %v11192
    %v11194 = vsub.f32 1.0, %v11193
    %v11195 = vmul.f32 %v11192, %v11194
    %v11196 = vadd.f32 %v11192, %v11195
    %vm11197 = vweird.f32 %v10866
    %vm11198 = vweird.f32 %v11192
    %vm11199 = vmor %vm11197, %vm11198
    %v11200 = vsel %vm11199, %v11192, %v11196
    %v11201 = vand.u32 2147483647, %v10866
    %vm11202 = vcmp.eq.f32.partialorder %v11201, 8.507059e+37
    %v11203 = vand.u32 %v10866, 2147483648
    %v11204 = vor.u32 1.1754944e-38, %v11203
    %v11205 = vsel %vm11202, %v11204, %v11200
    %v11206 = vmul.f32 1.0, %v11205
    %v11207 = vrcp.pop %v10867
    %v11208 = vmul.f32 %v10867, %v11207
    %v11209 = vsub.f32 1.0, %v11208
    %v11210 = vmul.f32 %v11207, %v11209
    %v11211 = vadd.f32 %v11207, %v11210
    %vm11212 = vweird.f32 %v10867
    %vm11213 = vweird.f32 %v11207
    %vm11214 = vmor %vm11212, %vm11213
    %v11215 = vsel %vm11214, %v11207, %v11211
    %v11216 = vand.u32 2147483647, %v10867
    %vm11217 = vcmp.eq.f32.partialorder %v11216, 8.507059e+37
    %v11218 = vand.u32 %v10867, 2147483648
    %v11219 = vor.u32 1.1754944e-38, %v11218
    %v11220 = vsel %vm11217, %v11219, %v11215
    %v11221 = vmul.f32 1.0, %v11220
    %v11222 = vrcp.pop %v10868
    %v11223 = vmul.f32 %v10868, %v11222
    %v11224 = vsub.f32 1.0, %v11223
    %v11225 = vmul.f32 %v11222, %v11224
    %v11226 = vadd.f32 %v11222, %v11225
    %vm11227 = vweird.f32 %v10868
    %vm11228 = vweird.f32 %v11222
    %vm11229 = vmor %vm11227, %vm11228
    %v11230 = vsel %vm11229, %v11222, %v11226
    %v11231 = vand.u32 2147483647, %v10868
    %vm11232 = vcmp.eq.f32.partialorder %v11231, 8.507059e+37
    %v11233 = vand.u32 %v10868, 2147483648
    %v11234 = vor.u32 1.1754944e-38, %v11233
    %v11235 = vsel %vm11232, %v11234, %v11230
    %v11236 = vmul.f32 1.0, %v11235
    %v11237 = vrcp.pop %v10869
    %v11238 = vmul.f32 %v10869, %v11237
    %v11239 = vsub.f32 1.0, %v11238
    %v11240 = vmul.f32 %v11237, %v11239
    %v11241 = vadd.f32 %v11237, %v11240
    %vm11242 = vweird.f32 %v10869
    %vm11243 = vweird.f32 %v11237
    %vm11244 = vmor %vm11242, %vm11243
    %v11245 = vsel %vm11244, %v11237, %v11241
    %v11246 = vand.u32 2147483647, %v10869
    %vm11247 = vcmp.eq.f32.partialorder %v11246, 8.507059e+37
    %v11248 = vand.u32 %v10869, 2147483648
    %v11249 = vor.u32 1.1754944e-38, %v11248
    %v11250 = vsel %vm11247, %v11249, %v11245
    %v11251 = vmul.f32 1.0, %v11250
    %v11252 = vrcp.pop %v10870
    %v11253 = vmul.f32 %v10870, %v11252
    %v11254 = vsub.f32 1.0, %v11253
    %v11255 = vmul.f32 %v11252, %v11254
    %v11256 = vadd.f32 %v11252, %v11255
    %vm11257 = vweird.f32 %v10870
    %vm11258 = vweird.f32 %v11252
    %vm11259 = vmor %vm11257, %vm11258
    %v11260 = vsel %vm11259, %v11252, %v11256
    %v11261 = vand.u32 2147483647, %v10870
    %vm11262 = vcmp.eq.f32.partialorder %v11261, 8.507059e+37
    %v11263 = vand.u32 %v10870, 2147483648
    %v11264 = vor.u32 1.1754944e-38, %v11263
    %v11265 = vsel %vm11262, %v11264, %v11260
    %v11266 = vmul.f32 1.0, %v11265
    %v11267 = vrcp.pop %v10871
    %v11268 = vmul.f32 %v10871, %v11267
    %v11269 = vsub.f32 1.0, %v11268
    %v11270 = vmul.f32 %v11267, %v11269
    %v11271 = vadd.f32 %v11267, %v11270
    %vm11272 = vweird.f32 %v10871
    %vm11273 = vweird.f32 %v11267
    %vm11274 = vmor %vm11272, %vm11273
    %v11275 = vsel %vm11274, %v11267, %v11271
    %v11276 = vand.u32 2147483647, %v10871
    %vm11277 = vcmp.eq.f32.partialorder %v11276, 8.507059e+37
    %v11278 = vand.u32 %v10871, 2147483648
    %v11279 = vor.u32 1.1754944e-38, %v11278
    %v11280 = vsel %vm11277, %v11279, %v11275
    %v11281 = vmul.f32 1.0, %v11280
    %v11282 = vrcp.pop %v10872
    %v11283 = vmul.f32 %v10872, %v11282
    %v11284 = vsub.f32 1.0, %v11283
    %v11285 = vmul.f32 %v11282, %v11284
    %v11286 = vadd.f32 %v11282, %v11285
    %vm11287 = vweird.f32 %v10872
    %vm11288 = vweird.f32 %v11282
    %vm11289 = vmor %vm11287, %vm11288
    %v11290 = vsel %vm11289, %v11282, %v11286
    %v11291 = vand.u32 2147483647, %v10872
    %vm11292 = vcmp.eq.f32.partialorder %v11291, 8.507059e+37
    %v11293 = vand.u32 %v10872, 2147483648
    %v11294 = vor.u32 1.1754944e-38, %v11293
    %v11295 = vsel %vm11292, %v11294, %v11290
    %v11296 = vmul.f32 1.0, %v11295
    %v11297 = vrcp.pop %v10873
    %v11298 = vmul.f32 %v10873, %v11297
    %v11299 = vsub.f32 1.0, %v11298
    %v11300 = vmul.f32 %v11297, %v11299
    %v11301 = vadd.f32 %v11297, %v11300
    %vm11302 = vweird.f32 %v10873
    %vm11303 = vweird.f32 %v11297
    %vm11304 = vmor %vm11302, %vm11303
    %v11305 = vsel %vm11304, %v11297, %v11301
    %v11306 = vand.u32 2147483647, %v10873
    %vm11307 = vcmp.eq.f32.partialorder %v11306, 8.507059e+37
    %v11308 = vand.u32 %v10873, 2147483648
    %v11309 = vor.u32 1.1754944e-38, %v11308
    %v11310 = vsel %vm11307, %v11309, %v11305
    %v11311 = vmul.f32 1.0, %v11310
    %v11312 = vrcp.pop %v10874
    %v11313 = vmul.f32 %v10874, %v11312
    %v11314 = vsub.f32 1.0, %v11313
    %v11315 = vmul.f32 %v11312, %v11314
    %v11316 = vadd.f32 %v11312, %v11315
    %vm11317 = vweird.f32 %v10874
    %vm11318 = vweird.f32 %v11312
    %vm11319 = vmor %vm11317, %vm11318
    %v11320 = vsel %vm11319, %v11312, %v11316
    %v11321 = vand.u32 2147483647, %v10874
    %vm11322 = vcmp.eq.f32.partialorder %v11321, 8.507059e+37
    %v11323 = vand.u32 %v10874, 2147483648
    %v11324 = vor.u32 1.1754944e-38, %v11323
    %v11325 = vsel %vm11322, %v11324, %v11320
    %v11326 = vmul.f32 1.0, %v11325
    %v11327 = vrcp.pop %v10875
    %v11328 = vmul.f32 %v10875, %v11327
    %v11329 = vsub.f32 1.0, %v11328
    %v11330 = vmul.f32 %v11327, %v11329
    %v11331 = vadd.f32 %v11327, %v11330
    %vm11332 = vweird.f32 %v10875
    %vm11333 = vweird.f32 %v11327
    %vm11334 = vmor %vm11332, %vm11333
    %v11335 = vsel %vm11334, %v11327, %v11331
    %v11336 = vand.u32 2147483647, %v10875
    %vm11337 = vcmp.eq.f32.partialorder %v11336, 8.507059e+37
    %v11338 = vand.u32 %v10875, 2147483648
    %v11339 = vor.u32 1.1754944e-38, %v11338
    %v11340 = vsel %vm11337, %v11339, %v11335
    %v11341 = vmul.f32 1.0, %v11340
    %v11342 = vrcp.pop %v10876
    %v11343 = vmul.f32 %v10876, %v11342
    %v11344 = vsub.f32 1.0, %v11343
    %v11345 = vmul.f32 %v11342, %v11344
    %v11346 = vadd.f32 %v11342, %v11345
    %vm11347 = vweird.f32 %v10876
    %vm11348 = vweird.f32 %v11342
    %vm11349 = vmor %vm11347, %vm11348
    %v11350 = vsel %vm11349, %v11342, %v11346
    %v11351 = vand.u32 2147483647, %v10876
    %vm11352 = vcmp.eq.f32.partialorder %v11351, 8.507059e+37
    %v11353 = vand.u32 %v10876, 2147483648
    %v11354 = vor.u32 1.1754944e-38, %v11353
    %v11355 = vsel %vm11352, %v11354, %v11350
    %v11356 = vmul.f32 1.0, %v11355
    %11358 = vset.pattern.permute.xlu0 0
    %11359 = vperm.xlu0 %11358, %v10891
    %v11360 = vpop.permute.xlu0 %11359
    %11363 = vset.pattern.permute.xlu0 0
    %11364 = vperm.xlu0 %11363, %v10906
    %v11365 = vpop.permute.xlu0 %11364
    %11368 = vset.pattern.permute.xlu0 0
    %11369 = vperm.xlu0 %11368, %v10921
    %v11370 = vpop.permute.xlu0 %11369
    %11373 = vset.pattern.permute.xlu0 0
    %11374 = vperm.xlu0 %11373, %v10936
    %v11375 = vpop.permute.xlu0 %11374
    %11378 = vset.pattern.permute.xlu0 0
    %11379 = vperm.xlu0 %11378, %v10951
    %v11380 = vpop.permute.xlu0 %11379
    %11383 = vset.pattern.permute.xlu0 0
    %11384 = vperm.xlu0 %11383, %v10966
    %v11385 = vpop.permute.xlu0 %11384
    %11388 = vset.pattern.permute.xlu0 0
    %11389 = vperm.xlu0 %11388, %v10981
    %v11390 = vpop.permute.xlu0 %11389
    %11393 = vset.pattern.permute.xlu0 0
    %11394 = vperm.xlu0 %11393, %v10996
    %v11395 = vpop.permute.xlu0 %11394
    %11398 = vset.pattern.permute.xlu0 0
    %11399 = vperm.xlu0 %11398, %v11011
    %v11400 = vpop.permute.xlu0 %11399
    %11403 = vset.pattern.permute.xlu0 0
    %11404 = vperm.xlu0 %11403, %v11026
    %v11405 = vpop.permute.xlu0 %11404
    %11408 = vset.pattern.permute.xlu0 0
    %11409 = vperm.xlu0 %11408, %v11041
    %v11410 = vpop.permute.xlu0 %11409
    %11413 = vset.pattern.permute.xlu0 0
    %11414 = vperm.xlu0 %11413, %v11056
    %v11415 = vpop.permute.xlu0 %11414
    %11418 = vset.pattern.permute.xlu0 0
    %11419 = vperm.xlu0 %11418, %v11071
    %v11420 = vpop.permute.xlu0 %11419
    %11423 = vset.pattern.permute.xlu0 0
    %11424 = vperm.xlu0 %11423, %v11086
    %v11425 = vpop.permute.xlu0 %11424
    %11428 = vset.pattern.permute.xlu0 0
    %11429 = vperm.xlu0 %11428, %v11101
    %v11430 = vpop.permute.xlu0 %11429
    %11433 = vset.pattern.permute.xlu0 0
    %11434 = vperm.xlu0 %11433, %v11116
    %v11435 = vpop.permute.xlu0 %11434
    %11438 = vset.pattern.permute.xlu0 0
    %11439 = vperm.xlu0 %11438, %v11131
    %v11440 = vpop.permute.xlu0 %11439
    %11443 = vset.pattern.permute.xlu0 0
    %11444 = vperm.xlu0 %11443, %v11146
    %v11445 = vpop.permute.xlu0 %11444
    %11448 = vset.pattern.permute.xlu0 0
    %11449 = vperm.xlu0 %11448, %v11161
    %v11450 = vpop.permute.xlu0 %11449
    %11453 = vset.pattern.permute.xlu0 0
    %11454 = vperm.xlu0 %11453, %v11176
    %v11455 = vpop.permute.xlu0 %11454
    %11458 = vset.pattern.permute.xlu0 0
    %11459 = vperm.xlu0 %11458, %v11191
    %v11460 = vpop.permute.xlu0 %11459
    %11463 = vset.pattern.permute.xlu0 0
    %11464 = vperm.xlu0 %11463, %v11206
    %v11465 = vpop.permute.xlu0 %11464
    %11468 = vset.pattern.permute.xlu0 0
    %11469 = vperm.xlu0 %11468, %v11221
    %v11470 = vpop.permute.xlu0 %11469
    %11473 = vset.pattern.permute.xlu0 0
    %11474 = vperm.xlu0 %11473, %v11236
    %v11475 = vpop.permute.xlu0 %11474
    %11478 = vset.pattern.permute.xlu0 0
    %11479 = vperm.xlu0 %11478, %v11251
    %v11480 = vpop.permute.xlu0 %11479
    %11483 = vset.pattern.permute.xlu0 0
    %11484 = vperm.xlu0 %11483, %v11266
    %v11485 = vpop.permute.xlu0 %11484
    %11488 = vset.pattern.permute.xlu0 0
    %11489 = vperm.xlu0 %11488, %v11281
    %v11490 = vpop.permute.xlu0 %11489
    %11493 = vset.pattern.permute.xlu0 0
    %11494 = vperm.xlu0 %11493, %v11296
    %v11495 = vpop.permute.xlu0 %11494
    %11498 = vset.pattern.permute.xlu0 0
    %11499 = vperm.xlu0 %11498, %v11311
    %v11500 = vpop.permute.xlu0 %11499
    %11503 = vset.pattern.permute.xlu0 0
    %11504 = vperm.xlu0 %11503, %v11326
    %v11505 = vpop.permute.xlu0 %11504
    %11508 = vset.pattern.permute.xlu0 0
    %11509 = vperm.xlu0 %11508, %v11341
    %v11510 = vpop.permute.xlu0 %11509
    %11513 = vset.pattern.permute.xlu0 0
    %11514 = vperm.xlu0 %11513, %v11356
    %v11515 = vpop.permute.xlu0 %11514
    %11517 = vset.pattern.permute.xlu0 1
    %11518 = vperm.xlu0 %11517, %v10891
    %v11519 = vpop.permute.xlu0 %11518
    %11521 = vset.pattern.permute.xlu0 1
    %11522 = vperm.xlu0 %11521, %v10906
    %v11523 = vpop.permute.xlu0 %11522
    %11525 = vset.pattern.permute.xlu0 1
    %11526 = vperm.xlu0 %11525, %v10921
    %v11527 = vpop.permute.xlu0 %11526
    %11529 = vset.pattern.permute.xlu0 1
    %11530 = vperm.xlu0 %11529, %v10936
    %v11531 = vpop.permute.xlu0 %11530
    %11533 = vset.pattern.permute.xlu0 1
    %11534 = vperm.xlu0 %11533, %v10951
    %v11535 = vpop.permute.xlu0 %11534
    %11537 = vset.pattern.permute.xlu0 1
    %11538 = vperm.xlu0 %11537, %v10966
    %v11539 = vpop.permute.xlu0 %11538
    %11541 = vset.pattern.permute.xlu0 1
    %11542 = vperm.xlu0 %11541, %v10981
    %v11543 = vpop.permute.xlu0 %11542
    %11545 = vset.pattern.permute.xlu0 1
    %11546 = vperm.xlu0 %11545, %v10996
    %v11547 = vpop.permute.xlu0 %11546
    %11549 = vset.pattern.permute.xlu0 1
    %11550 = vperm.xlu0 %11549, %v11011
    %v11551 = vpop.permute.xlu0 %11550
    %11553 = vset.pattern.permute.xlu0 1
    %11554 = vperm.xlu0 %11553, %v11026
    %v11555 = vpop.permute.xlu0 %11554
    %11557 = vset.pattern.permute.xlu0 1
    %11558 = vperm.xlu0 %11557, %v11041
    %v11559 = vpop.permute.xlu0 %11558
    %11561 = vset.pattern.permute.xlu0 1
    %11562 = vperm.xlu0 %11561, %v11056
    %v11563 = vpop.permute.xlu0 %11562
    %11565 = vset.pattern.permute.xlu0 1
    %11566 = vperm.xlu0 %11565, %v11071
    %v11567 = vpop.permute.xlu0 %11566
    %11569 = vset.pattern.permute.xlu0 1
    %11570 = vperm.xlu0 %11569, %v11086
    %v11571 = vpop.permute.xlu0 %11570
    %11573 = vset.pattern.permute.xlu0 1
    %11574 = vperm.xlu0 %11573, %v11101
    %v11575 = vpop.permute.xlu0 %11574
    %11577 = vset.pattern.permute.xlu0 1
    %11578 = vperm.xlu0 %11577, %v11116
    %v11579 = vpop.permute.xlu0 %11578
    %11581 = vset.pattern.permute.xlu0 1
    %11582 = vperm.xlu0 %11581, %v11131
    %v11583 = vpop.permute.xlu0 %11582
    %11585 = vset.pattern.permute.xlu0 1
    %11586 = vperm.xlu0 %11585, %v11146
    %v11587 = vpop.permute.xlu0 %11586
    %11589 = vset.pattern.permute.xlu0 1
    %11590 = vperm.xlu0 %11589, %v11161
    %v11591 = vpop.permute.xlu0 %11590
    %11593 = vset.pattern.permute.xlu0 1
    %11594 = vperm.xlu0 %11593, %v11176
    %v11595 = vpop.permute.xlu0 %11594
    %11597 = vset.pattern.permute.xlu0 1
    %11598 = vperm.xlu0 %11597, %v11191
    %v11599 = vpop.permute.xlu0 %11598
    %11601 = vset.pattern.permute.xlu0 1
    %11602 = vperm.xlu0 %11601, %v11206
    %v11603 = vpop.permute.xlu0 %11602
    %11605 = vset.pattern.permute.xlu0 1
    %11606 = vperm.xlu0 %11605, %v11221
    %v11607 = vpop.permute.xlu0 %11606
    %11609 = vset.pattern.permute.xlu0 1
    %11610 = vperm.xlu0 %11609, %v11236
    %v11611 = vpop.permute.xlu0 %11610
    %11613 = vset.pattern.permute.xlu0 1
    %11614 = vperm.xlu0 %11613, %v11251
    %v11615 = vpop.permute.xlu0 %11614
    %11617 = vset.pattern.permute.xlu0 1
    %11618 = vperm.xlu0 %11617, %v11266
    %v11619 = vpop.permute.xlu0 %11618
    %11621 = vset.pattern.permute.xlu0 1
    %11622 = vperm.xlu0 %11621, %v11281
    %v11623 = vpop.permute.xlu0 %11622
    %11625 = vset.pattern.permute.xlu0 1
    %11626 = vperm.xlu0 %11625, %v11296
    %v11627 = vpop.permute.xlu0 %11626
    %11629 = vset.pattern.permute.xlu0 1
    %11630 = vperm.xlu0 %11629, %v11311
    %v11631 = vpop.permute.xlu0 %11630
    %11633 = vset.pattern.permute.xlu0 1
    %11634 = vperm.xlu0 %11633, %v11326
    %v11635 = vpop.permute.xlu0 %11634
    %11637 = vset.pattern.permute.xlu0 1
    %11638 = vperm.xlu0 %11637, %v11341
    %v11639 = vpop.permute.xlu0 %11638
    %11641 = vset.pattern.permute.xlu0 1
    %11642 = vperm.xlu0 %11641, %v11356
    %v11643 = vpop.permute.xlu0 %11642
    %v11645 = vsel %vm245, %v11360, %v11519
    %v11646 = vsel %vm245, %v11365, %v11523
    %v11647 = vsel %vm245, %v11370, %v11527
    %v11648 = vsel %vm245, %v11375, %v11531
    %v11649 = vsel %vm245, %v11380, %v11535
    %v11650 = vsel %vm245, %v11385, %v11539
    %v11651 = vsel %vm245, %v11390, %v11543
    %v11652 = vsel %vm245, %v11395, %v11547
    %v11653 = vsel %vm245, %v11400, %v11551
    %v11654 = vsel %vm245, %v11405, %v11555
    %v11655 = vsel %vm245, %v11410, %v11559
    %v11656 = vsel %vm245, %v11415, %v11563
    %v11657 = vsel %vm245, %v11420, %v11567
    %v11658 = vsel %vm245, %v11425, %v11571
    %v11659 = vsel %vm245, %v11430, %v11575
    %v11660 = vsel %vm245, %v11435, %v11579
    %v11661 = vsel %vm245, %v11440, %v11583
    %v11662 = vsel %vm245, %v11445, %v11587
    %v11663 = vsel %vm245, %v11450, %v11591
    %v11664 = vsel %vm245, %v11455, %v11595
    %v11665 = vsel %vm245, %v11460, %v11599
    %v11666 = vsel %vm245, %v11465, %v11603
    %v11667 = vsel %vm245, %v11470, %v11607
    %v11668 = vsel %vm245, %v11475, %v11611
    %v11669 = vsel %vm245, %v11480, %v11615
    %v11670 = vsel %vm245, %v11485, %v11619
    %v11671 = vsel %vm245, %v11490, %v11623
    %v11672 = vsel %vm245, %v11495, %v11627
    %v11673 = vsel %vm245, %v11500, %v11631
    %v11674 = vsel %vm245, %v11505, %v11635
    %v11675 = vsel %vm245, %v11510, %v11639
    %v11676 = vsel %vm245, %v11515, %v11643
    %v11677 = vmul.f32 %v213, %v11645
    %v11678 = vmul.f32 %v214, %v11646
    %v11679 = vmul.f32 %v215, %v11647
    %v11680 = vmul.f32 %v216, %v11648
    %v11681 = vmul.f32 %v217, %v11649
    %v11682 = vmul.f32 %v218, %v11650
    %v11683 = vmul.f32 %v219, %v11651
    %v11684 = vmul.f32 %v220, %v11652
    %v11685 = vmul.f32 %v221, %v11653
    %v11686 = vmul.f32 %v222, %v11654
    %v11687 = vmul.f32 %v223, %v11655
    %v11688 = vmul.f32 %v224, %v11656
    %v11689 = vmul.f32 %v225, %v11657
    %v11690 = vmul.f32 %v226, %v11658
    %v11691 = vmul.f32 %v227, %v11659
    %v11692 = vmul.f32 %v228, %v11660
    %v11693 = vmul.f32 %v229, %v11661
    %v11694 = vmul.f32 %v230, %v11662
    %v11695 = vmul.f32 %v231, %v11663
    %v11696 = vmul.f32 %v232, %v11664
    %v11697 = vmul.f32 %v233, %v11665
    %v11698 = vmul.f32 %v234, %v11666
    %v11699 = vmul.f32 %v235, %v11667
    %v11700 = vmul.f32 %v236, %v11668
    %v11701 = vmul.f32 %v237, %v11669
    %v11702 = vmul.f32 %v238, %v11670
    %v11703 = vmul.f32 %v239, %v11671
    %v11704 = vmul.f32 %v240, %v11672
    %v11705 = vmul.f32 %v241, %v11673
    %v11706 = vmul.f32 %v242, %v11674
    %v11707 = vmul.f32 %v243, %v11675
    %v11708 = vmul.f32 %v244, %v11676
    %v11709 = vadd.f32 %v74, %v11677
    %v11710 = vadd.f32 %v75, %v11678
    %v11711 = vadd.f32 %v76, %v11679
    %v11712 = vadd.f32 %v77, %v11680
    %v11713 = vadd.f32 %v78, %v11681
    %v11714 = vadd.f32 %v79, %v11682
    %v11715 = vadd.f32 %v80, %v11683
    %v11716 = vadd.f32 %v81, %v11684
    %v11717 = vadd.f32 %v82, %v11685
    %v11718 = vadd.f32 %v83, %v11686
    %v11719 = vadd.f32 %v84, %v11687
    %v11720 = vadd.f32 %v85, %v11688
    %v11721 = vadd.f32 %v86, %v11689
    %v11722 = vadd.f32 %v87, %v11690
    %v11723 = vadd.f32 %v88, %v11691
    %v11724 = vadd.f32 %v89, %v11692
    %v11725 = vadd.f32 %v90, %v11693
    %v11726 = vadd.f32 %v91, %v11694
    %v11727 = vadd.f32 %v92, %v11695
    %v11728 = vadd.f32 %v93, %v11696
    %v11729 = vadd.f32 %v94, %v11697
    %v11730 = vadd.f32 %v95, %v11698
    %v11731 = vadd.f32 %v96, %v11699
    %v11732 = vadd.f32 %v97, %v11700
    %v11733 = vadd.f32 %v98, %v11701
    %v11734 = vadd.f32 %v99, %v11702
    %v11735 = vadd.f32 %v100, %v11703
    %v11736 = vadd.f32 %v101, %v11704
    %v11737 = vadd.f32 %v102, %v11705
    %v11738 = vadd.f32 %v103, %v11706
    %v11739 = vadd.f32 %v104, %v11707
    %v11740 = vadd.f32 %v105, %v11708
    %11741 = vst.msk [vmem:[#allocation10] sm:$0xff] %vm106, %v11709
    %11742 = vst.msk [vmem:[#allocation10 + $0x8] sm:$0xff] %vm106, %v11710
    %11743 = vst.msk [vmem:[#allocation10 + $0x10] sm:$0xff] %vm106, %v11711
    %11744 = vst.msk [vmem:[#allocation10 + $0x18] sm:$0xff] %vm106, %v11712
    %11745 = vst.msk [vmem:[#allocation10 + $0x20] sm:$0xff] %vm106, %v11713
    %11746 = vst.msk [vmem:[#allocation10 + $0x28] sm:$0xff] %vm106, %v11714
    %11747 = vst.msk [vmem:[#allocation10 + $0x30] sm:$0xff] %vm106, %v11715
    %11748 = vst.msk [vmem:[#allocation10 + $0x38] sm:$0xff] %vm106, %v11716
    %11749 = vst.msk [vmem:[#allocation10 + $0x40] sm:$0xff] %vm106, %v11717
    %11750 = vst.msk [vmem:[#allocation10 + $0x48] sm:$0xff] %vm106, %v11718
    %11751 = vst.msk [vmem:[#allocation10 + $0x50] sm:$0xff] %vm106, %v11719
    %11752 = vst.msk [vmem:[#allocation10 + $0x58] sm:$0xff] %vm106, %v11720
    %11753 = vst.msk [vmem:[#allocation10 + $0x60] sm:$0xff] %vm106, %v11721
    %11754 = vst.msk [vmem:[#allocation10 + $0x68] sm:$0xff] %vm106, %v11722
    %11755 = vst.msk [vmem:[#allocation10 + $0x70] sm:$0xff] %vm106, %v11723
    %11756 = vst.msk [vmem:[#allocation10 + $0x78] sm:$0xff] %vm106, %v11724
    %11757 = vst.msk [vmem:[#allocation10 + $0x80] sm:$0xff] %vm106, %v11725
    %11758 = vst.msk [vmem:[#allocation10 + $0x88] sm:$0xff] %vm106, %v11726
    %11759 = vst.msk [vmem:[#allocation10 + $0x90] sm:$0xff] %vm106, %v11727
    %11760 = vst.msk [vmem:[#allocation10 + $0x98] sm:$0xff] %vm106, %v11728
    %11761 = vst.msk [vmem:[#allocation10 + $0xa0] sm:$0xff] %vm106, %v11729
    %11762 = vst.msk [vmem:[#allocation10 + $0xa8] sm:$0xff] %vm106, %v11730
    %11763 = vst.msk [vmem:[#allocation10 + $0xb0] sm:$0xff] %vm106, %v11731
    %11764 = vst.msk [vmem:[#allocation10 + $0xb8] sm:$0xff] %vm106, %v11732
    %11765 = vst.msk [vmem:[#allocation10 + $0xc0] sm:$0xff] %vm106, %v11733
    %11766 = vst.msk [vmem:[#allocation10 + $0xc8] sm:$0xff] %vm106, %v11734
    %11767 = vst.msk [vmem:[#allocation10 + $0xd0] sm:$0xff] %vm106, %v11735
    %11768 = vst.msk [vmem:[#allocation10 + $0xd8] sm:$0xff] %vm106, %v11736
    %11769 = vst.msk [vmem:[#allocation10 + $0xe0] sm:$0xff] %vm106, %v11737
    %11770 = vst.msk [vmem:[#allocation10 + $0xe8] sm:$0xff] %vm106, %v11738
    %11771 = vst.msk [vmem:[#allocation10 + $0xf0] sm:$0xff] %vm106, %v11739
    %11772 = vst.msk [vmem:[#allocation10 + $0xf8] sm:$0xff] %vm106, %v11740
    // Predicated region
    $region34: #{tpu_custom_call.1} parent=1 // pred_check
      _
    $region35: #{tpu_custom_call.1} parent=1 // pred_check_branch
      %11774 = sbr.rel (0) target = $region37
    $region36: #{tpu_custom_call.1} parent=1 // pred_region
      %11776 = vsyncadd [#allocation4], 0
      %s11777 = sshll.u32 [#allocation10], 4
      %s11778 = int_to_ptr.vmem [resolvable:$true] %s11777
      %s11779 = sshll.u32 %s4, 4
      %s11780 = int_to_ptr.hbm [resolvable:$true] %s11779
      %11785 = dma.vmem_to_hbm [thread:$0]  %s11778, 4096, %s11780, [#allocation4], 128, 128, 8
    $region37: #{tpu_custom_call.1} parent=1 // pred_fallthru
      _
    // Predicated region
    $region38: #{tpu_custom_call.1} parent=1 // pred_check
      _
    $region39: #{tpu_custom_call.1} parent=1 // pred_check_branch
      %11787 = sbr.rel (0) target = $region41
    $region40: #{tpu_custom_call.1} parent=1 // pred_region
      %11789 = dma.done [#allocation4], 4096
    $region41: #{tpu_custom_call.1} parent=1 // pred_fallthru
      _
    %11790 = vsyncpa [#allocation3], 1
    %11791 = vsyncpa [#allocation7], 1
    %11792 = vsyncpa [#allocation4], 1
    %11793 = vsyncpa [#allocation5], 1

</llo_original>
